<compile_context>
chip_gen: v7x
topology: tpu7x:2x2x1
jax: 0.10.0
libtpu: 0.0.40
codegen_flags: <defaults>
</compile_context>

<pallas_src>
import functools

import jax
import jax.numpy as jnp
from jax.experimental import pallas as pl
from jax.experimental.pallas import tpu as pltpu

F32 = jnp.float32
BF16 = jnp.bfloat16
BN_EPS = 1e-5


# ---------------------------------------------------------------------------
# Kernel A: ConvTranspose2d(C, C, kernel_size=2, stride=2) as one fused matmul.
#   x_ref : (1, H*W, Cin)   f32   (spatial flattened, channels last)
#   w_ref : (Cin, 4*Cin)    bf16  (phase (di, dj) weights packed along columns)
#   b_ref : (1, 4*Cin)      f32
#   o_ref : (1, H*W, 4*Cin) f32   (per-phase outputs; interleaved in the wrapper)
# ---------------------------------------------------------------------------
def _upconv_kernel(x_ref, w_ref, b_ref, o_ref):
    xb = x_ref[0].astype(BF16)                       # matmul operands in bf16
    o_ref[0] = (jnp.dot(xb, w_ref[...], preferred_element_type=F32)
                + b_ref[...])                        # bias / output in f32


# ---------------------------------------------------------------------------
# Kernel B: double_conv = (3x3 conv + folded BN + ReLU) x 2 over a flat,
# zero-guarded padded image.
#   x_ref    : (1, Lp, Cin)   bf16  flat padded image with `guard` zeros on each end
#   mask_ref : (Npix, 1)      f32   1 on the interior, 0 on the 1-pixel padding ring
#   c1w_ref  : (9, Cin, Cout) bf16 ; c1b_ref : (1, Cout) f32
#   c2w_ref  : (9, Cout, Cout) bf16; c2b_ref : (1, Cout) f32
#   o_ref    : (1, Npix, Cout) f32  (full padded grid; wrapper strips the ring)
#   h1_ref   : VMEM scratch (Lp, Cout) bf16
# ---------------------------------------------------------------------------
def _double_conv_kernel(x_ref, mask_ref, c1w_ref, c1b_ref, c2w_ref, c2b_ref,
                        o_ref, h1_ref, *, guard, wp):
    npix = o_ref.shape[1]
    cout = o_ref.shape[2]

    def conv3x3(load, w_ref):
        acc = jnp.zeros((npix, cout), F32)
        for k in range(9):                                   # static flat shifts
            off = guard + (k // 3 - 1) * wp + (k % 3 - 1)
            acc = acc + jnp.dot(load(off), w_ref[k],
                                preferred_element_type=F32)
        return acc

    # conv1 + BN (folded) + ReLU; mask zeroes the padding ring so conv2 sees true
    # zero padding.
    h = conv3x3(lambda off: x_ref[0, off:off + npix, :], c1w_ref)
    h = jnp.maximum(h + c1b_ref[...], 0.0) * mask_ref[...]

    # Stash conv1 output into the guarded scratch (bf16 matmul operand for conv2).
    h1_ref[0:guard, :] = jnp.zeros((guard, cout), BF16)
    h1_ref[guard + npix:guard + npix + guard, :] = jnp.zeros((guard, cout), BF16)
    h1_ref[guard:guard + npix, :] = h.astype(BF16)

    # conv2 + BN (folded) + ReLU.
    y = conv3x3(lambda off: h1_ref[off:off + npix, :], c2w_ref)
    o_ref[0] = jnp.maximum(y + c2b_ref[...], 0.0)


# ---------------------------------------------------------------------------
# Parameter init (PyTorch-style shapes) and BN folding (inference mode).
# ---------------------------------------------------------------------------
def init_params(key, cin, cout):
    ks = jax.random.split(key, 16)
    it = iter(ks)

    def nrm(shape, scale=0.1):
        return scale * jax.random.normal(next(it), shape, dtype=F32)

    return {
        "up_w": nrm((cin, cin, 2, 2)), "up_b": nrm((cin,)),
        "c1_w": nrm((cout, cin, 3, 3)), "c1_b": nrm((cout,)),
        "bn1_gamma": 1.0 + nrm((cout,)), "bn1_beta": nrm((cout,)),
        "bn1_mean": nrm((cout,)),
        "bn1_var": 1.0 + jax.random.uniform(next(it), (cout,), dtype=F32),
        "c2_w": nrm((cout, cout, 3, 3)), "c2_b": nrm((cout,)),
        "bn2_gamma": 1.0 + nrm((cout,)), "bn2_beta": nrm((cout,)),
        "bn2_mean": nrm((cout,)),
        "bn2_var": 1.0 + jax.random.uniform(next(it), (cout,), dtype=F32),
    }


def fold_params(p):
    """Fold BN (eval mode) into the convs, repack for the kernels, cast weights to bf16."""
    # ConvTranspose2d (k=2, s=2): per-phase (di, dj) weight (Cin, Cin), packed columns.
    up_w_all = jnp.concatenate(
        [p["up_w"][:, :, di, dj] for di in range(2) for dj in range(2)], axis=1)
    up_b_all = jnp.tile(p["up_b"][None, :], (1, 4))                 # (1, 4*Cin)

    def fold_conv_bn(w, b, g, beta, mean, var):
        s = g / jnp.sqrt(var + BN_EPS)
        wf = w * s[:, None, None, None]                             # (Co, Ci, 3, 3)
        wk = jnp.transpose(wf, (2, 3, 1, 0)).reshape(9, w.shape[1], w.shape[0])
        bf = ((b - mean) * s + beta)[None, :]                       # (1, Co)
        return wk, bf

    c1w, c1b = fold_conv_bn(p["c1_w"], p["c1_b"], p["bn1_gamma"],
                            p["bn1_beta"], p["bn1_mean"], p["bn1_var"])
    c2w, c2b = fold_conv_bn(p["c2_w"], p["c2_b"], p["bn2_gamma"],
                            p["bn2_beta"], p["bn2_mean"], p["bn2_var"])

    return (up_w_all.astype(BF16), up_b_all.astype(F32),
            c1w.astype(BF16), c1b.astype(F32),
            c2w.astype(BF16), c2b.astype(F32))


# ---------------------------------------------------------------------------
# Wrapper: BlockSpecs, grid, and the XLA layout plumbing between the two kernels.
# ---------------------------------------------------------------------------
def _rep_spec(a):
    """Weight / constant replicated across the batch grid (constant index_map)."""
    nd = a.ndim
    return pl.BlockSpec(a.shape, lambda b, nd=nd: (0,) * nd)


def _compiler_params():
    # Derive a per-generation VMEM budget (don't hard-code 128 MiB: v7x only has 64 MiB).
    try:
        cap = int(pltpu.get_tpu_info().vmem_capacity_bytes)
        limit = min((cap * 3) // 4, 96 << 20)
    except Exception:
        limit = 48 << 20
    return pltpu.CompilerParams(
        dimension_semantics=("parallel",),      # batch elements are independent
        vmem_limit_bytes=limit,
    )


def up0_forward(x_nchw, folded):
    """x_nchw: (B, Cin, H, W) f32, PyTorch NCHW. Returns (B, Cout, 2H, 2W) f32."""
    up_w_all, up_b_all, c1w, c1b, c2w, c2b = folded
    B, Cin, H, W = x_nchw.shape
    Cout = c1w.shape[-1]
    H2, W2 = 2 * H, 2 * W
    Hp, Wp = H2 + 2, W2 + 2                    # zero-padded (padding=1) grid
    Npix = Hp * Wp
    G = ((Wp + 1 + 15) // 16) * 16             # flat guard >= Wp+1, 16-aligned
    Lp = Npix + 2 * G

    cp = _compiler_params()

    x_flat = jnp.transpose(x_nchw, (0, 2, 3, 1)).astype(F32).reshape(B, H * W, Cin)

    # ---- kernel A: transposed conv (4 phases fused into one matmul) ------------
    phases = pl.pallas_call(
        _upconv_kernel,
        out_shape=jax.ShapeDtypeStruct((B, H * W, 4 * Cin), F32),
        grid_spec=pltpu.PrefetchScalarGridSpec(
            num_scalar_prefetch=0,
            grid=(B,),
            in_specs=[pl.BlockSpec((1, H * W, Cin), lambda b: (b, 0, 0)),
                      _rep_spec(up_w_all), _rep_spec(up_b_all)],
            out_specs=pl.BlockSpec((1, H * W, 4 * Cin), lambda b: (b, 0, 0)),
        ),
        compiler_params=cp,
    )(x_flat, up_w_all, up_b_all)

    # ---- XLA layout plumbing: interleave phases, zero-pad, flatten, add guards -
    up_img = (phases.reshape(B, H, W, 2, 2, Cin)
              .transpose(0, 1, 3, 2, 4, 5)
              .reshape(B, H2, W2, Cin))                        # (B, 2H, 2W, Cin)
    up_pad = jnp.pad(up_img, ((0, 0), (1, 1), (1, 1), (0, 0)))  # 1-pixel zero ring
    gz = jnp.zeros((B, G, Cin), F32)
    up_g = jnp.concatenate([gz, up_pad.reshape(B, Npix, Cin), gz],
                           axis=1).astype(BF16)                # (B, Lp, Cin)

    # Interior mask over the padded grid (re-zeroes the padding ring after conv1).
    pq = jnp.arange(Npix)
    p_idx, q_idx = pq // Wp, pq % Wp
    mask = (((p_idx >= 1) & (p_idx <= Hp - 2) &
             (q_idx >= 1) & (q_idx <= Wp - 2)).astype(F32))[:, None]   # (Npix, 1)

    # ---- kernel B: double_conv over the flat guarded image ---------------------
    out_full = pl.pallas_call(
        functools.partial(_double_conv_kernel, guard=G, wp=Wp),
        out_shape=jax.ShapeDtypeStruct((B, Npix, Cout), F32),
        grid_spec=pltpu.PrefetchScalarGridSpec(
            num_scalar_prefetch=0,
            grid=(B,),
            in_specs=[pl.BlockSpec((1, Lp, Cin), lambda b: (b, 0, 0)),
                      _rep_spec(mask),
                      _rep_spec(c1w), _rep_spec(c1b),
                      _rep_spec(c2w), _rep_spec(c2b)],
            out_specs=pl.BlockSpec((1, Npix, Cout), lambda b: (b, 0, 0)),
            scratch_shapes=[pltpu.VMEM((Lp, Cout), BF16)],
        ),
        compiler_params=cp,
    )(up_g, mask, c1w, c1b, c2w, c2b)

    out = out_full.reshape(B, Hp, Wp, Cout)[:, 1:Hp - 1, 1:Wp - 1, :]
    return jnp.transpose(out, (0, 3, 1, 2))                    # back to NCHW


# ---------------------------------------------------------------------------
# Pure-JAX reference (eval-mode BN, f32 HIGHEST precision) for correctness check.
# ---------------------------------------------------------------------------
def reference_forward(x_nchw, p):
    hp = jax.lax.Precision.HIGHEST
    x = jnp.transpose(x_nchw, (0, 2, 3, 1)).astype(F32)        # NHWC
    B, H, W, Cin = x.shape
    up = jnp.einsum("bhwi,iojk->bhjwko", x, p["up_w"], precision=hp)
    up = up.reshape(B, 2 * H, 2 * W, Cin) + p["up_b"]

    def conv_bn_relu(z, w, b, g, beta, mean, var):
        out = jax.lax.conv_general_dilated(
            z, jnp.transpose(w, (2, 3, 1, 0)), (1, 1), ((1, 1), (1, 1)),
            dimension_numbers=("NHWC", "HWIO", "NHWC"), precision=hp)
        s = g / jnp.sqrt(var + BN_EPS)
        return jnp.maximum((out + b - mean) * s + beta, 0.0)

    h = conv_bn_relu(up, p["c1_w"], p["c1_b"], p["bn1_gamma"],
                     p["bn1_beta"], p["bn1_mean"], p["bn1_var"])
    y = conv_bn_relu(h, p["c2_w"], p["c2_b"], p["bn2_gamma"],
                     p["bn2_beta"], p["bn2_mean"], p["bn2_var"])
    return jnp.transpose(y, (0, 3, 1, 2))


if __name__ == "__main__":
    B, CIN, COUT, H, W = 2, 8, 16, 8, 8
    key = jax.random.PRNGKey(0)
    kp, kx = jax.random.split(key)
    params = init_params(kp, CIN, COUT)
    folded = fold_params(params)
    x = jax.random.normal(kx, (B, CIN, H, W), dtype=F32)       # PyTorch NCHW input

    fwd = jax.jit(up0_forward)
    out = fwd(x, folded)
    jax.block_until_ready(out)

    assert out.shape == (B, COUT, 2 * H, 2 * W)
    ref = reference_forward(x, params)
    max_err = float(jnp.max(jnp.abs(out - ref)))
    assert jnp.allclose(out, ref, rtol=2e-2, atol=2e-2), f"max abs err {max_err}"
    print("KERNEL_OK")
</pallas_src>

<mosaic_0001>
module attributes {stable_mosaic.version = 11 : i64} {
  func.func @_upconv_kernel(%arg0: i32, %arg1: memref<1x64x8xf32, #tpu.memory_space<vmem>>, %arg2: memref<8x32xbf16, #tpu.memory_space<vmem>>, %arg3: memref<1x32xf32, #tpu.memory_space<vmem>>, %arg4: memref<1x64x32xf32, #tpu.memory_space<vmem>>) attributes {dimension_semantics = [#tpu.dimension_semantics<parallel>], iteration_bounds = array<i64: 2>, scalar_prefetch = 0 : i64, scratch_operands = 0 : i64, tpu.core_type = #tpu.core_type<tc>, window_params = [{transform_indices = @transform_0, window_bounds = array<i64: 1, 64, 8>}, {pipeline_mode = #tpu.pipeline_mode<synchronous>, transform_indices = @transform_1, window_bounds = array<i64: 8, 32>}, {pipeline_mode = #tpu.pipeline_mode<synchronous>, transform_indices = @transform_2, window_bounds = array<i64: 1, 32>}, {transform_indices = @transform_3, window_bounds = array<i64: 1, 64, 32>}]} {
    %c0 = arith.constant 0 : index
    %c0_0 = arith.constant 0 : index
    %c0_1 = arith.constant 0 : index
    %0 = vector.load %arg1[%c0, %c0_0, %c0_1] : memref<1x64x8xf32, #tpu.memory_space<vmem>>, vector<1x64x8xf32>
    %1 = vector.shape_cast %0 : vector<1x64x8xf32> to vector<64x8xf32>
    %2 = arith.truncf %1 : vector<64x8xf32> to vector<64x8xbf16>
    %c0_2 = arith.constant 0 : index
    %c0_3 = arith.constant 0 : index
    %3 = vector.load %arg2[%c0_2, %c0_3] : memref<8x32xbf16, #tpu.memory_space<vmem>>, vector<8x32xbf16>
    %cst = arith.constant dense<0.000000e+00> : vector<64x32xf32>
    %4 = tpu.matmul %2, %3, %cst {dimension_numbers = #tpu.dot_dimension_numbers<[1], [0], [0], [1], [0, 0, 1, 1], [], []>} : vector<64x8xbf16>, vector<8x32xbf16>, vector<64x32xf32> -> vector<64x32xf32>
    %c0_4 = arith.constant 0 : index
    %c0_5 = arith.constant 0 : index
    %5 = vector.load %arg3[%c0_4, %c0_5] : memref<1x32xf32, #tpu.memory_space<vmem>>, vector<1x32xf32>
    %6 = vector.broadcast %5 : vector<1x32xf32> to vector<64x32xf32>
    %7 = arith.addf %4, %6 : vector<64x32xf32>
    %c0_6 = arith.constant 0 : index
    %c0_7 = arith.constant 0 : index
    %c0_8 = arith.constant 0 : index
    %8 = vector.load %arg4[%c0_6, %c0_7, %c0_8] : memref<1x64x32xf32, #tpu.memory_space<vmem>>, vector<1x64x32xf32>
    %9 = vector.shape_cast %8 : vector<1x64x32xf32> to vector<64x32xf32>
    %10 = vector.shape_cast %7 : vector<64x32xf32> to vector<1x64x32xf32>
    tpu.vector_store %arg4[%c0_6, %c0_7, %c0_8], %10 {strides = array<i32>} : memref<1x64x32xf32, #tpu.memory_space<vmem>>, vector<1x64x32xf32>,
    return
  }
  func.func @transform_0(%arg0: i32) -> (i32, i32, i32) {
    %c0_i32 = arith.constant 0 : i32
    %c0_i32_0 = arith.constant 0 : i32
    %c0_i32_1 = arith.constant 0 : i32
    return %arg0, %c0_i32, %c0_i32_0 : i32, i32, i32
  }
  func.func @transform_1(%arg0: i32) -> (i32, i32) {
    %c0_i32 = arith.constant 0 : i32
    %c0_i32_0 = arith.constant 0 : i32
    %c0_i32_1 = arith.constant 0 : i32
    return %c0_i32, %c0_i32_0 : i32, i32
  }
  func.func @transform_2(%arg0: i32) -> (i32, i32) {
    %c0_i32 = arith.constant 0 : i32
    %c0_i32_0 = arith.constant 0 : i32
    %c0_i32_1 = arith.constant 0 : i32
    return %c0_i32, %c0_i32_0 : i32, i32
  }
  func.func @transform_3(%arg0: i32) -> (i32, i32, i32) {
    %c0_i32 = arith.constant 0 : i32
    %c0_i32_0 = arith.constant 0 : i32
    %c0_i32_1 = arith.constant 0 : i32
    return %arg0, %c0_i32, %c0_i32_0 : i32, i32, i32
  }
}

module attributes {stable_mosaic.version = 11 : i64} {
  func.func @_double_conv_kernel(%arg0: i32, %arg1: memref<1x388x8xbf16, #tpu.memory_space<vmem>>, %arg2: memref<324x1xf32, #tpu.memory_space<vmem>>, %arg3: memref<9x8x16xbf16, #tpu.memory_space<vmem>>, %arg4: memref<1x16xf32, #tpu.memory_space<vmem>>, %arg5: memref<9x16x16xbf16, #tpu.memory_space<vmem>>, %arg6: memref<1x16xf32, #tpu.memory_space<vmem>>, %arg7: memref<1x324x16xf32, #tpu.memory_space<vmem>>, %arg8: memref<388x16xbf16, #tpu.memory_space<vmem>>) attributes {dimension_semantics = [#tpu.dimension_semantics<parallel>], iteration_bounds = array<i64: 2>, scalar_prefetch = 0 : i64, scratch_operands = 1 : i64, tpu.core_type = #tpu.core_type<tc>, window_params = [{transform_indices = @transform_0, window_bounds = array<i64: 1, 388, 8>}, {pipeline_mode = #tpu.pipeline_mode<synchronous>, transform_indices = @transform_1, window_bounds = array<i64: 324, 1>}, {pipeline_mode = #tpu.pipeline_mode<synchronous>, transform_indices = @transform_2, window_bounds = array<i64: 9, 8, 16>}, {pipeline_mode = #tpu.pipeline_mode<synchronous>, transform_indices = @transform_3, window_bounds = array<i64: 1, 16>}, {pipeline_mode = #tpu.pipeline_mode<synchronous>, transform_indices = @transform_4, window_bounds = array<i64: 9, 16, 16>}, {pipeline_mode = #tpu.pipeline_mode<synchronous>, transform_indices = @transform_5, window_bounds = array<i64: 1, 16>}, {transform_indices = @transform_6, window_bounds = array<i64: 1, 324, 16>}]} {
    %cst = arith.constant 0.000000e+00 : f32
    %0 = vector.broadcast %cst : f32 to vector<324x16xf32>
    %c0 = arith.constant 0 : index
    %c13 = arith.constant 13 : index
    %c0_0 = arith.constant 0 : index
    %1 = vector.load %arg1[%c0, %c13, %c0_0] : memref<1x388x8xbf16, #tpu.memory_space<vmem>>, vector<1x324x8xbf16>
    %2 = vector.shape_cast %1 : vector<1x324x8xbf16> to vector<324x8xbf16>
    %c0_1 = arith.constant 0 : index
    %c0_2 = arith.constant 0 : index
    %c0_3 = arith.constant 0 : index
    %3 = vector.load %arg3[%c0_1, %c0_2, %c0_3] : memref<9x8x16xbf16, #tpu.memory_space<vmem>>, vector<1x8x16xbf16>
    %4 = vector.shape_cast %3 : vector<1x8x16xbf16> to vector<8x16xbf16>
    %cst_4 = arith.constant dense<0.000000e+00> : vector<324x16xf32>
    %5 = tpu.matmul %2, %4, %cst_4 {dimension_numbers = #tpu.dot_dimension_numbers<[1], [0], [0], [1], [0, 0, 1, 1], [], []>} : vector<324x8xbf16>, vector<8x16xbf16>, vector<324x16xf32> -> vector<324x16xf32>
    %6 = arith.addf %0, %5 : vector<324x16xf32>
    %c0_5 = arith.constant 0 : index
    %c14 = arith.constant 14 : index
    %c0_6 = arith.constant 0 : index
    %7 = vector.load %arg1[%c0_5, %c14, %c0_6] : memref<1x388x8xbf16, #tpu.memory_space<vmem>>, vector<1x324x8xbf16>
    %8 = vector.shape_cast %7 : vector<1x324x8xbf16> to vector<324x8xbf16>
    %c1 = arith.constant 1 : index
    %c0_7 = arith.constant 0 : index
    %c0_8 = arith.constant 0 : index
    %9 = vector.load %arg3[%c1, %c0_7, %c0_8] : memref<9x8x16xbf16, #tpu.memory_space<vmem>>, vector<1x8x16xbf16>
    %10 = vector.shape_cast %9 : vector<1x8x16xbf16> to vector<8x16xbf16>
    %cst_9 = arith.constant dense<0.000000e+00> : vector<324x16xf32>
    %11 = tpu.matmul %8, %10, %cst_9 {dimension_numbers = #tpu.dot_dimension_numbers<[1], [0], [0], [1], [0, 0, 1, 1], [], []>} : vector<324x8xbf16>, vector<8x16xbf16>, vector<324x16xf32> -> vector<324x16xf32>
    %12 = arith.addf %6, %11 : vector<324x16xf32>
    %c0_10 = arith.constant 0 : index
    %c15 = arith.constant 15 : index
    %c0_11 = arith.constant 0 : index
    %13 = vector.load %arg1[%c0_10, %c15, %c0_11] : memref<1x388x8xbf16, #tpu.memory_space<vmem>>, vector<1x324x8xbf16>
    %14 = vector.shape_cast %13 : vector<1x324x8xbf16> to vector<324x8xbf16>
    %c2 = arith.constant 2 : index
    %c0_12 = arith.constant 0 : index
    %c0_13 = arith.constant 0 : index
    %15 = vector.load %arg3[%c2, %c0_12, %c0_13] : memref<9x8x16xbf16, #tpu.memory_space<vmem>>, vector<1x8x16xbf16>
    %16 = vector.shape_cast %15 : vector<1x8x16xbf16> to vector<8x16xbf16>
    %cst_14 = arith.constant dense<0.000000e+00> : vector<324x16xf32>
    %17 = tpu.matmul %14, %16, %cst_14 {dimension_numbers = #tpu.dot_dimension_numbers<[1], [0], [0], [1], [0, 0, 1, 1], [], []>} : vector<324x8xbf16>, vector<8x16xbf16>, vector<324x16xf32> -> vector<324x16xf32>
    %18 = arith.addf %12, %17 : vector<324x16xf32>
    %c0_15 = arith.constant 0 : index
    %c31 = arith.constant 31 : index
    %c0_16 = arith.constant 0 : index
    %19 = vector.load %arg1[%c0_15, %c31, %c0_16] : memref<1x388x8xbf16, #tpu.memory_space<vmem>>, vector<1x324x8xbf16>
    %20 = vector.shape_cast %19 : vector<1x324x8xbf16> to vector<324x8xbf16>
    %c3 = arith.constant 3 : index
    %c0_17 = arith.constant 0 : index
    %c0_18 = arith.constant 0 : index
    %21 = vector.load %arg3[%c3, %c0_17, %c0_18] : memref<9x8x16xbf16, #tpu.memory_space<vmem>>, vector<1x8x16xbf16>
    %22 = vector.shape_cast %21 : vector<1x8x16xbf16> to vector<8x16xbf16>
    %cst_19 = arith.constant dense<0.000000e+00> : vector<324x16xf32>
    %23 = tpu.matmul %20, %22, %cst_19 {dimension_numbers = #tpu.dot_dimension_numbers<[1], [0], [0], [1], [0, 0, 1, 1], [], []>} : vector<324x8xbf16>, vector<8x16xbf16>, vector<324x16xf32> -> vector<324x16xf32>
    %24 = arith.addf %18, %23 : vector<324x16xf32>
    %c0_20 = arith.constant 0 : index
    %c32 = arith.constant 32 : index
    %c0_21 = arith.constant 0 : index
    %25 = vector.load %arg1[%c0_20, %c32, %c0_21] : memref<1x388x8xbf16, #tpu.memory_space<vmem>>, vector<1x324x8xbf16>
    %26 = vector.shape_cast %25 : vector<1x324x8xbf16> to vector<324x8xbf16>
    %c4 = arith.constant 4 : index
    %c0_22 = arith.constant 0 : index
    %c0_23 = arith.constant 0 : index
    %27 = vector.load %arg3[%c4, %c0_22, %c0_23] : memref<9x8x16xbf16, #tpu.memory_space<vmem>>, vector<1x8x16xbf16>
    %28 = vector.shape_cast %27 : vector<1x8x16xbf16> to vector<8x16xbf16>
    %cst_24 = arith.constant dense<0.000000e+00> : vector<324x16xf32>
    %29 = tpu.matmul %26, %28, %cst_24 {dimension_numbers = #tpu.dot_dimension_numbers<[1], [0], [0], [1], [0, 0, 1, 1], [], []>} : vector<324x8xbf16>, vector<8x16xbf16>, vector<324x16xf32> -> vector<324x16xf32>
    %30 = arith.addf %24, %29 : vector<324x16xf32>
    %c0_25 = arith.constant 0 : index
    %c33 = arith.constant 33 : index
    %c0_26 = arith.constant 0 : index
    %31 = vector.load %arg1[%c0_25, %c33, %c0_26] : memref<1x388x8xbf16, #tpu.memory_space<vmem>>, vector<1x324x8xbf16>
    %32 = vector.shape_cast %31 : vector<1x324x8xbf16> to vector<324x8xbf16>
    %c5 = arith.constant 5 : index
    %c0_27 = arith.constant 0 : index
    %c0_28 = arith.constant 0 : index
    %33 = vector.load %arg3[%c5, %c0_27, %c0_28] : memref<9x8x16xbf16, #tpu.memory_space<vmem>>, vector<1x8x16xbf16>
    %34 = vector.shape_cast %33 : vector<1x8x16xbf16> to vector<8x16xbf16>
    %cst_29 = arith.constant dense<0.000000e+00> : vector<324x16xf32>
    %35 = tpu.matmul %32, %34, %cst_29 {dimension_numbers = #tpu.dot_dimension_numbers<[1], [0], [0], [1], [0, 0, 1, 1], [], []>} : vector<324x8xbf16>, vector<8x16xbf16>, vector<324x16xf32> -> vector<324x16xf32>
    %36 = arith.addf %30, %35 : vector<324x16xf32>
    %c0_30 = arith.constant 0 : index
    %c49 = arith.constant 49 : index
    %c0_31 = arith.constant 0 : index
    %37 = vector.load %arg1[%c0_30, %c49, %c0_31] : memref<1x388x8xbf16, #tpu.memory_space<vmem>>, vector<1x324x8xbf16>
    %38 = vector.shape_cast %37 : vector<1x324x8xbf16> to vector<324x8xbf16>
    %c6 = arith.constant 6 : index
    %c0_32 = arith.constant 0 : index
    %c0_33 = arith.constant 0 : index
    %39 = vector.load %arg3[%c6, %c0_32, %c0_33] : memref<9x8x16xbf16, #tpu.memory_space<vmem>>, vector<1x8x16xbf16>
    %40 = vector.shape_cast %39 : vector<1x8x16xbf16> to vector<8x16xbf16>
    %cst_34 = arith.constant dense<0.000000e+00> : vector<324x16xf32>
    %41 = tpu.matmul %38, %40, %cst_34 {dimension_numbers = #tpu.dot_dimension_numbers<[1], [0], [0], [1], [0, 0, 1, 1], [], []>} : vector<324x8xbf16>, vector<8x16xbf16>, vector<324x16xf32> -> vector<324x16xf32>
    %42 = arith.addf %36, %41 : vector<324x16xf32>
    %c0_35 = arith.constant 0 : index
    %c50 = arith.constant 50 : index
    %c0_36 = arith.constant 0 : index
    %43 = vector.load %arg1[%c0_35, %c50, %c0_36] : memref<1x388x8xbf16, #tpu.memory_space<vmem>>, vector<1x324x8xbf16>
    %44 = vector.shape_cast %43 : vector<1x324x8xbf16> to vector<324x8xbf16>
    %c7 = arith.constant 7 : index
    %c0_37 = arith.constant 0 : index
    %c0_38 = arith.constant 0 : index
    %45 = vector.load %arg3[%c7, %c0_37, %c0_38] : memref<9x8x16xbf16, #tpu.memory_space<vmem>>, vector<1x8x16xbf16>
    %46 = vector.shape_cast %45 : vector<1x8x16xbf16> to vector<8x16xbf16>
    %cst_39 = arith.constant dense<0.000000e+00> : vector<324x16xf32>
    %47 = tpu.matmul %44, %46, %cst_39 {dimension_numbers = #tpu.dot_dimension_numbers<[1], [0], [0], [1], [0, 0, 1, 1], [], []>} : vector<324x8xbf16>, vector<8x16xbf16>, vector<324x16xf32> -> vector<324x16xf32>
    %48 = arith.addf %42, %47 : vector<324x16xf32>
    %c0_40 = arith.constant 0 : index
    %c51 = arith.constant 51 : index
    %c0_41 = arith.constant 0 : index
    %49 = vector.load %arg1[%c0_40, %c51, %c0_41] : memref<1x388x8xbf16, #tpu.memory_space<vmem>>, vector<1x324x8xbf16>
    %50 = vector.shape_cast %49 : vector<1x324x8xbf16> to vector<324x8xbf16>
    %c8 = arith.constant 8 : index
    %c0_42 = arith.constant 0 : index
    %c0_43 = arith.constant 0 : index
    %51 = vector.load %arg3[%c8, %c0_42, %c0_43] : memref<9x8x16xbf16, #tpu.memory_space<vmem>>, vector<1x8x16xbf16>
    %52 = vector.shape_cast %51 : vector<1x8x16xbf16> to vector<8x16xbf16>
    %cst_44 = arith.constant dense<0.000000e+00> : vector<324x16xf32>
    %53 = tpu.matmul %50, %52, %cst_44 {dimension_numbers = #tpu.dot_dimension_numbers<[1], [0], [0], [1], [0, 0, 1, 1], [], []>} : vector<324x8xbf16>, vector<8x16xbf16>, vector<324x16xf32> -> vector<324x16xf32>
    %54 = arith.addf %48, %53 : vector<324x16xf32>
    %c0_45 = arith.constant 0 : index
    %c0_46 = arith.constant 0 : index
    %55 = vector.load %arg4[%c0_45, %c0_46] : memref<1x16xf32, #tpu.memory_space<vmem>>, vector<1x16xf32>
    %56 = vector.broadcast %55 : vector<1x16xf32> to vector<324x16xf32>
    %57 = arith.addf %54, %56 : vector<324x16xf32>
    %cst_47 = arith.constant 0.000000e+00 : f32
    %58 = vector.broadcast %cst_47 : f32 to vector<324x16xf32>
    %59 = arith.maximumf %57, %58 : vector<324x16xf32>
    %c0_48 = arith.constant 0 : index
    %c0_49 = arith.constant 0 : index
    %60 = vector.load %arg2[%c0_48, %c0_49] : memref<324x1xf32, #tpu.memory_space<vmem>>, vector<324x1xf32>
    %61 = vector.broadcast %60 : vector<324x1xf32> to vector<324x16xf32>
    %62 = arith.mulf %59, %61 : vector<324x16xf32>
    %cst_50 = arith.constant 0.000000e+00 : bf16
    %63 = vector.broadcast %cst_50 : bf16 to vector<32x16xbf16>
    %c0_51 = arith.constant 0 : index
    %c0_52 = arith.constant 0 : index
    %64 = vector.load %arg8[%c0_51, %c0_52] : memref<388x16xbf16, #tpu.memory_space<vmem>>, vector<32x16xbf16>
    tpu.vector_store %arg8[%c0_51, %c0_52], %63 {strides = array<i32>} : memref<388x16xbf16, #tpu.memory_space<vmem>>, vector<32x16xbf16>,
    %cst_53 = arith.constant 0.000000e+00 : bf16
    %65 = vector.broadcast %cst_53 : bf16 to vector<32x16xbf16>
    %c356 = arith.constant 356 : index
    %c0_54 = arith.constant 0 : index
    %66 = vector.load %arg8[%c356, %c0_54] : memref<388x16xbf16, #tpu.memory_space<vmem>>, vector<32x16xbf16>
    tpu.vector_store %arg8[%c356, %c0_54], %65 {strides = array<i32>} : memref<388x16xbf16, #tpu.memory_space<vmem>>, vector<32x16xbf16>,
    %67 = arith.truncf %62 : vector<324x16xf32> to vector<324x16xbf16>
    %c32_55 = arith.constant 32 : index
    %c0_56 = arith.constant 0 : index
    %68 = vector.load %arg8[%c32_55, %c0_56] : memref<388x16xbf16, #tpu.memory_space<vmem>>, vector<324x16xbf16>
    tpu.vector_store %arg8[%c32_55, %c0_56], %67 {strides = array<i32>} : memref<388x16xbf16, #tpu.memory_space<vmem>>, vector<324x16xbf16>,
    %cst_57 = arith.constant 0.000000e+00 : f32
    %69 = vector.broadcast %cst_57 : f32 to vector<324x16xf32>
    %c13_58 = arith.constant 13 : index
    %c0_59 = arith.constant 0 : index
    %70 = vector.load %arg8[%c13_58, %c0_59] : memref<388x16xbf16, #tpu.memory_space<vmem>>, vector<324x16xbf16>
    %c0_60 = arith.constant 0 : index
    %c0_61 = arith.constant 0 : index
    %c0_62 = arith.constant 0 : index
    %71 = vector.load %arg5[%c0_60, %c0_61, %c0_62] : memref<9x16x16xbf16, #tpu.memory_space<vmem>>, vector<1x16x16xbf16>
    %72 = vector.shape_cast %71 : vector<1x16x16xbf16> to vector<16x16xbf16>
    %cst_63 = arith.constant dense<0.000000e+00> : vector<324x16xf32>
    %73 = tpu.matmul %70, %72, %cst_63 {dimension_numbers = #tpu.dot_dimension_numbers<[1], [0], [0], [1], [0, 0, 1, 1], [], []>} : vector<324x16xbf16>, vector<16x16xbf16>, vector<324x16xf32> -> vector<324x16xf32>
    %74 = arith.addf %69, %73 : vector<324x16xf32>
    %c14_64 = arith.constant 14 : index
    %c0_65 = arith.constant 0 : index
    %75 = vector.load %arg8[%c14_64, %c0_65] : memref<388x16xbf16, #tpu.memory_space<vmem>>, vector<324x16xbf16>
    %c1_66 = arith.constant 1 : index
    %c0_67 = arith.constant 0 : index
    %c0_68 = arith.constant 0 : index
    %76 = vector.load %arg5[%c1_66, %c0_67, %c0_68] : memref<9x16x16xbf16, #tpu.memory_space<vmem>>, vector<1x16x16xbf16>
    %77 = vector.shape_cast %76 : vector<1x16x16xbf16> to vector<16x16xbf16>
    %cst_69 = arith.constant dense<0.000000e+00> : vector<324x16xf32>
    %78 = tpu.matmul %75, %77, %cst_69 {dimension_numbers = #tpu.dot_dimension_numbers<[1], [0], [0], [1], [0, 0, 1, 1], [], []>} : vector<324x16xbf16>, vector<16x16xbf16>, vector<324x16xf32> -> vector<324x16xf32>
    %79 = arith.addf %74, %78 : vector<324x16xf32>
    %c15_70 = arith.constant 15 : index
    %c0_71 = arith.constant 0 : index
    %80 = vector.load %arg8[%c15_70, %c0_71] : memref<388x16xbf16, #tpu.memory_space<vmem>>, vector<324x16xbf16>
    %c2_72 = arith.constant 2 : index
    %c0_73 = arith.constant 0 : index
    %c0_74 = arith.constant 0 : index
    %81 = vector.load %arg5[%c2_72, %c0_73, %c0_74] : memref<9x16x16xbf16, #tpu.memory_space<vmem>>, vector<1x16x16xbf16>
    %82 = vector.shape_cast %81 : vector<1x16x16xbf16> to vector<16x16xbf16>
    %cst_75 = arith.constant dense<0.000000e+00> : vector<324x16xf32>
    %83 = tpu.matmul %80, %82, %cst_75 {dimension_numbers = #tpu.dot_dimension_numbers<[1], [0], [0], [1], [0, 0, 1, 1], [], []>} : vector<324x16xbf16>, vector<16x16xbf16>, vector<324x16xf32> -> vector<324x16xf32>
    %84 = arith.addf %79, %83 : vector<324x16xf32>
    %c31_76 = arith.constant 31 : index
    %c0_77 = arith.constant 0 : index
    %85 = vector.load %arg8[%c31_76, %c0_77] : memref<388x16xbf16, #tpu.memory_space<vmem>>, vector<324x16xbf16>
    %c3_78 = arith.constant 3 : index
    %c0_79 = arith.constant 0 : index
    %c0_80 = arith.constant 0 : index
    %86 = vector.load %arg5[%c3_78, %c0_79, %c0_80] : memref<9x16x16xbf16, #tpu.memory_space<vmem>>, vector<1x16x16xbf16>
    %87 = vector.shape_cast %86 : vector<1x16x16xbf16> to vector<16x16xbf16>
    %cst_81 = arith.constant dense<0.000000e+00> : vector<324x16xf32>
    %88 = tpu.matmul %85, %87, %cst_81 {dimension_numbers = #tpu.dot_dimension_numbers<[1], [0], [0], [1], [0, 0, 1, 1], [], []>} : vector<324x16xbf16>, vector<16x16xbf16>, vector<324x16xf32> -> vector<324x16xf32>
    %89 = arith.addf %84, %88 : vector<324x16xf32>
    %c32_82 = arith.constant 32 : index
    %c0_83 = arith.constant 0 : index
    %90 = vector.load %arg8[%c32_82, %c0_83] : memref<388x16xbf16, #tpu.memory_space<vmem>>, vector<324x16xbf16>
    %c4_84 = arith.constant 4 : index
    %c0_85 = arith.constant 0 : index
    %c0_86 = arith.constant 0 : index
    %91 = vector.load %arg5[%c4_84, %c0_85, %c0_86] : memref<9x16x16xbf16, #tpu.memory_space<vmem>>, vector<1x16x16xbf16>
    %92 = vector.shape_cast %91 : vector<1x16x16xbf16> to vector<16x16xbf16>
    %cst_87 = arith.constant dense<0.000000e+00> : vector<324x16xf32>
    %93 = tpu.matmul %90, %92, %cst_87 {dimension_numbers = #tpu.dot_dimension_numbers<[1], [0], [0], [1], [0, 0, 1, 1], [], []>} : vector<324x16xbf16>, vector<16x16xbf16>, vector<324x16xf32> -> vector<324x16xf32>
    %94 = arith.addf %89, %93 : vector<324x16xf32>
    %c33_88 = arith.constant 33 : index
    %c0_89 = arith.constant 0 : index
    %95 = vector.load %arg8[%c33_88, %c0_89] : memref<388x16xbf16, #tpu.memory_space<vmem>>, vector<324x16xbf16>
    %c5_90 = arith.constant 5 : index
    %c0_91 = arith.constant 0 : index
    %c0_92 = arith.constant 0 : index
    %96 = vector.load %arg5[%c5_90, %c0_91, %c0_92] : memref<9x16x16xbf16, #tpu.memory_space<vmem>>, vector<1x16x16xbf16>
    %97 = vector.shape_cast %96 : vector<1x16x16xbf16> to vector<16x16xbf16>
    %cst_93 = arith.constant dense<0.000000e+00> : vector<324x16xf32>
    %98 = tpu.matmul %95, %97, %cst_93 {dimension_numbers = #tpu.dot_dimension_numbers<[1], [0], [0], [1], [0, 0, 1, 1], [], []>} : vector<324x16xbf16>, vector<16x16xbf16>, vector<324x16xf32> -> vector<324x16xf32>
    %99 = arith.addf %94, %98 : vector<324x16xf32>
    %c49_94 = arith.constant 49 : index
    %c0_95 = arith.constant 0 : index
    %100 = vector.load %arg8[%c49_94, %c0_95] : memref<388x16xbf16, #tpu.memory_space<vmem>>, vector<324x16xbf16>
    %c6_96 = arith.constant 6 : index
    %c0_97 = arith.constant 0 : index
    %c0_98 = arith.constant 0 : index
    %101 = vector.load %arg5[%c6_96, %c0_97, %c0_98] : memref<9x16x16xbf16, #tpu.memory_space<vmem>>, vector<1x16x16xbf16>
    %102 = vector.shape_cast %101 : vector<1x16x16xbf16> to vector<16x16xbf16>
    %cst_99 = arith.constant dense<0.000000e+00> : vector<324x16xf32>
    %103 = tpu.matmul %100, %102, %cst_99 {dimension_numbers = #tpu.dot_dimension_numbers<[1], [0], [0], [1], [0, 0, 1, 1], [], []>} : vector<324x16xbf16>, vector<16x16xbf16>, vector<324x16xf32> -> vector<324x16xf32>
    %104 = arith.addf %99, %103 : vector<324x16xf32>
    %c50_100 = arith.constant 50 : index
    %c0_101 = arith.constant 0 : index
    %105 = vector.load %arg8[%c50_100, %c0_101] : memref<388x16xbf16, #tpu.memory_space<vmem>>, vector<324x16xbf16>
    %c7_102 = arith.constant 7 : index
    %c0_103 = arith.constant 0 : index
    %c0_104 = arith.constant 0 : index
    %106 = vector.load %arg5[%c7_102, %c0_103, %c0_104] : memref<9x16x16xbf16, #tpu.memory_space<vmem>>, vector<1x16x16xbf16>
    %107 = vector.shape_cast %106 : vector<1x16x16xbf16> to vector<16x16xbf16>
    %cst_105 = arith.constant dense<0.000000e+00> : vector<324x16xf32>
    %108 = tpu.matmul %105, %107, %cst_105 {dimension_numbers = #tpu.dot_dimension_numbers<[1], [0], [0], [1], [0, 0, 1, 1], [], []>} : vector<324x16xbf16>, vector<16x16xbf16>, vector<324x16xf32> -> vector<324x16xf32>
    %109 = arith.addf %104, %108 : vector<324x16xf32>
    %c51_106 = arith.constant 51 : index
    %c0_107 = arith.constant 0 : index
    %110 = vector.load %arg8[%c51_106, %c0_107] : memref<388x16xbf16, #tpu.memory_space<vmem>>, vector<324x16xbf16>
    %c8_108 = arith.constant 8 : index
    %c0_109 = arith.constant 0 : index
    %c0_110 = arith.constant 0 : index
    %111 = vector.load %arg5[%c8_108, %c0_109, %c0_110] : memref<9x16x16xbf16, #tpu.memory_space<vmem>>, vector<1x16x16xbf16>
    %112 = vector.shape_cast %111 : vector<1x16x16xbf16> to vector<16x16xbf16>
    %cst_111 = arith.constant dense<0.000000e+00> : vector<324x16xf32>
    %113 = tpu.matmul %110, %112, %cst_111 {dimension_numbers = #tpu.dot_dimension_numbers<[1], [0], [0], [1], [0, 0, 1, 1], [], []>} : vector<324x16xbf16>, vector<16x16xbf16>, vector<324x16xf32> -> vector<324x16xf32>
    %114 = arith.addf %109, %113 : vector<324x16xf32>
    %c0_112 = arith.constant 0 : index
    %c0_113 = arith.constant 0 : index
    %115 = vector.load %arg6[%c0_112, %c0_113] : memref<1x16xf32, #tpu.memory_space<vmem>>, vector<1x16xf32>
    %116 = vector.broadcast %115 : vector<1x16xf32> to vector<324x16xf32>
    %117 = arith.addf %114, %116 : vector<324x16xf32>
    %cst_114 = arith.constant 0.000000e+00 : f32
    %118 = vector.broadcast %cst_114 : f32 to vector<324x16xf32>
    %119 = arith.maximumf %117, %118 : vector<324x16xf32>
    %c0_115 = arith.constant 0 : index
    %c0_116 = arith.constant 0 : index
    %c0_117 = arith.constant 0 : index
    %120 = vector.load %arg7[%c0_115, %c0_116, %c0_117] : memref<1x324x16xf32, #tpu.memory_space<vmem>>, vector<1x324x16xf32>
    %121 = vector.shape_cast %120 : vector<1x324x16xf32> to vector<324x16xf32>
    %122 = vector.shape_cast %119 : vector<324x16xf32> to vector<1x324x16xf32>
    tpu.vector_store %arg7[%c0_115, %c0_116, %c0_117], %122 {strides = array<i32>} : memref<1x324x16xf32, #tpu.memory_space<vmem>>, vector<1x324x16xf32>,
    return
  }
  func.func @transform_0(%arg0: i32) -> (i32, i32, i32) {
    %c0_i32 = arith.constant 0 : i32
    %c0_i32_0 = arith.constant 0 : i32
    %c0_i32_1 = arith.constant 0 : i32
    return %arg0, %c0_i32, %c0_i32_0 : i32, i32, i32
  }
  func.func @transform_1(%arg0: i32) -> (i32, i32) {
    %c0_i32 = arith.constant 0 : i32
    %c0_i32_0 = arith.constant 0 : i32
    %c0_i32_1 = arith.constant 0 : i32
    return %c0_i32, %c0_i32_0 : i32, i32
  }
  func.func @transform_2(%arg0: i32) -> (i32, i32, i32) {
    %c0_i32 = arith.constant 0 : i32
    %c0_i32_0 = arith.constant 0 : i32
    %c0_i32_1 = arith.constant 0 : i32
    %c0_i32_2 = arith.constant 0 : i32
    return %c0_i32, %c0_i32_0, %c0_i32_1 : i32, i32, i32
  }
  func.func @transform_3(%arg0: i32) -> (i32, i32) {
    %c0_i32 = arith.constant 0 : i32
    %c0_i32_0 = arith.constant 0 : i32
    %c0_i32_1 = arith.constant 0 : i32
    return %c0_i32, %c0_i32_0 : i32, i32
  }
  func.func @transform_4(%arg0: i32) -> (i32, i32, i32) {
    %c0_i32 = arith.constant 0 : i32
    %c0_i32_0 = arith.constant 0 : i32
    %c0_i32_1 = arith.constant 0 : i32
    %c0_i32_2 = arith.constant 0 : i32
    return %c0_i32, %c0_i32_0, %c0_i32_1 : i32, i32, i32
  }
  func.func @transform_5(%arg0: i32) -> (i32, i32) {
    %c0_i32 = arith.constant 0 : i32
    %c0_i32_0 = arith.constant 0 : i32
    %c0_i32_1 = arith.constant 0 : i32
    return %c0_i32, %c0_i32_0 : i32, i32
  }
  func.func @transform_6(%arg0: i32) -> (i32, i32, i32) {
    %c0_i32 = arith.constant 0 : i32
    %c0_i32_0 = arith.constant 0 : i32
    %c0_i32_1 = arith.constant 0 : i32
    return %arg0, %c0_i32, %c0_i32_0 : i32, i32, i32
  }
}

</mosaic_0001>

<llo_original>
// kernel: up0_forward.2
$region0: #{up0_forward.2}
  #allocation0 [shape = 'u32[]', space=smem, size = 0x4, offset = 0x4, fixed_abs, tag = 'smem constant byte address 0x4 - core index']
  #allocation1 [shape = 'u32[144,128]{1,0:T(1,128)}', space=vmem, size = 0x12000, scoped, tag = 'internal scratch']
  %s0 = inlined_call_operand.vmem [shape: f32[2,64,8], index: 0, kind: input, shape index: {}]
  %s1 = inlined_call_operand.vmem [shape: bf16[8,32], index: 1, kind: input, shape index: {}]
  %s2 = inlined_call_operand.vmem [shape: f32[1,32], index: 2, kind: input, shape index: {}]
  %s3 = inlined_call_operand.vmem [shape: f32[2,64,32], index: 3, kind: output, shape index: {}]
  %s4 = sld [smem:[#allocation0]]
  $region45: #{up0_forward.2} parent=0
    _
  %s6 = ssub.s32 1, %s4
  %s7 = scalar_select 0, %s6, %s4
  loop: start=0, step=1, limit=4
  $region2: #{up0_forward.2} parent=0 // loop_pre_header
    _
  $region3: #{up0_forward.2} parent=0 // loop_header
    %s9 = sphi 0, %s13
    %p10 = scmp.ge.s32.totalorder %s9, 4
    %s19 = sphi 0, %s21
    %s22 = sphi 0, %s19
    %s23 = sphi 0, %s22
    %s39 = sphi 0, %s23
    %s43 = sphi 0, %s43
    %s45 = sphi 0, %s43
    %s46 = sphi 0, %s45
    %s60 = sphi 0, %s46
    %s64 = sphi 0, %s64
    %s66 = sphi 0, %s64
    %s67 = sphi 0, %s66
    %s81 = sphi 0, %s67
    %s87 = sphi 0, %s89
    %s90 = sphi 0, %s87
    %s91 = sphi 0, %s90
    %s107 = sphi 0, %s91
  $region4: #{up0_forward.2} parent=0 // loop_header_branch
    %12 = sbr.rel (%p10) target = $region8
  $region5: #{up0_forward.2} parent=0 // loop_body
    %s14 = ssub.s32 %s9, 1
    %s15 = ssub.s32 %s9, 2
    %s16 = sadd.s32 %s9, 1
    %s17 = ssub.s32 %s9, %s16
    %p18 = scmp.eq.s32.totalorder %s17, 0
    %s20 = sadd.s32 %s19, 1
    %s21 = scalar_select %p18, %s19, %s20
    %p24 = pneg %p18
    %p25 = scmp.eq.s32.totalorder %s9, 1
    %p26 = por %p24, %p25
    %p27 = scmp.ne.s32.totalorder %s19, %s22
    %p28 = scmp.eq.s32.totalorder %s9, 0
    %p29 = por %p27, %p28
    %p30 = scmp.ne.s32.totalorder %s19, %s22
    %p31 = scmp.eq.s32.totalorder %s14, 1
    %p32 = por %p30, %p31
    %p33 = scmp.ne.s32.totalorder %s22, %s23
    %p34 = scmp.eq.s32.totalorder %s14, 0
    %p35 = por %p33, %p34
    %p36 = scmp.ne.s32.totalorder %s22, %s23
    %p37 = scmp.eq.s32.totalorder %s15, 1
    %p38 = por %p36, %p37
    %p40 = scmp.ne.s32.totalorder %s23, %s39
    %p41 = scmp.eq.s32.totalorder %s15, 0
    %p42 = por %p40, %p41
    %s44 = sadd.s32 %s43, 1
    %p47 = scmp.eq.s32.totalorder %s9, 1
    %p48 = scmp.ne.s32.totalorder %s43, %s45
    %p49 = scmp.eq.s32.totalorder %s9, 0
    %p50 = por %p48, %p49
    %p51 = scmp.ne.s32.totalorder %s43, %s45
    %p52 = scmp.eq.s32.totalorder %s14, 1
    %p53 = por %p51, %p52
    %p54 = scmp.ne.s32.totalorder %s45, %s46
    %p55 = scmp.eq.s32.totalorder %s14, 0
    %p56 = por %p54, %p55
    %p57 = scmp.ne.s32.totalorder %s45, %s46
    %p58 = scmp.eq.s32.totalorder %s15, 1
    %p59 = por %p57, %p58
    %p61 = scmp.ne.s32.totalorder %s46, %s60
    %p62 = scmp.eq.s32.totalorder %s15, 0
    %p63 = por %p61, %p62
    %s65 = sadd.s32 %s64, 1
    %p68 = scmp.eq.s32.totalorder %s9, 1
    %p69 = scmp.ne.s32.totalorder %s64, %s66
    %p70 = scmp.eq.s32.totalorder %s9, 0
    %p71 = por %p69, %p70
    %p72 = scmp.ne.s32.totalorder %s64, %s66
    %p73 = scmp.eq.s32.totalorder %s14, 1
    %p74 = por %p72, %p73
    %p75 = scmp.ne.s32.totalorder %s66, %s67
    %p76 = scmp.eq.s32.totalorder %s14, 0
    %p77 = por %p75, %p76
    %p78 = scmp.ne.s32.totalorder %s66, %s67
    %p79 = scmp.eq.s32.totalorder %s15, 1
    %p80 = por %p78, %p79
    %p82 = scmp.ne.s32.totalorder %s67, %s81
    %p83 = scmp.eq.s32.totalorder %s15, 0
    %p84 = por %p82, %p83
    %s85 = ssub.s32 %s9, %s16
    %p86 = scmp.eq.s32.totalorder %s85, 0
    %s88 = sadd.s32 %s87, 1
    %s89 = scalar_select %p86, %s87, %s88
    %p92 = pneg %p86
    %p93 = scmp.eq.s32.totalorder %s9, 1
    %p94 = por %p92, %p93
    %p95 = scmp.ne.s32.totalorder %s87, %s90
    %p96 = scmp.eq.s32.totalorder %s9, 0
    %p97 = por %p95, %p96
    %p98 = scmp.ne.s32.totalorder %s87, %s90
    %p99 = scmp.eq.s32.totalorder %s14, 1
    %p100 = por %p98, %p99
    %p101 = scmp.ne.s32.totalorder %s90, %s91
    %p102 = scmp.eq.s32.totalorder %s14, 0
    %p103 = por %p101, %p102
    %p104 = scmp.ne.s32.totalorder %s90, %s91
    %p105 = scmp.eq.s32.totalorder %s15, 1
    %p106 = por %p104, %p105
    %p108 = scmp.ne.s32.totalorder %s91, %s107
    %p109 = scmp.eq.s32.totalorder %s15, 0
    %p110 = por %p108, %p109
    %p111 = scmp.le.s32.totalorder 1, %s9
    %p112 = scmp.lt.s32.totalorder %s9, 3
    %p113 = pnand %p111, %p112
    %p114 = pneg %p113
    // Predicated region
    $region9: #{up0_forward.2} parent=5 // pred_check
      _
    $region10: #{up0_forward.2} parent=5 // pred_check_branch
      %116 = sbr.rel (%p113) target = $region12
    $region11: #{up0_forward.2} parent=5 // pred_region
      %s117 = ssub.s32 %s9, 1
      // Predicated region
      $region13: #{up0_forward.2} parent=11 // pred_check
        %p118 = pneg %p56
      $region14: #{up0_forward.2} parent=11 // pred_check_branch
        %120 = sbr.rel (%p118) target = $region16
      $region15: #{up0_forward.2} parent=11 // pred_region
        _
      $region16: #{up0_forward.2} parent=11 // pred_fallthru
        _
      // Predicated region
      $region17: #{up0_forward.2} parent=11 // pred_check
        %p121 = pneg %p77
      $region18: #{up0_forward.2} parent=11 // pred_check_branch
        %123 = sbr.rel (%p121) target = $region20
      $region19: #{up0_forward.2} parent=11 // pred_region
        _
      $region20: #{up0_forward.2} parent=11 // pred_fallthru
        _
    $region12: #{up0_forward.2} parent=5 // pred_fallthru
      _
    %p124 = scmp.lt.s32.totalorder %s9, 2
    // Predicated region
    $region21: #{up0_forward.2} parent=5 // pred_check
      %p125 = pneg %p124
    $region22: #{up0_forward.2} parent=5 // pred_check_branch
      %127 = sbr.rel (%p125) target = $region24
    $region23: #{up0_forward.2} parent=5 // pred_region
      // Predicated region
      $region25: #{up0_forward.2} parent=23 // pred_check
        %p128 = pneg %p29
      $region26: #{up0_forward.2} parent=23 // pred_check_branch
        %130 = sbr.rel (%p128) target = $region28
      $region27: #{up0_forward.2} parent=23 // pred_region
        %p131 = scmp.lt.s32.totalorder %s9, 1
        %s132 = scalar_select %p131, %s9, 1
        %s133 = smul.addr %s132, 8
        %s134 = smul.addr %s133, 8
        %s135 = scalar_lea.vmem %s0, %s134
      $region28: #{up0_forward.2} parent=23 // pred_fallthru
        _
    $region24: #{up0_forward.2} parent=5 // pred_fallthru
      _
    %p136 = scmp.le.s32.totalorder 1, %s9
    %p137 = scmp.lt.s32.totalorder %s9, 3
    %p138 = pnand %p136, %p137
    %p139 = pneg %p138
    // Predicated region
    $region29: #{up0_forward.2} parent=5 // pred_check
      _
    $region30: #{up0_forward.2} parent=5 // pred_check_branch
      %141 = sbr.rel (%p138) target = $region32
    $region31: #{up0_forward.2} parent=5 // pred_region
      %s142 = ssub.s32 %s9, 1
      %p143 = scmp.lt.s32.totalorder %s14, 1
      %s144 = scalar_select %p143, %s14, 1
      %s145 = smul.addr %s144, 8
      %s146 = smul.addr %s145, 8
      %s147 = scalar_lea.vmem %s0, %s146
      %p148 = pneg %p35
      %p149 = pneg %p32
      %p150 = pneg %p56
      %p151 = pneg %p53
      %p152 = pneg %p77
      %p153 = pneg %p74
      %p154 = pneg %p103
      %p155 = pneg %p100
      %p156 = scmp.lt.s32.totalorder %s14, 1
      %s157 = scalar_select %p156, %s14, 1
      %s158 = smul.addr %s157, 8
      %s159 = smul.addr %s158, 8
      %s160 = scalar_lea.vmem %s3, %s159
      %p161 = scmp.lt.s32.totalorder %s14, 1
      %s162 = scalar_select %p161, %s14, 1
      %s163 = smul.addr %s162, 8
      %s164 = smul.addr %s163, 8
      %s165 = scalar_lea.vmem %s0, %s164
      %p166 = scmp.lt.s32.totalorder %s14, 1
      %s167 = scalar_select %p166, %s14, 1
      %s168 = smul.addr %s167, 8
      %s169 = smul.addr %s168, 8
      %s170 = scalar_lea.vmem %s3, %s169
      %v172 = vld [vmem:[%s165] sm:$0xff]
      %v173 = vld [vmem:[%s165 + $0x8] sm:$0xff]
      %v174 = vld [vmem:[%s165 + $0x10] sm:$0xff]
      %v175 = vld [vmem:[%s165 + $0x18] sm:$0xff]
      %v176 = vld [vmem:[%s165 + $0x20] sm:$0xff]
      %v177 = vld [vmem:[%s165 + $0x28] sm:$0xff]
      %v178 = vld [vmem:[%s165 + $0x30] sm:$0xff]
      %v179 = vld [vmem:[%s165 + $0x38] sm:$0xff]
      %v180 = vpack.c.bf16 %v173, %v172
      %v181 = vpack.c.bf16 %v175, %v174
      %v182 = vpack.c.bf16 %v177, %v176
      %v183 = vpack.c.bf16 %v179, %v178
      %v184 = vld [vmem:[%s1] sm:$0xf]
      %v185 = vld [vmem:[%s2] sm:$0x1]
      %v187 = vlaneseq
      %v188 = vshrl.u32 %v187, 7
      %v189 = vsub.s32 0, %v188
      %v190 = vrot.slane %v185, %v189
      %vm192 = vcmask 64512
      %v194 = vsel %vm192, %v180, 0
      %v197 = vsel %vm192, %v181, 0
      %v200 = vsel %vm192, %v182, 0
      %v203 = vsel %vm192, %v183, 0
      %vm205 = vcmask 1043456
      %v207 = vsel %vm205, %v184, 0
      %209 = vmatprep.subr.bf16.mxu0 0
      %210 = vmatpush1.bf16.msra.mxu0 %v207
      %211 = vmatprep.subr.bf16.mxu0 0
      %212 = vmatpush1.bf16.msra.mxu0 0
      %213 = vmatprep.subr.bf16.mxu0 0
      %214 = vmatpush1.bf16.msra.mxu0 0
      %215 = vmatprep.subr.bf16.mxu0 0
      %216 = vmatpush1.bf16.msra.mxu0 0
      %217 = vmatprep.subr.bf16.mxu0 0
      %218 = vmatpush1.bf16.msra.mxu0 0
      %219 = vmatprep.subr.bf16.mxu0 0
      %220 = vmatpush1.bf16.msra.mxu0 0
      %221 = vmatprep.subr.bf16.mxu0 0
      %222 = vmatpush1.bf16.msra.mxu0 0
      %223 = vmatprep.subr.bf16.mxu0 0
      %224 = vmatpush1.bf16.msra.mxu0 0
      %225 = vmatprep.subr.bf16.mxu0 0
      %226 = vmatpush1.bf16.msra.mxu0 0
      %227 = vmatprep.subr.bf16.mxu0 0
      %228 = vmatpush1.bf16.msra.mxu0 0
      %229 = vmatprep.subr.bf16.mxu0 0
      %230 = vmatpush1.bf16.msra.mxu0 0
      %231 = vmatprep.subr.bf16.mxu0 0
      %232 = vmatpush1.bf16.msra.mxu0 0
      %233 = vmatprep.subr.bf16.mxu0 0
      %234 = vmatpush1.bf16.msra.mxu0 0
      %235 = vmatprep.subr.bf16.mxu0 0
      %236 = vmatpush1.bf16.msra.mxu0 0
      %237 = vmatprep.subr.bf16.mxu0 0
      %238 = vmatpush1.bf16.msra.mxu0 0
      %239 = vmatprep.subr.bf16.mxu0 0
      %240 = vmatpush1.bf16.msra.mxu0 0
      %241 = vmatprep.mubr.bf16.mxu0 0
      %242 = vmatmul.mubr.bf16.gmra.mrb[0].mxu0 %v194
      %v243 = vpop.f32.mrb[0].mxu0
      %v244 = vadd.f32 %v190, %v243
      %v245 = vpop.f32.mrb[0].mxu0
      %v246 = vpop.f32.mrb[0].mxu0
      %v247 = vadd.f32 %v190, %v246
      %v248 = vpop.f32.mrb[0].mxu0
      %249 = vmatprep.mubr.bf16.mxu0 0
      %250 = vmatmul.mubr.bf16.gmra.mrb[0].mxu0 %v197
      %v251 = vpop.f32.mrb[0].mxu0
      %v252 = vadd.f32 %v190, %v251
      %v253 = vpop.f32.mrb[0].mxu0
      %v254 = vpop.f32.mrb[0].mxu0
      %v255 = vadd.f32 %v190, %v254
      %v256 = vpop.f32.mrb[0].mxu0
      %257 = vmatprep.mubr.bf16.mxu0 0
      %258 = vmatmul.mubr.bf16.gmra.mrb[0].mxu0 %v200
      %v259 = vpop.f32.mrb[0].mxu0
      %v260 = vadd.f32 %v190, %v259
      %v261 = vpop.f32.mrb[0].mxu0
      %v262 = vpop.f32.mrb[0].mxu0
      %v263 = vadd.f32 %v190, %v262
      %v264 = vpop.f32.mrb[0].mxu0
      %265 = vmatprep.mubr.bf16.mxu0 0
      %266 = vmatmul.mubr.bf16.gmra.mrb[0].mxu0 %v203
      %v267 = vpop.f32.mrb[0].mxu0
      %v268 = vadd.f32 %v190, %v267
      %v269 = vpop.f32.mrb[0].mxu0
      %v270 = vpop.f32.mrb[0].mxu0
      %v271 = vadd.f32 %v190, %v270
      %v272 = vpop.f32.mrb[0].mxu0
      %273 = vdwg.mxu0
      %vm274 = vcmask 261120
      %275 = vst.msk [vmem:[%s170] sm:$0xff] %vm274, %v244
      %276 = vst.msk [vmem:[%s170 + $0x8] sm:$0xff] %vm274, %v247
      %277 = vst.msk [vmem:[%s170 + $0x10] sm:$0xff] %vm274, %v252
      %278 = vst.msk [vmem:[%s170 + $0x18] sm:$0xff] %vm274, %v255
      %279 = vst.msk [vmem:[%s170 + $0x20] sm:$0xff] %vm274, %v260
      %280 = vst.msk [vmem:[%s170 + $0x28] sm:$0xff] %vm274, %v263
      %281 = vst.msk [vmem:[%s170 + $0x30] sm:$0xff] %vm274, %v268
      %282 = vst.msk [vmem:[%s170 + $0x38] sm:$0xff] %vm274, %v271
      %p283 = scmp.lt.s32.totalorder %s14, 1
      %s284 = scalar_select %p283, %s14, 1
      %s285 = smul.addr %s284, 8
      %s286 = smul.addr %s285, 8
      %s287 = scalar_lea.vmem %s3, %s286
      // Predicated region
      $region33: #{up0_forward.2} parent=31 // pred_check
        %p288 = pneg %p100
      $region34: #{up0_forward.2} parent=31 // pred_check_branch
        %290 = sbr.rel (%p288) target = $region36
      $region35: #{up0_forward.2} parent=31 // pred_region
        _
      $region36: #{up0_forward.2} parent=31 // pred_fallthru
        _
    $region32: #{up0_forward.2} parent=5 // pred_fallthru
      _
    %p291 = scmp.le.s32.totalorder 2, %s9
    // Predicated region
    $region37: #{up0_forward.2} parent=5 // pred_check
      %p292 = pneg %p291
    $region38: #{up0_forward.2} parent=5 // pred_check_branch
      %294 = sbr.rel (%p292) target = $region40
    $region39: #{up0_forward.2} parent=5 // pred_region
      %s295 = ssub.s32 %s9, 2
      // Predicated region
      $region41: #{up0_forward.2} parent=39 // pred_check
        %p296 = pneg %p106
      $region42: #{up0_forward.2} parent=39 // pred_check_branch
        %298 = sbr.rel (%p296) target = $region44
      $region43: #{up0_forward.2} parent=39 // pred_region
        %p299 = scmp.lt.s32.totalorder %s15, 1
        %s300 = scalar_select %p299, %s15, 1
        %s301 = smul.addr %s300, 8
        %s302 = smul.addr %s301, 8
        %s303 = scalar_lea.vmem %s3, %s302
      $region44: #{up0_forward.2} parent=39 // pred_fallthru
        _
    $region40: #{up0_forward.2} parent=5 // pred_fallthru
      _
  $region6: #{up0_forward.2} parent=0 // loop_footer
    %s13 = sadd.s32 1, %s9
  $region7: #{up0_forward.2} parent=0 // loop_footer_branch
    %8 = sbr.rel target = $region3
  $region8: #{up0_forward.2} parent=0 // loop_exit
    _

// kernel: up0_forward.3
$region0: #{up0_forward.3}
  #allocation0 [shape = 'u32[]', space=smem, size = 0x4, offset = 0x4, fixed_abs, tag = 'smem constant byte address 0x4 - core index']
  #allocation1 [shape = 'u32[144,128]{1,0:T(1,128)}', space=vmem, size = 0x12000, scoped, tag = 'internal scratch']
  #allocation2 [shape = 'bf16[388,16]{1,0:T(8,128)(2,1)}', space=vmem, size = 0x18800, scoped, tag = 'scratch operand']
  %s0 = inlined_call_operand.vmem [shape: bf16[2,388,8], index: 0, kind: input, shape index: {}]
  %s1 = inlined_call_operand.vmem [shape: f32[324,1], index: 1, kind: input, shape index: {}]
  %s2 = inlined_call_operand.vmem [shape: bf16[9,8,16], index: 2, kind: input, shape index: {}]
  %s3 = inlined_call_operand.vmem [shape: f32[1,16], index: 3, kind: input, shape index: {}]
  %s4 = inlined_call_operand.vmem [shape: bf16[9,16,16], index: 4, kind: input, shape index: {}]
  %s5 = inlined_call_operand.vmem [shape: f32[1,16], index: 5, kind: input, shape index: {}]
  %s6 = inlined_call_operand.vmem [shape: f32[2,324,16], index: 6, kind: output, shape index: {}]
  %s7 = sld [smem:[#allocation0]]
  $region57: #{up0_forward.3} parent=0
    _
  %s9 = ssub.s32 1, %s7
  %s10 = scalar_select 0, %s9, %s7
  loop: start=0, step=1, limit=4
  $region2: #{up0_forward.3} parent=0 // loop_pre_header
    _
  $region3: #{up0_forward.3} parent=0 // loop_header
    %s12 = sphi 0, %s16
    %p13 = scmp.ge.s32.totalorder %s12, 4
    %s22 = sphi 0, %s24
    %s25 = sphi 0, %s22
    %s26 = sphi 0, %s25
    %s42 = sphi 0, %s26
    %s46 = sphi 0, %s46
    %s48 = sphi 0, %s46
    %s49 = sphi 0, %s48
    %s63 = sphi 0, %s49
    %s67 = sphi 0, %s67
    %s69 = sphi 0, %s67
    %s70 = sphi 0, %s69
    %s84 = sphi 0, %s70
    %s88 = sphi 0, %s88
    %s90 = sphi 0, %s88
    %s91 = sphi 0, %s90
    %s105 = sphi 0, %s91
    %s109 = sphi 0, %s109
    %s111 = sphi 0, %s109
    %s112 = sphi 0, %s111
    %s126 = sphi 0, %s112
    %s130 = sphi 0, %s130
    %s132 = sphi 0, %s130
    %s133 = sphi 0, %s132
    %s147 = sphi 0, %s133
    %s153 = sphi 0, %s155
    %s156 = sphi 0, %s153
    %s157 = sphi 0, %s156
    %s173 = sphi 0, %s157
  $region4: #{up0_forward.3} parent=0 // loop_header_branch
    %15 = sbr.rel (%p13) target = $region8
  $region5: #{up0_forward.3} parent=0 // loop_body
    %s17 = ssub.s32 %s12, 1
    %s18 = ssub.s32 %s12, 2
    %s19 = sadd.s32 %s12, 1
    %s20 = ssub.s32 %s12, %s19
    %p21 = scmp.eq.s32.totalorder %s20, 0
    %s23 = sadd.s32 %s22, 1
    %s24 = scalar_select %p21, %s22, %s23
    %p27 = pneg %p21
    %p28 = scmp.eq.s32.totalorder %s12, 1
    %p29 = por %p27, %p28
    %p30 = scmp.ne.s32.totalorder %s22, %s25
    %p31 = scmp.eq.s32.totalorder %s12, 0
    %p32 = por %p30, %p31
    %p33 = scmp.ne.s32.totalorder %s22, %s25
    %p34 = scmp.eq.s32.totalorder %s17, 1
    %p35 = por %p33, %p34
    %p36 = scmp.ne.s32.totalorder %s25, %s26
    %p37 = scmp.eq.s32.totalorder %s17, 0
    %p38 = por %p36, %p37
    %p39 = scmp.ne.s32.totalorder %s25, %s26
    %p40 = scmp.eq.s32.totalorder %s18, 1
    %p41 = por %p39, %p40
    %p43 = scmp.ne.s32.totalorder %s26, %s42
    %p44 = scmp.eq.s32.totalorder %s18, 0
    %p45 = por %p43, %p44
    %s47 = sadd.s32 %s46, 1
    %p50 = scmp.eq.s32.totalorder %s12, 1
    %p51 = scmp.ne.s32.totalorder %s46, %s48
    %p52 = scmp.eq.s32.totalorder %s12, 0
    %p53 = por %p51, %p52
    %p54 = scmp.ne.s32.totalorder %s46, %s48
    %p55 = scmp.eq.s32.totalorder %s17, 1
    %p56 = por %p54, %p55
    %p57 = scmp.ne.s32.totalorder %s48, %s49
    %p58 = scmp.eq.s32.totalorder %s17, 0
    %p59 = por %p57, %p58
    %p60 = scmp.ne.s32.totalorder %s48, %s49
    %p61 = scmp.eq.s32.totalorder %s18, 1
    %p62 = por %p60, %p61
    %p64 = scmp.ne.s32.totalorder %s49, %s63
    %p65 = scmp.eq.s32.totalorder %s18, 0
    %p66 = por %p64, %p65
    %s68 = sadd.s32 %s67, 1
    %p71 = scmp.eq.s32.totalorder %s12, 1
    %p72 = scmp.ne.s32.totalorder %s67, %s69
    %p73 = scmp.eq.s32.totalorder %s12, 0
    %p74 = por %p72, %p73
    %p75 = scmp.ne.s32.totalorder %s67, %s69
    %p76 = scmp.eq.s32.totalorder %s17, 1
    %p77 = por %p75, %p76
    %p78 = scmp.ne.s32.totalorder %s69, %s70
    %p79 = scmp.eq.s32.totalorder %s17, 0
    %p80 = por %p78, %p79
    %p81 = scmp.ne.s32.totalorder %s69, %s70
    %p82 = scmp.eq.s32.totalorder %s18, 1
    %p83 = por %p81, %p82
    %p85 = scmp.ne.s32.totalorder %s70, %s84
    %p86 = scmp.eq.s32.totalorder %s18, 0
    %p87 = por %p85, %p86
    %s89 = sadd.s32 %s88, 1
    %p92 = scmp.eq.s32.totalorder %s12, 1
    %p93 = scmp.ne.s32.totalorder %s88, %s90
    %p94 = scmp.eq.s32.totalorder %s12, 0
    %p95 = por %p93, %p94
    %p96 = scmp.ne.s32.totalorder %s88, %s90
    %p97 = scmp.eq.s32.totalorder %s17, 1
    %p98 = por %p96, %p97
    %p99 = scmp.ne.s32.totalorder %s90, %s91
    %p100 = scmp.eq.s32.totalorder %s17, 0
    %p101 = por %p99, %p100
    %p102 = scmp.ne.s32.totalorder %s90, %s91
    %p103 = scmp.eq.s32.totalorder %s18, 1
    %p104 = por %p102, %p103
    %p106 = scmp.ne.s32.totalorder %s91, %s105
    %p107 = scmp.eq.s32.totalorder %s18, 0
    %p108 = por %p106, %p107
    %s110 = sadd.s32 %s109, 1
    %p113 = scmp.eq.s32.totalorder %s12, 1
    %p114 = scmp.ne.s32.totalorder %s109, %s111
    %p115 = scmp.eq.s32.totalorder %s12, 0
    %p116 = por %p114, %p115
    %p117 = scmp.ne.s32.totalorder %s109, %s111
    %p118 = scmp.eq.s32.totalorder %s17, 1
    %p119 = por %p117, %p118
    %p120 = scmp.ne.s32.totalorder %s111, %s112
    %p121 = scmp.eq.s32.totalorder %s17, 0
    %p122 = por %p120, %p121
    %p123 = scmp.ne.s32.totalorder %s111, %s112
    %p124 = scmp.eq.s32.totalorder %s18, 1
    %p125 = por %p123, %p124
    %p127 = scmp.ne.s32.totalorder %s112, %s126
    %p128 = scmp.eq.s32.totalorder %s18, 0
    %p129 = por %p127, %p128
    %s131 = sadd.s32 %s130, 1
    %p134 = scmp.eq.s32.totalorder %s12, 1
    %p135 = scmp.ne.s32.totalorder %s130, %s132
    %p136 = scmp.eq.s32.totalorder %s12, 0
    %p137 = por %p135, %p136
    %p138 = scmp.ne.s32.totalorder %s130, %s132
    %p139 = scmp.eq.s32.totalorder %s17, 1
    %p140 = por %p138, %p139
    %p141 = scmp.ne.s32.totalorder %s132, %s133
    %p142 = scmp.eq.s32.totalorder %s17, 0
    %p143 = por %p141, %p142
    %p144 = scmp.ne.s32.totalorder %s132, %s133
    %p145 = scmp.eq.s32.totalorder %s18, 1
    %p146 = por %p144, %p145
    %p148 = scmp.ne.s32.totalorder %s133, %s147
    %p149 = scmp.eq.s32.totalorder %s18, 0
    %p150 = por %p148, %p149
    %s151 = ssub.s32 %s12, %s19
    %p152 = scmp.eq.s32.totalorder %s151, 0
    %s154 = sadd.s32 %s153, 1
    %s155 = scalar_select %p152, %s153, %s154
    %p158 = pneg %p152
    %p159 = scmp.eq.s32.totalorder %s12, 1
    %p160 = por %p158, %p159
    %p161 = scmp.ne.s32.totalorder %s153, %s156
    %p162 = scmp.eq.s32.totalorder %s12, 0
    %p163 = por %p161, %p162
    %p164 = scmp.ne.s32.totalorder %s153, %s156
    %p165 = scmp.eq.s32.totalorder %s17, 1
    %p166 = por %p164, %p165
    %p167 = scmp.ne.s32.totalorder %s156, %s157
    %p168 = scmp.eq.s32.totalorder %s17, 0
    %p169 = por %p167, %p168
    %p170 = scmp.ne.s32.totalorder %s156, %s157
    %p171 = scmp.eq.s32.totalorder %s18, 1
    %p172 = por %p170, %p171
    %p174 = scmp.ne.s32.totalorder %s157, %s173
    %p175 = scmp.eq.s32.totalorder %s18, 0
    %p176 = por %p174, %p175
    %p177 = scmp.le.s32.totalorder 1, %s12
    %p178 = scmp.lt.s32.totalorder %s12, 3
    %p179 = pnand %p177, %p178
    %p180 = pneg %p179
    // Predicated region
    $region9: #{up0_forward.3} parent=5 // pred_check
      _
    $region10: #{up0_forward.3} parent=5 // pred_check_branch
      %182 = sbr.rel (%p179) target = $region12
    $region11: #{up0_forward.3} parent=5 // pred_region
      %s183 = ssub.s32 %s12, 1
      // Predicated region
      $region13: #{up0_forward.3} parent=11 // pred_check
        %p184 = pneg %p59
      $region14: #{up0_forward.3} parent=11 // pred_check_branch
        %186 = sbr.rel (%p184) target = $region16
      $region15: #{up0_forward.3} parent=11 // pred_region
        _
      $region16: #{up0_forward.3} parent=11 // pred_fallthru
        _
      // Predicated region
      $region17: #{up0_forward.3} parent=11 // pred_check
        %p187 = pneg %p80
      $region18: #{up0_forward.3} parent=11 // pred_check_branch
        %189 = sbr.rel (%p187) target = $region20
      $region19: #{up0_forward.3} parent=11 // pred_region
        _
      $region20: #{up0_forward.3} parent=11 // pred_fallthru
        _
      // Predicated region
      $region21: #{up0_forward.3} parent=11 // pred_check
        %p190 = pneg %p101
      $region22: #{up0_forward.3} parent=11 // pred_check_branch
        %192 = sbr.rel (%p190) target = $region24
      $region23: #{up0_forward.3} parent=11 // pred_region
        _
      $region24: #{up0_forward.3} parent=11 // pred_fallthru
        _
      // Predicated region
      $region25: #{up0_forward.3} parent=11 // pred_check
        %p193 = pneg %p122
      $region26: #{up0_forward.3} parent=11 // pred_check_branch
        %195 = sbr.rel (%p193) target = $region28
      $region27: #{up0_forward.3} parent=11 // pred_region
        _
      $region28: #{up0_forward.3} parent=11 // pred_fallthru
        _
      // Predicated region
      $region29: #{up0_forward.3} parent=11 // pred_check
        %p196 = pneg %p143
      $region30: #{up0_forward.3} parent=11 // pred_check_branch
        %198 = sbr.rel (%p196) target = $region32
      $region31: #{up0_forward.3} parent=11 // pred_region
        _
      $region32: #{up0_forward.3} parent=11 // pred_fallthru
        _
    $region12: #{up0_forward.3} parent=5 // pred_fallthru
      _
    %p199 = scmp.lt.s32.totalorder %s12, 2
    // Predicated region
    $region33: #{up0_forward.3} parent=5 // pred_check
      %p200 = pneg %p199
    $region34: #{up0_forward.3} parent=5 // pred_check_branch
      %202 = sbr.rel (%p200) target = $region36
    $region35: #{up0_forward.3} parent=5 // pred_region
      // Predicated region
      $region37: #{up0_forward.3} parent=35 // pred_check
        %p203 = pneg %p32
      $region38: #{up0_forward.3} parent=35 // pred_check_branch
        %205 = sbr.rel (%p203) target = $region40
      $region39: #{up0_forward.3} parent=35 // pred_region
        %p206 = scmp.lt.s32.totalorder %s12, 1
        %s207 = scalar_select %p206, %s12, 1
        %s208 = smul.addr %s207, 49
        %s209 = smul.addr %s208, 4
        %s210 = scalar_lea.vmem %s0, %s209
      $region40: #{up0_forward.3} parent=35 // pred_fallthru
        _
    $region36: #{up0_forward.3} parent=5 // pred_fallthru
      _
    %p211 = scmp.le.s32.totalorder 1, %s12
    %p212 = scmp.lt.s32.totalorder %s12, 3
    %p213 = pnand %p211, %p212
    %p214 = pneg %p213
    // Predicated region
    $region41: #{up0_forward.3} parent=5 // pred_check
      _
    $region42: #{up0_forward.3} parent=5 // pred_check_branch
      %216 = sbr.rel (%p213) target = $region44
    $region43: #{up0_forward.3} parent=5 // pred_region
      %s217 = ssub.s32 %s12, 1
      %p218 = scmp.lt.s32.totalorder %s17, 1
      %s219 = scalar_select %p218, %s17, 1
      %s220 = smul.addr %s219, 49
      %s221 = smul.addr %s220, 4
      %s222 = scalar_lea.vmem %s0, %s221
      %p223 = pneg %p38
      %p224 = pneg %p35
      %p225 = pneg %p59
      %p226 = pneg %p56
      %p227 = pneg %p80
      %p228 = pneg %p77
      %p229 = pneg %p101
      %p230 = pneg %p98
      %p231 = pneg %p122
      %p232 = pneg %p119
      %p233 = pneg %p143
      %p234 = pneg %p140
      %p235 = pneg %p169
      %p236 = pneg %p166
      %p237 = scmp.lt.s32.totalorder %s17, 1
      %s238 = scalar_select %p237, %s17, 1
      %s239 = smul.addr %s238, 41
      %s240 = smul.addr %s239, 8
      %s241 = scalar_lea.vmem %s6, %s240
      %p242 = scmp.lt.s32.totalorder %s17, 1
      %s243 = scalar_select %p242, %s17, 1
      %s244 = smul.addr %s243, 49
      %s245 = smul.addr %s244, 4
      %s246 = scalar_lea.vmem %s0, %s245
      %p247 = scmp.lt.s32.totalorder %s17, 1
      %s248 = scalar_select %p247, %s17, 1
      %s249 = smul.addr %s248, 41
      %s250 = smul.addr %s249, 8
      %s251 = scalar_lea.vmem %s6, %s250
      %v253 = vld [vmem:[%s246 + $0x4] sm:$0xc]
      %v254 = vld [vmem:[%s246 + $0x8] sm:$0xf]
      %v255 = vld [vmem:[%s246 + $0xc] sm:$0xf]
      %v256 = vld [vmem:[%s246 + $0x10] sm:$0xf]
      %v257 = vld [vmem:[%s246 + $0x14] sm:$0xf]
      %v258 = vld [vmem:[%s246 + $0x18] sm:$0xf]
      %v259 = vld [vmem:[%s246 + $0x1c] sm:$0xf]
      %v260 = vld [vmem:[%s246 + $0x20] sm:$0xf]
      %v261 = vld [vmem:[%s246 + $0x24] sm:$0xf]
      %v262 = vld [vmem:[%s246 + $0x28] sm:$0xf]
      %v263 = vld [vmem:[%s246 + $0x2c] sm:$0xf]
      %v264 = vld [vmem:[%s246 + $0x30] sm:$0xf]
      %v265 = vld [vmem:[%s246 + $0x34] sm:$0xf]
      %v266 = vld [vmem:[%s246 + $0x38] sm:$0xf]
      %v267 = vld [vmem:[%s246 + $0x3c] sm:$0xf]
      %v268 = vld [vmem:[%s246 + $0x40] sm:$0xf]
      %v269 = vld [vmem:[%s246 + $0x44] sm:$0xf]
      %v270 = vld [vmem:[%s246 + $0x48] sm:$0xf]
      %v271 = vld [vmem:[%s246 + $0x4c] sm:$0xf]
      %v272 = vld [vmem:[%s246 + $0x50] sm:$0xf]
      %v273 = vld [vmem:[%s246 + $0x54] sm:$0xf]
      %v274 = vld [vmem:[%s246 + $0x58] sm:$0xf]
      %v275 = vld [vmem:[%s246 + $0x5c] sm:$0xf]
      %v276 = vld [vmem:[%s246 + $0x60] sm:$0xf]
      %v277 = vld [vmem:[%s246 + $0x64] sm:$0xf]
      %v278 = vld [vmem:[%s246 + $0x68] sm:$0xf]
      %v279 = vld [vmem:[%s246 + $0x6c] sm:$0xf]
      %v280 = vld [vmem:[%s246 + $0x70] sm:$0xf]
      %v281 = vld [vmem:[%s246 + $0x74] sm:$0xf]
      %v282 = vld [vmem:[%s246 + $0x78] sm:$0xf]
      %v283 = vld [vmem:[%s246 + $0x7c] sm:$0xf]
      %v284 = vld [vmem:[%s246 + $0x80] sm:$0xf]
      %v285 = vld [vmem:[%s246 + $0x84] sm:$0xf]
      %v286 = vld [vmem:[%s246 + $0x88] sm:$0xf]
      %v287 = vld [vmem:[%s246 + $0x8c] sm:$0xf]
      %v288 = vld [vmem:[%s246 + $0x90] sm:$0xf]
      %v289 = vld [vmem:[%s246 + $0x94] sm:$0xf]
      %v290 = vld [vmem:[%s246 + $0x98] sm:$0xf]
      %v291 = vld [vmem:[%s246 + $0x9c] sm:$0xf]
      %v292 = vld [vmem:[%s246 + $0xa0] sm:$0xf]
      %v293 = vld [vmem:[%s246 + $0xa4] sm:$0xf]
      %v294 = vld [vmem:[%s246 + $0xa8] sm:$0x1]
      %v295 = vld [vmem:[%s2] sm:$0xf]
      %v296 = vld [vmem:[%s246 + $0x4] sm:$0x8]
      %s297 = scalar_lea.vmem %s2, 4
      %v298 = vld [vmem:[%s297] sm:$0xf]
      %v341 = vunpack.c.l.b16 %v296
      %v342 = vunpack.c.l.b16 %v254
      %v343 = vunpack.c.l.b16 %v255
      %v344 = vunpack.c.l.b16 %v256
      %v345 = vunpack.c.l.b16 %v257
      %v346 = vunpack.c.l.b16 %v258
      %v347 = vunpack.c.l.b16 %v259
      %v348 = vunpack.c.l.b16 %v260
      %v349 = vunpack.c.l.b16 %v261
      %v350 = vunpack.c.l.b16 %v262
      %v351 = vunpack.c.l.b16 %v263
      %v352 = vunpack.c.l.b16 %v264
      %v353 = vunpack.c.l.b16 %v265
      %v354 = vunpack.c.l.b16 %v266
      %v355 = vunpack.c.l.b16 %v267
      %v356 = vunpack.c.l.b16 %v268
      %v357 = vunpack.c.l.b16 %v269
      %v358 = vunpack.c.l.b16 %v270
      %v359 = vunpack.c.l.b16 %v271
      %v360 = vunpack.c.l.b16 %v272
      %v361 = vunpack.c.l.b16 %v273
      %v362 = vunpack.c.l.b16 %v274
      %v363 = vunpack.c.l.b16 %v275
      %v364 = vunpack.c.l.b16 %v276
      %v365 = vunpack.c.l.b16 %v277
      %v366 = vunpack.c.l.b16 %v278
      %v367 = vunpack.c.l.b16 %v279
      %v368 = vunpack.c.l.b16 %v280
      %v369 = vunpack.c.l.b16 %v281
      %v370 = vunpack.c.l.b16 %v282
      %v371 = vunpack.c.l.b16 %v283
      %v372 = vunpack.c.l.b16 %v284
      %v373 = vunpack.c.l.b16 %v285
      %v374 = vunpack.c.l.b16 %v286
      %v375 = vunpack.c.l.b16 %v287
      %v376 = vunpack.c.l.b16 %v288
      %v377 = vunpack.c.l.b16 %v289
      %v378 = vunpack.c.l.b16 %v290
      %v379 = vunpack.c.l.b16 %v291
      %v380 = vunpack.c.l.b16 %v292
      %v381 = vunpack.c.l.b16 %v293
      %v382 = vunpack.c.l.b16 %v294
      %v383 = vpack.c.b16 %v342, %v341
      %v384 = vpack.c.b16 %v344, %v343
      %v385 = vpack.c.b16 %v346, %v345
      %v386 = vpack.c.b16 %v348, %v347
      %v387 = vpack.c.b16 %v350, %v349
      %v388 = vpack.c.b16 %v352, %v351
      %v389 = vpack.c.b16 %v354, %v353
      %v390 = vpack.c.b16 %v356, %v355
      %v391 = vpack.c.b16 %v358, %v357
      %v392 = vpack.c.b16 %v360, %v359
      %v393 = vpack.c.b16 %v362, %v361
      %v394 = vpack.c.b16 %v364, %v363
      %v395 = vpack.c.b16 %v366, %v365
      %v396 = vpack.c.b16 %v368, %v367
      %v397 = vpack.c.b16 %v370, %v369
      %v398 = vpack.c.b16 %v372, %v371
      %v399 = vpack.c.b16 %v374, %v373
      %v400 = vpack.c.b16 %v376, %v375
      %v401 = vpack.c.b16 %v378, %v377
      %v402 = vpack.c.b16 %v380, %v379
      %v403 = vpack.c.b16 %v382, %v381
      %vm404 = vcmask 1044480
      %v405 = vrot.slane %v383, 3
      %v406 = vrot.slane %v384, 3
      %v407 = vsel %vm404, %v405, %v406
      %v408 = vrot.slane %v385, 3
      %v409 = vsel %vm404, %v406, %v408
      %v410 = vrot.slane %v386, 3
      %v411 = vsel %vm404, %v408, %v410
      %v412 = vrot.slane %v387, 3
      %v413 = vsel %vm404, %v410, %v412
      %v414 = vrot.slane %v388, 3
      %v415 = vsel %vm404, %v412, %v414
      %v416 = vrot.slane %v389, 3
      %v417 = vsel %vm404, %v414, %v416
      %v418 = vrot.slane %v390, 3
      %v419 = vsel %vm404, %v416, %v418
      %v420 = vrot.slane %v391, 3
      %v421 = vsel %vm404, %v418, %v420
      %v422 = vrot.slane %v392, 3
      %v423 = vsel %vm404, %v420, %v422
      %v424 = vrot.slane %v393, 3
      %v425 = vsel %vm404, %v422, %v424
      %v426 = vrot.slane %v394, 3
      %v427 = vsel %vm404, %v424, %v426
      %v428 = vrot.slane %v395, 3
      %v429 = vsel %vm404, %v426, %v428
      %v430 = vrot.slane %v396, 3
      %v431 = vsel %vm404, %v428, %v430
      %v432 = vrot.slane %v397, 3
      %v433 = vsel %vm404, %v430, %v432
      %v434 = vrot.slane %v398, 3
      %v435 = vsel %vm404, %v432, %v434
      %v436 = vrot.slane %v399, 3
      %v437 = vsel %vm404, %v434, %v436
      %v438 = vrot.slane %v400, 3
      %v439 = vsel %vm404, %v436, %v438
      %v440 = vrot.slane %v401, 3
      %v441 = vsel %vm404, %v438, %v440
      %v442 = vrot.slane %v402, 3
      %v443 = vsel %vm404, %v440, %v442
      %v444 = vrot.slane %v403, 3
      %v445 = vsel %vm404, %v442, %v444
      %vm446 = vcmask 64512
      %v448 = vsel %vm446, %v407, 0
      %v451 = vsel %vm446, %v409, 0
      %v454 = vsel %vm446, %v411, 0
      %v457 = vsel %vm446, %v413, 0
      %v460 = vsel %vm446, %v415, 0
      %v463 = vsel %vm446, %v417, 0
      %v466 = vsel %vm446, %v419, 0
      %v469 = vsel %vm446, %v421, 0
      %v472 = vsel %vm446, %v423, 0
      %v475 = vsel %vm446, %v425, 0
      %v478 = vsel %vm446, %v427, 0
      %v481 = vsel %vm446, %v429, 0
      %v484 = vsel %vm446, %v431, 0
      %v487 = vsel %vm446, %v433, 0
      %v490 = vsel %vm446, %v435, 0
      %v493 = vsel %vm446, %v437, 0
      %v496 = vsel %vm446, %v439, 0
      %v499 = vsel %vm446, %v441, 0
      %v502 = vsel %vm446, %v443, 0
      %v505 = vsel %vm446, %v445, 0
      %v508 = vsel %vm446, %v444, 0
      %vm510 = vcmask 1043456
      %v512 = vsel %vm510, %v298, 0
      %514 = vmatprep.subr.bf16.mxu0 0
      %515 = vmatpush1.bf16.msra.mxu0 %v512
      %516 = vmatprep.subr.bf16.mxu0 0
      %517 = vmatpush1.bf16.msra.mxu0 0
      %518 = vmatprep.subr.bf16.mxu0 0
      %519 = vmatpush1.bf16.msra.mxu0 0
      %520 = vmatprep.subr.bf16.mxu0 0
      %521 = vmatpush1.bf16.msra.mxu0 0
      %522 = vmatprep.subr.bf16.mxu0 0
      %523 = vmatpush1.bf16.msra.mxu0 0
      %524 = vmatprep.subr.bf16.mxu0 0
      %525 = vmatpush1.bf16.msra.mxu0 0
      %526 = vmatprep.subr.bf16.mxu0 0
      %527 = vmatpush1.bf16.msra.mxu0 0
      %528 = vmatprep.subr.bf16.mxu0 0
      %529 = vmatpush1.bf16.msra.mxu0 0
      %530 = vmatprep.subr.bf16.mxu0 0
      %531 = vmatpush1.bf16.msra.mxu0 0
      %532 = vmatprep.subr.bf16.mxu0 0
      %533 = vmatpush1.bf16.msra.mxu0 0
      %534 = vmatprep.subr.bf16.mxu0 0
      %535 = vmatpush1.bf16.msra.mxu0 0
      %536 = vmatprep.subr.bf16.mxu0 0
      %537 = vmatpush1.bf16.msra.mxu0 0
      %538 = vmatprep.subr.bf16.mxu0 0
      %539 = vmatpush1.bf16.msra.mxu0 0
      %540 = vmatprep.subr.bf16.mxu0 0
      %541 = vmatpush1.bf16.msra.mxu0 0
      %542 = vmatprep.subr.bf16.mxu0 0
      %543 = vmatpush1.bf16.msra.mxu0 0
      %544 = vmatprep.subr.bf16.mxu0 0
      %545 = vmatpush1.bf16.msra.mxu0 0
      %546 = vmatprep.mubr.bf16.mxu0 0
      %547 = vmatmul.mubr.bf16.gmra.mrb[0].mxu0 %v448
      %v548 = vpop.f32.mrb[0].mxu0
      %v549 = vadd.f32 0.0, %v548
      %v550 = vpop.f32.mrb[0].mxu0
      %v551 = vpop.f32.mrb[0].mxu0
      %v552 = vadd.f32 0.0, %v551
      %v553 = vpop.f32.mrb[0].mxu0
      %554 = vmatprep.mubr.bf16.mxu0 0
      %555 = vmatmul.mubr.bf16.gmra.mrb[0].mxu0 %v451
      %v556 = vpop.f32.mrb[0].mxu0
      %v557 = vadd.f32 0.0, %v556
      %v558 = vpop.f32.mrb[0].mxu0
      %v559 = vpop.f32.mrb[0].mxu0
      %v560 = vadd.f32 0.0, %v559
      %v561 = vpop.f32.mrb[0].mxu0
      %562 = vmatprep.mubr.bf16.mxu0 0
      %563 = vmatmul.mubr.bf16.gmra.mrb[0].mxu0 %v454
      %v564 = vpop.f32.mrb[0].mxu0
      %v565 = vadd.f32 0.0, %v564
      %v566 = vpop.f32.mrb[0].mxu0
      %v567 = vpop.f32.mrb[0].mxu0
      %v568 = vadd.f32 0.0, %v567
      %v569 = vpop.f32.mrb[0].mxu0
      %570 = vmatprep.mubr.bf16.mxu0 0
      %571 = vmatmul.mubr.bf16.gmra.mrb[0].mxu0 %v457
      %v572 = vpop.f32.mrb[0].mxu0
      %v573 = vadd.f32 0.0, %v572
      %v574 = vpop.f32.mrb[0].mxu0
      %v575 = vpop.f32.mrb[0].mxu0
      %v576 = vadd.f32 0.0, %v575
      %v577 = vpop.f32.mrb[0].mxu0
      %578 = vmatprep.mubr.bf16.mxu0 0
      %579 = vmatmul.mubr.bf16.gmra.mrb[0].mxu0 %v460
      %v580 = vpop.f32.mrb[0].mxu0
      %v581 = vadd.f32 0.0, %v580
      %v582 = vpop.f32.mrb[0].mxu0
      %v583 = vpop.f32.mrb[0].mxu0
      %v584 = vadd.f32 0.0, %v583
      %v585 = vpop.f32.mrb[0].mxu0
      %586 = vmatprep.mubr.bf16.mxu0 0
      %587 = vmatmul.mubr.bf16.gmra.mrb[0].mxu0 %v463
      %v588 = vpop.f32.mrb[0].mxu0
      %v589 = vadd.f32 0.0, %v588
      %v590 = vpop.f32.mrb[0].mxu0
      %v591 = vpop.f32.mrb[0].mxu0
      %v592 = vadd.f32 0.0, %v591
      %v593 = vpop.f32.mrb[0].mxu0
      %594 = vmatprep.mubr.bf16.mxu0 0
      %595 = vmatmul.mubr.bf16.gmra.mrb[0].mxu0 %v466
      %v596 = vpop.f32.mrb[0].mxu0
      %v597 = vadd.f32 0.0, %v596
      %v598 = vpop.f32.mrb[0].mxu0
      %v599 = vpop.f32.mrb[0].mxu0
      %v600 = vadd.f32 0.0, %v599
      %v601 = vpop.f32.mrb[0].mxu0
      %602 = vmatprep.mubr.bf16.mxu0 0
      %603 = vmatmul.mubr.bf16.gmra.mrb[0].mxu0 %v469
      %v604 = vpop.f32.mrb[0].mxu0
      %v605 = vadd.f32 0.0, %v604
      %v606 = vpop.f32.mrb[0].mxu0
      %v607 = vpop.f32.mrb[0].mxu0
      %v608 = vadd.f32 0.0, %v607
      %v609 = vpop.f32.mrb[0].mxu0
      %610 = vmatprep.mubr.bf16.mxu0 0
      %611 = vmatmul.mubr.bf16.gmra.mrb[0].mxu0 %v472
      %v612 = vpop.f32.mrb[0].mxu0
      %v613 = vadd.f32 0.0, %v612
      %v614 = vpop.f32.mrb[0].mxu0
      %v615 = vpop.f32.mrb[0].mxu0
      %v616 = vadd.f32 0.0, %v615
      %v617 = vpop.f32.mrb[0].mxu0
      %618 = vmatprep.mubr.bf16.mxu0 0
      %619 = vmatmul.mubr.bf16.gmra.mrb[0].mxu0 %v475
      %v620 = vpop.f32.mrb[0].mxu0
      %v621 = vadd.f32 0.0, %v620
      %v622 = vpop.f32.mrb[0].mxu0
      %v623 = vpop.f32.mrb[0].mxu0
      %v624 = vadd.f32 0.0, %v623
      %v625 = vpop.f32.mrb[0].mxu0
      %626 = vmatprep.mubr.bf16.mxu0 0
      %627 = vmatmul.mubr.bf16.gmra.mrb[0].mxu0 %v478
      %v628 = vpop.f32.mrb[0].mxu0
      %v629 = vadd.f32 0.0, %v628
      %v630 = vpop.f32.mrb[0].mxu0
      %v631 = vpop.f32.mrb[0].mxu0
      %v632 = vadd.f32 0.0, %v631
      %v633 = vpop.f32.mrb[0].mxu0
      %634 = vmatprep.mubr.bf16.mxu0 0
      %635 = vmatmul.mubr.bf16.gmra.mrb[0].mxu0 %v481
      %v636 = vpop.f32.mrb[0].mxu0
      %v637 = vadd.f32 0.0, %v636
      %v638 = vpop.f32.mrb[0].mxu0
      %v639 = vpop.f32.mrb[0].mxu0
      %v640 = vadd.f32 0.0, %v639
      %v641 = vpop.f32.mrb[0].mxu0
      %642 = vmatprep.mubr.bf16.mxu0 0
      %643 = vmatmul.mubr.bf16.gmra.mrb[0].mxu0 %v484
      %v644 = vpop.f32.mrb[0].mxu0
      %v645 = vadd.f32 0.0, %v644
      %v646 = vpop.f32.mrb[0].mxu0
      %v647 = vpop.f32.mrb[0].mxu0
      %v648 = vadd.f32 0.0, %v647
      %v649 = vpop.f32.mrb[0].mxu0
      %650 = vmatprep.mubr.bf16.mxu0 0
      %651 = vmatmul.mubr.bf16.gmra.mrb[0].mxu0 %v487
      %v652 = vpop.f32.mrb[0].mxu0
      %v653 = vadd.f32 0.0, %v652
      %v654 = vpop.f32.mrb[0].mxu0
      %v655 = vpop.f32.mrb[0].mxu0
      %v656 = vadd.f32 0.0, %v655
      %v657 = vpop.f32.mrb[0].mxu0
      %658 = vmatprep.mubr.bf16.mxu0 0
      %659 = vmatmul.mubr.bf16.gmra.mrb[0].mxu0 %v490
      %v660 = vpop.f32.mrb[0].mxu0
      %v661 = vadd.f32 0.0, %v660
      %v662 = vpop.f32.mrb[0].mxu0
      %v663 = vpop.f32.mrb[0].mxu0
      %v664 = vadd.f32 0.0, %v663
      %v665 = vpop.f32.mrb[0].mxu0
      %666 = vmatprep.mubr.bf16.mxu0 0
      %667 = vmatmul.mubr.bf16.gmra.mrb[0].mxu0 %v493
      %v668 = vpop.f32.mrb[0].mxu0
      %v669 = vadd.f32 0.0, %v668
      %v670 = vpop.f32.mrb[0].mxu0
      %v671 = vpop.f32.mrb[0].mxu0
      %v672 = vadd.f32 0.0, %v671
      %v673 = vpop.f32.mrb[0].mxu0
      %674 = vmatprep.mubr.bf16.mxu0 0
      %675 = vmatmul.mubr.bf16.gmra.mrb[0].mxu0 %v496
      %v676 = vpop.f32.mrb[0].mxu0
      %v677 = vadd.f32 0.0, %v676
      %v678 = vpop.f32.mrb[0].mxu0
      %v679 = vpop.f32.mrb[0].mxu0
      %v680 = vadd.f32 0.0, %v679
      %v681 = vpop.f32.mrb[0].mxu0
      %682 = vmatprep.mubr.bf16.mxu0 0
      %683 = vmatmul.mubr.bf16.gmra.mrb[0].mxu0 %v499
      %v684 = vpop.f32.mrb[0].mxu0
      %v685 = vadd.f32 0.0, %v684
      %v686 = vpop.f32.mrb[0].mxu0
      %v687 = vpop.f32.mrb[0].mxu0
      %v688 = vadd.f32 0.0, %v687
      %v689 = vpop.f32.mrb[0].mxu0
      %690 = vmatprep.mubr.bf16.mxu0 0
      %691 = vmatmul.mubr.bf16.gmra.mrb[0].mxu0 %v502
      %v692 = vpop.f32.mrb[0].mxu0
      %v693 = vadd.f32 0.0, %v692
      %v694 = vpop.f32.mrb[0].mxu0
      %v695 = vpop.f32.mrb[0].mxu0
      %v696 = vadd.f32 0.0, %v695
      %v697 = vpop.f32.mrb[0].mxu0
      %698 = vmatprep.mubr.bf16.mxu0 0
      %699 = vmatmul.mubr.bf16.gmra.mrb[0].mxu0 %v505
      %v700 = vpop.f32.mrb[0].mxu0
      %v701 = vadd.f32 0.0, %v700
      %v702 = vpop.f32.mrb[0].mxu0
      %v703 = vpop.f32.mrb[0].mxu0
      %v704 = vadd.f32 0.0, %v703
      %v705 = vpop.f32.mrb[0].mxu0
      %706 = vmatprep.mubr.bf16.mxu0 0
      %707 = vmatmul.mubr.bf16.gmra.mrb[0].mxu0 %v508
      %v708 = vpop.f32.mrb[0].mxu0
      %v709 = vadd.f32 0.0, %v708
      %v710 = vpop.f32.mrb[0].mxu0
      %v711 = vpop.f32.mrb[0].mxu0
      %v712 = vpop.f32.mrb[0].mxu0
      %713 = vdwg.mxu0
      %v715 = vunpack.c.l.b16 %v253
      %v716 = vpack.c.b16 %v342, %v715
      %vm717 = vsmask.f32 5376
      %v719 = vshrl.u32 %v716, 16
      %v721 = vrot.slane %v719, 2
      %v722 = vshll.u32 %v716, 16
      %v724 = vrot.slane %v722, 3
      %v725 = vor.u32 %v721, %v724
      %v727 = vshrl.u32 %v384, 16
      %v729 = vrot.slane %v727, 2
      %v730 = vshll.u32 %v384, 16
      %v732 = vrot.slane %v730, 3
      %v733 = vor.u32 %v729, %v732
      %v734 = vsel %vm717, %v725, %v733
      %v736 = vshrl.u32 %v385, 16
      %v738 = vrot.slane %v736, 2
      %v739 = vshll.u32 %v385, 16
      %v741 = vrot.slane %v739, 3
      %v742 = vor.u32 %v738, %v741
      %v743 = vsel %vm717, %v733, %v742
      %v745 = vshrl.u32 %v386, 16
      %v747 = vrot.slane %v745, 2
      %v748 = vshll.u32 %v386, 16
      %v750 = vrot.slane %v748, 3
      %v751 = vor.u32 %v747, %v750
      %v752 = vsel %vm717, %v742, %v751
      %v754 = vshrl.u32 %v387, 16
      %v756 = vrot.slane %v754, 2
      %v757 = vshll.u32 %v387, 16
      %v759 = vrot.slane %v757, 3
      %v760 = vor.u32 %v756, %v759
      %v761 = vsel %vm717, %v751, %v760
      %v763 = vshrl.u32 %v388, 16
      %v765 = vrot.slane %v763, 2
      %v766 = vshll.u32 %v388, 16
      %v768 = vrot.slane %v766, 3
      %v769 = vor.u32 %v765, %v768
      %v770 = vsel %vm717, %v760, %v769
      %v772 = vshrl.u32 %v389, 16
      %v774 = vrot.slane %v772, 2
      %v775 = vshll.u32 %v389, 16
      %v777 = vrot.slane %v775, 3
      %v778 = vor.u32 %v774, %v777
      %v779 = vsel %vm717, %v769, %v778
      %v781 = vshrl.u32 %v390, 16
      %v783 = vrot.slane %v781, 2
      %v784 = vshll.u32 %v390, 16
      %v786 = vrot.slane %v784, 3
      %v787 = vor.u32 %v783, %v786
      %v788 = vsel %vm717, %v778, %v787
      %v790 = vshrl.u32 %v391, 16
      %v792 = vrot.slane %v790, 2
      %v793 = vshll.u32 %v391, 16
      %v795 = vrot.slane %v793, 3
      %v796 = vor.u32 %v792, %v795
      %v797 = vsel %vm717, %v787, %v796
      %v799 = vshrl.u32 %v392, 16
      %v801 = vrot.slane %v799, 2
      %v802 = vshll.u32 %v392, 16
      %v804 = vrot.slane %v802, 3
      %v805 = vor.u32 %v801, %v804
      %v806 = vsel %vm717, %v796, %v805
      %v808 = vshrl.u32 %v393, 16
      %v810 = vrot.slane %v808, 2
      %v811 = vshll.u32 %v393, 16
      %v813 = vrot.slane %v811, 3
      %v814 = vor.u32 %v810, %v813
      %v815 = vsel %vm717, %v805, %v814
      %v817 = vshrl.u32 %v394, 16
      %v819 = vrot.slane %v817, 2
      %v820 = vshll.u32 %v394, 16
      %v822 = vrot.slane %v820, 3
      %v823 = vor.u32 %v819, %v822
      %v824 = vsel %vm717, %v814, %v823
      %v826 = vshrl.u32 %v395, 16
      %v828 = vrot.slane %v826, 2
      %v829 = vshll.u32 %v395, 16
      %v831 = vrot.slane %v829, 3
      %v832 = vor.u32 %v828, %v831
      %v833 = vsel %vm717, %v823, %v832
      %v835 = vshrl.u32 %v396, 16
      %v837 = vrot.slane %v835, 2
      %v838 = vshll.u32 %v396, 16
      %v840 = vrot.slane %v838, 3
      %v841 = vor.u32 %v837, %v840
      %v842 = vsel %vm717, %v832, %v841
      %v844 = vshrl.u32 %v397, 16
      %v846 = vrot.slane %v844, 2
      %v847 = vshll.u32 %v397, 16
      %v849 = vrot.slane %v847, 3
      %v850 = vor.u32 %v846, %v849
      %v851 = vsel %vm717, %v841, %v850
      %v853 = vshrl.u32 %v398, 16
      %v855 = vrot.slane %v853, 2
      %v856 = vshll.u32 %v398, 16
      %v858 = vrot.slane %v856, 3
      %v859 = vor.u32 %v855, %v858
      %v860 = vsel %vm717, %v850, %v859
      %v862 = vshrl.u32 %v399, 16
      %v864 = vrot.slane %v862, 2
      %v865 = vshll.u32 %v399, 16
      %v867 = vrot.slane %v865, 3
      %v868 = vor.u32 %v864, %v867
      %v869 = vsel %vm717, %v859, %v868
      %v871 = vshrl.u32 %v400, 16
      %v873 = vrot.slane %v871, 2
      %v874 = vshll.u32 %v400, 16
      %v876 = vrot.slane %v874, 3
      %v877 = vor.u32 %v873, %v876
      %v878 = vsel %vm717, %v868, %v877
      %v880 = vshrl.u32 %v401, 16
      %v882 = vrot.slane %v880, 2
      %v883 = vshll.u32 %v401, 16
      %v885 = vrot.slane %v883, 3
      %v886 = vor.u32 %v882, %v885
      %v887 = vsel %vm717, %v877, %v886
      %v889 = vshrl.u32 %v402, 16
      %v891 = vrot.slane %v889, 2
      %v892 = vshll.u32 %v402, 16
      %v894 = vrot.slane %v892, 3
      %v895 = vor.u32 %v891, %v894
      %v896 = vsel %vm717, %v886, %v895
      %v898 = vshrl.u32 %v403, 16
      %v900 = vrot.slane %v898, 2
      %v901 = vshll.u32 %v403, 16
      %v903 = vrot.slane %v901, 3
      %v904 = vor.u32 %v900, %v903
      %v905 = vsel %vm717, %v895, %v904
      %v907 = vsel %vm446, %v734, 0
      %v910 = vsel %vm446, %v743, 0
      %v913 = vsel %vm446, %v752, 0
      %v916 = vsel %vm446, %v761, 0
      %v919 = vsel %vm446, %v770, 0
      %v922 = vsel %vm446, %v779, 0
      %v925 = vsel %vm446, %v788, 0
      %v928 = vsel %vm446, %v797, 0
      %v931 = vsel %vm446, %v806, 0
      %v934 = vsel %vm446, %v815, 0
      %v937 = vsel %vm446, %v824, 0
      %v940 = vsel %vm446, %v833, 0
      %v943 = vsel %vm446, %v842, 0
      %v946 = vsel %vm446, %v851, 0
      %v949 = vsel %vm446, %v860, 0
      %v952 = vsel %vm446, %v869, 0
      %v955 = vsel %vm446, %v878, 0
      %v958 = vsel %vm446, %v887, 0
      %v961 = vsel %vm446, %v896, 0
      %v964 = vsel %vm446, %v905, 0
      %v967 = vsel %vm446, %v904, 0
      %v970 = vsel %vm510, %v295, 0
      %972 = vmatprep.subr.bf16.mxu0 0
      %973 = vmatpush1.bf16.msra.mxu0 %v970
      %974 = vmatprep.subr.bf16.mxu0 0
      %975 = vmatpush1.bf16.msra.mxu0 0
      %976 = vmatprep.subr.bf16.mxu0 0
      %977 = vmatpush1.bf16.msra.mxu0 0
      %978 = vmatprep.subr.bf16.mxu0 0
      %979 = vmatpush1.bf16.msra.mxu0 0
      %980 = vmatprep.subr.bf16.mxu0 0
      %981 = vmatpush1.bf16.msra.mxu0 0
      %982 = vmatprep.subr.bf16.mxu0 0
      %983 = vmatpush1.bf16.msra.mxu0 0
      %984 = vmatprep.subr.bf16.mxu0 0
      %985 = vmatpush1.bf16.msra.mxu0 0
      %986 = vmatprep.subr.bf16.mxu0 0
      %987 = vmatpush1.bf16.msra.mxu0 0
      %988 = vmatprep.subr.bf16.mxu0 0
      %989 = vmatpush1.bf16.msra.mxu0 0
      %990 = vmatprep.subr.bf16.mxu0 0
      %991 = vmatpush1.bf16.msra.mxu0 0
      %992 = vmatprep.subr.bf16.mxu0 0
      %993 = vmatpush1.bf16.msra.mxu0 0
      %994 = vmatprep.subr.bf16.mxu0 0
      %995 = vmatpush1.bf16.msra.mxu0 0
      %996 = vmatprep.subr.bf16.mxu0 0
      %997 = vmatpush1.bf16.msra.mxu0 0
      %998 = vmatprep.subr.bf16.mxu0 0
      %999 = vmatpush1.bf16.msra.mxu0 0
      %1000 = vmatprep.subr.bf16.mxu0 0
      %1001 = vmatpush1.bf16.msra.mxu0 0
      %1002 = vmatprep.subr.bf16.mxu0 0
      %1003 = vmatpush1.bf16.msra.mxu0 0
      %1004 = vmatprep.mubr.bf16.mxu0 0
      %1005 = vmatmul.mubr.bf16.gmra.mrb[0].mxu0 %v907
      %v1006 = vpop.f32.mrb[0].mxu0
      %v1007 = vadd.f32 %v549, %v1006
      %v1008 = vpop.f32.mrb[0].mxu0
      %v1009 = vpop.f32.mrb[0].mxu0
      %v1010 = vadd.f32 %v552, %v1009
      %v1011 = vpop.f32.mrb[0].mxu0
      %1012 = vmatprep.mubr.bf16.mxu0 0
      %1013 = vmatmul.mubr.bf16.gmra.mrb[0].mxu0 %v910
      %v1014 = vpop.f32.mrb[0].mxu0
      %v1015 = vadd.f32 %v557, %v1014
      %v1016 = vpop.f32.mrb[0].mxu0
      %v1017 = vpop.f32.mrb[0].mxu0
      %v1018 = vadd.f32 %v560, %v1017
      %v1019 = vpop.f32.mrb[0].mxu0
      %1020 = vmatprep.mubr.bf16.mxu0 0
      %1021 = vmatmul.mubr.bf16.gmra.mrb[0].mxu0 %v913
      %v1022 = vpop.f32.mrb[0].mxu0
      %v1023 = vadd.f32 %v565, %v1022
      %v1024 = vpop.f32.mrb[0].mxu0
      %v1025 = vpop.f32.mrb[0].mxu0
      %v1026 = vadd.f32 %v568, %v1025
      %v1027 = vpop.f32.mrb[0].mxu0
      %1028 = vmatprep.mubr.bf16.mxu0 0
      %1029 = vmatmul.mubr.bf16.gmra.mrb[0].mxu0 %v916
      %v1030 = vpop.f32.mrb[0].mxu0
      %v1031 = vadd.f32 %v573, %v1030
      %v1032 = vpop.f32.mrb[0].mxu0
      %v1033 = vpop.f32.mrb[0].mxu0
      %v1034 = vadd.f32 %v576, %v1033
      %v1035 = vpop.f32.mrb[0].mxu0
      %1036 = vmatprep.mubr.bf16.mxu0 0
      %1037 = vmatmul.mubr.bf16.gmra.mrb[0].mxu0 %v919
      %v1038 = vpop.f32.mrb[0].mxu0
      %v1039 = vadd.f32 %v581, %v1038
      %v1040 = vpop.f32.mrb[0].mxu0
      %v1041 = vpop.f32.mrb[0].mxu0
      %v1042 = vadd.f32 %v584, %v1041
      %v1043 = vpop.f32.mrb[0].mxu0
      %1044 = vmatprep.mubr.bf16.mxu0 0
      %1045 = vmatmul.mubr.bf16.gmra.mrb[0].mxu0 %v922
      %v1046 = vpop.f32.mrb[0].mxu0
      %v1047 = vadd.f32 %v589, %v1046
      %v1048 = vpop.f32.mrb[0].mxu0
      %v1049 = vpop.f32.mrb[0].mxu0
      %v1050 = vadd.f32 %v592, %v1049
      %v1051 = vpop.f32.mrb[0].mxu0
      %1052 = vmatprep.mubr.bf16.mxu0 0
      %1053 = vmatmul.mubr.bf16.gmra.mrb[0].mxu0 %v925
      %v1054 = vpop.f32.mrb[0].mxu0
      %v1055 = vadd.f32 %v597, %v1054
      %v1056 = vpop.f32.mrb[0].mxu0
      %v1057 = vpop.f32.mrb[0].mxu0
      %v1058 = vadd.f32 %v600, %v1057
      %v1059 = vpop.f32.mrb[0].mxu0
      %1060 = vmatprep.mubr.bf16.mxu0 0
      %1061 = vmatmul.mubr.bf16.gmra.mrb[0].mxu0 %v928
      %v1062 = vpop.f32.mrb[0].mxu0
      %v1063 = vadd.f32 %v605, %v1062
      %v1064 = vpop.f32.mrb[0].mxu0
      %v1065 = vpop.f32.mrb[0].mxu0
      %v1066 = vadd.f32 %v608, %v1065
      %v1067 = vpop.f32.mrb[0].mxu0
      %1068 = vmatprep.mubr.bf16.mxu0 0
      %1069 = vmatmul.mubr.bf16.gmra.mrb[0].mxu0 %v931
      %v1070 = vpop.f32.mrb[0].mxu0
      %v1071 = vadd.f32 %v613, %v1070
      %v1072 = vpop.f32.mrb[0].mxu0
      %v1073 = vpop.f32.mrb[0].mxu0
      %v1074 = vadd.f32 %v616, %v1073
      %v1075 = vpop.f32.mrb[0].mxu0
      %1076 = vmatprep.mubr.bf16.mxu0 0
      %1077 = vmatmul.mubr.bf16.gmra.mrb[0].mxu0 %v934
      %v1078 = vpop.f32.mrb[0].mxu0
      %v1079 = vadd.f32 %v621, %v1078
      %v1080 = vpop.f32.mrb[0].mxu0
      %v1081 = vpop.f32.mrb[0].mxu0
      %v1082 = vadd.f32 %v624, %v1081
      %v1083 = vpop.f32.mrb[0].mxu0
      %1084 = vmatprep.mubr.bf16.mxu0 0
      %1085 = vmatmul.mubr.bf16.gmra.mrb[0].mxu0 %v937
      %v1086 = vpop.f32.mrb[0].mxu0
      %v1087 = vadd.f32 %v629, %v1086
      %v1088 = vpop.f32.mrb[0].mxu0
      %v1089 = vpop.f32.mrb[0].mxu0
      %v1090 = vadd.f32 %v632, %v1089
      %v1091 = vpop.f32.mrb[0].mxu0
      %1092 = vmatprep.mubr.bf16.mxu0 0
      %1093 = vmatmul.mubr.bf16.gmra.mrb[0].mxu0 %v940
      %v1094 = vpop.f32.mrb[0].mxu0
      %v1095 = vadd.f32 %v637, %v1094
      %v1096 = vpop.f32.mrb[0].mxu0
      %v1097 = vpop.f32.mrb[0].mxu0
      %v1098 = vadd.f32 %v640, %v1097
      %v1099 = vpop.f32.mrb[0].mxu0
      %1100 = vmatprep.mubr.bf16.mxu0 0
      %1101 = vmatmul.mubr.bf16.gmra.mrb[0].mxu0 %v943
      %v1102 = vpop.f32.mrb[0].mxu0
      %v1103 = vadd.f32 %v645, %v1102
      %v1104 = vpop.f32.mrb[0].mxu0
      %v1105 = vpop.f32.mrb[0].mxu0
      %v1106 = vadd.f32 %v648, %v1105
      %v1107 = vpop.f32.mrb[0].mxu0
      %1108 = vmatprep.mubr.bf16.mxu0 0
      %1109 = vmatmul.mubr.bf16.gmra.mrb[0].mxu0 %v946
      %v1110 = vpop.f32.mrb[0].mxu0
      %v1111 = vadd.f32 %v653, %v1110
      %v1112 = vpop.f32.mrb[0].mxu0
      %v1113 = vpop.f32.mrb[0].mxu0
      %v1114 = vadd.f32 %v656, %v1113
      %v1115 = vpop.f32.mrb[0].mxu0
      %1116 = vmatprep.mubr.bf16.mxu0 0
      %1117 = vmatmul.mubr.bf16.gmra.mrb[0].mxu0 %v949
      %v1118 = vpop.f32.mrb[0].mxu0
      %v1119 = vadd.f32 %v661, %v1118
      %v1120 = vpop.f32.mrb[0].mxu0
      %v1121 = vpop.f32.mrb[0].mxu0
      %v1122 = vadd.f32 %v664, %v1121
      %v1123 = vpop.f32.mrb[0].mxu0
      %1124 = vmatprep.mubr.bf16.mxu0 0
      %1125 = vmatmul.mubr.bf16.gmra.mrb[0].mxu0 %v952
      %v1126 = vpop.f32.mrb[0].mxu0
      %v1127 = vadd.f32 %v669, %v1126
      %v1128 = vpop.f32.mrb[0].mxu0
      %v1129 = vpop.f32.mrb[0].mxu0
      %v1130 = vadd.f32 %v672, %v1129
      %v1131 = vpop.f32.mrb[0].mxu0
      %1132 = vmatprep.mubr.bf16.mxu0 0
      %1133 = vmatmul.mubr.bf16.gmra.mrb[0].mxu0 %v955
      %v1134 = vpop.f32.mrb[0].mxu0
      %v1135 = vadd.f32 %v677, %v1134
      %v1136 = vpop.f32.mrb[0].mxu0
      %v1137 = vpop.f32.mrb[0].mxu0
      %v1138 = vadd.f32 %v680, %v1137
      %v1139 = vpop.f32.mrb[0].mxu0
      %1140 = vmatprep.mubr.bf16.mxu0 0
      %1141 = vmatmul.mubr.bf16.gmra.mrb[0].mxu0 %v958
      %v1142 = vpop.f32.mrb[0].mxu0
      %v1143 = vadd.f32 %v685, %v1142
      %v1144 = vpop.f32.mrb[0].mxu0
      %v1145 = vpop.f32.mrb[0].mxu0
      %v1146 = vadd.f32 %v688, %v1145
      %v1147 = vpop.f32.mrb[0].mxu0
      %1148 = vmatprep.mubr.bf16.mxu0 0
      %1149 = vmatmul.mubr.bf16.gmra.mrb[0].mxu0 %v961
      %v1150 = vpop.f32.mrb[0].mxu0
      %v1151 = vadd.f32 %v693, %v1150
      %v1152 = vpop.f32.mrb[0].mxu0
      %v1153 = vpop.f32.mrb[0].mxu0
      %v1154 = vadd.f32 %v696, %v1153
      %v1155 = vpop.f32.mrb[0].mxu0
      %1156 = vmatprep.mubr.bf16.mxu0 0
      %1157 = vmatmul.mubr.bf16.gmra.mrb[0].mxu0 %v964
      %v1158 = vpop.f32.mrb[0].mxu0
      %v1159 = vadd.f32 %v701, %v1158
      %v1160 = vpop.f32.mrb[0].mxu0
      %v1161 = vpop.f32.mrb[0].mxu0
      %v1162 = vadd.f32 %v704, %v1161
      %v1163 = vpop.f32.mrb[0].mxu0
      %1164 = vmatprep.mubr.bf16.mxu0 0
      %1165 = vmatmul.mubr.bf16.gmra.mrb[0].mxu0 %v967
      %v1166 = vpop.f32.mrb[0].mxu0
      %v1167 = vadd.f32 %v709, %v1166
      %v1168 = vpop.f32.mrb[0].mxu0
      %v1169 = vpop.f32.mrb[0].mxu0
      %v1170 = vpop.f32.mrb[0].mxu0
      %1171 = vdwg.mxu0
      %v1172 = vld [vmem:[%s246 + $0xa8] sm:$0x3]
      %s1173 = scalar_lea.vmem %s2, 8
      %v1174 = vld [vmem:[%s1173] sm:$0xf]
      %v1176 = vunpack.c.l.b16 %v1172
      %v1177 = vpack.c.b16 %v1176, %v381
      %vm1178 = vsmask.f32 4352
      %v1180 = vshrl.u32 %v383, 16
      %v1182 = vrot.slane %v1180, 3
      %v1183 = vshll.u32 %v383, 16
      %v1185 = vrot.slane %v1183, 4
      %v1186 = vor.u32 %v1182, %v1185
      %v1187 = vrot.slane %v727, 3
      %v1188 = vrot.slane %v730, 4
      %v1189 = vor.u32 %v1187, %v1188
      %v1190 = vsel %vm1178, %v1186, %v1189
      %v1191 = vrot.slane %v736, 3
      %v1192 = vrot.slane %v739, 4
      %v1193 = vor.u32 %v1191, %v1192
      %v1194 = vsel %vm1178, %v1189, %v1193
      %v1195 = vrot.slane %v745, 3
      %v1196 = vrot.slane %v748, 4
      %v1197 = vor.u32 %v1195, %v1196
      %v1198 = vsel %vm1178, %v1193, %v1197
      %v1199 = vrot.slane %v754, 3
      %v1200 = vrot.slane %v757, 4
      %v1201 = vor.u32 %v1199, %v1200
      %v1202 = vsel %vm1178, %v1197, %v1201
      %v1203 = vrot.slane %v763, 3
      %v1204 = vrot.slane %v766, 4
      %v1205 = vor.u32 %v1203, %v1204
      %v1206 = vsel %vm1178, %v1201, %v1205
      %v1207 = vrot.slane %v772, 3
      %v1208 = vrot.slane %v775, 4
      %v1209 = vor.u32 %v1207, %v1208
      %v1210 = vsel %vm1178, %v1205, %v1209
      %v1211 = vrot.slane %v781, 3
      %v1212 = vrot.slane %v784, 4
      %v1213 = vor.u32 %v1211, %v1212
      %v1214 = vsel %vm1178, %v1209, %v1213
      %v1215 = vrot.slane %v790, 3
      %v1216 = vrot.slane %v793, 4
      %v1217 = vor.u32 %v1215, %v1216
      %v1218 = vsel %vm1178, %v1213, %v1217
      %v1219 = vrot.slane %v799, 3
      %v1220 = vrot.slane %v802, 4
      %v1221 = vor.u32 %v1219, %v1220
      %v1222 = vsel %vm1178, %v1217, %v1221
      %v1223 = vrot.slane %v808, 3
      %v1224 = vrot.slane %v811, 4
      %v1225 = vor.u32 %v1223, %v1224
      %v1226 = vsel %vm1178, %v1221, %v1225
      %v1227 = vrot.slane %v817, 3
      %v1228 = vrot.slane %v820, 4
      %v1229 = vor.u32 %v1227, %v1228
      %v1230 = vsel %vm1178, %v1225, %v1229
      %v1231 = vrot.slane %v826, 3
      %v1232 = vrot.slane %v829, 4
      %v1233 = vor.u32 %v1231, %v1232
      %v1234 = vsel %vm1178, %v1229, %v1233
      %v1235 = vrot.slane %v835, 3
      %v1236 = vrot.slane %v838, 4
      %v1237 = vor.u32 %v1235, %v1236
      %v1238 = vsel %vm1178, %v1233, %v1237
      %v1239 = vrot.slane %v844, 3
      %v1240 = vrot.slane %v847, 4
      %v1241 = vor.u32 %v1239, %v1240
      %v1242 = vsel %vm1178, %v1237, %v1241
      %v1243 = vrot.slane %v853, 3
      %v1244 = vrot.slane %v856, 4
      %v1245 = vor.u32 %v1243, %v1244
      %v1246 = vsel %vm1178, %v1241, %v1245
      %v1247 = vrot.slane %v862, 3
      %v1248 = vrot.slane %v865, 4
      %v1249 = vor.u32 %v1247, %v1248
      %v1250 = vsel %vm1178, %v1245, %v1249
      %v1251 = vrot.slane %v871, 3
      %v1252 = vrot.slane %v874, 4
      %v1253 = vor.u32 %v1251, %v1252
      %v1254 = vsel %vm1178, %v1249, %v1253
      %v1255 = vrot.slane %v880, 3
      %v1256 = vrot.slane %v883, 4
      %v1257 = vor.u32 %v1255, %v1256
      %v1258 = vsel %vm1178, %v1253, %v1257
      %v1259 = vrot.slane %v889, 3
      %v1260 = vrot.slane %v892, 4
      %v1261 = vor.u32 %v1259, %v1260
      %v1262 = vsel %vm1178, %v1257, %v1261
      %v1264 = vshrl.u32 %v1177, 16
      %v1266 = vrot.slane %v1264, 3
      %v1267 = vshll.u32 %v1177, 16
      %v1269 = vrot.slane %v1267, 4
      %v1270 = vor.u32 %v1266, %v1269
      %v1271 = vsel %vm1178, %v1261, %v1270
      %v1273 = vsel %vm446, %v1190, 0
      %v1276 = vsel %vm446, %v1194, 0
      %v1279 = vsel %vm446, %v1198, 0
      %v1282 = vsel %vm446, %v1202, 0
      %v1285 = vsel %vm446, %v1206, 0
      %v1288 = vsel %vm446, %v1210, 0
      %v1291 = vsel %vm446, %v1214, 0
      %v1294 = vsel %vm446, %v1218, 0
      %v1297 = vsel %vm446, %v1222, 0
      %v1300 = vsel %vm446, %v1226, 0
      %v1303 = vsel %vm446, %v1230, 0
      %v1306 = vsel %vm446, %v1234, 0
      %v1309 = vsel %vm446, %v1238, 0
      %v1312 = vsel %vm446, %v1242, 0
      %v1315 = vsel %vm446, %v1246, 0
      %v1318 = vsel %vm446, %v1250, 0
      %v1321 = vsel %vm446, %v1254, 0
      %v1324 = vsel %vm446, %v1258, 0
      %v1327 = vsel %vm446, %v1262, 0
      %v1330 = vsel %vm446, %v1271, 0
      %v1333 = vsel %vm446, %v1270, 0
      %v1336 = vsel %vm510, %v1174, 0
      %1338 = vmatprep.subr.bf16.mxu0 0
      %1339 = vmatpush1.bf16.msra.mxu0 %v1336
      %1340 = vmatprep.subr.bf16.mxu0 0
      %1341 = vmatpush1.bf16.msra.mxu0 0
      %1342 = vmatprep.subr.bf16.mxu0 0
      %1343 = vmatpush1.bf16.msra.mxu0 0
      %1344 = vmatprep.subr.bf16.mxu0 0
      %1345 = vmatpush1.bf16.msra.mxu0 0
      %1346 = vmatprep.subr.bf16.mxu0 0
      %1347 = vmatpush1.bf16.msra.mxu0 0
      %1348 = vmatprep.subr.bf16.mxu0 0
      %1349 = vmatpush1.bf16.msra.mxu0 0
      %1350 = vmatprep.subr.bf16.mxu0 0
      %1351 = vmatpush1.bf16.msra.mxu0 0
      %1352 = vmatprep.subr.bf16.mxu0 0
      %1353 = vmatpush1.bf16.msra.mxu0 0
      %1354 = vmatprep.subr.bf16.mxu0 0
      %1355 = vmatpush1.bf16.msra.mxu0 0
      %1356 = vmatprep.subr.bf16.mxu0 0
      %1357 = vmatpush1.bf16.msra.mxu0 0
      %1358 = vmatprep.subr.bf16.mxu0 0
      %1359 = vmatpush1.bf16.msra.mxu0 0
      %1360 = vmatprep.subr.bf16.mxu0 0
      %1361 = vmatpush1.bf16.msra.mxu0 0
      %1362 = vmatprep.subr.bf16.mxu0 0
      %1363 = vmatpush1.bf16.msra.mxu0 0
      %1364 = vmatprep.subr.bf16.mxu0 0
      %1365 = vmatpush1.bf16.msra.mxu0 0
      %1366 = vmatprep.subr.bf16.mxu0 0
      %1367 = vmatpush1.bf16.msra.mxu0 0
      %1368 = vmatprep.subr.bf16.mxu0 0
      %1369 = vmatpush1.bf16.msra.mxu0 0
      %1370 = vmatprep.mubr.bf16.mxu0 0
      %1371 = vmatmul.mubr.bf16.gmra.mrb[0].mxu0 %v1273
      %v1372 = vpop.f32.mrb[0].mxu0
      %v1373 = vadd.f32 0.0, %v1372
      %v1374 = vpop.f32.mrb[0].mxu0
      %v1375 = vpop.f32.mrb[0].mxu0
      %v1376 = vadd.f32 0.0, %v1375
      %v1377 = vpop.f32.mrb[0].mxu0
      %1378 = vmatprep.mubr.bf16.mxu0 0
      %1379 = vmatmul.mubr.bf16.gmra.mrb[0].mxu0 %v1276
      %v1380 = vpop.f32.mrb[0].mxu0
      %v1381 = vadd.f32 0.0, %v1380
      %v1382 = vpop.f32.mrb[0].mxu0
      %v1383 = vpop.f32.mrb[0].mxu0
      %v1384 = vadd.f32 0.0, %v1383
      %v1385 = vpop.f32.mrb[0].mxu0
      %1386 = vmatprep.mubr.bf16.mxu0 0
      %1387 = vmatmul.mubr.bf16.gmra.mrb[0].mxu0 %v1279
      %v1388 = vpop.f32.mrb[0].mxu0
      %v1389 = vadd.f32 0.0, %v1388
      %v1390 = vpop.f32.mrb[0].mxu0
      %v1391 = vpop.f32.mrb[0].mxu0
      %v1392 = vadd.f32 0.0, %v1391
      %v1393 = vpop.f32.mrb[0].mxu0
      %1394 = vmatprep.mubr.bf16.mxu0 0
      %1395 = vmatmul.mubr.bf16.gmra.mrb[0].mxu0 %v1282
      %v1396 = vpop.f32.mrb[0].mxu0
      %v1397 = vadd.f32 0.0, %v1396
      %v1398 = vpop.f32.mrb[0].mxu0
      %v1399 = vpop.f32.mrb[0].mxu0
      %v1400 = vadd.f32 0.0, %v1399
      %v1401 = vpop.f32.mrb[0].mxu0
      %1402 = vmatprep.mubr.bf16.mxu0 0
      %1403 = vmatmul.mubr.bf16.gmra.mrb[0].mxu0 %v1285
      %v1404 = vpop.f32.mrb[0].mxu0
      %v1405 = vadd.f32 0.0, %v1404
      %v1406 = vpop.f32.mrb[0].mxu0
      %v1407 = vpop.f32.mrb[0].mxu0
      %v1408 = vadd.f32 0.0, %v1407
      %v1409 = vpop.f32.mrb[0].mxu0
      %1410 = vmatprep.mubr.bf16.mxu0 0
      %1411 = vmatmul.mubr.bf16.gmra.mrb[0].mxu0 %v1288
      %v1412 = vpop.f32.mrb[0].mxu0
      %v1413 = vadd.f32 0.0, %v1412
      %v1414 = vpop.f32.mrb[0].mxu0
      %v1415 = vpop.f32.mrb[0].mxu0
      %v1416 = vadd.f32 0.0, %v1415
      %v1417 = vpop.f32.mrb[0].mxu0
      %1418 = vmatprep.mubr.bf16.mxu0 0
      %1419 = vmatmul.mubr.bf16.gmra.mrb[0].mxu0 %v1291
      %v1420 = vpop.f32.mrb[0].mxu0
      %v1421 = vadd.f32 0.0, %v1420
      %v1422 = vpop.f32.mrb[0].mxu0
      %v1423 = vpop.f32.mrb[0].mxu0
      %v1424 = vadd.f32 0.0, %v1423
      %v1425 = vpop.f32.mrb[0].mxu0
      %1426 = vmatprep.mubr.bf16.mxu0 0
      %1427 = vmatmul.mubr.bf16.gmra.mrb[0].mxu0 %v1294
      %v1428 = vpop.f32.mrb[0].mxu0
      %v1429 = vadd.f32 0.0, %v1428
      %v1430 = vpop.f32.mrb[0].mxu0
      %v1431 = vpop.f32.mrb[0].mxu0
      %v1432 = vadd.f32 0.0, %v1431
      %v1433 = vpop.f32.mrb[0].mxu0
      %1434 = vmatprep.mubr.bf16.mxu0 0
      %1435 = vmatmul.mubr.bf16.gmra.mrb[0].mxu0 %v1297
      %v1436 = vpop.f32.mrb[0].mxu0
      %v1437 = vadd.f32 0.0, %v1436
      %v1438 = vpop.f32.mrb[0].mxu0
      %v1439 = vpop.f32.mrb[0].mxu0
      %v1440 = vadd.f32 0.0, %v1439
      %v1441 = vpop.f32.mrb[0].mxu0
      %1442 = vmatprep.mubr.bf16.mxu0 0
      %1443 = vmatmul.mubr.bf16.gmra.mrb[0].mxu0 %v1300
      %v1444 = vpop.f32.mrb[0].mxu0
      %v1445 = vadd.f32 0.0, %v1444
      %v1446 = vpop.f32.mrb[0].mxu0
      %v1447 = vpop.f32.mrb[0].mxu0
      %v1448 = vadd.f32 0.0, %v1447
      %v1449 = vpop.f32.mrb[0].mxu0
      %1450 = vmatprep.mubr.bf16.mxu0 0
      %1451 = vmatmul.mubr.bf16.gmra.mrb[0].mxu0 %v1303
      %v1452 = vpop.f32.mrb[0].mxu0
      %v1453 = vadd.f32 0.0, %v1452
      %v1454 = vpop.f32.mrb[0].mxu0
      %v1455 = vpop.f32.mrb[0].mxu0
      %v1456 = vadd.f32 0.0, %v1455
      %v1457 = vpop.f32.mrb[0].mxu0
      %1458 = vmatprep.mubr.bf16.mxu0 0
      %1459 = vmatmul.mubr.bf16.gmra.mrb[0].mxu0 %v1306
      %v1460 = vpop.f32.mrb[0].mxu0
      %v1461 = vadd.f32 0.0, %v1460
      %v1462 = vpop.f32.mrb[0].mxu0
      %v1463 = vpop.f32.mrb[0].mxu0
      %v1464 = vadd.f32 0.0, %v1463
      %v1465 = vpop.f32.mrb[0].mxu0
      %1466 = vmatprep.mubr.bf16.mxu0 0
      %1467 = vmatmul.mubr.bf16.gmra.mrb[0].mxu0 %v1309
      %v1468 = vpop.f32.mrb[0].mxu0
      %v1469 = vadd.f32 0.0, %v1468
      %v1470 = vpop.f32.mrb[0].mxu0
      %v1471 = vpop.f32.mrb[0].mxu0
      %v1472 = vadd.f32 0.0, %v1471
      %v1473 = vpop.f32.mrb[0].mxu0
      %1474 = vmatprep.mubr.bf16.mxu0 0
      %1475 = vmatmul.mubr.bf16.gmra.mrb[0].mxu0 %v1312
      %v1476 = vpop.f32.mrb[0].mxu0
      %v1477 = vadd.f32 0.0, %v1476
      %v1478 = vpop.f32.mrb[0].mxu0
      %v1479 = vpop.f32.mrb[0].mxu0
      %v1480 = vadd.f32 0.0, %v1479
      %v1481 = vpop.f32.mrb[0].mxu0
      %1482 = vmatprep.mubr.bf16.mxu0 0
      %1483 = vmatmul.mubr.bf16.gmra.mrb[0].mxu0 %v1315
      %v1484 = vpop.f32.mrb[0].mxu0
      %v1485 = vadd.f32 0.0, %v1484
      %v1486 = vpop.f32.mrb[0].mxu0
      %v1487 = vpop.f32.mrb[0].mxu0
      %v1488 = vadd.f32 0.0, %v1487
      %v1489 = vpop.f32.mrb[0].mxu0
      %1490 = vmatprep.mubr.bf16.mxu0 0
      %1491 = vmatmul.mubr.bf16.gmra.mrb[0].mxu0 %v1318
      %v1492 = vpop.f32.mrb[0].mxu0
      %v1493 = vadd.f32 0.0, %v1492
      %v1494 = vpop.f32.mrb[0].mxu0
      %v1495 = vpop.f32.mrb[0].mxu0
      %v1496 = vadd.f32 0.0, %v1495
      %v1497 = vpop.f32.mrb[0].mxu0
      %1498 = vmatprep.mubr.bf16.mxu0 0
      %1499 = vmatmul.mubr.bf16.gmra.mrb[0].mxu0 %v1321
      %v1500 = vpop.f32.mrb[0].mxu0
      %v1501 = vadd.f32 0.0, %v1500
      %v1502 = vpop.f32.mrb[0].mxu0
      %v1503 = vpop.f32.mrb[0].mxu0
      %v1504 = vadd.f32 0.0, %v1503
      %v1505 = vpop.f32.mrb[0].mxu0
      %1506 = vmatprep.mubr.bf16.mxu0 0
      %1507 = vmatmul.mubr.bf16.gmra.mrb[0].mxu0 %v1324
      %v1508 = vpop.f32.mrb[0].mxu0
      %v1509 = vadd.f32 0.0, %v1508
      %v1510 = vpop.f32.mrb[0].mxu0
      %v1511 = vpop.f32.mrb[0].mxu0
      %v1512 = vadd.f32 0.0, %v1511
      %v1513 = vpop.f32.mrb[0].mxu0
      %1514 = vmatprep.mubr.bf16.mxu0 0
      %1515 = vmatmul.mubr.bf16.gmra.mrb[0].mxu0 %v1327
      %v1516 = vpop.f32.mrb[0].mxu0
      %v1517 = vadd.f32 0.0, %v1516
      %v1518 = vpop.f32.mrb[0].mxu0
      %v1519 = vpop.f32.mrb[0].mxu0
      %v1520 = vadd.f32 0.0, %v1519
      %v1521 = vpop.f32.mrb[0].mxu0
      %1522 = vmatprep.mubr.bf16.mxu0 0
      %1523 = vmatmul.mubr.bf16.gmra.mrb[0].mxu0 %v1330
      %v1524 = vpop.f32.mrb[0].mxu0
      %v1525 = vadd.f32 0.0, %v1524
      %v1526 = vpop.f32.mrb[0].mxu0
      %v1527 = vpop.f32.mrb[0].mxu0
      %v1528 = vadd.f32 0.0, %v1527
      %v1529 = vpop.f32.mrb[0].mxu0
      %1530 = vmatprep.mubr.bf16.mxu0 0
      %1531 = vmatmul.mubr.bf16.gmra.mrb[0].mxu0 %v1333
      %v1532 = vpop.f32.mrb[0].mxu0
      %v1533 = vadd.f32 0.0, %v1532
      %v1534 = vpop.f32.mrb[0].mxu0
      %v1535 = vpop.f32.mrb[0].mxu0
      %v1536 = vpop.f32.mrb[0].mxu0
      %1537 = vdwg.mxu0
      %v1538 = vadd.f32 %v1007, %v1373
      %v1539 = vadd.f32 %v1010, %v1376
      %v1540 = vadd.f32 %v1015, %v1381
      %v1541 = vadd.f32 %v1018, %v1384
      %v1542 = vadd.f32 %v1023, %v1389
      %v1543 = vadd.f32 %v1026, %v1392
      %v1544 = vadd.f32 %v1031, %v1397
      %v1545 = vadd.f32 %v1034, %v1400
      %v1546 = vadd.f32 %v1039, %v1405
      %v1547 = vadd.f32 %v1042, %v1408
      %v1548 = vadd.f32 %v1047, %v1413
      %v1549 = vadd.f32 %v1050, %v1416
      %v1550 = vadd.f32 %v1055, %v1421
      %v1551 = vadd.f32 %v1058, %v1424
      %v1552 = vadd.f32 %v1063, %v1429
      %v1553 = vadd.f32 %v1066, %v1432
      %v1554 = vadd.f32 %v1071, %v1437
      %v1555 = vadd.f32 %v1074, %v1440
      %v1556 = vadd.f32 %v1079, %v1445
      %v1557 = vadd.f32 %v1082, %v1448
      %v1558 = vadd.f32 %v1087, %v1453
      %v1559 = vadd.f32 %v1090, %v1456
      %v1560 = vadd.f32 %v1095, %v1461
      %v1561 = vadd.f32 %v1098, %v1464
      %v1562 = vadd.f32 %v1103, %v1469
      %v1563 = vadd.f32 %v1106, %v1472
      %v1564 = vadd.f32 %v1111, %v1477
      %v1565 = vadd.f32 %v1114, %v1480
      %v1566 = vadd.f32 %v1119, %v1485
      %v1567 = vadd.f32 %v1122, %v1488
      %v1568 = vadd.f32 %v1127, %v1493
      %v1569 = vadd.f32 %v1130, %v1496
      %v1570 = vadd.f32 %v1135, %v1501
      %v1571 = vadd.f32 %v1138, %v1504
      %v1572 = vadd.f32 %v1143, %v1509
      %v1573 = vadd.f32 %v1146, %v1512
      %v1574 = vadd.f32 %v1151, %v1517
      %v1575 = vadd.f32 %v1154, %v1520
      %v1576 = vadd.f32 %v1159, %v1525
      %v1577 = vadd.f32 %v1162, %v1528
      %v1578 = vadd.f32 %v1167, %v1533
      %v1579 = vld [vmem:[%s246 + $0xc] sm:$0x8]
      %v1580 = vld [vmem:[%s246 + $0x10] sm:$0xf]
      %v1581 = vld [vmem:[%s246 + $0x14] sm:$0xf]
      %v1582 = vld [vmem:[%s246 + $0x18] sm:$0xf]
      %v1583 = vld [vmem:[%s246 + $0x1c] sm:$0xf]
      %v1584 = vld [vmem:[%s246 + $0x20] sm:$0xf]
      %v1585 = vld [vmem:[%s246 + $0x24] sm:$0xf]
      %v1586 = vld [vmem:[%s246 + $0x28] sm:$0xf]
      %v1587 = vld [vmem:[%s246 + $0x2c] sm:$0xf]
      %v1588 = vld [vmem:[%s246 + $0x30] sm:$0xf]
      %v1589 = vld [vmem:[%s246 + $0x34] sm:$0xf]
      %v1590 = vld [vmem:[%s246 + $0x38] sm:$0xf]
      %v1591 = vld [vmem:[%s246 + $0x3c] sm:$0xf]
      %v1592 = vld [vmem:[%s246 + $0x40] sm:$0xf]
      %v1593 = vld [vmem:[%s246 + $0x44] sm:$0xf]
      %v1594 = vld [vmem:[%s246 + $0x48] sm:$0xf]
      %v1595 = vld [vmem:[%s246 + $0x4c] sm:$0xf]
      %v1596 = vld [vmem:[%s246 + $0x50] sm:$0xf]
      %v1597 = vld [vmem:[%s246 + $0x54] sm:$0xf]
      %v1598 = vld [vmem:[%s246 + $0x58] sm:$0xf]
      %v1599 = vld [vmem:[%s246 + $0x5c] sm:$0xf]
      %v1600 = vld [vmem:[%s246 + $0x60] sm:$0xf]
      %v1601 = vld [vmem:[%s246 + $0x64] sm:$0xf]
      %v1602 = vld [vmem:[%s246 + $0x68] sm:$0xf]
      %v1603 = vld [vmem:[%s246 + $0x6c] sm:$0xf]
      %v1604 = vld [vmem:[%s246 + $0x70] sm:$0xf]
      %v1605 = vld [vmem:[%s246 + $0x74] sm:$0xf]
      %v1606 = vld [vmem:[%s246 + $0x78] sm:$0xf]
      %v1607 = vld [vmem:[%s246 + $0x7c] sm:$0xf]
      %v1608 = vld [vmem:[%s246 + $0x80] sm:$0xf]
      %v1609 = vld [vmem:[%s246 + $0x84] sm:$0xf]
      %v1610 = vld [vmem:[%s246 + $0x88] sm:$0xf]
      %v1611 = vld [vmem:[%s246 + $0x8c] sm:$0xf]
      %v1612 = vld [vmem:[%s246 + $0x90] sm:$0xf]
      %v1613 = vld [vmem:[%s246 + $0x94] sm:$0xf]
      %v1614 = vld [vmem:[%s246 + $0x98] sm:$0xf]
      %v1615 = vld [vmem:[%s246 + $0x9c] sm:$0xf]
      %v1616 = vld [vmem:[%s246 + $0xa0] sm:$0xf]
      %v1617 = vld [vmem:[%s246 + $0xa4] sm:$0xf]
      %v1618 = vld [vmem:[%s246 + $0xa8] sm:$0xf]
      %v1619 = vld [vmem:[%s246 + $0xac] sm:$0xf]
      %v1620 = vld [vmem:[%s246 + $0xb0] sm:$0x3]
      %s1621 = scalar_lea.vmem %s2, 12
      %v1622 = vld [vmem:[%s1621] sm:$0xf]
      %v1665 = vunpack.c.l.b16 %v1579
      %v1666 = vunpack.c.l.b16 %v1580
      %v1667 = vunpack.c.l.b16 %v1581
      %v1668 = vunpack.c.l.b16 %v1582
      %v1669 = vunpack.c.l.b16 %v1583
      %v1670 = vunpack.c.l.b16 %v1584
      %v1671 = vunpack.c.l.b16 %v1585
      %v1672 = vunpack.c.l.b16 %v1586
      %v1673 = vunpack.c.l.b16 %v1587
      %v1674 = vunpack.c.l.b16 %v1588
      %v1675 = vunpack.c.l.b16 %v1589
      %v1676 = vunpack.c.l.b16 %v1590
      %v1677 = vunpack.c.l.b16 %v1591
      %v1678 = vunpack.c.l.b16 %v1592
      %v1679 = vunpack.c.l.b16 %v1593
      %v1680 = vunpack.c.l.b16 %v1594
      %v1681 = vunpack.c.l.b16 %v1595
      %v1682 = vunpack.c.l.b16 %v1596
      %v1683 = vunpack.c.l.b16 %v1597
      %v1684 = vunpack.c.l.b16 %v1598
      %v1685 = vunpack.c.l.b16 %v1599
      %v1686 = vunpack.c.l.b16 %v1600
      %v1687 = vunpack.c.l.b16 %v1601
      %v1688 = vunpack.c.l.b16 %v1602
      %v1689 = vunpack.c.l.b16 %v1603
      %v1690 = vunpack.c.l.b16 %v1604
      %v1691 = vunpack.c.l.b16 %v1605
      %v1692 = vunpack.c.l.b16 %v1606
      %v1693 = vunpack.c.l.b16 %v1607
      %v1694 = vunpack.c.l.b16 %v1608
      %v1695 = vunpack.c.l.b16 %v1609
      %v1696 = vunpack.c.l.b16 %v1610
      %v1697 = vunpack.c.l.b16 %v1611
      %v1698 = vunpack.c.l.b16 %v1612
      %v1699 = vunpack.c.l.b16 %v1613
      %v1700 = vunpack.c.l.b16 %v1614
      %v1701 = vunpack.c.l.b16 %v1615
      %v1702 = vunpack.c.l.b16 %v1616
      %v1703 = vunpack.c.l.b16 %v1617
      %v1704 = vunpack.c.l.b16 %v1618
      %v1705 = vunpack.c.l.b16 %v1619
      %v1706 = vunpack.c.l.b16 %v1620
      %v1707 = vpack.c.b16 %v1666, %v1665
      %v1708 = vpack.c.b16 %v1668, %v1667
      %v1709 = vpack.c.b16 %v1670, %v1669
      %v1710 = vpack.c.b16 %v1672, %v1671
      %v1711 = vpack.c.b16 %v1674, %v1673
      %v1712 = vpack.c.b16 %v1676, %v1675
      %v1713 = vpack.c.b16 %v1678, %v1677
      %v1714 = vpack.c.b16 %v1680, %v1679
      %v1715 = vpack.c.b16 %v1682, %v1681
      %v1716 = vpack.c.b16 %v1684, %v1683
      %v1717 = vpack.c.b16 %v1686, %v1685
      %v1718 = vpack.c.b16 %v1688, %v1687
      %v1719 = vpack.c.b16 %v1690, %v1689
      %v1720 = vpack.c.b16 %v1692, %v1691
      %v1721 = vpack.c.b16 %v1694, %v1693
      %v1722 = vpack.c.b16 %v1696, %v1695
      %v1723 = vpack.c.b16 %v1698, %v1697
      %v1724 = vpack.c.b16 %v1700, %v1699
      %v1725 = vpack.c.b16 %v1702, %v1701
      %v1726 = vpack.c.b16 %v1704, %v1703
      %v1727 = vpack.c.b16 %v1706, %v1705
      %v1729 = vshrl.u32 %v1707, 16
      %v1731 = vrot.slane %v1729, 3
      %v1732 = vshll.u32 %v1707, 16
      %v1734 = vrot.slane %v1732, 4
      %v1735 = vor.u32 %v1731, %v1734
      %v1737 = vshrl.u32 %v1708, 16
      %v1739 = vrot.slane %v1737, 3
      %v1740 = vshll.u32 %v1708, 16
      %v1742 = vrot.slane %v1740, 4
      %v1743 = vor.u32 %v1739, %v1742
      %v1744 = vsel %vm1178, %v1735, %v1743
      %v1746 = vshrl.u32 %v1709, 16
      %v1748 = vrot.slane %v1746, 3
      %v1749 = vshll.u32 %v1709, 16
      %v1751 = vrot.slane %v1749, 4
      %v1752 = vor.u32 %v1748, %v1751
      %v1753 = vsel %vm1178, %v1743, %v1752
      %v1755 = vshrl.u32 %v1710, 16
      %v1757 = vrot.slane %v1755, 3
      %v1758 = vshll.u32 %v1710, 16
      %v1760 = vrot.slane %v1758, 4
      %v1761 = vor.u32 %v1757, %v1760
      %v1762 = vsel %vm1178, %v1752, %v1761
      %v1764 = vshrl.u32 %v1711, 16
      %v1766 = vrot.slane %v1764, 3
      %v1767 = vshll.u32 %v1711, 16
      %v1769 = vrot.slane %v1767, 4
      %v1770 = vor.u32 %v1766, %v1769
      %v1771 = vsel %vm1178, %v1761, %v1770
      %v1773 = vshrl.u32 %v1712, 16
      %v1775 = vrot.slane %v1773, 3
      %v1776 = vshll.u32 %v1712, 16
      %v1778 = vrot.slane %v1776, 4
      %v1779 = vor.u32 %v1775, %v1778
      %v1780 = vsel %vm1178, %v1770, %v1779
      %v1782 = vshrl.u32 %v1713, 16
      %v1784 = vrot.slane %v1782, 3
      %v1785 = vshll.u32 %v1713, 16
      %v1787 = vrot.slane %v1785, 4
      %v1788 = vor.u32 %v1784, %v1787
      %v1789 = vsel %vm1178, %v1779, %v1788
      %v1791 = vshrl.u32 %v1714, 16
      %v1793 = vrot.slane %v1791, 3
      %v1794 = vshll.u32 %v1714, 16
      %v1796 = vrot.slane %v1794, 4
      %v1797 = vor.u32 %v1793, %v1796
      %v1798 = vsel %vm1178, %v1788, %v1797
      %v1800 = vshrl.u32 %v1715, 16
      %v1802 = vrot.slane %v1800, 3
      %v1803 = vshll.u32 %v1715, 16
      %v1805 = vrot.slane %v1803, 4
      %v1806 = vor.u32 %v1802, %v1805
      %v1807 = vsel %vm1178, %v1797, %v1806
      %v1809 = vshrl.u32 %v1716, 16
      %v1811 = vrot.slane %v1809, 3
      %v1812 = vshll.u32 %v1716, 16
      %v1814 = vrot.slane %v1812, 4
      %v1815 = vor.u32 %v1811, %v1814
      %v1816 = vsel %vm1178, %v1806, %v1815
      %v1818 = vshrl.u32 %v1717, 16
      %v1820 = vrot.slane %v1818, 3
      %v1821 = vshll.u32 %v1717, 16
      %v1823 = vrot.slane %v1821, 4
      %v1824 = vor.u32 %v1820, %v1823
      %v1825 = vsel %vm1178, %v1815, %v1824
      %v1827 = vshrl.u32 %v1718, 16
      %v1829 = vrot.slane %v1827, 3
      %v1830 = vshll.u32 %v1718, 16
      %v1832 = vrot.slane %v1830, 4
      %v1833 = vor.u32 %v1829, %v1832
      %v1834 = vsel %vm1178, %v1824, %v1833
      %v1836 = vshrl.u32 %v1719, 16
      %v1838 = vrot.slane %v1836, 3
      %v1839 = vshll.u32 %v1719, 16
      %v1841 = vrot.slane %v1839, 4
      %v1842 = vor.u32 %v1838, %v1841
      %v1843 = vsel %vm1178, %v1833, %v1842
      %v1845 = vshrl.u32 %v1720, 16
      %v1847 = vrot.slane %v1845, 3
      %v1848 = vshll.u32 %v1720, 16
      %v1850 = vrot.slane %v1848, 4
      %v1851 = vor.u32 %v1847, %v1850
      %v1852 = vsel %vm1178, %v1842, %v1851
      %v1854 = vshrl.u32 %v1721, 16
      %v1856 = vrot.slane %v1854, 3
      %v1857 = vshll.u32 %v1721, 16
      %v1859 = vrot.slane %v1857, 4
      %v1860 = vor.u32 %v1856, %v1859
      %v1861 = vsel %vm1178, %v1851, %v1860
      %v1863 = vshrl.u32 %v1722, 16
      %v1865 = vrot.slane %v1863, 3
      %v1866 = vshll.u32 %v1722, 16
      %v1868 = vrot.slane %v1866, 4
      %v1869 = vor.u32 %v1865, %v1868
      %v1870 = vsel %vm1178, %v1860, %v1869
      %v1872 = vshrl.u32 %v1723, 16
      %v1874 = vrot.slane %v1872, 3
      %v1875 = vshll.u32 %v1723, 16
      %v1877 = vrot.slane %v1875, 4
      %v1878 = vor.u32 %v1874, %v1877
      %v1879 = vsel %vm1178, %v1869, %v1878
      %v1881 = vshrl.u32 %v1724, 16
      %v1883 = vrot.slane %v1881, 3
      %v1884 = vshll.u32 %v1724, 16
      %v1886 = vrot.slane %v1884, 4
      %v1887 = vor.u32 %v1883, %v1886
      %v1888 = vsel %vm1178, %v1878, %v1887
      %v1890 = vshrl.u32 %v1725, 16
      %v1892 = vrot.slane %v1890, 3
      %v1893 = vshll.u32 %v1725, 16
      %v1895 = vrot.slane %v1893, 4
      %v1896 = vor.u32 %v1892, %v1895
      %v1897 = vsel %vm1178, %v1887, %v1896
      %v1899 = vshrl.u32 %v1726, 16
      %v1901 = vrot.slane %v1899, 3
      %v1902 = vshll.u32 %v1726, 16
      %v1904 = vrot.slane %v1902, 4
      %v1905 = vor.u32 %v1901, %v1904
      %v1906 = vsel %vm1178, %v1896, %v1905
      %v1908 = vshrl.u32 %v1727, 16
      %v1910 = vrot.slane %v1908, 3
      %v1911 = vshll.u32 %v1727, 16
      %v1913 = vrot.slane %v1911, 4
      %v1914 = vor.u32 %v1910, %v1913
      %v1915 = vsel %vm1178, %v1905, %v1914
      %v1917 = vsel %vm446, %v1744, 0
      %v1920 = vsel %vm446, %v1753, 0
      %v1923 = vsel %vm446, %v1762, 0
      %v1926 = vsel %vm446, %v1771, 0
      %v1929 = vsel %vm446, %v1780, 0
      %v1932 = vsel %vm446, %v1789, 0
      %v1935 = vsel %vm446, %v1798, 0
      %v1938 = vsel %vm446, %v1807, 0
      %v1941 = vsel %vm446, %v1816, 0
      %v1944 = vsel %vm446, %v1825, 0
      %v1947 = vsel %vm446, %v1834, 0
      %v1950 = vsel %vm446, %v1843, 0
      %v1953 = vsel %vm446, %v1852, 0
      %v1956 = vsel %vm446, %v1861, 0
      %v1959 = vsel %vm446, %v1870, 0
      %v1962 = vsel %vm446, %v1879, 0
      %v1965 = vsel %vm446, %v1888, 0
      %v1968 = vsel %vm446, %v1897, 0
      %v1971 = vsel %vm446, %v1906, 0
      %v1974 = vsel %vm446, %v1915, 0
      %v1977 = vsel %vm446, %v1914, 0
      %v1980 = vsel %vm510, %v1622, 0
      %1982 = vmatprep.subr.bf16.mxu0 0
      %1983 = vmatpush1.bf16.msra.mxu0 %v1980
      %1984 = vmatprep.subr.bf16.mxu0 0
      %1985 = vmatpush1.bf16.msra.mxu0 0
      %1986 = vmatprep.subr.bf16.mxu0 0
      %1987 = vmatpush1.bf16.msra.mxu0 0
      %1988 = vmatprep.subr.bf16.mxu0 0
      %1989 = vmatpush1.bf16.msra.mxu0 0
      %1990 = vmatprep.subr.bf16.mxu0 0
      %1991 = vmatpush1.bf16.msra.mxu0 0
      %1992 = vmatprep.subr.bf16.mxu0 0
      %1993 = vmatpush1.bf16.msra.mxu0 0
      %1994 = vmatprep.subr.bf16.mxu0 0
      %1995 = vmatpush1.bf16.msra.mxu0 0
      %1996 = vmatprep.subr.bf16.mxu0 0
      %1997 = vmatpush1.bf16.msra.mxu0 0
      %1998 = vmatprep.subr.bf16.mxu0 0
      %1999 = vmatpush1.bf16.msra.mxu0 0
      %2000 = vmatprep.subr.bf16.mxu0 0
      %2001 = vmatpush1.bf16.msra.mxu0 0
      %2002 = vmatprep.subr.bf16.mxu0 0
      %2003 = vmatpush1.bf16.msra.mxu0 0
      %2004 = vmatprep.subr.bf16.mxu0 0
      %2005 = vmatpush1.bf16.msra.mxu0 0
      %2006 = vmatprep.subr.bf16.mxu0 0
      %2007 = vmatpush1.bf16.msra.mxu0 0
      %2008 = vmatprep.subr.bf16.mxu0 0
      %2009 = vmatpush1.bf16.msra.mxu0 0
      %2010 = vmatprep.subr.bf16.mxu0 0
      %2011 = vmatpush1.bf16.msra.mxu0 0
      %2012 = vmatprep.subr.bf16.mxu0 0
      %2013 = vmatpush1.bf16.msra.mxu0 0
      %2014 = vmatprep.mubr.bf16.mxu0 0
      %2015 = vmatmul.mubr.bf16.gmra.mrb[0].mxu0 %v1917
      %v2016 = vpop.f32.mrb[0].mxu0
      %v2017 = vadd.f32 0.0, %v2016
      %v2018 = vpop.f32.mrb[0].mxu0
      %v2019 = vpop.f32.mrb[0].mxu0
      %v2020 = vadd.f32 0.0, %v2019
      %v2021 = vpop.f32.mrb[0].mxu0
      %2022 = vmatprep.mubr.bf16.mxu0 0
      %2023 = vmatmul.mubr.bf16.gmra.mrb[0].mxu0 %v1920
      %v2024 = vpop.f32.mrb[0].mxu0
      %v2025 = vadd.f32 0.0, %v2024
      %v2026 = vpop.f32.mrb[0].mxu0
      %v2027 = vpop.f32.mrb[0].mxu0
      %v2028 = vadd.f32 0.0, %v2027
      %v2029 = vpop.f32.mrb[0].mxu0
      %2030 = vmatprep.mubr.bf16.mxu0 0
      %2031 = vmatmul.mubr.bf16.gmra.mrb[0].mxu0 %v1923
      %v2032 = vpop.f32.mrb[0].mxu0
      %v2033 = vadd.f32 0.0, %v2032
      %v2034 = vpop.f32.mrb[0].mxu0
      %v2035 = vpop.f32.mrb[0].mxu0
      %v2036 = vadd.f32 0.0, %v2035
      %v2037 = vpop.f32.mrb[0].mxu0
      %2038 = vmatprep.mubr.bf16.mxu0 0
      %2039 = vmatmul.mubr.bf16.gmra.mrb[0].mxu0 %v1926
      %v2040 = vpop.f32.mrb[0].mxu0
      %v2041 = vadd.f32 0.0, %v2040
      %v2042 = vpop.f32.mrb[0].mxu0
      %v2043 = vpop.f32.mrb[0].mxu0
      %v2044 = vadd.f32 0.0, %v2043
      %v2045 = vpop.f32.mrb[0].mxu0
      %2046 = vmatprep.mubr.bf16.mxu0 0
      %2047 = vmatmul.mubr.bf16.gmra.mrb[0].mxu0 %v1929
      %v2048 = vpop.f32.mrb[0].mxu0
      %v2049 = vadd.f32 0.0, %v2048
      %v2050 = vpop.f32.mrb[0].mxu0
      %v2051 = vpop.f32.mrb[0].mxu0
      %v2052 = vadd.f32 0.0, %v2051
      %v2053 = vpop.f32.mrb[0].mxu0
      %2054 = vmatprep.mubr.bf16.mxu0 0
      %2055 = vmatmul.mubr.bf16.gmra.mrb[0].mxu0 %v1932
      %v2056 = vpop.f32.mrb[0].mxu0
      %v2057 = vadd.f32 0.0, %v2056
      %v2058 = vpop.f32.mrb[0].mxu0
      %v2059 = vpop.f32.mrb[0].mxu0
      %v2060 = vadd.f32 0.0, %v2059
      %v2061 = vpop.f32.mrb[0].mxu0
      %2062 = vmatprep.mubr.bf16.mxu0 0
      %2063 = vmatmul.mubr.bf16.gmra.mrb[0].mxu0 %v1935
      %v2064 = vpop.f32.mrb[0].mxu0
      %v2065 = vadd.f32 0.0, %v2064
      %v2066 = vpop.f32.mrb[0].mxu0
      %v2067 = vpop.f32.mrb[0].mxu0
      %v2068 = vadd.f32 0.0, %v2067
      %v2069 = vpop.f32.mrb[0].mxu0
      %2070 = vmatprep.mubr.bf16.mxu0 0
      %2071 = vmatmul.mubr.bf16.gmra.mrb[0].mxu0 %v1938
      %v2072 = vpop.f32.mrb[0].mxu0
      %v2073 = vadd.f32 0.0, %v2072
      %v2074 = vpop.f32.mrb[0].mxu0
      %v2075 = vpop.f32.mrb[0].mxu0
      %v2076 = vadd.f32 0.0, %v2075
      %v2077 = vpop.f32.mrb[0].mxu0
      %2078 = vmatprep.mubr.bf16.mxu0 0
      %2079 = vmatmul.mubr.bf16.gmra.mrb[0].mxu0 %v1941
      %v2080 = vpop.f32.mrb[0].mxu0
      %v2081 = vadd.f32 0.0, %v2080
      %v2082 = vpop.f32.mrb[0].mxu0
      %v2083 = vpop.f32.mrb[0].mxu0
      %v2084 = vadd.f32 0.0, %v2083
      %v2085 = vpop.f32.mrb[0].mxu0
      %2086 = vmatprep.mubr.bf16.mxu0 0
      %2087 = vmatmul.mubr.bf16.gmra.mrb[0].mxu0 %v1944
      %v2088 = vpop.f32.mrb[0].mxu0
      %v2089 = vadd.f32 0.0, %v2088
      %v2090 = vpop.f32.mrb[0].mxu0
      %v2091 = vpop.f32.mrb[0].mxu0
      %v2092 = vadd.f32 0.0, %v2091
      %v2093 = vpop.f32.mrb[0].mxu0
      %2094 = vmatprep.mubr.bf16.mxu0 0
      %2095 = vmatmul.mubr.bf16.gmra.mrb[0].mxu0 %v1947
      %v2096 = vpop.f32.mrb[0].mxu0
      %v2097 = vadd.f32 0.0, %v2096
      %v2098 = vpop.f32.mrb[0].mxu0
      %v2099 = vpop.f32.mrb[0].mxu0
      %v2100 = vadd.f32 0.0, %v2099
      %v2101 = vpop.f32.mrb[0].mxu0
      %2102 = vmatprep.mubr.bf16.mxu0 0
      %2103 = vmatmul.mubr.bf16.gmra.mrb[0].mxu0 %v1950
      %v2104 = vpop.f32.mrb[0].mxu0
      %v2105 = vadd.f32 0.0, %v2104
      %v2106 = vpop.f32.mrb[0].mxu0
      %v2107 = vpop.f32.mrb[0].mxu0
      %v2108 = vadd.f32 0.0, %v2107
      %v2109 = vpop.f32.mrb[0].mxu0
      %2110 = vmatprep.mubr.bf16.mxu0 0
      %2111 = vmatmul.mubr.bf16.gmra.mrb[0].mxu0 %v1953
      %v2112 = vpop.f32.mrb[0].mxu0
      %v2113 = vadd.f32 0.0, %v2112
      %v2114 = vpop.f32.mrb[0].mxu0
      %v2115 = vpop.f32.mrb[0].mxu0
      %v2116 = vadd.f32 0.0, %v2115
      %v2117 = vpop.f32.mrb[0].mxu0
      %2118 = vmatprep.mubr.bf16.mxu0 0
      %2119 = vmatmul.mubr.bf16.gmra.mrb[0].mxu0 %v1956
      %v2120 = vpop.f32.mrb[0].mxu0
      %v2121 = vadd.f32 0.0, %v2120
      %v2122 = vpop.f32.mrb[0].mxu0
      %v2123 = vpop.f32.mrb[0].mxu0
      %v2124 = vadd.f32 0.0, %v2123
      %v2125 = vpop.f32.mrb[0].mxu0
      %2126 = vmatprep.mubr.bf16.mxu0 0
      %2127 = vmatmul.mubr.bf16.gmra.mrb[0].mxu0 %v1959
      %v2128 = vpop.f32.mrb[0].mxu0
      %v2129 = vadd.f32 0.0, %v2128
      %v2130 = vpop.f32.mrb[0].mxu0
      %v2131 = vpop.f32.mrb[0].mxu0
      %v2132 = vadd.f32 0.0, %v2131
      %v2133 = vpop.f32.mrb[0].mxu0
      %2134 = vmatprep.mubr.bf16.mxu0 0
      %2135 = vmatmul.mubr.bf16.gmra.mrb[0].mxu0 %v1962
      %v2136 = vpop.f32.mrb[0].mxu0
      %v2137 = vadd.f32 0.0, %v2136
      %v2138 = vpop.f32.mrb[0].mxu0
      %v2139 = vpop.f32.mrb[0].mxu0
      %v2140 = vadd.f32 0.0, %v2139
      %v2141 = vpop.f32.mrb[0].mxu0
      %2142 = vmatprep.mubr.bf16.mxu0 0
      %2143 = vmatmul.mubr.bf16.gmra.mrb[0].mxu0 %v1965
      %v2144 = vpop.f32.mrb[0].mxu0
      %v2145 = vadd.f32 0.0, %v2144
      %v2146 = vpop.f32.mrb[0].mxu0
      %v2147 = vpop.f32.mrb[0].mxu0
      %v2148 = vadd.f32 0.0, %v2147
      %v2149 = vpop.f32.mrb[0].mxu0
      %2150 = vmatprep.mubr.bf16.mxu0 0
      %2151 = vmatmul.mubr.bf16.gmra.mrb[0].mxu0 %v1968
      %v2152 = vpop.f32.mrb[0].mxu0
      %v2153 = vadd.f32 0.0, %v2152
      %v2154 = vpop.f32.mrb[0].mxu0
      %v2155 = vpop.f32.mrb[0].mxu0
      %v2156 = vadd.f32 0.0, %v2155
      %v2157 = vpop.f32.mrb[0].mxu0
      %2158 = vmatprep.mubr.bf16.mxu0 0
      %2159 = vmatmul.mubr.bf16.gmra.mrb[0].mxu0 %v1971
      %v2160 = vpop.f32.mrb[0].mxu0
      %v2161 = vadd.f32 0.0, %v2160
      %v2162 = vpop.f32.mrb[0].mxu0
      %v2163 = vpop.f32.mrb[0].mxu0
      %v2164 = vadd.f32 0.0, %v2163
      %v2165 = vpop.f32.mrb[0].mxu0
      %2166 = vmatprep.mubr.bf16.mxu0 0
      %2167 = vmatmul.mubr.bf16.gmra.mrb[0].mxu0 %v1974
      %v2168 = vpop.f32.mrb[0].mxu0
      %v2169 = vadd.f32 0.0, %v2168
      %v2170 = vpop.f32.mrb[0].mxu0
      %v2171 = vpop.f32.mrb[0].mxu0
      %v2172 = vadd.f32 0.0, %v2171
      %v2173 = vpop.f32.mrb[0].mxu0
      %2174 = vmatprep.mubr.bf16.mxu0 0
      %2175 = vmatmul.mubr.bf16.gmra.mrb[0].mxu0 %v1977
      %v2176 = vpop.f32.mrb[0].mxu0
      %v2177 = vadd.f32 0.0, %v2176
      %v2178 = vpop.f32.mrb[0].mxu0
      %v2179 = vpop.f32.mrb[0].mxu0
      %v2180 = vpop.f32.mrb[0].mxu0
      %2181 = vdwg.mxu0
      %v2182 = vadd.f32 %v1538, %v2017
      %v2183 = vadd.f32 %v1539, %v2020
      %v2184 = vadd.f32 %v1540, %v2025
      %v2185 = vadd.f32 %v1541, %v2028
      %v2186 = vadd.f32 %v1542, %v2033
      %v2187 = vadd.f32 %v1543, %v2036
      %v2188 = vadd.f32 %v1544, %v2041
      %v2189 = vadd.f32 %v1545, %v2044
      %v2190 = vadd.f32 %v1546, %v2049
      %v2191 = vadd.f32 %v1547, %v2052
      %v2192 = vadd.f32 %v1548, %v2057
      %v2193 = vadd.f32 %v1549, %v2060
      %v2194 = vadd.f32 %v1550, %v2065
      %v2195 = vadd.f32 %v1551, %v2068
      %v2196 = vadd.f32 %v1552, %v2073
      %v2197 = vadd.f32 %v1553, %v2076
      %v2198 = vadd.f32 %v1554, %v2081
      %v2199 = vadd.f32 %v1555, %v2084
      %v2200 = vadd.f32 %v1556, %v2089
      %v2201 = vadd.f32 %v1557, %v2092
      %v2202 = vadd.f32 %v1558, %v2097
      %v2203 = vadd.f32 %v1559, %v2100
      %v2204 = vadd.f32 %v1560, %v2105
      %v2205 = vadd.f32 %v1561, %v2108
      %v2206 = vadd.f32 %v1562, %v2113
      %v2207 = vadd.f32 %v1563, %v2116
      %v2208 = vadd.f32 %v1564, %v2121
      %v2209 = vadd.f32 %v1565, %v2124
      %v2210 = vadd.f32 %v1566, %v2129
      %v2211 = vadd.f32 %v1567, %v2132
      %v2212 = vadd.f32 %v1568, %v2137
      %v2213 = vadd.f32 %v1569, %v2140
      %v2214 = vadd.f32 %v1570, %v2145
      %v2215 = vadd.f32 %v1571, %v2148
      %v2216 = vadd.f32 %v1572, %v2153
      %v2217 = vadd.f32 %v1573, %v2156
      %v2218 = vadd.f32 %v1574, %v2161
      %v2219 = vadd.f32 %v1575, %v2164
      %v2220 = vadd.f32 %v1576, %v2169
      %v2221 = vadd.f32 %v1577, %v2172
      %v2222 = vadd.f32 %v1578, %v2177
      %s2223 = scalar_lea.vmem %s2, 16
      %v2224 = vld [vmem:[%s2223] sm:$0xf]
      %v2225 = vpack.c.b16 %v1667, %v1666
      %v2226 = vpack.c.b16 %v1669, %v1668
      %v2227 = vpack.c.b16 %v1671, %v1670
      %v2228 = vpack.c.b16 %v1673, %v1672
      %v2229 = vpack.c.b16 %v1675, %v1674
      %v2230 = vpack.c.b16 %v1677, %v1676
      %v2231 = vpack.c.b16 %v1679, %v1678
      %v2232 = vpack.c.b16 %v1681, %v1680
      %v2233 = vpack.c.b16 %v1683, %v1682
      %v2234 = vpack.c.b16 %v1685, %v1684
      %v2235 = vpack.c.b16 %v1687, %v1686
      %v2236 = vpack.c.b16 %v1689, %v1688
      %v2237 = vpack.c.b16 %v1691, %v1690
      %v2238 = vpack.c.b16 %v1693, %v1692
      %v2239 = vpack.c.b16 %v1695, %v1694
      %v2240 = vpack.c.b16 %v1697, %v1696
      %v2241 = vpack.c.b16 %v1699, %v1698
      %v2242 = vpack.c.b16 %v1701, %v1700
      %v2243 = vpack.c.b16 %v1703, %v1702
      %v2244 = vpack.c.b16 %v1705, %v1704
      %v2245 = vpack.c.b16 %v1706, %v1706
      %v2247 = vsel %vm446, %v2225, 0
      %v2250 = vsel %vm446, %v2226, 0
      %v2253 = vsel %vm446, %v2227, 0
      %v2256 = vsel %vm446, %v2228, 0
      %v2259 = vsel %vm446, %v2229, 0
      %v2262 = vsel %vm446, %v2230, 0
      %v2265 = vsel %vm446, %v2231, 0
      %v2268 = vsel %vm446, %v2232, 0
      %v2271 = vsel %vm446, %v2233, 0
      %v2274 = vsel %vm446, %v2234, 0
      %v2277 = vsel %vm446, %v2235, 0
      %v2280 = vsel %vm446, %v2236, 0
      %v2283 = vsel %vm446, %v2237, 0
      %v2286 = vsel %vm446, %v2238, 0
      %v2289 = vsel %vm446, %v2239, 0
      %v2292 = vsel %vm446, %v2240, 0
      %v2295 = vsel %vm446, %v2241, 0
      %v2298 = vsel %vm446, %v2242, 0
      %v2301 = vsel %vm446, %v2243, 0
      %v2304 = vsel %vm446, %v2244, 0
      %v2307 = vsel %vm446, %v2245, 0
      %v2310 = vsel %vm510, %v2224, 0
      %2312 = vmatprep.subr.bf16.mxu0 0
      %2313 = vmatpush1.bf16.msra.mxu0 %v2310
      %2314 = vmatprep.subr.bf16.mxu0 0
      %2315 = vmatpush1.bf16.msra.mxu0 0
      %2316 = vmatprep.subr.bf16.mxu0 0
      %2317 = vmatpush1.bf16.msra.mxu0 0
      %2318 = vmatprep.subr.bf16.mxu0 0
      %2319 = vmatpush1.bf16.msra.mxu0 0
      %2320 = vmatprep.subr.bf16.mxu0 0
      %2321 = vmatpush1.bf16.msra.mxu0 0
      %2322 = vmatprep.subr.bf16.mxu0 0
      %2323 = vmatpush1.bf16.msra.mxu0 0
      %2324 = vmatprep.subr.bf16.mxu0 0
      %2325 = vmatpush1.bf16.msra.mxu0 0
      %2326 = vmatprep.subr.bf16.mxu0 0
      %2327 = vmatpush1.bf16.msra.mxu0 0
      %2328 = vmatprep.subr.bf16.mxu0 0
      %2329 = vmatpush1.bf16.msra.mxu0 0
      %2330 = vmatprep.subr.bf16.mxu0 0
      %2331 = vmatpush1.bf16.msra.mxu0 0
      %2332 = vmatprep.subr.bf16.mxu0 0
      %2333 = vmatpush1.bf16.msra.mxu0 0
      %2334 = vmatprep.subr.bf16.mxu0 0
      %2335 = vmatpush1.bf16.msra.mxu0 0
      %2336 = vmatprep.subr.bf16.mxu0 0
      %2337 = vmatpush1.bf16.msra.mxu0 0
      %2338 = vmatprep.subr.bf16.mxu0 0
      %2339 = vmatpush1.bf16.msra.mxu0 0
      %2340 = vmatprep.subr.bf16.mxu0 0
      %2341 = vmatpush1.bf16.msra.mxu0 0
      %2342 = vmatprep.subr.bf16.mxu0 0
      %2343 = vmatpush1.bf16.msra.mxu0 0
      %2344 = vmatprep.mubr.bf16.mxu0 0
      %2345 = vmatmul.mubr.bf16.gmra.mrb[0].mxu0 %v2247
      %v2346 = vpop.f32.mrb[0].mxu0
      %v2347 = vadd.f32 0.0, %v2346
      %v2348 = vpop.f32.mrb[0].mxu0
      %v2349 = vpop.f32.mrb[0].mxu0
      %v2350 = vadd.f32 0.0, %v2349
      %v2351 = vpop.f32.mrb[0].mxu0
      %2352 = vmatprep.mubr.bf16.mxu0 0
      %2353 = vmatmul.mubr.bf16.gmra.mrb[0].mxu0 %v2250
      %v2354 = vpop.f32.mrb[0].mxu0
      %v2355 = vadd.f32 0.0, %v2354
      %v2356 = vpop.f32.mrb[0].mxu0
      %v2357 = vpop.f32.mrb[0].mxu0
      %v2358 = vadd.f32 0.0, %v2357
      %v2359 = vpop.f32.mrb[0].mxu0
      %2360 = vmatprep.mubr.bf16.mxu0 0
      %2361 = vmatmul.mubr.bf16.gmra.mrb[0].mxu0 %v2253
      %v2362 = vpop.f32.mrb[0].mxu0
      %v2363 = vadd.f32 0.0, %v2362
      %v2364 = vpop.f32.mrb[0].mxu0
      %v2365 = vpop.f32.mrb[0].mxu0
      %v2366 = vadd.f32 0.0, %v2365
      %v2367 = vpop.f32.mrb[0].mxu0
      %2368 = vmatprep.mubr.bf16.mxu0 0
      %2369 = vmatmul.mubr.bf16.gmra.mrb[0].mxu0 %v2256
      %v2370 = vpop.f32.mrb[0].mxu0
      %v2371 = vadd.f32 0.0, %v2370
      %v2372 = vpop.f32.mrb[0].mxu0
      %v2373 = vpop.f32.mrb[0].mxu0
      %v2374 = vadd.f32 0.0, %v2373
      %v2375 = vpop.f32.mrb[0].mxu0
      %2376 = vmatprep.mubr.bf16.mxu0 0
      %2377 = vmatmul.mubr.bf16.gmra.mrb[0].mxu0 %v2259
      %v2378 = vpop.f32.mrb[0].mxu0
      %v2379 = vadd.f32 0.0, %v2378
      %v2380 = vpop.f32.mrb[0].mxu0
      %v2381 = vpop.f32.mrb[0].mxu0
      %v2382 = vadd.f32 0.0, %v2381
      %v2383 = vpop.f32.mrb[0].mxu0
      %2384 = vmatprep.mubr.bf16.mxu0 0
      %2385 = vmatmul.mubr.bf16.gmra.mrb[0].mxu0 %v2262
      %v2386 = vpop.f32.mrb[0].mxu0
      %v2387 = vadd.f32 0.0, %v2386
      %v2388 = vpop.f32.mrb[0].mxu0
      %v2389 = vpop.f32.mrb[0].mxu0
      %v2390 = vadd.f32 0.0, %v2389
      %v2391 = vpop.f32.mrb[0].mxu0
      %2392 = vmatprep.mubr.bf16.mxu0 0
      %2393 = vmatmul.mubr.bf16.gmra.mrb[0].mxu0 %v2265
      %v2394 = vpop.f32.mrb[0].mxu0
      %v2395 = vadd.f32 0.0, %v2394
      %v2396 = vpop.f32.mrb[0].mxu0
      %v2397 = vpop.f32.mrb[0].mxu0
      %v2398 = vadd.f32 0.0, %v2397
      %v2399 = vpop.f32.mrb[0].mxu0
      %2400 = vmatprep.mubr.bf16.mxu0 0
      %2401 = vmatmul.mubr.bf16.gmra.mrb[0].mxu0 %v2268
      %v2402 = vpop.f32.mrb[0].mxu0
      %v2403 = vadd.f32 0.0, %v2402
      %v2404 = vpop.f32.mrb[0].mxu0
      %v2405 = vpop.f32.mrb[0].mxu0
      %v2406 = vadd.f32 0.0, %v2405
      %v2407 = vpop.f32.mrb[0].mxu0
      %2408 = vmatprep.mubr.bf16.mxu0 0
      %2409 = vmatmul.mubr.bf16.gmra.mrb[0].mxu0 %v2271
      %v2410 = vpop.f32.mrb[0].mxu0
      %v2411 = vadd.f32 0.0, %v2410
      %v2412 = vpop.f32.mrb[0].mxu0
      %v2413 = vpop.f32.mrb[0].mxu0
      %v2414 = vadd.f32 0.0, %v2413
      %v2415 = vpop.f32.mrb[0].mxu0
      %2416 = vmatprep.mubr.bf16.mxu0 0
      %2417 = vmatmul.mubr.bf16.gmra.mrb[0].mxu0 %v2274
      %v2418 = vpop.f32.mrb[0].mxu0
      %v2419 = vadd.f32 0.0, %v2418
      %v2420 = vpop.f32.mrb[0].mxu0
      %v2421 = vpop.f32.mrb[0].mxu0
      %v2422 = vadd.f32 0.0, %v2421
      %v2423 = vpop.f32.mrb[0].mxu0
      %2424 = vmatprep.mubr.bf16.mxu0 0
      %2425 = vmatmul.mubr.bf16.gmra.mrb[0].mxu0 %v2277
      %v2426 = vpop.f32.mrb[0].mxu0
      %v2427 = vadd.f32 0.0, %v2426
      %v2428 = vpop.f32.mrb[0].mxu0
      %v2429 = vpop.f32.mrb[0].mxu0
      %v2430 = vadd.f32 0.0, %v2429
      %v2431 = vpop.f32.mrb[0].mxu0
      %2432 = vmatprep.mubr.bf16.mxu0 0
      %2433 = vmatmul.mubr.bf16.gmra.mrb[0].mxu0 %v2280
      %v2434 = vpop.f32.mrb[0].mxu0
      %v2435 = vadd.f32 0.0, %v2434
      %v2436 = vpop.f32.mrb[0].mxu0
      %v2437 = vpop.f32.mrb[0].mxu0
      %v2438 = vadd.f32 0.0, %v2437
      %v2439 = vpop.f32.mrb[0].mxu0
      %2440 = vmatprep.mubr.bf16.mxu0 0
      %2441 = vmatmul.mubr.bf16.gmra.mrb[0].mxu0 %v2283
      %v2442 = vpop.f32.mrb[0].mxu0
      %v2443 = vadd.f32 0.0, %v2442
      %v2444 = vpop.f32.mrb[0].mxu0
      %v2445 = vpop.f32.mrb[0].mxu0
      %v2446 = vadd.f32 0.0, %v2445
      %v2447 = vpop.f32.mrb[0].mxu0
      %2448 = vmatprep.mubr.bf16.mxu0 0
      %2449 = vmatmul.mubr.bf16.gmra.mrb[0].mxu0 %v2286
      %v2450 = vpop.f32.mrb[0].mxu0
      %v2451 = vadd.f32 0.0, %v2450
      %v2452 = vpop.f32.mrb[0].mxu0
      %v2453 = vpop.f32.mrb[0].mxu0
      %v2454 = vadd.f32 0.0, %v2453
      %v2455 = vpop.f32.mrb[0].mxu0
      %2456 = vmatprep.mubr.bf16.mxu0 0
      %2457 = vmatmul.mubr.bf16.gmra.mrb[0].mxu0 %v2289
      %v2458 = vpop.f32.mrb[0].mxu0
      %v2459 = vadd.f32 0.0, %v2458
      %v2460 = vpop.f32.mrb[0].mxu0
      %v2461 = vpop.f32.mrb[0].mxu0
      %v2462 = vadd.f32 0.0, %v2461
      %v2463 = vpop.f32.mrb[0].mxu0
      %2464 = vmatprep.mubr.bf16.mxu0 0
      %2465 = vmatmul.mubr.bf16.gmra.mrb[0].mxu0 %v2292
      %v2466 = vpop.f32.mrb[0].mxu0
      %v2467 = vadd.f32 0.0, %v2466
      %v2468 = vpop.f32.mrb[0].mxu0
      %v2469 = vpop.f32.mrb[0].mxu0
      %v2470 = vadd.f32 0.0, %v2469
      %v2471 = vpop.f32.mrb[0].mxu0
      %2472 = vmatprep.mubr.bf16.mxu0 0
      %2473 = vmatmul.mubr.bf16.gmra.mrb[0].mxu0 %v2295
      %v2474 = vpop.f32.mrb[0].mxu0
      %v2475 = vadd.f32 0.0, %v2474
      %v2476 = vpop.f32.mrb[0].mxu0
      %v2477 = vpop.f32.mrb[0].mxu0
      %v2478 = vadd.f32 0.0, %v2477
      %v2479 = vpop.f32.mrb[0].mxu0
      %2480 = vmatprep.mubr.bf16.mxu0 0
      %2481 = vmatmul.mubr.bf16.gmra.mrb[0].mxu0 %v2298
      %v2482 = vpop.f32.mrb[0].mxu0
      %v2483 = vadd.f32 0.0, %v2482
      %v2484 = vpop.f32.mrb[0].mxu0
      %v2485 = vpop.f32.mrb[0].mxu0
      %v2486 = vadd.f32 0.0, %v2485
      %v2487 = vpop.f32.mrb[0].mxu0
      %2488 = vmatprep.mubr.bf16.mxu0 0
      %2489 = vmatmul.mubr.bf16.gmra.mrb[0].mxu0 %v2301
      %v2490 = vpop.f32.mrb[0].mxu0
      %v2491 = vadd.f32 0.0, %v2490
      %v2492 = vpop.f32.mrb[0].mxu0
      %v2493 = vpop.f32.mrb[0].mxu0
      %v2494 = vadd.f32 0.0, %v2493
      %v2495 = vpop.f32.mrb[0].mxu0
      %2496 = vmatprep.mubr.bf16.mxu0 0
      %2497 = vmatmul.mubr.bf16.gmra.mrb[0].mxu0 %v2304
      %v2498 = vpop.f32.mrb[0].mxu0
      %v2499 = vadd.f32 0.0, %v2498
      %v2500 = vpop.f32.mrb[0].mxu0
      %v2501 = vpop.f32.mrb[0].mxu0
      %v2502 = vadd.f32 0.0, %v2501
      %v2503 = vpop.f32.mrb[0].mxu0
      %2504 = vmatprep.mubr.bf16.mxu0 0
      %2505 = vmatmul.mubr.bf16.gmra.mrb[0].mxu0 %v2307
      %v2506 = vpop.f32.mrb[0].mxu0
      %v2507 = vadd.f32 0.0, %v2506
      %v2508 = vpop.f32.mrb[0].mxu0
      %v2509 = vpop.f32.mrb[0].mxu0
      %v2510 = vpop.f32.mrb[0].mxu0
      %2511 = vdwg.mxu0
      %v2512 = vadd.f32 %v2182, %v2347
      %v2513 = vadd.f32 %v2183, %v2350
      %v2514 = vadd.f32 %v2184, %v2355
      %v2515 = vadd.f32 %v2185, %v2358
      %v2516 = vadd.f32 %v2186, %v2363
      %v2517 = vadd.f32 %v2187, %v2366
      %v2518 = vadd.f32 %v2188, %v2371
      %v2519 = vadd.f32 %v2189, %v2374
      %v2520 = vadd.f32 %v2190, %v2379
      %v2521 = vadd.f32 %v2191, %v2382
      %v2522 = vadd.f32 %v2192, %v2387
      %v2523 = vadd.f32 %v2193, %v2390
      %v2524 = vadd.f32 %v2194, %v2395
      %v2525 = vadd.f32 %v2195, %v2398
      %v2526 = vadd.f32 %v2196, %v2403
      %v2527 = vadd.f32 %v2197, %v2406
      %v2528 = vadd.f32 %v2198, %v2411
      %v2529 = vadd.f32 %v2199, %v2414
      %v2530 = vadd.f32 %v2200, %v2419
      %v2531 = vadd.f32 %v2201, %v2422
      %v2532 = vadd.f32 %v2202, %v2427
      %v2533 = vadd.f32 %v2203, %v2430
      %v2534 = vadd.f32 %v2204, %v2435
      %v2535 = vadd.f32 %v2205, %v2438
      %v2536 = vadd.f32 %v2206, %v2443
      %v2537 = vadd.f32 %v2207, %v2446
      %v2538 = vadd.f32 %v2208, %v2451
      %v2539 = vadd.f32 %v2209, %v2454
      %v2540 = vadd.f32 %v2210, %v2459
      %v2541 = vadd.f32 %v2211, %v2462
      %v2542 = vadd.f32 %v2212, %v2467
      %v2543 = vadd.f32 %v2213, %v2470
      %v2544 = vadd.f32 %v2214, %v2475
      %v2545 = vadd.f32 %v2215, %v2478
      %v2546 = vadd.f32 %v2216, %v2483
      %v2547 = vadd.f32 %v2217, %v2486
      %v2548 = vadd.f32 %v2218, %v2491
      %v2549 = vadd.f32 %v2219, %v2494
      %v2550 = vadd.f32 %v2220, %v2499
      %v2551 = vadd.f32 %v2221, %v2502
      %v2552 = vadd.f32 %v2222, %v2507
      %v2553 = vld [vmem:[%s246 + $0xb0] sm:$0x7]
      %s2554 = scalar_lea.vmem %s2, 20
      %v2555 = vld [vmem:[%s2554] sm:$0xf]
      %v2557 = vunpack.c.l.b16 %v2553
      %v2558 = vpack.c.b16 %v2557, %v2557
      %vm2559 = vsmask.f32 7424
      %v2560 = vshrl.u32 %v2225, 16
      %v2562 = vshll.u32 %v2225, 16
      %v2564 = vrot.slane %v2562, 1
      %v2565 = vor.u32 %v2560, %v2564
      %v2566 = vshll.u32 %v2226, 16
      %v2568 = vrot.slane %v2566, 1
      %v2569 = vsel %vm2559, %v2565, %v2568
      %v2570 = vshrl.u32 %v2226, 16
      %v2572 = vor.u32 %v2570, %v2568
      %v2573 = vshll.u32 %v2227, 16
      %v2575 = vrot.slane %v2573, 1
      %v2576 = vsel %vm2559, %v2572, %v2575
      %v2577 = vshrl.u32 %v2227, 16
      %v2579 = vor.u32 %v2577, %v2575
      %v2580 = vshll.u32 %v2228, 16
      %v2582 = vrot.slane %v2580, 1
      %v2583 = vsel %vm2559, %v2579, %v2582
      %v2584 = vshrl.u32 %v2228, 16
      %v2586 = vor.u32 %v2584, %v2582
      %v2587 = vshll.u32 %v2229, 16
      %v2589 = vrot.slane %v2587, 1
      %v2590 = vsel %vm2559, %v2586, %v2589
      %v2591 = vshrl.u32 %v2229, 16
      %v2593 = vor.u32 %v2591, %v2589
      %v2594 = vshll.u32 %v2230, 16
      %v2596 = vrot.slane %v2594, 1
      %v2597 = vsel %vm2559, %v2593, %v2596
      %v2598 = vshrl.u32 %v2230, 16
      %v2600 = vor.u32 %v2598, %v2596
      %v2601 = vshll.u32 %v2231, 16
      %v2603 = vrot.slane %v2601, 1
      %v2604 = vsel %vm2559, %v2600, %v2603
      %v2605 = vshrl.u32 %v2231, 16
      %v2607 = vor.u32 %v2605, %v2603
      %v2608 = vshll.u32 %v2232, 16
      %v2610 = vrot.slane %v2608, 1
      %v2611 = vsel %vm2559, %v2607, %v2610
      %v2612 = vshrl.u32 %v2232, 16
      %v2614 = vor.u32 %v2612, %v2610
      %v2615 = vshll.u32 %v2233, 16
      %v2617 = vrot.slane %v2615, 1
      %v2618 = vsel %vm2559, %v2614, %v2617
      %v2619 = vshrl.u32 %v2233, 16
      %v2621 = vor.u32 %v2619, %v2617
      %v2622 = vshll.u32 %v2234, 16
      %v2624 = vrot.slane %v2622, 1
      %v2625 = vsel %vm2559, %v2621, %v2624
      %v2626 = vshrl.u32 %v2234, 16
      %v2628 = vor.u32 %v2626, %v2624
      %v2629 = vshll.u32 %v2235, 16
      %v2631 = vrot.slane %v2629, 1
      %v2632 = vsel %vm2559, %v2628, %v2631
      %v2633 = vshrl.u32 %v2235, 16
      %v2635 = vor.u32 %v2633, %v2631
      %v2636 = vshll.u32 %v2236, 16
      %v2638 = vrot.slane %v2636, 1
      %v2639 = vsel %vm2559, %v2635, %v2638
      %v2640 = vshrl.u32 %v2236, 16
      %v2642 = vor.u32 %v2640, %v2638
      %v2643 = vshll.u32 %v2237, 16
      %v2645 = vrot.slane %v2643, 1
      %v2646 = vsel %vm2559, %v2642, %v2645
      %v2647 = vshrl.u32 %v2237, 16
      %v2649 = vor.u32 %v2647, %v2645
      %v2650 = vshll.u32 %v2238, 16
      %v2652 = vrot.slane %v2650, 1
      %v2653 = vsel %vm2559, %v2649, %v2652
      %v2654 = vshrl.u32 %v2238, 16
      %v2656 = vor.u32 %v2654, %v2652
      %v2657 = vshll.u32 %v2239, 16
      %v2659 = vrot.slane %v2657, 1
      %v2660 = vsel %vm2559, %v2656, %v2659
      %v2661 = vshrl.u32 %v2239, 16
      %v2663 = vor.u32 %v2661, %v2659
      %v2664 = vshll.u32 %v2240, 16
      %v2666 = vrot.slane %v2664, 1
      %v2667 = vsel %vm2559, %v2663, %v2666
      %v2668 = vshrl.u32 %v2240, 16
      %v2670 = vor.u32 %v2668, %v2666
      %v2671 = vshll.u32 %v2241, 16
      %v2673 = vrot.slane %v2671, 1
      %v2674 = vsel %vm2559, %v2670, %v2673
      %v2675 = vshrl.u32 %v2241, 16
      %v2677 = vor.u32 %v2675, %v2673
      %v2678 = vshll.u32 %v2242, 16
      %v2680 = vrot.slane %v2678, 1
      %v2681 = vsel %vm2559, %v2677, %v2680
      %v2682 = vshrl.u32 %v2242, 16
      %v2684 = vor.u32 %v2682, %v2680
      %v2685 = vshll.u32 %v2243, 16
      %v2687 = vrot.slane %v2685, 1
      %v2688 = vsel %vm2559, %v2684, %v2687
      %v2689 = vshrl.u32 %v2243, 16
      %v2691 = vor.u32 %v2689, %v2687
      %v2692 = vshll.u32 %v2244, 16
      %v2694 = vrot.slane %v2692, 1
      %v2695 = vsel %vm2559, %v2691, %v2694
      %v2696 = vshrl.u32 %v2244, 16
      %v2698 = vor.u32 %v2696, %v2694
      %v2700 = vshll.u32 %v2558, 16
      %v2702 = vrot.slane %v2700, 1
      %v2703 = vsel %vm2559, %v2698, %v2702
      %v2704 = vshrl.u32 %v2558, 16
      %v2706 = vor.u32 %v2704, %v2702
      %v2708 = vsel %vm446, %v2569, 0
      %v2711 = vsel %vm446, %v2576, 0
      %v2714 = vsel %vm446, %v2583, 0
      %v2717 = vsel %vm446, %v2590, 0
      %v2720 = vsel %vm446, %v2597, 0
      %v2723 = vsel %vm446, %v2604, 0
      %v2726 = vsel %vm446, %v2611, 0
      %v2729 = vsel %vm446, %v2618, 0
      %v2732 = vsel %vm446, %v2625, 0
      %v2735 = vsel %vm446, %v2632, 0
      %v2738 = vsel %vm446, %v2639, 0
      %v2741 = vsel %vm446, %v2646, 0
      %v2744 = vsel %vm446, %v2653, 0
      %v2747 = vsel %vm446, %v2660, 0
      %v2750 = vsel %vm446, %v2667, 0
      %v2753 = vsel %vm446, %v2674, 0
      %v2756 = vsel %vm446, %v2681, 0
      %v2759 = vsel %vm446, %v2688, 0
      %v2762 = vsel %vm446, %v2695, 0
      %v2765 = vsel %vm446, %v2703, 0
      %v2768 = vsel %vm446, %v2706, 0
      %v2771 = vsel %vm510, %v2555, 0
      %2773 = vmatprep.subr.bf16.mxu0 0
      %2774 = vmatpush1.bf16.msra.mxu0 %v2771
      %2775 = vmatprep.subr.bf16.mxu0 0
      %2776 = vmatpush1.bf16.msra.mxu0 0
      %2777 = vmatprep.subr.bf16.mxu0 0
      %2778 = vmatpush1.bf16.msra.mxu0 0
      %2779 = vmatprep.subr.bf16.mxu0 0
      %2780 = vmatpush1.bf16.msra.mxu0 0
      %2781 = vmatprep.subr.bf16.mxu0 0
      %2782 = vmatpush1.bf16.msra.mxu0 0
      %2783 = vmatprep.subr.bf16.mxu0 0
      %2784 = vmatpush1.bf16.msra.mxu0 0
      %2785 = vmatprep.subr.bf16.mxu0 0
      %2786 = vmatpush1.bf16.msra.mxu0 0
      %2787 = vmatprep.subr.bf16.mxu0 0
      %2788 = vmatpush1.bf16.msra.mxu0 0
      %2789 = vmatprep.subr.bf16.mxu0 0
      %2790 = vmatpush1.bf16.msra.mxu0 0
      %2791 = vmatprep.subr.bf16.mxu0 0
      %2792 = vmatpush1.bf16.msra.mxu0 0
      %2793 = vmatprep.subr.bf16.mxu0 0
      %2794 = vmatpush1.bf16.msra.mxu0 0
      %2795 = vmatprep.subr.bf16.mxu0 0
      %2796 = vmatpush1.bf16.msra.mxu0 0
      %2797 = vmatprep.subr.bf16.mxu0 0
      %2798 = vmatpush1.bf16.msra.mxu0 0
      %2799 = vmatprep.subr.bf16.mxu0 0
      %2800 = vmatpush1.bf16.msra.mxu0 0
      %2801 = vmatprep.subr.bf16.mxu0 0
      %2802 = vmatpush1.bf16.msra.mxu0 0
      %2803 = vmatprep.subr.bf16.mxu0 0
      %2804 = vmatpush1.bf16.msra.mxu0 0
      %2805 = vmatprep.mubr.bf16.mxu0 0
      %2806 = vmatmul.mubr.bf16.gmra.mrb[0].mxu0 %v2708
      %v2807 = vpop.f32.mrb[0].mxu0
      %v2808 = vadd.f32 0.0, %v2807
      %v2809 = vpop.f32.mrb[0].mxu0
      %v2810 = vpop.f32.mrb[0].mxu0
      %v2811 = vadd.f32 0.0, %v2810
      %v2812 = vpop.f32.mrb[0].mxu0
      %2813 = vmatprep.mubr.bf16.mxu0 0
      %2814 = vmatmul.mubr.bf16.gmra.mrb[0].mxu0 %v2711
      %v2815 = vpop.f32.mrb[0].mxu0
      %v2816 = vadd.f32 0.0, %v2815
      %v2817 = vpop.f32.mrb[0].mxu0
      %v2818 = vpop.f32.mrb[0].mxu0
      %v2819 = vadd.f32 0.0, %v2818
      %v2820 = vpop.f32.mrb[0].mxu0
      %2821 = vmatprep.mubr.bf16.mxu0 0
      %2822 = vmatmul.mubr.bf16.gmra.mrb[0].mxu0 %v2714
      %v2823 = vpop.f32.mrb[0].mxu0
      %v2824 = vadd.f32 0.0, %v2823
      %v2825 = vpop.f32.mrb[0].mxu0
      %v2826 = vpop.f32.mrb[0].mxu0
      %v2827 = vadd.f32 0.0, %v2826
      %v2828 = vpop.f32.mrb[0].mxu0
      %2829 = vmatprep.mubr.bf16.mxu0 0
      %2830 = vmatmul.mubr.bf16.gmra.mrb[0].mxu0 %v2717
      %v2831 = vpop.f32.mrb[0].mxu0
      %v2832 = vadd.f32 0.0, %v2831
      %v2833 = vpop.f32.mrb[0].mxu0
      %v2834 = vpop.f32.mrb[0].mxu0
      %v2835 = vadd.f32 0.0, %v2834
      %v2836 = vpop.f32.mrb[0].mxu0
      %2837 = vmatprep.mubr.bf16.mxu0 0
      %2838 = vmatmul.mubr.bf16.gmra.mrb[0].mxu0 %v2720
      %v2839 = vpop.f32.mrb[0].mxu0
      %v2840 = vadd.f32 0.0, %v2839
      %v2841 = vpop.f32.mrb[0].mxu0
      %v2842 = vpop.f32.mrb[0].mxu0
      %v2843 = vadd.f32 0.0, %v2842
      %v2844 = vpop.f32.mrb[0].mxu0
      %2845 = vmatprep.mubr.bf16.mxu0 0
      %2846 = vmatmul.mubr.bf16.gmra.mrb[0].mxu0 %v2723
      %v2847 = vpop.f32.mrb[0].mxu0
      %v2848 = vadd.f32 0.0, %v2847
      %v2849 = vpop.f32.mrb[0].mxu0
      %v2850 = vpop.f32.mrb[0].mxu0
      %v2851 = vadd.f32 0.0, %v2850
      %v2852 = vpop.f32.mrb[0].mxu0
      %2853 = vmatprep.mubr.bf16.mxu0 0
      %2854 = vmatmul.mubr.bf16.gmra.mrb[0].mxu0 %v2726
      %v2855 = vpop.f32.mrb[0].mxu0
      %v2856 = vadd.f32 0.0, %v2855
      %v2857 = vpop.f32.mrb[0].mxu0
      %v2858 = vpop.f32.mrb[0].mxu0
      %v2859 = vadd.f32 0.0, %v2858
      %v2860 = vpop.f32.mrb[0].mxu0
      %2861 = vmatprep.mubr.bf16.mxu0 0
      %2862 = vmatmul.mubr.bf16.gmra.mrb[0].mxu0 %v2729
      %v2863 = vpop.f32.mrb[0].mxu0
      %v2864 = vadd.f32 0.0, %v2863
      %v2865 = vpop.f32.mrb[0].mxu0
      %v2866 = vpop.f32.mrb[0].mxu0
      %v2867 = vadd.f32 0.0, %v2866
      %v2868 = vpop.f32.mrb[0].mxu0
      %2869 = vmatprep.mubr.bf16.mxu0 0
      %2870 = vmatmul.mubr.bf16.gmra.mrb[0].mxu0 %v2732
      %v2871 = vpop.f32.mrb[0].mxu0
      %v2872 = vadd.f32 0.0, %v2871
      %v2873 = vpop.f32.mrb[0].mxu0
      %v2874 = vpop.f32.mrb[0].mxu0
      %v2875 = vadd.f32 0.0, %v2874
      %v2876 = vpop.f32.mrb[0].mxu0
      %2877 = vmatprep.mubr.bf16.mxu0 0
      %2878 = vmatmul.mubr.bf16.gmra.mrb[0].mxu0 %v2735
      %v2879 = vpop.f32.mrb[0].mxu0
      %v2880 = vadd.f32 0.0, %v2879
      %v2881 = vpop.f32.mrb[0].mxu0
      %v2882 = vpop.f32.mrb[0].mxu0
      %v2883 = vadd.f32 0.0, %v2882
      %v2884 = vpop.f32.mrb[0].mxu0
      %2885 = vmatprep.mubr.bf16.mxu0 0
      %2886 = vmatmul.mubr.bf16.gmra.mrb[0].mxu0 %v2738
      %v2887 = vpop.f32.mrb[0].mxu0
      %v2888 = vadd.f32 0.0, %v2887
      %v2889 = vpop.f32.mrb[0].mxu0
      %v2890 = vpop.f32.mrb[0].mxu0
      %v2891 = vadd.f32 0.0, %v2890
      %v2892 = vpop.f32.mrb[0].mxu0
      %2893 = vmatprep.mubr.bf16.mxu0 0
      %2894 = vmatmul.mubr.bf16.gmra.mrb[0].mxu0 %v2741
      %v2895 = vpop.f32.mrb[0].mxu0
      %v2896 = vadd.f32 0.0, %v2895
      %v2897 = vpop.f32.mrb[0].mxu0
      %v2898 = vpop.f32.mrb[0].mxu0
      %v2899 = vadd.f32 0.0, %v2898
      %v2900 = vpop.f32.mrb[0].mxu0
      %2901 = vmatprep.mubr.bf16.mxu0 0
      %2902 = vmatmul.mubr.bf16.gmra.mrb[0].mxu0 %v2744
      %v2903 = vpop.f32.mrb[0].mxu0
      %v2904 = vadd.f32 0.0, %v2903
      %v2905 = vpop.f32.mrb[0].mxu0
      %v2906 = vpop.f32.mrb[0].mxu0
      %v2907 = vadd.f32 0.0, %v2906
      %v2908 = vpop.f32.mrb[0].mxu0
      %2909 = vmatprep.mubr.bf16.mxu0 0
      %2910 = vmatmul.mubr.bf16.gmra.mrb[0].mxu0 %v2747
      %v2911 = vpop.f32.mrb[0].mxu0
      %v2912 = vadd.f32 0.0, %v2911
      %v2913 = vpop.f32.mrb[0].mxu0
      %v2914 = vpop.f32.mrb[0].mxu0
      %v2915 = vadd.f32 0.0, %v2914
      %v2916 = vpop.f32.mrb[0].mxu0
      %2917 = vmatprep.mubr.bf16.mxu0 0
      %2918 = vmatmul.mubr.bf16.gmra.mrb[0].mxu0 %v2750
      %v2919 = vpop.f32.mrb[0].mxu0
      %v2920 = vadd.f32 0.0, %v2919
      %v2921 = vpop.f32.mrb[0].mxu0
      %v2922 = vpop.f32.mrb[0].mxu0
      %v2923 = vadd.f32 0.0, %v2922
      %v2924 = vpop.f32.mrb[0].mxu0
      %2925 = vmatprep.mubr.bf16.mxu0 0
      %2926 = vmatmul.mubr.bf16.gmra.mrb[0].mxu0 %v2753
      %v2927 = vpop.f32.mrb[0].mxu0
      %v2928 = vadd.f32 0.0, %v2927
      %v2929 = vpop.f32.mrb[0].mxu0
      %v2930 = vpop.f32.mrb[0].mxu0
      %v2931 = vadd.f32 0.0, %v2930
      %v2932 = vpop.f32.mrb[0].mxu0
      %2933 = vmatprep.mubr.bf16.mxu0 0
      %2934 = vmatmul.mubr.bf16.gmra.mrb[0].mxu0 %v2756
      %v2935 = vpop.f32.mrb[0].mxu0
      %v2936 = vadd.f32 0.0, %v2935
      %v2937 = vpop.f32.mrb[0].mxu0
      %v2938 = vpop.f32.mrb[0].mxu0
      %v2939 = vadd.f32 0.0, %v2938
      %v2940 = vpop.f32.mrb[0].mxu0
      %2941 = vmatprep.mubr.bf16.mxu0 0
      %2942 = vmatmul.mubr.bf16.gmra.mrb[0].mxu0 %v2759
      %v2943 = vpop.f32.mrb[0].mxu0
      %v2944 = vadd.f32 0.0, %v2943
      %v2945 = vpop.f32.mrb[0].mxu0
      %v2946 = vpop.f32.mrb[0].mxu0
      %v2947 = vadd.f32 0.0, %v2946
      %v2948 = vpop.f32.mrb[0].mxu0
      %2949 = vmatprep.mubr.bf16.mxu0 0
      %2950 = vmatmul.mubr.bf16.gmra.mrb[0].mxu0 %v2762
      %v2951 = vpop.f32.mrb[0].mxu0
      %v2952 = vadd.f32 0.0, %v2951
      %v2953 = vpop.f32.mrb[0].mxu0
      %v2954 = vpop.f32.mrb[0].mxu0
      %v2955 = vadd.f32 0.0, %v2954
      %v2956 = vpop.f32.mrb[0].mxu0
      %2957 = vmatprep.mubr.bf16.mxu0 0
      %2958 = vmatmul.mubr.bf16.gmra.mrb[0].mxu0 %v2765
      %v2959 = vpop.f32.mrb[0].mxu0
      %v2960 = vadd.f32 0.0, %v2959
      %v2961 = vpop.f32.mrb[0].mxu0
      %v2962 = vpop.f32.mrb[0].mxu0
      %v2963 = vadd.f32 0.0, %v2962
      %v2964 = vpop.f32.mrb[0].mxu0
      %2965 = vmatprep.mubr.bf16.mxu0 0
      %2966 = vmatmul.mubr.bf16.gmra.mrb[0].mxu0 %v2768
      %v2967 = vpop.f32.mrb[0].mxu0
      %v2968 = vadd.f32 0.0, %v2967
      %v2969 = vpop.f32.mrb[0].mxu0
      %v2970 = vpop.f32.mrb[0].mxu0
      %v2971 = vpop.f32.mrb[0].mxu0
      %2972 = vdwg.mxu0
      %v2973 = vadd.f32 %v2512, %v2808
      %v2974 = vadd.f32 %v2513, %v2811
      %v2975 = vadd.f32 %v2514, %v2816
      %v2976 = vadd.f32 %v2515, %v2819
      %v2977 = vadd.f32 %v2516, %v2824
      %v2978 = vadd.f32 %v2517, %v2827
      %v2979 = vadd.f32 %v2518, %v2832
      %v2980 = vadd.f32 %v2519, %v2835
      %v2981 = vadd.f32 %v2520, %v2840
      %v2982 = vadd.f32 %v2521, %v2843
      %v2983 = vadd.f32 %v2522, %v2848
      %v2984 = vadd.f32 %v2523, %v2851
      %v2985 = vadd.f32 %v2524, %v2856
      %v2986 = vadd.f32 %v2525, %v2859
      %v2987 = vadd.f32 %v2526, %v2864
      %v2988 = vadd.f32 %v2527, %v2867
      %v2989 = vadd.f32 %v2528, %v2872
      %v2990 = vadd.f32 %v2529, %v2875
      %v2991 = vadd.f32 %v2530, %v2880
      %v2992 = vadd.f32 %v2531, %v2883
      %v2993 = vadd.f32 %v2532, %v2888
      %v2994 = vadd.f32 %v2533, %v2891
      %v2995 = vadd.f32 %v2534, %v2896
      %v2996 = vadd.f32 %v2535, %v2899
      %v2997 = vadd.f32 %v2536, %v2904
      %v2998 = vadd.f32 %v2537, %v2907
      %v2999 = vadd.f32 %v2538, %v2912
      %v3000 = vadd.f32 %v2539, %v2915
      %v3001 = vadd.f32 %v2540, %v2920
      %v3002 = vadd.f32 %v2541, %v2923
      %v3003 = vadd.f32 %v2542, %v2928
      %v3004 = vadd.f32 %v2543, %v2931
      %v3005 = vadd.f32 %v2544, %v2936
      %v3006 = vadd.f32 %v2545, %v2939
      %v3007 = vadd.f32 %v2546, %v2944
      %v3008 = vadd.f32 %v2547, %v2947
      %v3009 = vadd.f32 %v2548, %v2952
      %v3010 = vadd.f32 %v2549, %v2955
      %v3011 = vadd.f32 %v2550, %v2960
      %v3012 = vadd.f32 %v2551, %v2963
      %v3013 = vadd.f32 %v2552, %v2968
      %v3014 = vld [vmem:[%s246 + $0x18] sm:$0xf]
      %v3015 = vld [vmem:[%s246 + $0x1c] sm:$0xf]
      %v3016 = vld [vmem:[%s246 + $0x20] sm:$0xf]
      %v3017 = vld [vmem:[%s246 + $0x24] sm:$0xf]
      %v3018 = vld [vmem:[%s246 + $0x28] sm:$0xf]
      %v3019 = vld [vmem:[%s246 + $0x2c] sm:$0xf]
      %v3020 = vld [vmem:[%s246 + $0x30] sm:$0xf]
      %v3021 = vld [vmem:[%s246 + $0x34] sm:$0xf]
      %v3022 = vld [vmem:[%s246 + $0x38] sm:$0xf]
      %v3023 = vld [vmem:[%s246 + $0x3c] sm:$0xf]
      %v3024 = vld [vmem:[%s246 + $0x40] sm:$0xf]
      %v3025 = vld [vmem:[%s246 + $0x44] sm:$0xf]
      %v3026 = vld [vmem:[%s246 + $0x48] sm:$0xf]
      %v3027 = vld [vmem:[%s246 + $0x4c] sm:$0xf]
      %v3028 = vld [vmem:[%s246 + $0x50] sm:$0xf]
      %v3029 = vld [vmem:[%s246 + $0x54] sm:$0xf]
      %v3030 = vld [vmem:[%s246 + $0x58] sm:$0xf]
      %v3031 = vld [vmem:[%s246 + $0x5c] sm:$0xf]
      %v3032 = vld [vmem:[%s246 + $0x60] sm:$0xf]
      %v3033 = vld [vmem:[%s246 + $0x64] sm:$0xf]
      %v3034 = vld [vmem:[%s246 + $0x68] sm:$0xf]
      %v3035 = vld [vmem:[%s246 + $0x6c] sm:$0xf]
      %v3036 = vld [vmem:[%s246 + $0x70] sm:$0xf]
      %v3037 = vld [vmem:[%s246 + $0x74] sm:$0xf]
      %v3038 = vld [vmem:[%s246 + $0x78] sm:$0xf]
      %v3039 = vld [vmem:[%s246 + $0x7c] sm:$0xf]
      %v3040 = vld [vmem:[%s246 + $0x80] sm:$0xf]
      %v3041 = vld [vmem:[%s246 + $0x84] sm:$0xf]
      %v3042 = vld [vmem:[%s246 + $0x88] sm:$0xf]
      %v3043 = vld [vmem:[%s246 + $0x8c] sm:$0xf]
      %v3044 = vld [vmem:[%s246 + $0x90] sm:$0xf]
      %v3045 = vld [vmem:[%s246 + $0x94] sm:$0xf]
      %v3046 = vld [vmem:[%s246 + $0x98] sm:$0xf]
      %v3047 = vld [vmem:[%s246 + $0x9c] sm:$0xf]
      %v3048 = vld [vmem:[%s246 + $0xa0] sm:$0xf]
      %v3049 = vld [vmem:[%s246 + $0xa4] sm:$0xf]
      %v3050 = vld [vmem:[%s246 + $0xa8] sm:$0xf]
      %v3051 = vld [vmem:[%s246 + $0xac] sm:$0xf]
      %v3052 = vld [vmem:[%s246 + $0xb0] sm:$0xf]
      %v3053 = vld [vmem:[%s246 + $0xb4] sm:$0xf]
      %v3054 = vld [vmem:[%s246 + $0xb8] sm:$0x7]
      %s3055 = scalar_lea.vmem %s2, 24
      %v3056 = vld [vmem:[%s3055] sm:$0xf]
      %v3098 = vunpack.c.l.b16 %v3014
      %v3099 = vunpack.c.l.b16 %v3015
      %v3100 = vunpack.c.l.b16 %v3016
      %v3101 = vunpack.c.l.b16 %v3017
      %v3102 = vunpack.c.l.b16 %v3018
      %v3103 = vunpack.c.l.b16 %v3019
      %v3104 = vunpack.c.l.b16 %v3020
      %v3105 = vunpack.c.l.b16 %v3021
      %v3106 = vunpack.c.l.b16 %v3022
      %v3107 = vunpack.c.l.b16 %v3023
      %v3108 = vunpack.c.l.b16 %v3024
      %v3109 = vunpack.c.l.b16 %v3025
      %v3110 = vunpack.c.l.b16 %v3026
      %v3111 = vunpack.c.l.b16 %v3027
      %v3112 = vunpack.c.l.b16 %v3028
      %v3113 = vunpack.c.l.b16 %v3029
      %v3114 = vunpack.c.l.b16 %v3030
      %v3115 = vunpack.c.l.b16 %v3031
      %v3116 = vunpack.c.l.b16 %v3032
      %v3117 = vunpack.c.l.b16 %v3033
      %v3118 = vunpack.c.l.b16 %v3034
      %v3119 = vunpack.c.l.b16 %v3035
      %v3120 = vunpack.c.l.b16 %v3036
      %v3121 = vunpack.c.l.b16 %v3037
      %v3122 = vunpack.c.l.b16 %v3038
      %v3123 = vunpack.c.l.b16 %v3039
      %v3124 = vunpack.c.l.b16 %v3040
      %v3125 = vunpack.c.l.b16 %v3041
      %v3126 = vunpack.c.l.b16 %v3042
      %v3127 = vunpack.c.l.b16 %v3043
      %v3128 = vunpack.c.l.b16 %v3044
      %v3129 = vunpack.c.l.b16 %v3045
      %v3130 = vunpack.c.l.b16 %v3046
      %v3131 = vunpack.c.l.b16 %v3047
      %v3132 = vunpack.c.l.b16 %v3048
      %v3133 = vunpack.c.l.b16 %v3049
      %v3134 = vunpack.c.l.b16 %v3050
      %v3135 = vunpack.c.l.b16 %v3051
      %v3136 = vunpack.c.l.b16 %v3052
      %v3137 = vunpack.c.l.b16 %v3053
      %v3138 = vunpack.c.l.b16 %v3054
      %v3139 = vpack.c.b16 %v3099, %v3098
      %v3140 = vpack.c.b16 %v3101, %v3100
      %v3141 = vpack.c.b16 %v3103, %v3102
      %v3142 = vpack.c.b16 %v3105, %v3104
      %v3143 = vpack.c.b16 %v3107, %v3106
      %v3144 = vpack.c.b16 %v3109, %v3108
      %v3145 = vpack.c.b16 %v3111, %v3110
      %v3146 = vpack.c.b16 %v3113, %v3112
      %v3147 = vpack.c.b16 %v3115, %v3114
      %v3148 = vpack.c.b16 %v3117, %v3116
      %v3149 = vpack.c.b16 %v3119, %v3118
      %v3150 = vpack.c.b16 %v3121, %v3120
      %v3151 = vpack.c.b16 %v3123, %v3122
      %v3152 = vpack.c.b16 %v3125, %v3124
      %v3153 = vpack.c.b16 %v3127, %v3126
      %v3154 = vpack.c.b16 %v3129, %v3128
      %v3155 = vpack.c.b16 %v3131, %v3130
      %v3156 = vpack.c.b16 %v3133, %v3132
      %v3157 = vpack.c.b16 %v3135, %v3134
      %v3158 = vpack.c.b16 %v3137, %v3136
      %v3159 = vpack.c.b16 %v3138, %v3138
      %v3161 = vshrl.u32 %v3139, 16
      %v3163 = vshll.u32 %v3139, 16
      %v3165 = vrot.slane %v3163, 1
      %v3166 = vor.u32 %v3161, %v3165
      %v3168 = vshll.u32 %v3140, 16
      %v3170 = vrot.slane %v3168, 1
      %v3171 = vsel %vm2559, %v3166, %v3170
      %v3172 = vshrl.u32 %v3140, 16
      %v3174 = vor.u32 %v3172, %v3170
      %v3176 = vshll.u32 %v3141, 16
      %v3178 = vrot.slane %v3176, 1
      %v3179 = vsel %vm2559, %v3174, %v3178
      %v3180 = vshrl.u32 %v3141, 16
      %v3182 = vor.u32 %v3180, %v3178
      %v3184 = vshll.u32 %v3142, 16
      %v3186 = vrot.slane %v3184, 1
      %v3187 = vsel %vm2559, %v3182, %v3186
      %v3188 = vshrl.u32 %v3142, 16
      %v3190 = vor.u32 %v3188, %v3186
      %v3192 = vshll.u32 %v3143, 16
      %v3194 = vrot.slane %v3192, 1
      %v3195 = vsel %vm2559, %v3190, %v3194
      %v3196 = vshrl.u32 %v3143, 16
      %v3198 = vor.u32 %v3196, %v3194
      %v3200 = vshll.u32 %v3144, 16
      %v3202 = vrot.slane %v3200, 1
      %v3203 = vsel %vm2559, %v3198, %v3202
      %v3204 = vshrl.u32 %v3144, 16
      %v3206 = vor.u32 %v3204, %v3202
      %v3208 = vshll.u32 %v3145, 16
      %v3210 = vrot.slane %v3208, 1
      %v3211 = vsel %vm2559, %v3206, %v3210
      %v3212 = vshrl.u32 %v3145, 16
      %v3214 = vor.u32 %v3212, %v3210
      %v3216 = vshll.u32 %v3146, 16
      %v3218 = vrot.slane %v3216, 1
      %v3219 = vsel %vm2559, %v3214, %v3218
      %v3220 = vshrl.u32 %v3146, 16
      %v3222 = vor.u32 %v3220, %v3218
      %v3224 = vshll.u32 %v3147, 16
      %v3226 = vrot.slane %v3224, 1
      %v3227 = vsel %vm2559, %v3222, %v3226
      %v3228 = vshrl.u32 %v3147, 16
      %v3230 = vor.u32 %v3228, %v3226
      %v3232 = vshll.u32 %v3148, 16
      %v3234 = vrot.slane %v3232, 1
      %v3235 = vsel %vm2559, %v3230, %v3234
      %v3236 = vshrl.u32 %v3148, 16
      %v3238 = vor.u32 %v3236, %v3234
      %v3240 = vshll.u32 %v3149, 16
      %v3242 = vrot.slane %v3240, 1
      %v3243 = vsel %vm2559, %v3238, %v3242
      %v3244 = vshrl.u32 %v3149, 16
      %v3246 = vor.u32 %v3244, %v3242
      %v3248 = vshll.u32 %v3150, 16
      %v3250 = vrot.slane %v3248, 1
      %v3251 = vsel %vm2559, %v3246, %v3250
      %v3252 = vshrl.u32 %v3150, 16
      %v3254 = vor.u32 %v3252, %v3250
      %v3256 = vshll.u32 %v3151, 16
      %v3258 = vrot.slane %v3256, 1
      %v3259 = vsel %vm2559, %v3254, %v3258
      %v3260 = vshrl.u32 %v3151, 16
      %v3262 = vor.u32 %v3260, %v3258
      %v3264 = vshll.u32 %v3152, 16
      %v3266 = vrot.slane %v3264, 1
      %v3267 = vsel %vm2559, %v3262, %v3266
      %v3268 = vshrl.u32 %v3152, 16
      %v3270 = vor.u32 %v3268, %v3266
      %v3272 = vshll.u32 %v3153, 16
      %v3274 = vrot.slane %v3272, 1
      %v3275 = vsel %vm2559, %v3270, %v3274
      %v3276 = vshrl.u32 %v3153, 16
      %v3278 = vor.u32 %v3276, %v3274
      %v3280 = vshll.u32 %v3154, 16
      %v3282 = vrot.slane %v3280, 1
      %v3283 = vsel %vm2559, %v3278, %v3282
      %v3284 = vshrl.u32 %v3154, 16
      %v3286 = vor.u32 %v3284, %v3282
      %v3288 = vshll.u32 %v3155, 16
      %v3290 = vrot.slane %v3288, 1
      %v3291 = vsel %vm2559, %v3286, %v3290
      %v3292 = vshrl.u32 %v3155, 16
      %v3294 = vor.u32 %v3292, %v3290
      %v3296 = vshll.u32 %v3156, 16
      %v3298 = vrot.slane %v3296, 1
      %v3299 = vsel %vm2559, %v3294, %v3298
      %v3300 = vshrl.u32 %v3156, 16
      %v3302 = vor.u32 %v3300, %v3298
      %v3304 = vshll.u32 %v3157, 16
      %v3306 = vrot.slane %v3304, 1
      %v3307 = vsel %vm2559, %v3302, %v3306
      %v3308 = vshrl.u32 %v3157, 16
      %v3310 = vor.u32 %v3308, %v3306
      %v3312 = vshll.u32 %v3158, 16
      %v3314 = vrot.slane %v3312, 1
      %v3315 = vsel %vm2559, %v3310, %v3314
      %v3316 = vshrl.u32 %v3158, 16
      %v3318 = vor.u32 %v3316, %v3314
      %v3320 = vshll.u32 %v3159, 16
      %v3322 = vrot.slane %v3320, 1
      %v3323 = vsel %vm2559, %v3318, %v3322
      %v3324 = vshrl.u32 %v3159, 16
      %v3326 = vor.u32 %v3324, %v3322
      %v3328 = vsel %vm446, %v3171, 0
      %v3331 = vsel %vm446, %v3179, 0
      %v3334 = vsel %vm446, %v3187, 0
      %v3337 = vsel %vm446, %v3195, 0
      %v3340 = vsel %vm446, %v3203, 0
      %v3343 = vsel %vm446, %v3211, 0
      %v3346 = vsel %vm446, %v3219, 0
      %v3349 = vsel %vm446, %v3227, 0
      %v3352 = vsel %vm446, %v3235, 0
      %v3355 = vsel %vm446, %v3243, 0
      %v3358 = vsel %vm446, %v3251, 0
      %v3361 = vsel %vm446, %v3259, 0
      %v3364 = vsel %vm446, %v3267, 0
      %v3367 = vsel %vm446, %v3275, 0
      %v3370 = vsel %vm446, %v3283, 0
      %v3373 = vsel %vm446, %v3291, 0
      %v3376 = vsel %vm446, %v3299, 0
      %v3379 = vsel %vm446, %v3307, 0
      %v3382 = vsel %vm446, %v3315, 0
      %v3385 = vsel %vm446, %v3323, 0
      %v3388 = vsel %vm446, %v3326, 0
      %v3391 = vsel %vm510, %v3056, 0
      %3393 = vmatprep.subr.bf16.mxu0 0
      %3394 = vmatpush1.bf16.msra.mxu0 %v3391
      %3395 = vmatprep.subr.bf16.mxu0 0
      %3396 = vmatpush1.bf16.msra.mxu0 0
      %3397 = vmatprep.subr.bf16.mxu0 0
      %3398 = vmatpush1.bf16.msra.mxu0 0
      %3399 = vmatprep.subr.bf16.mxu0 0
      %3400 = vmatpush1.bf16.msra.mxu0 0
      %3401 = vmatprep.subr.bf16.mxu0 0
      %3402 = vmatpush1.bf16.msra.mxu0 0
      %3403 = vmatprep.subr.bf16.mxu0 0
      %3404 = vmatpush1.bf16.msra.mxu0 0
      %3405 = vmatprep.subr.bf16.mxu0 0
      %3406 = vmatpush1.bf16.msra.mxu0 0
      %3407 = vmatprep.subr.bf16.mxu0 0
      %3408 = vmatpush1.bf16.msra.mxu0 0
      %3409 = vmatprep.subr.bf16.mxu0 0
      %3410 = vmatpush1.bf16.msra.mxu0 0
      %3411 = vmatprep.subr.bf16.mxu0 0
      %3412 = vmatpush1.bf16.msra.mxu0 0
      %3413 = vmatprep.subr.bf16.mxu0 0
      %3414 = vmatpush1.bf16.msra.mxu0 0
      %3415 = vmatprep.subr.bf16.mxu0 0
      %3416 = vmatpush1.bf16.msra.mxu0 0
      %3417 = vmatprep.subr.bf16.mxu0 0
      %3418 = vmatpush1.bf16.msra.mxu0 0
      %3419 = vmatprep.subr.bf16.mxu0 0
      %3420 = vmatpush1.bf16.msra.mxu0 0
      %3421 = vmatprep.subr.bf16.mxu0 0
      %3422 = vmatpush1.bf16.msra.mxu0 0
      %3423 = vmatprep.subr.bf16.mxu0 0
      %3424 = vmatpush1.bf16.msra.mxu0 0
      %3425 = vmatprep.mubr.bf16.mxu0 0
      %3426 = vmatmul.mubr.bf16.gmra.mrb[0].mxu0 %v3328
      %v3427 = vpop.f32.mrb[0].mxu0
      %v3428 = vadd.f32 0.0, %v3427
      %v3429 = vpop.f32.mrb[0].mxu0
      %v3430 = vpop.f32.mrb[0].mxu0
      %v3431 = vadd.f32 0.0, %v3430
      %v3432 = vpop.f32.mrb[0].mxu0
      %3433 = vmatprep.mubr.bf16.mxu0 0
      %3434 = vmatmul.mubr.bf16.gmra.mrb[0].mxu0 %v3331
      %v3435 = vpop.f32.mrb[0].mxu0
      %v3436 = vadd.f32 0.0, %v3435
      %v3437 = vpop.f32.mrb[0].mxu0
      %v3438 = vpop.f32.mrb[0].mxu0
      %v3439 = vadd.f32 0.0, %v3438
      %v3440 = vpop.f32.mrb[0].mxu0
      %3441 = vmatprep.mubr.bf16.mxu0 0
      %3442 = vmatmul.mubr.bf16.gmra.mrb[0].mxu0 %v3334
      %v3443 = vpop.f32.mrb[0].mxu0
      %v3444 = vadd.f32 0.0, %v3443
      %v3445 = vpop.f32.mrb[0].mxu0
      %v3446 = vpop.f32.mrb[0].mxu0
      %v3447 = vadd.f32 0.0, %v3446
      %v3448 = vpop.f32.mrb[0].mxu0
      %3449 = vmatprep.mubr.bf16.mxu0 0
      %3450 = vmatmul.mubr.bf16.gmra.mrb[0].mxu0 %v3337
      %v3451 = vpop.f32.mrb[0].mxu0
      %v3452 = vadd.f32 0.0, %v3451
      %v3453 = vpop.f32.mrb[0].mxu0
      %v3454 = vpop.f32.mrb[0].mxu0
      %v3455 = vadd.f32 0.0, %v3454
      %v3456 = vpop.f32.mrb[0].mxu0
      %3457 = vmatprep.mubr.bf16.mxu0 0
      %3458 = vmatmul.mubr.bf16.gmra.mrb[0].mxu0 %v3340
      %v3459 = vpop.f32.mrb[0].mxu0
      %v3460 = vadd.f32 0.0, %v3459
      %v3461 = vpop.f32.mrb[0].mxu0
      %v3462 = vpop.f32.mrb[0].mxu0
      %v3463 = vadd.f32 0.0, %v3462
      %v3464 = vpop.f32.mrb[0].mxu0
      %3465 = vmatprep.mubr.bf16.mxu0 0
      %3466 = vmatmul.mubr.bf16.gmra.mrb[0].mxu0 %v3343
      %v3467 = vpop.f32.mrb[0].mxu0
      %v3468 = vadd.f32 0.0, %v3467
      %v3469 = vpop.f32.mrb[0].mxu0
      %v3470 = vpop.f32.mrb[0].mxu0
      %v3471 = vadd.f32 0.0, %v3470
      %v3472 = vpop.f32.mrb[0].mxu0
      %3473 = vmatprep.mubr.bf16.mxu0 0
      %3474 = vmatmul.mubr.bf16.gmra.mrb[0].mxu0 %v3346
      %v3475 = vpop.f32.mrb[0].mxu0
      %v3476 = vadd.f32 0.0, %v3475
      %v3477 = vpop.f32.mrb[0].mxu0
      %v3478 = vpop.f32.mrb[0].mxu0
      %v3479 = vadd.f32 0.0, %v3478
      %v3480 = vpop.f32.mrb[0].mxu0
      %3481 = vmatprep.mubr.bf16.mxu0 0
      %3482 = vmatmul.mubr.bf16.gmra.mrb[0].mxu0 %v3349
      %v3483 = vpop.f32.mrb[0].mxu0
      %v3484 = vadd.f32 0.0, %v3483
      %v3485 = vpop.f32.mrb[0].mxu0
      %v3486 = vpop.f32.mrb[0].mxu0
      %v3487 = vadd.f32 0.0, %v3486
      %v3488 = vpop.f32.mrb[0].mxu0
      %3489 = vmatprep.mubr.bf16.mxu0 0
      %3490 = vmatmul.mubr.bf16.gmra.mrb[0].mxu0 %v3352
      %v3491 = vpop.f32.mrb[0].mxu0
      %v3492 = vadd.f32 0.0, %v3491
      %v3493 = vpop.f32.mrb[0].mxu0
      %v3494 = vpop.f32.mrb[0].mxu0
      %v3495 = vadd.f32 0.0, %v3494
      %v3496 = vpop.f32.mrb[0].mxu0
      %3497 = vmatprep.mubr.bf16.mxu0 0
      %3498 = vmatmul.mubr.bf16.gmra.mrb[0].mxu0 %v3355
      %v3499 = vpop.f32.mrb[0].mxu0
      %v3500 = vadd.f32 0.0, %v3499
      %v3501 = vpop.f32.mrb[0].mxu0
      %v3502 = vpop.f32.mrb[0].mxu0
      %v3503 = vadd.f32 0.0, %v3502
      %v3504 = vpop.f32.mrb[0].mxu0
      %3505 = vmatprep.mubr.bf16.mxu0 0
      %3506 = vmatmul.mubr.bf16.gmra.mrb[0].mxu0 %v3358
      %v3507 = vpop.f32.mrb[0].mxu0
      %v3508 = vadd.f32 0.0, %v3507
      %v3509 = vpop.f32.mrb[0].mxu0
      %v3510 = vpop.f32.mrb[0].mxu0
      %v3511 = vadd.f32 0.0, %v3510
      %v3512 = vpop.f32.mrb[0].mxu0
      %3513 = vmatprep.mubr.bf16.mxu0 0
      %3514 = vmatmul.mubr.bf16.gmra.mrb[0].mxu0 %v3361
      %v3515 = vpop.f32.mrb[0].mxu0
      %v3516 = vadd.f32 0.0, %v3515
      %v3517 = vpop.f32.mrb[0].mxu0
      %v3518 = vpop.f32.mrb[0].mxu0
      %v3519 = vadd.f32 0.0, %v3518
      %v3520 = vpop.f32.mrb[0].mxu0
      %3521 = vmatprep.mubr.bf16.mxu0 0
      %3522 = vmatmul.mubr.bf16.gmra.mrb[0].mxu0 %v3364
      %v3523 = vpop.f32.mrb[0].mxu0
      %v3524 = vadd.f32 0.0, %v3523
      %v3525 = vpop.f32.mrb[0].mxu0
      %v3526 = vpop.f32.mrb[0].mxu0
      %v3527 = vadd.f32 0.0, %v3526
      %v3528 = vpop.f32.mrb[0].mxu0
      %3529 = vmatprep.mubr.bf16.mxu0 0
      %3530 = vmatmul.mubr.bf16.gmra.mrb[0].mxu0 %v3367
      %v3531 = vpop.f32.mrb[0].mxu0
      %v3532 = vadd.f32 0.0, %v3531
      %v3533 = vpop.f32.mrb[0].mxu0
      %v3534 = vpop.f32.mrb[0].mxu0
      %v3535 = vadd.f32 0.0, %v3534
      %v3536 = vpop.f32.mrb[0].mxu0
      %3537 = vmatprep.mubr.bf16.mxu0 0
      %3538 = vmatmul.mubr.bf16.gmra.mrb[0].mxu0 %v3370
      %v3539 = vpop.f32.mrb[0].mxu0
      %v3540 = vadd.f32 0.0, %v3539
      %v3541 = vpop.f32.mrb[0].mxu0
      %v3542 = vpop.f32.mrb[0].mxu0
      %v3543 = vadd.f32 0.0, %v3542
      %v3544 = vpop.f32.mrb[0].mxu0
      %3545 = vmatprep.mubr.bf16.mxu0 0
      %3546 = vmatmul.mubr.bf16.gmra.mrb[0].mxu0 %v3373
      %v3547 = vpop.f32.mrb[0].mxu0
      %v3548 = vadd.f32 0.0, %v3547
      %v3549 = vpop.f32.mrb[0].mxu0
      %v3550 = vpop.f32.mrb[0].mxu0
      %v3551 = vadd.f32 0.0, %v3550
      %v3552 = vpop.f32.mrb[0].mxu0
      %3553 = vmatprep.mubr.bf16.mxu0 0
      %3554 = vmatmul.mubr.bf16.gmra.mrb[0].mxu0 %v3376
      %v3555 = vpop.f32.mrb[0].mxu0
      %v3556 = vadd.f32 0.0, %v3555
      %v3557 = vpop.f32.mrb[0].mxu0
      %v3558 = vpop.f32.mrb[0].mxu0
      %v3559 = vadd.f32 0.0, %v3558
      %v3560 = vpop.f32.mrb[0].mxu0
      %3561 = vmatprep.mubr.bf16.mxu0 0
      %3562 = vmatmul.mubr.bf16.gmra.mrb[0].mxu0 %v3379
      %v3563 = vpop.f32.mrb[0].mxu0
      %v3564 = vadd.f32 0.0, %v3563
      %v3565 = vpop.f32.mrb[0].mxu0
      %v3566 = vpop.f32.mrb[0].mxu0
      %v3567 = vadd.f32 0.0, %v3566
      %v3568 = vpop.f32.mrb[0].mxu0
      %3569 = vmatprep.mubr.bf16.mxu0 0
      %3570 = vmatmul.mubr.bf16.gmra.mrb[0].mxu0 %v3382
      %v3571 = vpop.f32.mrb[0].mxu0
      %v3572 = vadd.f32 0.0, %v3571
      %v3573 = vpop.f32.mrb[0].mxu0
      %v3574 = vpop.f32.mrb[0].mxu0
      %v3575 = vadd.f32 0.0, %v3574
      %v3576 = vpop.f32.mrb[0].mxu0
      %3577 = vmatprep.mubr.bf16.mxu0 0
      %3578 = vmatmul.mubr.bf16.gmra.mrb[0].mxu0 %v3385
      %v3579 = vpop.f32.mrb[0].mxu0
      %v3580 = vadd.f32 0.0, %v3579
      %v3581 = vpop.f32.mrb[0].mxu0
      %v3582 = vpop.f32.mrb[0].mxu0
      %v3583 = vadd.f32 0.0, %v3582
      %v3584 = vpop.f32.mrb[0].mxu0
      %3585 = vmatprep.mubr.bf16.mxu0 0
      %3586 = vmatmul.mubr.bf16.gmra.mrb[0].mxu0 %v3388
      %v3587 = vpop.f32.mrb[0].mxu0
      %v3588 = vadd.f32 0.0, %v3587
      %v3589 = vpop.f32.mrb[0].mxu0
      %v3590 = vpop.f32.mrb[0].mxu0
      %v3591 = vpop.f32.mrb[0].mxu0
      %3592 = vdwg.mxu0
      %v3593 = vadd.f32 %v2973, %v3428
      %v3594 = vadd.f32 %v2974, %v3431
      %v3595 = vadd.f32 %v2975, %v3436
      %v3596 = vadd.f32 %v2976, %v3439
      %v3597 = vadd.f32 %v2977, %v3444
      %v3598 = vadd.f32 %v2978, %v3447
      %v3599 = vadd.f32 %v2979, %v3452
      %v3600 = vadd.f32 %v2980, %v3455
      %v3601 = vadd.f32 %v2981, %v3460
      %v3602 = vadd.f32 %v2982, %v3463
      %v3603 = vadd.f32 %v2983, %v3468
      %v3604 = vadd.f32 %v2984, %v3471
      %v3605 = vadd.f32 %v2985, %v3476
      %v3606 = vadd.f32 %v2986, %v3479
      %v3607 = vadd.f32 %v2987, %v3484
      %v3608 = vadd.f32 %v2988, %v3487
      %v3609 = vadd.f32 %v2989, %v3492
      %v3610 = vadd.f32 %v2990, %v3495
      %v3611 = vadd.f32 %v2991, %v3500
      %v3612 = vadd.f32 %v2992, %v3503
      %v3613 = vadd.f32 %v2993, %v3508
      %v3614 = vadd.f32 %v2994, %v3511
      %v3615 = vadd.f32 %v2995, %v3516
      %v3616 = vadd.f32 %v2996, %v3519
      %v3617 = vadd.f32 %v2997, %v3524
      %v3618 = vadd.f32 %v2998, %v3527
      %v3619 = vadd.f32 %v2999, %v3532
      %v3620 = vadd.f32 %v3000, %v3535
      %v3621 = vadd.f32 %v3001, %v3540
      %v3622 = vadd.f32 %v3002, %v3543
      %v3623 = vadd.f32 %v3003, %v3548
      %v3624 = vadd.f32 %v3004, %v3551
      %v3625 = vadd.f32 %v3005, %v3556
      %v3626 = vadd.f32 %v3006, %v3559
      %v3627 = vadd.f32 %v3007, %v3564
      %v3628 = vadd.f32 %v3008, %v3567
      %v3629 = vadd.f32 %v3009, %v3572
      %v3630 = vadd.f32 %v3010, %v3575
      %v3631 = vadd.f32 %v3011, %v3580
      %v3632 = vadd.f32 %v3012, %v3583
      %v3633 = vadd.f32 %v3013, %v3588
      %v3634 = vld [vmem:[%s246 + $0x18] sm:$0xe]
      %s3635 = scalar_lea.vmem %s2, 28
      %v3636 = vld [vmem:[%s3635] sm:$0xf]
      %v3638 = vunpack.c.l.b16 %v3634
      %v3639 = vpack.c.b16 %v3099, %v3638
      %vm3640 = vcmask 1046528
      %v3641 = vrot.slane %v3639, 1
      %v3642 = vrot.slane %v3140, 1
      %v3643 = vsel %vm3640, %v3641, %v3642
      %v3644 = vrot.slane %v3141, 1
      %v3645 = vsel %vm3640, %v3642, %v3644
      %v3646 = vrot.slane %v3142, 1
      %v3647 = vsel %vm3640, %v3644, %v3646
      %v3648 = vrot.slane %v3143, 1
      %v3649 = vsel %vm3640, %v3646, %v3648
      %v3650 = vrot.slane %v3144, 1
      %v3651 = vsel %vm3640, %v3648, %v3650
      %v3652 = vrot.slane %v3145, 1
      %v3653 = vsel %vm3640, %v3650, %v3652
      %v3654 = vrot.slane %v3146, 1
      %v3655 = vsel %vm3640, %v3652, %v3654
      %v3656 = vrot.slane %v3147, 1
      %v3657 = vsel %vm3640, %v3654, %v3656
      %v3658 = vrot.slane %v3148, 1
      %v3659 = vsel %vm3640, %v3656, %v3658
      %v3660 = vrot.slane %v3149, 1
      %v3661 = vsel %vm3640, %v3658, %v3660
      %v3662 = vrot.slane %v3150, 1
      %v3663 = vsel %vm3640, %v3660, %v3662
      %v3664 = vrot.slane %v3151, 1
      %v3665 = vsel %vm3640, %v3662, %v3664
      %v3666 = vrot.slane %v3152, 1
      %v3667 = vsel %vm3640, %v3664, %v3666
      %v3668 = vrot.slane %v3153, 1
      %v3669 = vsel %vm3640, %v3666, %v3668
      %v3670 = vrot.slane %v3154, 1
      %v3671 = vsel %vm3640, %v3668, %v3670
      %v3672 = vrot.slane %v3155, 1
      %v3673 = vsel %vm3640, %v3670, %v3672
      %v3674 = vrot.slane %v3156, 1
      %v3675 = vsel %vm3640, %v3672, %v3674
      %v3676 = vrot.slane %v3157, 1
      %v3677 = vsel %vm3640, %v3674, %v3676
      %v3678 = vrot.slane %v3158, 1
      %v3679 = vsel %vm3640, %v3676, %v3678
      %v3680 = vrot.slane %v3159, 1
      %v3681 = vsel %vm3640, %v3678, %v3680
      %v3683 = vsel %vm446, %v3643, 0
      %v3686 = vsel %vm446, %v3645, 0
      %v3689 = vsel %vm446, %v3647, 0
      %v3692 = vsel %vm446, %v3649, 0
      %v3695 = vsel %vm446, %v3651, 0
      %v3698 = vsel %vm446, %v3653, 0
      %v3701 = vsel %vm446, %v3655, 0
      %v3704 = vsel %vm446, %v3657, 0
      %v3707 = vsel %vm446, %v3659, 0
      %v3710 = vsel %vm446, %v3661, 0
      %v3713 = vsel %vm446, %v3663, 0
      %v3716 = vsel %vm446, %v3665, 0
      %v3719 = vsel %vm446, %v3667, 0
      %v3722 = vsel %vm446, %v3669, 0
      %v3725 = vsel %vm446, %v3671, 0
      %v3728 = vsel %vm446, %v3673, 0
      %v3731 = vsel %vm446, %v3675, 0
      %v3734 = vsel %vm446, %v3677, 0
      %v3737 = vsel %vm446, %v3679, 0
      %v3740 = vsel %vm446, %v3681, 0
      %v3743 = vsel %vm446, %v3680, 0
      %v3746 = vsel %vm510, %v3636, 0
      %3748 = vmatprep.subr.bf16.mxu0 0
      %3749 = vmatpush1.bf16.msra.mxu0 %v3746
      %3750 = vmatprep.subr.bf16.mxu0 0
      %3751 = vmatpush1.bf16.msra.mxu0 0
      %3752 = vmatprep.subr.bf16.mxu0 0
      %3753 = vmatpush1.bf16.msra.mxu0 0
      %3754 = vmatprep.subr.bf16.mxu0 0
      %3755 = vmatpush1.bf16.msra.mxu0 0
      %3756 = vmatprep.subr.bf16.mxu0 0
      %3757 = vmatpush1.bf16.msra.mxu0 0
      %3758 = vmatprep.subr.bf16.mxu0 0
      %3759 = vmatpush1.bf16.msra.mxu0 0
      %3760 = vmatprep.subr.bf16.mxu0 0
      %3761 = vmatpush1.bf16.msra.mxu0 0
      %3762 = vmatprep.subr.bf16.mxu0 0
      %3763 = vmatpush1.bf16.msra.mxu0 0
      %3764 = vmatprep.subr.bf16.mxu0 0
      %3765 = vmatpush1.bf16.msra.mxu0 0
      %3766 = vmatprep.subr.bf16.mxu0 0
      %3767 = vmatpush1.bf16.msra.mxu0 0
      %3768 = vmatprep.subr.bf16.mxu0 0
      %3769 = vmatpush1.bf16.msra.mxu0 0
      %3770 = vmatprep.subr.bf16.mxu0 0
      %3771 = vmatpush1.bf16.msra.mxu0 0
      %3772 = vmatprep.subr.bf16.mxu0 0
      %3773 = vmatpush1.bf16.msra.mxu0 0
      %3774 = vmatprep.subr.bf16.mxu0 0
      %3775 = vmatpush1.bf16.msra.mxu0 0
      %3776 = vmatprep.subr.bf16.mxu0 0
      %3777 = vmatpush1.bf16.msra.mxu0 0
      %3778 = vmatprep.subr.bf16.mxu0 0
      %3779 = vmatpush1.bf16.msra.mxu0 0
      %3780 = vmatprep.mubr.bf16.mxu0 0
      %3781 = vmatmul.mubr.bf16.gmra.mrb[0].mxu0 %v3683
      %v3782 = vpop.f32.mrb[0].mxu0
      %v3783 = vadd.f32 0.0, %v3782
      %v3784 = vpop.f32.mrb[0].mxu0
      %v3785 = vpop.f32.mrb[0].mxu0
      %v3786 = vadd.f32 0.0, %v3785
      %v3787 = vpop.f32.mrb[0].mxu0
      %3788 = vmatprep.mubr.bf16.mxu0 0
      %3789 = vmatmul.mubr.bf16.gmra.mrb[0].mxu0 %v3686
      %v3790 = vpop.f32.mrb[0].mxu0
      %v3791 = vadd.f32 0.0, %v3790
      %v3792 = vpop.f32.mrb[0].mxu0
      %v3793 = vpop.f32.mrb[0].mxu0
      %v3794 = vadd.f32 0.0, %v3793
      %v3795 = vpop.f32.mrb[0].mxu0
      %3796 = vmatprep.mubr.bf16.mxu0 0
      %3797 = vmatmul.mubr.bf16.gmra.mrb[0].mxu0 %v3689
      %v3798 = vpop.f32.mrb[0].mxu0
      %v3799 = vadd.f32 0.0, %v3798
      %v3800 = vpop.f32.mrb[0].mxu0
      %v3801 = vpop.f32.mrb[0].mxu0
      %v3802 = vadd.f32 0.0, %v3801
      %v3803 = vpop.f32.mrb[0].mxu0
      %3804 = vmatprep.mubr.bf16.mxu0 0
      %3805 = vmatmul.mubr.bf16.gmra.mrb[0].mxu0 %v3692
      %v3806 = vpop.f32.mrb[0].mxu0
      %v3807 = vadd.f32 0.0, %v3806
      %v3808 = vpop.f32.mrb[0].mxu0
      %v3809 = vpop.f32.mrb[0].mxu0
      %v3810 = vadd.f32 0.0, %v3809
      %v3811 = vpop.f32.mrb[0].mxu0
      %3812 = vmatprep.mubr.bf16.mxu0 0
      %3813 = vmatmul.mubr.bf16.gmra.mrb[0].mxu0 %v3695
      %v3814 = vpop.f32.mrb[0].mxu0
      %v3815 = vadd.f32 0.0, %v3814
      %v3816 = vpop.f32.mrb[0].mxu0
      %v3817 = vpop.f32.mrb[0].mxu0
      %v3818 = vadd.f32 0.0, %v3817
      %v3819 = vpop.f32.mrb[0].mxu0
      %3820 = vmatprep.mubr.bf16.mxu0 0
      %3821 = vmatmul.mubr.bf16.gmra.mrb[0].mxu0 %v3698
      %v3822 = vpop.f32.mrb[0].mxu0
      %v3823 = vadd.f32 0.0, %v3822
      %v3824 = vpop.f32.mrb[0].mxu0
      %v3825 = vpop.f32.mrb[0].mxu0
      %v3826 = vadd.f32 0.0, %v3825
      %v3827 = vpop.f32.mrb[0].mxu0
      %3828 = vmatprep.mubr.bf16.mxu0 0
      %3829 = vmatmul.mubr.bf16.gmra.mrb[0].mxu0 %v3701
      %v3830 = vpop.f32.mrb[0].mxu0
      %v3831 = vadd.f32 0.0, %v3830
      %v3832 = vpop.f32.mrb[0].mxu0
      %v3833 = vpop.f32.mrb[0].mxu0
      %v3834 = vadd.f32 0.0, %v3833
      %v3835 = vpop.f32.mrb[0].mxu0
      %3836 = vmatprep.mubr.bf16.mxu0 0
      %3837 = vmatmul.mubr.bf16.gmra.mrb[0].mxu0 %v3704
      %v3838 = vpop.f32.mrb[0].mxu0
      %v3839 = vadd.f32 0.0, %v3838
      %v3840 = vpop.f32.mrb[0].mxu0
      %v3841 = vpop.f32.mrb[0].mxu0
      %v3842 = vadd.f32 0.0, %v3841
      %v3843 = vpop.f32.mrb[0].mxu0
      %3844 = vmatprep.mubr.bf16.mxu0 0
      %3845 = vmatmul.mubr.bf16.gmra.mrb[0].mxu0 %v3707
      %v3846 = vpop.f32.mrb[0].mxu0
      %v3847 = vadd.f32 0.0, %v3846
      %v3848 = vpop.f32.mrb[0].mxu0
      %v3849 = vpop.f32.mrb[0].mxu0
      %v3850 = vadd.f32 0.0, %v3849
      %v3851 = vpop.f32.mrb[0].mxu0
      %3852 = vmatprep.mubr.bf16.mxu0 0
      %3853 = vmatmul.mubr.bf16.gmra.mrb[0].mxu0 %v3710
      %v3854 = vpop.f32.mrb[0].mxu0
      %v3855 = vadd.f32 0.0, %v3854
      %v3856 = vpop.f32.mrb[0].mxu0
      %v3857 = vpop.f32.mrb[0].mxu0
      %v3858 = vadd.f32 0.0, %v3857
      %v3859 = vpop.f32.mrb[0].mxu0
      %3860 = vmatprep.mubr.bf16.mxu0 0
      %3861 = vmatmul.mubr.bf16.gmra.mrb[0].mxu0 %v3713
      %v3862 = vpop.f32.mrb[0].mxu0
      %v3863 = vadd.f32 0.0, %v3862
      %v3864 = vpop.f32.mrb[0].mxu0
      %v3865 = vpop.f32.mrb[0].mxu0
      %v3866 = vadd.f32 0.0, %v3865
      %v3867 = vpop.f32.mrb[0].mxu0
      %3868 = vmatprep.mubr.bf16.mxu0 0
      %3869 = vmatmul.mubr.bf16.gmra.mrb[0].mxu0 %v3716
      %v3870 = vpop.f32.mrb[0].mxu0
      %v3871 = vadd.f32 0.0, %v3870
      %v3872 = vpop.f32.mrb[0].mxu0
      %v3873 = vpop.f32.mrb[0].mxu0
      %v3874 = vadd.f32 0.0, %v3873
      %v3875 = vpop.f32.mrb[0].mxu0
      %3876 = vmatprep.mubr.bf16.mxu0 0
      %3877 = vmatmul.mubr.bf16.gmra.mrb[0].mxu0 %v3719
      %v3878 = vpop.f32.mrb[0].mxu0
      %v3879 = vadd.f32 0.0, %v3878
      %v3880 = vpop.f32.mrb[0].mxu0
      %v3881 = vpop.f32.mrb[0].mxu0
      %v3882 = vadd.f32 0.0, %v3881
      %v3883 = vpop.f32.mrb[0].mxu0
      %3884 = vmatprep.mubr.bf16.mxu0 0
      %3885 = vmatmul.mubr.bf16.gmra.mrb[0].mxu0 %v3722
      %v3886 = vpop.f32.mrb[0].mxu0
      %v3887 = vadd.f32 0.0, %v3886
      %v3888 = vpop.f32.mrb[0].mxu0
      %v3889 = vpop.f32.mrb[0].mxu0
      %v3890 = vadd.f32 0.0, %v3889
      %v3891 = vpop.f32.mrb[0].mxu0
      %3892 = vmatprep.mubr.bf16.mxu0 0
      %3893 = vmatmul.mubr.bf16.gmra.mrb[0].mxu0 %v3725
      %v3894 = vpop.f32.mrb[0].mxu0
      %v3895 = vadd.f32 0.0, %v3894
      %v3896 = vpop.f32.mrb[0].mxu0
      %v3897 = vpop.f32.mrb[0].mxu0
      %v3898 = vadd.f32 0.0, %v3897
      %v3899 = vpop.f32.mrb[0].mxu0
      %3900 = vmatprep.mubr.bf16.mxu0 0
      %3901 = vmatmul.mubr.bf16.gmra.mrb[0].mxu0 %v3728
      %v3902 = vpop.f32.mrb[0].mxu0
      %v3903 = vadd.f32 0.0, %v3902
      %v3904 = vpop.f32.mrb[0].mxu0
      %v3905 = vpop.f32.mrb[0].mxu0
      %v3906 = vadd.f32 0.0, %v3905
      %v3907 = vpop.f32.mrb[0].mxu0
      %3908 = vmatprep.mubr.bf16.mxu0 0
      %3909 = vmatmul.mubr.bf16.gmra.mrb[0].mxu0 %v3731
      %v3910 = vpop.f32.mrb[0].mxu0
      %v3911 = vadd.f32 0.0, %v3910
      %v3912 = vpop.f32.mrb[0].mxu0
      %v3913 = vpop.f32.mrb[0].mxu0
      %v3914 = vadd.f32 0.0, %v3913
      %v3915 = vpop.f32.mrb[0].mxu0
      %3916 = vmatprep.mubr.bf16.mxu0 0
      %3917 = vmatmul.mubr.bf16.gmra.mrb[0].mxu0 %v3734
      %v3918 = vpop.f32.mrb[0].mxu0
      %v3919 = vadd.f32 0.0, %v3918
      %v3920 = vpop.f32.mrb[0].mxu0
      %v3921 = vpop.f32.mrb[0].mxu0
      %v3922 = vadd.f32 0.0, %v3921
      %v3923 = vpop.f32.mrb[0].mxu0
      %3924 = vmatprep.mubr.bf16.mxu0 0
      %3925 = vmatmul.mubr.bf16.gmra.mrb[0].mxu0 %v3737
      %v3926 = vpop.f32.mrb[0].mxu0
      %v3927 = vadd.f32 0.0, %v3926
      %v3928 = vpop.f32.mrb[0].mxu0
      %v3929 = vpop.f32.mrb[0].mxu0
      %v3930 = vadd.f32 0.0, %v3929
      %v3931 = vpop.f32.mrb[0].mxu0
      %3932 = vmatprep.mubr.bf16.mxu0 0
      %3933 = vmatmul.mubr.bf16.gmra.mrb[0].mxu0 %v3740
      %v3934 = vpop.f32.mrb[0].mxu0
      %v3935 = vadd.f32 0.0, %v3934
      %v3936 = vpop.f32.mrb[0].mxu0
      %v3937 = vpop.f32.mrb[0].mxu0
      %v3938 = vadd.f32 0.0, %v3937
      %v3939 = vpop.f32.mrb[0].mxu0
      %3940 = vmatprep.mubr.bf16.mxu0 0
      %3941 = vmatmul.mubr.bf16.gmra.mrb[0].mxu0 %v3743
      %v3942 = vpop.f32.mrb[0].mxu0
      %v3943 = vadd.f32 0.0, %v3942
      %v3944 = vpop.f32.mrb[0].mxu0
      %v3945 = vpop.f32.mrb[0].mxu0
      %v3946 = vpop.f32.mrb[0].mxu0
      %3947 = vdwg.mxu0
      %v3948 = vadd.f32 %v3593, %v3783
      %v3949 = vadd.f32 %v3594, %v3786
      %v3950 = vadd.f32 %v3595, %v3791
      %v3951 = vadd.f32 %v3596, %v3794
      %v3952 = vadd.f32 %v3597, %v3799
      %v3953 = vadd.f32 %v3598, %v3802
      %v3954 = vadd.f32 %v3599, %v3807
      %v3955 = vadd.f32 %v3600, %v3810
      %v3956 = vadd.f32 %v3601, %v3815
      %v3957 = vadd.f32 %v3602, %v3818
      %v3958 = vadd.f32 %v3603, %v3823
      %v3959 = vadd.f32 %v3604, %v3826
      %v3960 = vadd.f32 %v3605, %v3831
      %v3961 = vadd.f32 %v3606, %v3834
      %v3962 = vadd.f32 %v3607, %v3839
      %v3963 = vadd.f32 %v3608, %v3842
      %v3964 = vadd.f32 %v3609, %v3847
      %v3965 = vadd.f32 %v3610, %v3850
      %v3966 = vadd.f32 %v3611, %v3855
      %v3967 = vadd.f32 %v3612, %v3858
      %v3968 = vadd.f32 %v3613, %v3863
      %v3969 = vadd.f32 %v3614, %v3866
      %v3970 = vadd.f32 %v3615, %v3871
      %v3971 = vadd.f32 %v3616, %v3874
      %v3972 = vadd.f32 %v3617, %v3879
      %v3973 = vadd.f32 %v3618, %v3882
      %v3974 = vadd.f32 %v3619, %v3887
      %v3975 = vadd.f32 %v3620, %v3890
      %v3976 = vadd.f32 %v3621, %v3895
      %v3977 = vadd.f32 %v3622, %v3898
      %v3978 = vadd.f32 %v3623, %v3903
      %v3979 = vadd.f32 %v3624, %v3906
      %v3980 = vadd.f32 %v3625, %v3911
      %v3981 = vadd.f32 %v3626, %v3914
      %v3982 = vadd.f32 %v3627, %v3919
      %v3983 = vadd.f32 %v3628, %v3922
      %v3984 = vadd.f32 %v3629, %v3927
      %v3985 = vadd.f32 %v3630, %v3930
      %v3986 = vadd.f32 %v3631, %v3935
      %v3987 = vadd.f32 %v3632, %v3938
      %v3988 = vadd.f32 %v3633, %v3943
      %v3989 = vld [vmem:[%s246 + $0xb8] sm:$0xf]
      %s3990 = scalar_lea.vmem %s2, 32
      %v3991 = vld [vmem:[%s3990] sm:$0xf]
      %v3993 = vunpack.c.l.b16 %v3989
      %v3994 = vpack.c.b16 %v3993, %v3993
      %vm3995 = vsmask.f32 6400
      %v3997 = vshrl.u32 %v3639, 16
      %v3999 = vrot.slane %v3997, 1
      %v4000 = vshll.u32 %v3639, 16
      %v4002 = vrot.slane %v4000, 2
      %v4003 = vor.u32 %v3999, %v4002
      %v4004 = vrot.slane %v3172, 1
      %v4005 = vrot.slane %v3168, 2
      %v4006 = vor.u32 %v4004, %v4005
      %v4007 = vsel %vm3995, %v4003, %v4006
      %v4008 = vrot.slane %v3180, 1
      %v4009 = vrot.slane %v3176, 2
      %v4010 = vor.u32 %v4008, %v4009
      %v4011 = vsel %vm3995, %v4006, %v4010
      %v4012 = vrot.slane %v3188, 1
      %v4013 = vrot.slane %v3184, 2
      %v4014 = vor.u32 %v4012, %v4013
      %v4015 = vsel %vm3995, %v4010, %v4014
      %v4016 = vrot.slane %v3196, 1
      %v4017 = vrot.slane %v3192, 2
      %v4018 = vor.u32 %v4016, %v4017
      %v4019 = vsel %vm3995, %v4014, %v4018
      %v4020 = vrot.slane %v3204, 1
      %v4021 = vrot.slane %v3200, 2
      %v4022 = vor.u32 %v4020, %v4021
      %v4023 = vsel %vm3995, %v4018, %v4022
      %v4024 = vrot.slane %v3212, 1
      %v4025 = vrot.slane %v3208, 2
      %v4026 = vor.u32 %v4024, %v4025
      %v4027 = vsel %vm3995, %v4022, %v4026
      %v4028 = vrot.slane %v3220, 1
      %v4029 = vrot.slane %v3216, 2
      %v4030 = vor.u32 %v4028, %v4029
      %v4031 = vsel %vm3995, %v4026, %v4030
      %v4032 = vrot.slane %v3228, 1
      %v4033 = vrot.slane %v3224, 2
      %v4034 = vor.u32 %v4032, %v4033
      %v4035 = vsel %vm3995, %v4030, %v4034
      %v4036 = vrot.slane %v3236, 1
      %v4037 = vrot.slane %v3232, 2
      %v4038 = vor.u32 %v4036, %v4037
      %v4039 = vsel %vm3995, %v4034, %v4038
      %v4040 = vrot.slane %v3244, 1
      %v4041 = vrot.slane %v3240, 2
      %v4042 = vor.u32 %v4040, %v4041
      %v4043 = vsel %vm3995, %v4038, %v4042
      %v4044 = vrot.slane %v3252, 1
      %v4045 = vrot.slane %v3248, 2
      %v4046 = vor.u32 %v4044, %v4045
      %v4047 = vsel %vm3995, %v4042, %v4046
      %v4048 = vrot.slane %v3260, 1
      %v4049 = vrot.slane %v3256, 2
      %v4050 = vor.u32 %v4048, %v4049
      %v4051 = vsel %vm3995, %v4046, %v4050
      %v4052 = vrot.slane %v3268, 1
      %v4053 = vrot.slane %v3264, 2
      %v4054 = vor.u32 %v4052, %v4053
      %v4055 = vsel %vm3995, %v4050, %v4054
      %v4056 = vrot.slane %v3276, 1
      %v4057 = vrot.slane %v3272, 2
      %v4058 = vor.u32 %v4056, %v4057
      %v4059 = vsel %vm3995, %v4054, %v4058
      %v4060 = vrot.slane %v3284, 1
      %v4061 = vrot.slane %v3280, 2
      %v4062 = vor.u32 %v4060, %v4061
      %v4063 = vsel %vm3995, %v4058, %v4062
      %v4064 = vrot.slane %v3292, 1
      %v4065 = vrot.slane %v3288, 2
      %v4066 = vor.u32 %v4064, %v4065
      %v4067 = vsel %vm3995, %v4062, %v4066
      %v4068 = vrot.slane %v3300, 1
      %v4069 = vrot.slane %v3296, 2
      %v4070 = vor.u32 %v4068, %v4069
      %v4071 = vsel %vm3995, %v4066, %v4070
      %v4072 = vrot.slane %v3308, 1
      %v4073 = vrot.slane %v3304, 2
      %v4074 = vor.u32 %v4072, %v4073
      %v4075 = vsel %vm3995, %v4070, %v4074
      %v4076 = vrot.slane %v3316, 1
      %v4077 = vrot.slane %v3312, 2
      %v4078 = vor.u32 %v4076, %v4077
      %v4079 = vsel %vm3995, %v4074, %v4078
      %v4081 = vshrl.u32 %v3994, 16
      %v4083 = vrot.slane %v4081, 1
      %v4084 = vshll.u32 %v3994, 16
      %v4086 = vrot.slane %v4084, 2
      %v4087 = vor.u32 %v4083, %v4086
      %v4088 = vsel %vm3995, %v4078, %v4087
      %v4090 = vsel %vm446, %v4007, 0
      %v4093 = vsel %vm446, %v4011, 0
      %v4096 = vsel %vm446, %v4015, 0
      %v4099 = vsel %vm446, %v4019, 0
      %v4102 = vsel %vm446, %v4023, 0
      %v4105 = vsel %vm446, %v4027, 0
      %v4108 = vsel %vm446, %v4031, 0
      %v4111 = vsel %vm446, %v4035, 0
      %v4114 = vsel %vm446, %v4039, 0
      %v4117 = vsel %vm446, %v4043, 0
      %v4120 = vsel %vm446, %v4047, 0
      %v4123 = vsel %vm446, %v4051, 0
      %v4126 = vsel %vm446, %v4055, 0
      %v4129 = vsel %vm446, %v4059, 0
      %v4132 = vsel %vm446, %v4063, 0
      %v4135 = vsel %vm446, %v4067, 0
      %v4138 = vsel %vm446, %v4071, 0
      %v4141 = vsel %vm446, %v4075, 0
      %v4144 = vsel %vm446, %v4079, 0
      %v4147 = vsel %vm446, %v4088, 0
      %v4150 = vsel %vm446, %v4087, 0
      %v4153 = vsel %vm510, %v3991, 0
      %4155 = vmatprep.subr.bf16.mxu0 0
      %4156 = vmatpush1.bf16.msra.mxu0 %v4153
      %4157 = vmatprep.subr.bf16.mxu0 0
      %4158 = vmatpush1.bf16.msra.mxu0 0
      %4159 = vmatprep.subr.bf16.mxu0 0
      %4160 = vmatpush1.bf16.msra.mxu0 0
      %4161 = vmatprep.subr.bf16.mxu0 0
      %4162 = vmatpush1.bf16.msra.mxu0 0
      %4163 = vmatprep.subr.bf16.mxu0 0
      %4164 = vmatpush1.bf16.msra.mxu0 0
      %4165 = vmatprep.subr.bf16.mxu0 0
      %4166 = vmatpush1.bf16.msra.mxu0 0
      %4167 = vmatprep.subr.bf16.mxu0 0
      %4168 = vmatpush1.bf16.msra.mxu0 0
      %4169 = vmatprep.subr.bf16.mxu0 0
      %4170 = vmatpush1.bf16.msra.mxu0 0
      %4171 = vmatprep.subr.bf16.mxu0 0
      %4172 = vmatpush1.bf16.msra.mxu0 0
      %4173 = vmatprep.subr.bf16.mxu0 0
      %4174 = vmatpush1.bf16.msra.mxu0 0
      %4175 = vmatprep.subr.bf16.mxu0 0
      %4176 = vmatpush1.bf16.msra.mxu0 0
      %4177 = vmatprep.subr.bf16.mxu0 0
      %4178 = vmatpush1.bf16.msra.mxu0 0
      %4179 = vmatprep.subr.bf16.mxu0 0
      %4180 = vmatpush1.bf16.msra.mxu0 0
      %4181 = vmatprep.subr.bf16.mxu0 0
      %4182 = vmatpush1.bf16.msra.mxu0 0
      %4183 = vmatprep.subr.bf16.mxu0 0
      %4184 = vmatpush1.bf16.msra.mxu0 0
      %4185 = vmatprep.subr.bf16.mxu0 0
      %4186 = vmatpush1.bf16.msra.mxu0 0
      %4187 = vmatprep.mubr.bf16.mxu0 0
      %4188 = vmatmul.mubr.bf16.gmra.mrb[0].mxu0 %v4090
      %v4189 = vpop.f32.mrb[0].mxu0
      %v4190 = vadd.f32 0.0, %v4189
      %v4191 = vpop.f32.mrb[0].mxu0
      %v4192 = vpop.f32.mrb[0].mxu0
      %v4193 = vadd.f32 0.0, %v4192
      %v4194 = vpop.f32.mrb[0].mxu0
      %4195 = vmatprep.mubr.bf16.mxu0 0
      %4196 = vmatmul.mubr.bf16.gmra.mrb[0].mxu0 %v4093
      %v4197 = vpop.f32.mrb[0].mxu0
      %v4198 = vadd.f32 0.0, %v4197
      %v4199 = vpop.f32.mrb[0].mxu0
      %v4200 = vpop.f32.mrb[0].mxu0
      %v4201 = vadd.f32 0.0, %v4200
      %v4202 = vpop.f32.mrb[0].mxu0
      %4203 = vmatprep.mubr.bf16.mxu0 0
      %4204 = vmatmul.mubr.bf16.gmra.mrb[0].mxu0 %v4096
      %v4205 = vpop.f32.mrb[0].mxu0
      %v4206 = vadd.f32 0.0, %v4205
      %v4207 = vpop.f32.mrb[0].mxu0
      %v4208 = vpop.f32.mrb[0].mxu0
      %v4209 = vadd.f32 0.0, %v4208
      %v4210 = vpop.f32.mrb[0].mxu0
      %4211 = vmatprep.mubr.bf16.mxu0 0
      %4212 = vmatmul.mubr.bf16.gmra.mrb[0].mxu0 %v4099
      %v4213 = vpop.f32.mrb[0].mxu0
      %v4214 = vadd.f32 0.0, %v4213
      %v4215 = vpop.f32.mrb[0].mxu0
      %v4216 = vpop.f32.mrb[0].mxu0
      %v4217 = vadd.f32 0.0, %v4216
      %v4218 = vpop.f32.mrb[0].mxu0
      %4219 = vmatprep.mubr.bf16.mxu0 0
      %4220 = vmatmul.mubr.bf16.gmra.mrb[0].mxu0 %v4102
      %v4221 = vpop.f32.mrb[0].mxu0
      %v4222 = vadd.f32 0.0, %v4221
      %v4223 = vpop.f32.mrb[0].mxu0
      %v4224 = vpop.f32.mrb[0].mxu0
      %v4225 = vadd.f32 0.0, %v4224
      %v4226 = vpop.f32.mrb[0].mxu0
      %4227 = vmatprep.mubr.bf16.mxu0 0
      %4228 = vmatmul.mubr.bf16.gmra.mrb[0].mxu0 %v4105
      %v4229 = vpop.f32.mrb[0].mxu0
      %v4230 = vadd.f32 0.0, %v4229
      %v4231 = vpop.f32.mrb[0].mxu0
      %v4232 = vpop.f32.mrb[0].mxu0
      %v4233 = vadd.f32 0.0, %v4232
      %v4234 = vpop.f32.mrb[0].mxu0
      %4235 = vmatprep.mubr.bf16.mxu0 0
      %4236 = vmatmul.mubr.bf16.gmra.mrb[0].mxu0 %v4108
      %v4237 = vpop.f32.mrb[0].mxu0
      %v4238 = vadd.f32 0.0, %v4237
      %v4239 = vpop.f32.mrb[0].mxu0
      %v4240 = vpop.f32.mrb[0].mxu0
      %v4241 = vadd.f32 0.0, %v4240
      %v4242 = vpop.f32.mrb[0].mxu0
      %4243 = vmatprep.mubr.bf16.mxu0 0
      %4244 = vmatmul.mubr.bf16.gmra.mrb[0].mxu0 %v4111
      %v4245 = vpop.f32.mrb[0].mxu0
      %v4246 = vadd.f32 0.0, %v4245
      %v4247 = vpop.f32.mrb[0].mxu0
      %v4248 = vpop.f32.mrb[0].mxu0
      %v4249 = vadd.f32 0.0, %v4248
      %v4250 = vpop.f32.mrb[0].mxu0
      %4251 = vmatprep.mubr.bf16.mxu0 0
      %4252 = vmatmul.mubr.bf16.gmra.mrb[0].mxu0 %v4114
      %v4253 = vpop.f32.mrb[0].mxu0
      %v4254 = vadd.f32 0.0, %v4253
      %v4255 = vpop.f32.mrb[0].mxu0
      %v4256 = vpop.f32.mrb[0].mxu0
      %v4257 = vadd.f32 0.0, %v4256
      %v4258 = vpop.f32.mrb[0].mxu0
      %4259 = vmatprep.mubr.bf16.mxu0 0
      %4260 = vmatmul.mubr.bf16.gmra.mrb[0].mxu0 %v4117
      %v4261 = vpop.f32.mrb[0].mxu0
      %v4262 = vadd.f32 0.0, %v4261
      %v4263 = vpop.f32.mrb[0].mxu0
      %v4264 = vpop.f32.mrb[0].mxu0
      %v4265 = vadd.f32 0.0, %v4264
      %v4266 = vpop.f32.mrb[0].mxu0
      %4267 = vmatprep.mubr.bf16.mxu0 0
      %4268 = vmatmul.mubr.bf16.gmra.mrb[0].mxu0 %v4120
      %v4269 = vpop.f32.mrb[0].mxu0
      %v4270 = vadd.f32 0.0, %v4269
      %v4271 = vpop.f32.mrb[0].mxu0
      %v4272 = vpop.f32.mrb[0].mxu0
      %v4273 = vadd.f32 0.0, %v4272
      %v4274 = vpop.f32.mrb[0].mxu0
      %4275 = vmatprep.mubr.bf16.mxu0 0
      %4276 = vmatmul.mubr.bf16.gmra.mrb[0].mxu0 %v4123
      %v4277 = vpop.f32.mrb[0].mxu0
      %v4278 = vadd.f32 0.0, %v4277
      %v4279 = vpop.f32.mrb[0].mxu0
      %v4280 = vpop.f32.mrb[0].mxu0
      %v4281 = vadd.f32 0.0, %v4280
      %v4282 = vpop.f32.mrb[0].mxu0
      %4283 = vmatprep.mubr.bf16.mxu0 0
      %4284 = vmatmul.mubr.bf16.gmra.mrb[0].mxu0 %v4126
      %v4285 = vpop.f32.mrb[0].mxu0
      %v4286 = vadd.f32 0.0, %v4285
      %v4287 = vpop.f32.mrb[0].mxu0
      %v4288 = vpop.f32.mrb[0].mxu0
      %v4289 = vadd.f32 0.0, %v4288
      %v4290 = vpop.f32.mrb[0].mxu0
      %4291 = vmatprep.mubr.bf16.mxu0 0
      %4292 = vmatmul.mubr.bf16.gmra.mrb[0].mxu0 %v4129
      %v4293 = vpop.f32.mrb[0].mxu0
      %v4294 = vadd.f32 0.0, %v4293
      %v4295 = vpop.f32.mrb[0].mxu0
      %v4296 = vpop.f32.mrb[0].mxu0
      %v4297 = vadd.f32 0.0, %v4296
      %v4298 = vpop.f32.mrb[0].mxu0
      %4299 = vmatprep.mubr.bf16.mxu0 0
      %4300 = vmatmul.mubr.bf16.gmra.mrb[0].mxu0 %v4132
      %v4301 = vpop.f32.mrb[0].mxu0
      %v4302 = vadd.f32 0.0, %v4301
      %v4303 = vpop.f32.mrb[0].mxu0
      %v4304 = vpop.f32.mrb[0].mxu0
      %v4305 = vadd.f32 0.0, %v4304
      %v4306 = vpop.f32.mrb[0].mxu0
      %4307 = vmatprep.mubr.bf16.mxu0 0
      %4308 = vmatmul.mubr.bf16.gmra.mrb[0].mxu0 %v4135
      %v4309 = vpop.f32.mrb[0].mxu0
      %v4310 = vadd.f32 0.0, %v4309
      %v4311 = vpop.f32.mrb[0].mxu0
      %v4312 = vpop.f32.mrb[0].mxu0
      %v4313 = vadd.f32 0.0, %v4312
      %v4314 = vpop.f32.mrb[0].mxu0
      %4315 = vmatprep.mubr.bf16.mxu0 0
      %4316 = vmatmul.mubr.bf16.gmra.mrb[0].mxu0 %v4138
      %v4317 = vpop.f32.mrb[0].mxu0
      %v4318 = vadd.f32 0.0, %v4317
      %v4319 = vpop.f32.mrb[0].mxu0
      %v4320 = vpop.f32.mrb[0].mxu0
      %v4321 = vadd.f32 0.0, %v4320
      %v4322 = vpop.f32.mrb[0].mxu0
      %4323 = vmatprep.mubr.bf16.mxu0 0
      %4324 = vmatmul.mubr.bf16.gmra.mrb[0].mxu0 %v4141
      %v4325 = vpop.f32.mrb[0].mxu0
      %v4326 = vadd.f32 0.0, %v4325
      %v4327 = vpop.f32.mrb[0].mxu0
      %v4328 = vpop.f32.mrb[0].mxu0
      %v4329 = vadd.f32 0.0, %v4328
      %v4330 = vpop.f32.mrb[0].mxu0
      %4331 = vmatprep.mubr.bf16.mxu0 0
      %4332 = vmatmul.mubr.bf16.gmra.mrb[0].mxu0 %v4144
      %v4333 = vpop.f32.mrb[0].mxu0
      %v4334 = vadd.f32 0.0, %v4333
      %v4335 = vpop.f32.mrb[0].mxu0
      %v4336 = vpop.f32.mrb[0].mxu0
      %v4337 = vadd.f32 0.0, %v4336
      %v4338 = vpop.f32.mrb[0].mxu0
      %4339 = vmatprep.mubr.bf16.mxu0 0
      %4340 = vmatmul.mubr.bf16.gmra.mrb[0].mxu0 %v4147
      %v4341 = vpop.f32.mrb[0].mxu0
      %v4342 = vadd.f32 0.0, %v4341
      %v4343 = vpop.f32.mrb[0].mxu0
      %v4344 = vpop.f32.mrb[0].mxu0
      %v4345 = vadd.f32 0.0, %v4344
      %v4346 = vpop.f32.mrb[0].mxu0
      %4347 = vmatprep.mubr.bf16.mxu0 0
      %4348 = vmatmul.mubr.bf16.gmra.mrb[0].mxu0 %v4150
      %v4349 = vpop.f32.mrb[0].mxu0
      %v4350 = vadd.f32 0.0, %v4349
      %v4351 = vpop.f32.mrb[0].mxu0
      %v4352 = vpop.f32.mrb[0].mxu0
      %v4353 = vpop.f32.mrb[0].mxu0
      %4354 = vdwg.mxu0
      %v4355 = vadd.f32 %v3948, %v4190
      %v4356 = vadd.f32 %v3949, %v4193
      %v4357 = vadd.f32 %v3950, %v4198
      %v4358 = vadd.f32 %v3951, %v4201
      %v4359 = vadd.f32 %v3952, %v4206
      %v4360 = vadd.f32 %v3953, %v4209
      %v4361 = vadd.f32 %v3954, %v4214
      %v4362 = vadd.f32 %v3955, %v4217
      %v4363 = vadd.f32 %v3956, %v4222
      %v4364 = vadd.f32 %v3957, %v4225
      %v4365 = vadd.f32 %v3958, %v4230
      %v4366 = vadd.f32 %v3959, %v4233
      %v4367 = vadd.f32 %v3960, %v4238
      %v4368 = vadd.f32 %v3961, %v4241
      %v4369 = vadd.f32 %v3962, %v4246
      %v4370 = vadd.f32 %v3963, %v4249
      %v4371 = vadd.f32 %v3964, %v4254
      %v4372 = vadd.f32 %v3965, %v4257
      %v4373 = vadd.f32 %v3966, %v4262
      %v4374 = vadd.f32 %v3967, %v4265
      %v4375 = vadd.f32 %v3968, %v4270
      %v4376 = vadd.f32 %v3969, %v4273
      %v4377 = vadd.f32 %v3970, %v4278
      %v4378 = vadd.f32 %v3971, %v4281
      %v4379 = vadd.f32 %v3972, %v4286
      %v4380 = vadd.f32 %v3973, %v4289
      %v4381 = vadd.f32 %v3974, %v4294
      %v4382 = vadd.f32 %v3975, %v4297
      %v4383 = vadd.f32 %v3976, %v4302
      %v4384 = vadd.f32 %v3977, %v4305
      %v4385 = vadd.f32 %v3978, %v4310
      %v4386 = vadd.f32 %v3979, %v4313
      %v4387 = vadd.f32 %v3980, %v4318
      %v4388 = vadd.f32 %v3981, %v4321
      %v4389 = vadd.f32 %v3982, %v4326
      %v4390 = vadd.f32 %v3983, %v4329
      %v4391 = vadd.f32 %v3984, %v4334
      %v4392 = vadd.f32 %v3985, %v4337
      %v4393 = vadd.f32 %v3986, %v4342
      %v4394 = vadd.f32 %v3987, %v4345
      %v4395 = vadd.f32 %v3988, %v4350
      %v4396 = vld [vmem:[%s3] sm:$0x1]
      %v4398 = vlaneseq
      %v4399 = vshrl.u32 %v4398, 7
      %v4400 = vsub.s32 0, %v4399
      %v4401 = vrot.slane %v4396, %v4400
      %v4403 = vadd.f32 %v4355, %v4401
      %v4404 = vadd.f32 %v4356, %v4401
      %v4405 = vadd.f32 %v4357, %v4401
      %v4406 = vadd.f32 %v4358, %v4401
      %v4407 = vadd.f32 %v4359, %v4401
      %v4408 = vadd.f32 %v4360, %v4401
      %v4409 = vadd.f32 %v4361, %v4401
      %v4410 = vadd.f32 %v4362, %v4401
      %v4411 = vadd.f32 %v4363, %v4401
      %v4412 = vadd.f32 %v4364, %v4401
      %v4413 = vadd.f32 %v4365, %v4401
      %v4414 = vadd.f32 %v4366, %v4401
      %v4415 = vadd.f32 %v4367, %v4401
      %v4416 = vadd.f32 %v4368, %v4401
      %v4417 = vadd.f32 %v4369, %v4401
      %v4418 = vadd.f32 %v4370, %v4401
      %v4419 = vadd.f32 %v4371, %v4401
      %v4420 = vadd.f32 %v4372, %v4401
      %v4421 = vadd.f32 %v4373, %v4401
      %v4422 = vadd.f32 %v4374, %v4401
      %v4423 = vadd.f32 %v4375, %v4401
      %v4424 = vadd.f32 %v4376, %v4401
      %v4425 = vadd.f32 %v4377, %v4401
      %v4426 = vadd.f32 %v4378, %v4401
      %v4427 = vadd.f32 %v4379, %v4401
      %v4428 = vadd.f32 %v4380, %v4401
      %v4429 = vadd.f32 %v4381, %v4401
      %v4430 = vadd.f32 %v4382, %v4401
      %v4431 = vadd.f32 %v4383, %v4401
      %v4432 = vadd.f32 %v4384, %v4401
      %v4433 = vadd.f32 %v4385, %v4401
      %v4434 = vadd.f32 %v4386, %v4401
      %v4435 = vadd.f32 %v4387, %v4401
      %v4436 = vadd.f32 %v4388, %v4401
      %v4437 = vadd.f32 %v4389, %v4401
      %v4438 = vadd.f32 %v4390, %v4401
      %v4439 = vadd.f32 %v4391, %v4401
      %v4440 = vadd.f32 %v4392, %v4401
      %v4441 = vadd.f32 %v4393, %v4401
      %v4442 = vadd.f32 %v4394, %v4401
      %v4443 = vadd.f32 %v4395, %v4401
      %v4444 = vmax.f32 %v4403, 0.0
      %v4445 = vmax.f32 %v4404, 0.0
      %v4446 = vmax.f32 %v4405, 0.0
      %v4447 = vmax.f32 %v4406, 0.0
      %v4448 = vmax.f32 %v4407, 0.0
      %v4449 = vmax.f32 %v4408, 0.0
      %v4450 = vmax.f32 %v4409, 0.0
      %v4451 = vmax.f32 %v4410, 0.0
      %v4452 = vmax.f32 %v4411, 0.0
      %v4453 = vmax.f32 %v4412, 0.0
      %v4454 = vmax.f32 %v4413, 0.0
      %v4455 = vmax.f32 %v4414, 0.0
      %v4456 = vmax.f32 %v4415, 0.0
      %v4457 = vmax.f32 %v4416, 0.0
      %v4458 = vmax.f32 %v4417, 0.0
      %v4459 = vmax.f32 %v4418, 0.0
      %v4460 = vmax.f32 %v4419, 0.0
      %v4461 = vmax.f32 %v4420, 0.0
      %v4462 = vmax.f32 %v4421, 0.0
      %v4463 = vmax.f32 %v4422, 0.0
      %v4464 = vmax.f32 %v4423, 0.0
      %v4465 = vmax.f32 %v4424, 0.0
      %v4466 = vmax.f32 %v4425, 0.0
      %v4467 = vmax.f32 %v4426, 0.0
      %v4468 = vmax.f32 %v4427, 0.0
      %v4469 = vmax.f32 %v4428, 0.0
      %v4470 = vmax.f32 %v4429, 0.0
      %v4471 = vmax.f32 %v4430, 0.0
      %v4472 = vmax.f32 %v4431, 0.0
      %v4473 = vmax.f32 %v4432, 0.0
      %v4474 = vmax.f32 %v4433, 0.0
      %v4475 = vmax.f32 %v4434, 0.0
      %v4476 = vmax.f32 %v4435, 0.0
      %v4477 = vmax.f32 %v4436, 0.0
      %v4478 = vmax.f32 %v4437, 0.0
      %v4479 = vmax.f32 %v4438, 0.0
      %v4480 = vmax.f32 %v4439, 0.0
      %v4481 = vmax.f32 %v4440, 0.0
      %v4482 = vmax.f32 %v4441, 0.0
      %v4483 = vmax.f32 %v4442, 0.0
      %v4484 = vmax.f32 %v4443, 0.0
      %v4485 = vld [vmem:[%s1] sm:$0xff]
      %v4486 = vld [vmem:[%s1 + $0x8] sm:$0xff]
      %v4487 = vld [vmem:[%s1 + $0x10] sm:$0xff]
      %v4488 = vld [vmem:[%s1 + $0x18] sm:$0xff]
      %v4489 = vld [vmem:[%s1 + $0x20] sm:$0xff]
      %v4490 = vld [vmem:[%s1 + $0x28] sm:$0xff]
      %v4491 = vld [vmem:[%s1 + $0x30] sm:$0xff]
      %v4492 = vld [vmem:[%s1 + $0x38] sm:$0xff]
      %v4493 = vld [vmem:[%s1 + $0x40] sm:$0xff]
      %v4494 = vld [vmem:[%s1 + $0x48] sm:$0xff]
      %v4495 = vld [vmem:[%s1 + $0x50] sm:$0xff]
      %v4496 = vld [vmem:[%s1 + $0x58] sm:$0xff]
      %v4497 = vld [vmem:[%s1 + $0x60] sm:$0xff]
      %v4498 = vld [vmem:[%s1 + $0x68] sm:$0xff]
      %v4499 = vld [vmem:[%s1 + $0x70] sm:$0xff]
      %v4500 = vld [vmem:[%s1 + $0x78] sm:$0xff]
      %v4501 = vld [vmem:[%s1 + $0x80] sm:$0xff]
      %v4502 = vld [vmem:[%s1 + $0x88] sm:$0xff]
      %v4503 = vld [vmem:[%s1 + $0x90] sm:$0xff]
      %v4504 = vld [vmem:[%s1 + $0x98] sm:$0xff]
      %v4505 = vld [vmem:[%s1 + $0xa0] sm:$0xff]
      %v4506 = vld [vmem:[%s1 + $0xa8] sm:$0xff]
      %v4507 = vld [vmem:[%s1 + $0xb0] sm:$0xff]
      %v4508 = vld [vmem:[%s1 + $0xb8] sm:$0xff]
      %v4509 = vld [vmem:[%s1 + $0xc0] sm:$0xff]
      %v4510 = vld [vmem:[%s1 + $0xc8] sm:$0xff]
      %v4511 = vld [vmem:[%s1 + $0xd0] sm:$0xff]
      %v4512 = vld [vmem:[%s1 + $0xd8] sm:$0xff]
      %v4513 = vld [vmem:[%s1 + $0xe0] sm:$0xff]
      %v4514 = vld [vmem:[%s1 + $0xe8] sm:$0xff]
      %v4515 = vld [vmem:[%s1 + $0xf0] sm:$0xff]
      %v4516 = vld [vmem:[%s1 + $0xf8] sm:$0xff]
      %v4517 = vld [vmem:[%s1 + $0x100] sm:$0xff]
      %v4518 = vld [vmem:[%s1 + $0x108] sm:$0xff]
      %v4519 = vld [vmem:[%s1 + $0x110] sm:$0xff]
      %v4520 = vld [vmem:[%s1 + $0x118] sm:$0xff]
      %v4521 = vld [vmem:[%s1 + $0x120] sm:$0xff]
      %v4522 = vld [vmem:[%s1 + $0x128] sm:$0xff]
      %v4523 = vld [vmem:[%s1 + $0x130] sm:$0xff]
      %v4524 = vld [vmem:[%s1 + $0x138] sm:$0xff]
      %v4525 = vld [vmem:[%s1 + $0x140] sm:$0xf]
      %4527 = vset.pattern.permute.xlu0 0
      %4528 = vperm.xlu0 %4527, %v4485
      %v4529 = vpop.permute.xlu0 %4528
      %4532 = vset.pattern.permute.xlu0 0
      %4533 = vperm.xlu0 %4532, %v4486
      %v4534 = vpop.permute.xlu0 %4533
      %4537 = vset.pattern.permute.xlu0 0
      %4538 = vperm.xlu0 %4537, %v4487
      %v4539 = vpop.permute.xlu0 %4538
      %4542 = vset.pattern.permute.xlu0 0
      %4543 = vperm.xlu0 %4542, %v4488
      %v4544 = vpop.permute.xlu0 %4543
      %4547 = vset.pattern.permute.xlu0 0
      %4548 = vperm.xlu0 %4547, %v4489
      %v4549 = vpop.permute.xlu0 %4548
      %4552 = vset.pattern.permute.xlu0 0
      %4553 = vperm.xlu0 %4552, %v4490
      %v4554 = vpop.permute.xlu0 %4553
      %4557 = vset.pattern.permute.xlu0 0
      %4558 = vperm.xlu0 %4557, %v4491
      %v4559 = vpop.permute.xlu0 %4558
      %4562 = vset.pattern.permute.xlu0 0
      %4563 = vperm.xlu0 %4562, %v4492
      %v4564 = vpop.permute.xlu0 %4563
      %4567 = vset.pattern.permute.xlu0 0
      %4568 = vperm.xlu0 %4567, %v4493
      %v4569 = vpop.permute.xlu0 %4568
      %4572 = vset.pattern.permute.xlu0 0
      %4573 = vperm.xlu0 %4572, %v4494
      %v4574 = vpop.permute.xlu0 %4573
      %4577 = vset.pattern.permute.xlu0 0
      %4578 = vperm.xlu0 %4577, %v4495
      %v4579 = vpop.permute.xlu0 %4578
      %4582 = vset.pattern.permute.xlu0 0
      %4583 = vperm.xlu0 %4582, %v4496
      %v4584 = vpop.permute.xlu0 %4583
      %4587 = vset.pattern.permute.xlu0 0
      %4588 = vperm.xlu0 %4587, %v4497
      %v4589 = vpop.permute.xlu0 %4588
      %4592 = vset.pattern.permute.xlu0 0
      %4593 = vperm.xlu0 %4592, %v4498
      %v4594 = vpop.permute.xlu0 %4593
      %4597 = vset.pattern.permute.xlu0 0
      %4598 = vperm.xlu0 %4597, %v4499
      %v4599 = vpop.permute.xlu0 %4598
      %4602 = vset.pattern.permute.xlu0 0
      %4603 = vperm.xlu0 %4602, %v4500
      %v4604 = vpop.permute.xlu0 %4603
      %4607 = vset.pattern.permute.xlu0 0
      %4608 = vperm.xlu0 %4607, %v4501
      %v4609 = vpop.permute.xlu0 %4608
      %4612 = vset.pattern.permute.xlu0 0
      %4613 = vperm.xlu0 %4612, %v4502
      %v4614 = vpop.permute.xlu0 %4613
      %4617 = vset.pattern.permute.xlu0 0
      %4618 = vperm.xlu0 %4617, %v4503
      %v4619 = vpop.permute.xlu0 %4618
      %4622 = vset.pattern.permute.xlu0 0
      %4623 = vperm.xlu0 %4622, %v4504
      %v4624 = vpop.permute.xlu0 %4623
      %4627 = vset.pattern.permute.xlu0 0
      %4628 = vperm.xlu0 %4627, %v4505
      %v4629 = vpop.permute.xlu0 %4628
      %4632 = vset.pattern.permute.xlu0 0
      %4633 = vperm.xlu0 %4632, %v4506
      %v4634 = vpop.permute.xlu0 %4633
      %4637 = vset.pattern.permute.xlu0 0
      %4638 = vperm.xlu0 %4637, %v4507
      %v4639 = vpop.permute.xlu0 %4638
      %4642 = vset.pattern.permute.xlu0 0
      %4643 = vperm.xlu0 %4642, %v4508
      %v4644 = vpop.permute.xlu0 %4643
      %4647 = vset.pattern.permute.xlu0 0
      %4648 = vperm.xlu0 %4647, %v4509
      %v4649 = vpop.permute.xlu0 %4648
      %4652 = vset.pattern.permute.xlu0 0
      %4653 = vperm.xlu0 %4652, %v4510
      %v4654 = vpop.permute.xlu0 %4653
      %4657 = vset.pattern.permute.xlu0 0
      %4658 = vperm.xlu0 %4657, %v4511
      %v4659 = vpop.permute.xlu0 %4658
      %4662 = vset.pattern.permute.xlu0 0
      %4663 = vperm.xlu0 %4662, %v4512
      %v4664 = vpop.permute.xlu0 %4663
      %4667 = vset.pattern.permute.xlu0 0
      %4668 = vperm.xlu0 %4667, %v4513
      %v4669 = vpop.permute.xlu0 %4668
      %4672 = vset.pattern.permute.xlu0 0
      %4673 = vperm.xlu0 %4672, %v4514
      %v4674 = vpop.permute.xlu0 %4673
      %4677 = vset.pattern.permute.xlu0 0
      %4678 = vperm.xlu0 %4677, %v4515
      %v4679 = vpop.permute.xlu0 %4678
      %4682 = vset.pattern.permute.xlu0 0
      %4683 = vperm.xlu0 %4682, %v4516
      %v4684 = vpop.permute.xlu0 %4683
      %4687 = vset.pattern.permute.xlu0 0
      %4688 = vperm.xlu0 %4687, %v4517
      %v4689 = vpop.permute.xlu0 %4688
      %4692 = vset.pattern.permute.xlu0 0
      %4693 = vperm.xlu0 %4692, %v4518
      %v4694 = vpop.permute.xlu0 %4693
      %4697 = vset.pattern.permute.xlu0 0
      %4698 = vperm.xlu0 %4697, %v4519
      %v4699 = vpop.permute.xlu0 %4698
      %4702 = vset.pattern.permute.xlu0 0
      %4703 = vperm.xlu0 %4702, %v4520
      %v4704 = vpop.permute.xlu0 %4703
      %4707 = vset.pattern.permute.xlu0 0
      %4708 = vperm.xlu0 %4707, %v4521
      %v4709 = vpop.permute.xlu0 %4708
      %4712 = vset.pattern.permute.xlu0 0
      %4713 = vperm.xlu0 %4712, %v4522
      %v4714 = vpop.permute.xlu0 %4713
      %4717 = vset.pattern.permute.xlu0 0
      %4718 = vperm.xlu0 %4717, %v4523
      %v4719 = vpop.permute.xlu0 %4718
      %4722 = vset.pattern.permute.xlu0 0
      %4723 = vperm.xlu0 %4722, %v4524
      %v4724 = vpop.permute.xlu0 %4723
      %4727 = vset.pattern.permute.xlu0 0
      %4728 = vperm.xlu0 %4727, %v4525
      %v4729 = vpop.permute.xlu0 %4728
      %v4731 = vmul.f32 %v4444, %v4529
      %v4732 = vmul.f32 %v4445, %v4534
      %v4733 = vmul.f32 %v4446, %v4539
      %v4734 = vmul.f32 %v4447, %v4544
      %v4735 = vmul.f32 %v4448, %v4549
      %v4736 = vmul.f32 %v4449, %v4554
      %v4737 = vmul.f32 %v4450, %v4559
      %v4738 = vmul.f32 %v4451, %v4564
      %v4739 = vmul.f32 %v4452, %v4569
      %v4740 = vmul.f32 %v4453, %v4574
      %v4741 = vmul.f32 %v4454, %v4579
      %v4742 = vmul.f32 %v4455, %v4584
      %v4743 = vmul.f32 %v4456, %v4589
      %v4744 = vmul.f32 %v4457, %v4594
      %v4745 = vmul.f32 %v4458, %v4599
      %v4746 = vmul.f32 %v4459, %v4604
      %v4747 = vmul.f32 %v4460, %v4609
      %v4748 = vmul.f32 %v4461, %v4614
      %v4749 = vmul.f32 %v4462, %v4619
      %v4750 = vmul.f32 %v4463, %v4624
      %v4751 = vmul.f32 %v4464, %v4629
      %v4752 = vmul.f32 %v4465, %v4634
      %v4753 = vmul.f32 %v4466, %v4639
      %v4754 = vmul.f32 %v4467, %v4644
      %v4755 = vmul.f32 %v4468, %v4649
      %v4756 = vmul.f32 %v4469, %v4654
      %v4757 = vmul.f32 %v4470, %v4659
      %v4758 = vmul.f32 %v4471, %v4664
      %v4759 = vmul.f32 %v4472, %v4669
      %v4760 = vmul.f32 %v4473, %v4674
      %v4761 = vmul.f32 %v4474, %v4679
      %v4762 = vmul.f32 %v4475, %v4684
      %v4763 = vmul.f32 %v4476, %v4689
      %v4764 = vmul.f32 %v4477, %v4694
      %v4765 = vmul.f32 %v4478, %v4699
      %v4766 = vmul.f32 %v4479, %v4704
      %v4767 = vmul.f32 %v4480, %v4709
      %v4768 = vmul.f32 %v4481, %v4714
      %v4769 = vmul.f32 %v4482, %v4719
      %v4770 = vmul.f32 %v4483, %v4724
      %v4771 = vmul.f32 %v4484, %v4729
      %vm4772 = vcmask 125952
      %4773 = vst.msk [vmem:[#allocation2] sm:$0xf] %vm4772, 0
      %4774 = vst.msk [vmem:[#allocation2 + $0x4] sm:$0xf] %vm4772, 0
      %4775 = vst.msk [vmem:[#allocation2 + $0x8] sm:$0xf] %vm4772, 0
      %4776 = vst.msk [vmem:[#allocation2 + $0xc] sm:$0xf] %vm4772, 0
      %vm4777 = vcmask 125954
      %4778 = vst.msk [vmem:[#allocation2 + $0xb0] sm:$0xc] %vm4777, 0
      %4779 = vst.msk [vmem:[#allocation2 + $0xb4] sm:$0xf] %vm4772, 0
      %4780 = vst.msk [vmem:[#allocation2 + $0xb8] sm:$0xf] %vm4772, 0
      %4781 = vst.msk [vmem:[#allocation2 + $0xbc] sm:$0xf] %vm4772, 0
      %vm4782 = vcmask 123904
      %4783 = vst.msk [vmem:[#allocation2 + $0xc0] sm:$0x3] %vm4782, 0
      %v4784 = vpack.c.bf16 %v4732, %v4731
      %v4785 = vpack.c.bf16 %v4734, %v4733
      %v4786 = vpack.c.bf16 %v4736, %v4735
      %v4787 = vpack.c.bf16 %v4738, %v4737
      %v4788 = vpack.c.bf16 %v4740, %v4739
      %v4789 = vpack.c.bf16 %v4742, %v4741
      %v4790 = vpack.c.bf16 %v4744, %v4743
      %v4791 = vpack.c.bf16 %v4746, %v4745
      %v4792 = vpack.c.bf16 %v4748, %v4747
      %v4793 = vpack.c.bf16 %v4750, %v4749
      %v4794 = vpack.c.bf16 %v4752, %v4751
      %v4795 = vpack.c.bf16 %v4754, %v4753
      %v4796 = vpack.c.bf16 %v4756, %v4755
      %v4797 = vpack.c.bf16 %v4758, %v4757
      %v4798 = vpack.c.bf16 %v4760, %v4759
      %v4799 = vpack.c.bf16 %v4762, %v4761
      %v4800 = vpack.c.bf16 %v4764, %v4763
      %v4801 = vpack.c.bf16 %v4766, %v4765
      %v4802 = vpack.c.bf16 %v4768, %v4767
      %v4803 = vpack.c.bf16 %v4770, %v4769
      %v4804 = vpack.c.bf16 %v4771, %v4771
      %v4826 = vunpack.c.l.b16 %v4784
      %v4827 = vunpack.c.h.b16 %v4784
      %v4828 = vunpack.c.l.b16 %v4785
      %v4829 = vunpack.c.h.b16 %v4785
      %v4830 = vunpack.c.l.b16 %v4786
      %v4831 = vunpack.c.h.b16 %v4786
      %v4832 = vunpack.c.l.b16 %v4787
      %v4833 = vunpack.c.h.b16 %v4787
      %v4834 = vunpack.c.l.b16 %v4788
      %v4835 = vunpack.c.h.b16 %v4788
      %v4836 = vunpack.c.l.b16 %v4789
      %v4837 = vunpack.c.h.b16 %v4789
      %v4838 = vunpack.c.l.b16 %v4790
      %v4839 = vunpack.c.h.b16 %v4790
      %v4840 = vunpack.c.l.b16 %v4791
      %v4841 = vunpack.c.h.b16 %v4791
      %v4842 = vunpack.c.l.b16 %v4792
      %v4843 = vunpack.c.h.b16 %v4792
      %v4844 = vunpack.c.l.b16 %v4793
      %v4845 = vunpack.c.h.b16 %v4793
      %v4846 = vunpack.c.l.b16 %v4794
      %v4847 = vunpack.c.h.b16 %v4794
      %v4848 = vunpack.c.l.b16 %v4795
      %v4849 = vunpack.c.h.b16 %v4795
      %v4850 = vunpack.c.l.b16 %v4796
      %v4851 = vunpack.c.h.b16 %v4796
      %v4852 = vunpack.c.l.b16 %v4797
      %v4853 = vunpack.c.h.b16 %v4797
      %v4854 = vunpack.c.l.b16 %v4798
      %v4855 = vunpack.c.h.b16 %v4798
      %v4856 = vunpack.c.l.b16 %v4799
      %v4857 = vunpack.c.h.b16 %v4799
      %v4858 = vunpack.c.l.b16 %v4800
      %v4859 = vunpack.c.h.b16 %v4800
      %v4860 = vunpack.c.l.b16 %v4801
      %v4861 = vunpack.c.h.b16 %v4801
      %v4862 = vunpack.c.l.b16 %v4802
      %v4863 = vunpack.c.h.b16 %v4802
      %v4864 = vunpack.c.l.b16 %v4803
      %v4865 = vunpack.c.h.b16 %v4803
      %v4866 = vunpack.c.l.b16 %v4804
      %v4867 = vpack.c.b16 %v4826, %v4826
      %v4868 = vpack.c.b16 %v4827, %v4827
      %v4869 = vpack.c.b16 %v4828, %v4828
      %v4870 = vpack.c.b16 %v4829, %v4829
      %v4871 = vpack.c.b16 %v4830, %v4830
      %v4872 = vpack.c.b16 %v4831, %v4831
      %v4873 = vpack.c.b16 %v4832, %v4832
      %v4874 = vpack.c.b16 %v4833, %v4833
      %v4875 = vpack.c.b16 %v4834, %v4834
      %v4876 = vpack.c.b16 %v4835, %v4835
      %v4877 = vpack.c.b16 %v4836, %v4836
      %v4878 = vpack.c.b16 %v4837, %v4837
      %v4879 = vpack.c.b16 %v4838, %v4838
      %v4880 = vpack.c.b16 %v4839, %v4839
      %v4881 = vpack.c.b16 %v4840, %v4840
      %v4882 = vpack.c.b16 %v4841, %v4841
      %v4883 = vpack.c.b16 %v4842, %v4842
      %v4884 = vpack.c.b16 %v4843, %v4843
      %v4885 = vpack.c.b16 %v4844, %v4844
      %v4886 = vpack.c.b16 %v4845, %v4845
      %v4887 = vpack.c.b16 %v4846, %v4846
      %v4888 = vpack.c.b16 %v4847, %v4847
      %v4889 = vpack.c.b16 %v4848, %v4848
      %v4890 = vpack.c.b16 %v4849, %v4849
      %v4891 = vpack.c.b16 %v4850, %v4850
      %v4892 = vpack.c.b16 %v4851, %v4851
      %v4893 = vpack.c.b16 %v4852, %v4852
      %v4894 = vpack.c.b16 %v4853, %v4853
      %v4895 = vpack.c.b16 %v4854, %v4854
      %v4896 = vpack.c.b16 %v4855, %v4855
      %v4897 = vpack.c.b16 %v4856, %v4856
      %v4898 = vpack.c.b16 %v4857, %v4857
      %v4899 = vpack.c.b16 %v4858, %v4858
      %v4900 = vpack.c.b16 %v4859, %v4859
      %v4901 = vpack.c.b16 %v4860, %v4860
      %v4902 = vpack.c.b16 %v4861, %v4861
      %v4903 = vpack.c.b16 %v4862, %v4862
      %v4904 = vpack.c.b16 %v4863, %v4863
      %v4905 = vpack.c.b16 %v4864, %v4864
      %v4906 = vpack.c.b16 %v4865, %v4865
      %v4907 = vpack.c.b16 %v4866, %v4866
      %4949 = vst.msk [vmem:[#allocation2 + $0x10] sm:$0xf] %vm4772, %v4867
      %4950 = vst.msk [vmem:[#allocation2 + $0x14] sm:$0xf] %vm4772, %v4868
      %4951 = vst.msk [vmem:[#allocation2 + $0x18] sm:$0xf] %vm4772, %v4869
      %4952 = vst.msk [vmem:[#allocation2 + $0x1c] sm:$0xf] %vm4772, %v4870
      %4953 = vst.msk [vmem:[#allocation2 + $0x20] sm:$0xf] %vm4772, %v4871
      %4954 = vst.msk [vmem:[#allocation2 + $0x24] sm:$0xf] %vm4772, %v4872
      %4955 = vst.msk [vmem:[#allocation2 + $0x28] sm:$0xf] %vm4772, %v4873
      %4956 = vst.msk [vmem:[#allocation2 + $0x2c] sm:$0xf] %vm4772, %v4874
      %4957 = vst.msk [vmem:[#allocation2 + $0x30] sm:$0xf] %vm4772, %v4875
      %4958 = vst.msk [vmem:[#allocation2 + $0x34] sm:$0xf] %vm4772, %v4876
      %4959 = vst.msk [vmem:[#allocation2 + $0x38] sm:$0xf] %vm4772, %v4877
      %4960 = vst.msk [vmem:[#allocation2 + $0x3c] sm:$0xf] %vm4772, %v4878
      %4961 = vst.msk [vmem:[#allocation2 + $0x40] sm:$0xf] %vm4772, %v4879
      %4962 = vst.msk [vmem:[#allocation2 + $0x44] sm:$0xf] %vm4772, %v4880
      %4963 = vst.msk [vmem:[#allocation2 + $0x48] sm:$0xf] %vm4772, %v4881
      %4964 = vst.msk [vmem:[#allocation2 + $0x4c] sm:$0xf] %vm4772, %v4882
      %4965 = vst.msk [vmem:[#allocation2 + $0x50] sm:$0xf] %vm4772, %v4883
      %4966 = vst.msk [vmem:[#allocation2 + $0x54] sm:$0xf] %vm4772, %v4884
      %4967 = vst.msk [vmem:[#allocation2 + $0x58] sm:$0xf] %vm4772, %v4885
      %4968 = vst.msk [vmem:[#allocation2 + $0x5c] sm:$0xf] %vm4772, %v4886
      %4969 = vst.msk [vmem:[#allocation2 + $0x60] sm:$0xf] %vm4772, %v4887
      %4970 = vst.msk [vmem:[#allocation2 + $0x64] sm:$0xf] %vm4772, %v4888
      %4971 = vst.msk [vmem:[#allocation2 + $0x68] sm:$0xf] %vm4772, %v4889
      %4972 = vst.msk [vmem:[#allocation2 + $0x6c] sm:$0xf] %vm4772, %v4890
      %4973 = vst.msk [vmem:[#allocation2 + $0x70] sm:$0xf] %vm4772, %v4891
      %4974 = vst.msk [vmem:[#allocation2 + $0x74] sm:$0xf] %vm4772, %v4892
      %4975 = vst.msk [vmem:[#allocation2 + $0x78] sm:$0xf] %vm4772, %v4893
      %4976 = vst.msk [vmem:[#allocation2 + $0x7c] sm:$0xf] %vm4772, %v4894
      %4977 = vst.msk [vmem:[#allocation2 + $0x80] sm:$0xf] %vm4772, %v4895
      %4978 = vst.msk [vmem:[#allocation2 + $0x84] sm:$0xf] %vm4772, %v4896
      %4979 = vst.msk [vmem:[#allocation2 + $0x88] sm:$0xf] %vm4772, %v4897
      %4980 = vst.msk [vmem:[#allocation2 + $0x8c] sm:$0xf] %vm4772, %v4898
      %4981 = vst.msk [vmem:[#allocation2 + $0x90] sm:$0xf] %vm4772, %v4899
      %4982 = vst.msk [vmem:[#allocation2 + $0x94] sm:$0xf] %vm4772, %v4900
      %4983 = vst.msk [vmem:[#allocation2 + $0x98] sm:$0xf] %vm4772, %v4901
      %4984 = vst.msk [vmem:[#allocation2 + $0x9c] sm:$0xf] %vm4772, %v4902
      %4985 = vst.msk [vmem:[#allocation2 + $0xa0] sm:$0xf] %vm4772, %v4903
      %4986 = vst.msk [vmem:[#allocation2 + $0xa4] sm:$0xf] %vm4772, %v4904
      %4987 = vst.msk [vmem:[#allocation2 + $0xa8] sm:$0xf] %vm4772, %v4905
      %4988 = vst.msk [vmem:[#allocation2 + $0xac] sm:$0xf] %vm4772, %v4906
      %4989 = vst.msk [vmem:[#allocation2 + $0xb0] sm:$0x3] %vm4782, %v4907
      %v4990 = vld [vmem:[#allocation2 + $0x4] sm:$0xc]
      %v4991 = vld [vmem:[#allocation2 + $0x8] sm:$0xf]
      %v4992 = vld [vmem:[#allocation2 + $0xc] sm:$0xf]
      %v4993 = vld [vmem:[#allocation2 + $0x10] sm:$0xf]
      %v4994 = vld [vmem:[#allocation2 + $0x14] sm:$0xf]
      %v4995 = vld [vmem:[#allocation2 + $0x18] sm:$0xf]
      %v4996 = vld [vmem:[#allocation2 + $0x1c] sm:$0xf]
      %v4997 = vld [vmem:[#allocation2 + $0x20] sm:$0xf]
      %v4998 = vld [vmem:[#allocation2 + $0x24] sm:$0xf]
      %v4999 = vld [vmem:[#allocation2 + $0x28] sm:$0xf]
      %v5000 = vld [vmem:[#allocation2 + $0x2c] sm:$0xf]
      %v5001 = vld [vmem:[#allocation2 + $0x30] sm:$0xf]
      %v5002 = vld [vmem:[#allocation2 + $0x34] sm:$0xf]
      %v5003 = vld [vmem:[#allocation2 + $0x38] sm:$0xf]
      %v5004 = vld [vmem:[#allocation2 + $0x3c] sm:$0xf]
      %v5005 = vld [vmem:[#allocation2 + $0x40] sm:$0xf]
      %v5006 = vld [vmem:[#allocation2 + $0x44] sm:$0xf]
      %v5007 = vld [vmem:[#allocation2 + $0x48] sm:$0xf]
      %v5008 = vld [vmem:[#allocation2 + $0x4c] sm:$0xf]
      %v5009 = vld [vmem:[#allocation2 + $0x50] sm:$0xf]
      %v5010 = vld [vmem:[#allocation2 + $0x54] sm:$0xf]
      %v5011 = vld [vmem:[#allocation2 + $0x58] sm:$0xf]
      %v5012 = vld [vmem:[#allocation2 + $0x5c] sm:$0xf]
      %v5013 = vld [vmem:[#allocation2 + $0x60] sm:$0xf]
      %v5014 = vld [vmem:[#allocation2 + $0x64] sm:$0xf]
      %v5015 = vld [vmem:[#allocation2 + $0x68] sm:$0xf]
      %v5016 = vld [vmem:[#allocation2 + $0x6c] sm:$0xf]
      %v5017 = vld [vmem:[#allocation2 + $0x70] sm:$0xf]
      %v5018 = vld [vmem:[#allocation2 + $0x74] sm:$0xf]
      %v5019 = vld [vmem:[#allocation2 + $0x78] sm:$0xf]
      %v5020 = vld [vmem:[#allocation2 + $0x7c] sm:$0xf]
      %v5021 = vld [vmem:[#allocation2 + $0x80] sm:$0xf]
      %v5022 = vld [vmem:[#allocation2 + $0x84] sm:$0xf]
      %v5023 = vld [vmem:[#allocation2 + $0x88] sm:$0xf]
      %v5024 = vld [vmem:[#allocation2 + $0x8c] sm:$0xf]
      %v5025 = vld [vmem:[#allocation2 + $0x90] sm:$0xf]
      %v5026 = vld [vmem:[#allocation2 + $0x94] sm:$0xf]
      %v5027 = vld [vmem:[#allocation2 + $0x98] sm:$0xf]
      %v5028 = vld [vmem:[#allocation2 + $0x9c] sm:$0xf]
      %v5029 = vld [vmem:[#allocation2 + $0xa0] sm:$0xf]
      %v5030 = vld [vmem:[#allocation2 + $0xa4] sm:$0xf]
      %v5031 = vld [vmem:[#allocation2 + $0xa8] sm:$0x1]
      %v5032 = vld [vmem:[%s4] sm:$0xf]
      %v5033 = vld [vmem:[%s4 + $0x4] sm:$0xf]
      %v5034 = vld [vmem:[#allocation2 + $0x4] sm:$0x8]
      %s5035 = scalar_lea.vmem %s4, 8
      %v5036 = vld [vmem:[%s5035] sm:$0xf]
      %v5037 = vld [vmem:[%s5035 + $0x4] sm:$0xf]
      %v5080 = vunpack.c.l.b16 %v5034
      %v5081 = vunpack.c.l.b16 %v4991
      %v5082 = vunpack.c.l.b16 %v4992
      %v5083 = vunpack.c.l.b16 %v4993
      %v5084 = vunpack.c.l.b16 %v4994
      %v5085 = vunpack.c.l.b16 %v4995
      %v5086 = vunpack.c.l.b16 %v4996
      %v5087 = vunpack.c.l.b16 %v4997
      %v5088 = vunpack.c.l.b16 %v4998
      %v5089 = vunpack.c.l.b16 %v4999
      %v5090 = vunpack.c.l.b16 %v5000
      %v5091 = vunpack.c.l.b16 %v5001
      %v5092 = vunpack.c.l.b16 %v5002
      %v5093 = vunpack.c.l.b16 %v5003
      %v5094 = vunpack.c.l.b16 %v5004
      %v5095 = vunpack.c.l.b16 %v5005
      %v5096 = vunpack.c.l.b16 %v5006
      %v5097 = vunpack.c.l.b16 %v5007
      %v5098 = vunpack.c.l.b16 %v5008
      %v5099 = vunpack.c.l.b16 %v5009
      %v5100 = vunpack.c.l.b16 %v5010
      %v5101 = vunpack.c.l.b16 %v5011
      %v5102 = vunpack.c.l.b16 %v5012
      %v5103 = vunpack.c.l.b16 %v5013
      %v5104 = vunpack.c.l.b16 %v5014
      %v5105 = vunpack.c.l.b16 %v5015
      %v5106 = vunpack.c.l.b16 %v5016
      %v5107 = vunpack.c.l.b16 %v5017
      %v5108 = vunpack.c.l.b16 %v5018
      %v5109 = vunpack.c.l.b16 %v5019
      %v5110 = vunpack.c.l.b16 %v5020
      %v5111 = vunpack.c.l.b16 %v5021
      %v5112 = vunpack.c.l.b16 %v5022
      %v5113 = vunpack.c.l.b16 %v5023
      %v5114 = vunpack.c.l.b16 %v5024
      %v5115 = vunpack.c.l.b16 %v5025
      %v5116 = vunpack.c.l.b16 %v5026
      %v5117 = vunpack.c.l.b16 %v5027
      %v5118 = vunpack.c.l.b16 %v5028
      %v5119 = vunpack.c.l.b16 %v5029
      %v5120 = vunpack.c.l.b16 %v5030
      %v5121 = vunpack.c.l.b16 %v5031
      %v5122 = vpack.c.b16 %v5081, %v5080
      %v5123 = vpack.c.b16 %v5083, %v5082
      %v5124 = vpack.c.b16 %v5085, %v5084
      %v5125 = vpack.c.b16 %v5087, %v5086
      %v5126 = vpack.c.b16 %v5089, %v5088
      %v5127 = vpack.c.b16 %v5091, %v5090
      %v5128 = vpack.c.b16 %v5093, %v5092
      %v5129 = vpack.c.b16 %v5095, %v5094
      %v5130 = vpack.c.b16 %v5097, %v5096
      %v5131 = vpack.c.b16 %v5099, %v5098
      %v5132 = vpack.c.b16 %v5101, %v5100
      %v5133 = vpack.c.b16 %v5103, %v5102
      %v5134 = vpack.c.b16 %v5105, %v5104
      %v5135 = vpack.c.b16 %v5107, %v5106
      %v5136 = vpack.c.b16 %v5109, %v5108
      %v5137 = vpack.c.b16 %v5111, %v5110
      %v5138 = vpack.c.b16 %v5113, %v5112
      %v5139 = vpack.c.b16 %v5115, %v5114
      %v5140 = vpack.c.b16 %v5117, %v5116
      %v5141 = vpack.c.b16 %v5119, %v5118
      %v5142 = vpack.c.b16 %v5121, %v5120
      %v5143 = vrot.slane %v5122, 3
      %v5144 = vrot.slane %v5123, 3
      %v5145 = vsel %vm404, %v5143, %v5144
      %v5146 = vrot.slane %v5124, 3
      %v5147 = vsel %vm404, %v5144, %v5146
      %v5148 = vrot.slane %v5125, 3
      %v5149 = vsel %vm404, %v5146, %v5148
      %v5150 = vrot.slane %v5126, 3
      %v5151 = vsel %vm404, %v5148, %v5150
      %v5152 = vrot.slane %v5127, 3
      %v5153 = vsel %vm404, %v5150, %v5152
      %v5154 = vrot.slane %v5128, 3
      %v5155 = vsel %vm404, %v5152, %v5154
      %v5156 = vrot.slane %v5129, 3
      %v5157 = vsel %vm404, %v5154, %v5156
      %v5158 = vrot.slane %v5130, 3
      %v5159 = vsel %vm404, %v5156, %v5158
      %v5160 = vrot.slane %v5131, 3
      %v5161 = vsel %vm404, %v5158, %v5160
      %v5162 = vrot.slane %v5132, 3
      %v5163 = vsel %vm404, %v5160, %v5162
      %v5164 = vrot.slane %v5133, 3
      %v5165 = vsel %vm404, %v5162, %v5164
      %v5166 = vrot.slane %v5134, 3
      %v5167 = vsel %vm404, %v5164, %v5166
      %v5168 = vrot.slane %v5135, 3
      %v5169 = vsel %vm404, %v5166, %v5168
      %v5170 = vrot.slane %v5136, 3
      %v5171 = vsel %vm404, %v5168, %v5170
      %v5172 = vrot.slane %v5137, 3
      %v5173 = vsel %vm404, %v5170, %v5172
      %v5174 = vrot.slane %v5138, 3
      %v5175 = vsel %vm404, %v5172, %v5174
      %v5176 = vrot.slane %v5139, 3
      %v5177 = vsel %vm404, %v5174, %v5176
      %v5178 = vrot.slane %v5140, 3
      %v5179 = vsel %vm404, %v5176, %v5178
      %v5180 = vrot.slane %v5141, 3
      %v5181 = vsel %vm404, %v5178, %v5180
      %v5182 = vrot.slane %v5142, 3
      %v5183 = vsel %vm404, %v5180, %v5182
      %v5186 = vunpack.c.l.b16 %v5036
      %v5187 = vunpack.c.l.b16 %v5037
      %v5188 = vpack.c.b16 %v5187, %v5186
      %vm5190 = vcmask 130048
      %v5192 = vsel %vm5190, %v5145, 0
      %v5195 = vsel %vm5190, %v5147, 0
      %v5198 = vsel %vm5190, %v5149, 0
      %v5201 = vsel %vm5190, %v5151, 0
      %v5204 = vsel %vm5190, %v5153, 0
      %v5207 = vsel %vm5190, %v5155, 0
      %v5210 = vsel %vm5190, %v5157, 0
      %v5213 = vsel %vm5190, %v5159, 0
      %v5216 = vsel %vm5190, %v5161, 0
      %v5219 = vsel %vm5190, %v5163, 0
      %v5222 = vsel %vm5190, %v5165, 0
      %v5225 = vsel %vm5190, %v5167, 0
      %v5228 = vsel %vm5190, %v5169, 0
      %v5231 = vsel %vm5190, %v5171, 0
      %v5234 = vsel %vm5190, %v5173, 0
      %v5237 = vsel %vm5190, %v5175, 0
      %v5240 = vsel %vm5190, %v5177, 0
      %v5243 = vsel %vm5190, %v5179, 0
      %v5246 = vsel %vm5190, %v5181, 0
      %v5249 = vsel %vm5190, %v5183, 0
      %v5252 = vsel %vm5190, %v5182, 0
      %5254 = vmatprep.subr.bf16.mxu0 0
      %5255 = vmatpush1.bf16.msra.mxu0 %v5188
      %5256 = vmatprep.subr.bf16.mxu0 0
      %5257 = vmatpush1.bf16.msra.mxu0 0
      %5258 = vmatprep.subr.bf16.mxu0 0
      %5259 = vmatpush1.bf16.msra.mxu0 0
      %5260 = vmatprep.subr.bf16.mxu0 0
      %5261 = vmatpush1.bf16.msra.mxu0 0
      %5262 = vmatprep.subr.bf16.mxu0 0
      %5263 = vmatpush1.bf16.msra.mxu0 0
      %5264 = vmatprep.subr.bf16.mxu0 0
      %5265 = vmatpush1.bf16.msra.mxu0 0
      %5266 = vmatprep.subr.bf16.mxu0 0
      %5267 = vmatpush1.bf16.msra.mxu0 0
      %5268 = vmatprep.subr.bf16.mxu0 0
      %5269 = vmatpush1.bf16.msra.mxu0 0
      %5270 = vmatprep.subr.bf16.mxu0 0
      %5271 = vmatpush1.bf16.msra.mxu0 0
      %5272 = vmatprep.subr.bf16.mxu0 0
      %5273 = vmatpush1.bf16.msra.mxu0 0
      %5274 = vmatprep.subr.bf16.mxu0 0
      %5275 = vmatpush1.bf16.msra.mxu0 0
      %5276 = vmatprep.subr.bf16.mxu0 0
      %5277 = vmatpush1.bf16.msra.mxu0 0
      %5278 = vmatprep.subr.bf16.mxu0 0
      %5279 = vmatpush1.bf16.msra.mxu0 0
      %5280 = vmatprep.subr.bf16.mxu0 0
      %5281 = vmatpush1.bf16.msra.mxu0 0
      %5282 = vmatprep.subr.bf16.mxu0 0
      %5283 = vmatpush1.bf16.msra.mxu0 0
      %5284 = vmatprep.subr.bf16.mxu0 0
      %5285 = vmatpush1.bf16.msra.mxu0 0
      %5286 = vmatprep.mubr.bf16.mxu0 0
      %5287 = vmatmul.mubr.bf16.gmra.mrb[0].mxu0 %v5192
      %v5288 = vpop.f32.mrb[0].mxu0
      %v5289 = vadd.f32 0.0, %v5288
      %v5290 = vpop.f32.mrb[0].mxu0
      %v5291 = vpop.f32.mrb[0].mxu0
      %v5292 = vadd.f32 0.0, %v5291
      %v5293 = vpop.f32.mrb[0].mxu0
      %5294 = vmatprep.mubr.bf16.mxu0 0
      %5295 = vmatmul.mubr.bf16.gmra.mrb[0].mxu0 %v5195
      %v5296 = vpop.f32.mrb[0].mxu0
      %v5297 = vadd.f32 0.0, %v5296
      %v5298 = vpop.f32.mrb[0].mxu0
      %v5299 = vpop.f32.mrb[0].mxu0
      %v5300 = vadd.f32 0.0, %v5299
      %v5301 = vpop.f32.mrb[0].mxu0
      %5302 = vmatprep.mubr.bf16.mxu0 0
      %5303 = vmatmul.mubr.bf16.gmra.mrb[0].mxu0 %v5198
      %v5304 = vpop.f32.mrb[0].mxu0
      %v5305 = vadd.f32 0.0, %v5304
      %v5306 = vpop.f32.mrb[0].mxu0
      %v5307 = vpop.f32.mrb[0].mxu0
      %v5308 = vadd.f32 0.0, %v5307
      %v5309 = vpop.f32.mrb[0].mxu0
      %5310 = vmatprep.mubr.bf16.mxu0 0
      %5311 = vmatmul.mubr.bf16.gmra.mrb[0].mxu0 %v5201
      %v5312 = vpop.f32.mrb[0].mxu0
      %v5313 = vadd.f32 0.0, %v5312
      %v5314 = vpop.f32.mrb[0].mxu0
      %v5315 = vpop.f32.mrb[0].mxu0
      %v5316 = vadd.f32 0.0, %v5315
      %v5317 = vpop.f32.mrb[0].mxu0
      %5318 = vmatprep.mubr.bf16.mxu0 0
      %5319 = vmatmul.mubr.bf16.gmra.mrb[0].mxu0 %v5204
      %v5320 = vpop.f32.mrb[0].mxu0
      %v5321 = vadd.f32 0.0, %v5320
      %v5322 = vpop.f32.mrb[0].mxu0
      %v5323 = vpop.f32.mrb[0].mxu0
      %v5324 = vadd.f32 0.0, %v5323
      %v5325 = vpop.f32.mrb[0].mxu0
      %5326 = vmatprep.mubr.bf16.mxu0 0
      %5327 = vmatmul.mubr.bf16.gmra.mrb[0].mxu0 %v5207
      %v5328 = vpop.f32.mrb[0].mxu0
      %v5329 = vadd.f32 0.0, %v5328
      %v5330 = vpop.f32.mrb[0].mxu0
      %v5331 = vpop.f32.mrb[0].mxu0
      %v5332 = vadd.f32 0.0, %v5331
      %v5333 = vpop.f32.mrb[0].mxu0
      %5334 = vmatprep.mubr.bf16.mxu0 0
      %5335 = vmatmul.mubr.bf16.gmra.mrb[0].mxu0 %v5210
      %v5336 = vpop.f32.mrb[0].mxu0
      %v5337 = vadd.f32 0.0, %v5336
      %v5338 = vpop.f32.mrb[0].mxu0
      %v5339 = vpop.f32.mrb[0].mxu0
      %v5340 = vadd.f32 0.0, %v5339
      %v5341 = vpop.f32.mrb[0].mxu0
      %5342 = vmatprep.mubr.bf16.mxu0 0
      %5343 = vmatmul.mubr.bf16.gmra.mrb[0].mxu0 %v5213
      %v5344 = vpop.f32.mrb[0].mxu0
      %v5345 = vadd.f32 0.0, %v5344
      %v5346 = vpop.f32.mrb[0].mxu0
      %v5347 = vpop.f32.mrb[0].mxu0
      %v5348 = vadd.f32 0.0, %v5347
      %v5349 = vpop.f32.mrb[0].mxu0
      %5350 = vmatprep.mubr.bf16.mxu0 0
      %5351 = vmatmul.mubr.bf16.gmra.mrb[0].mxu0 %v5216
      %v5352 = vpop.f32.mrb[0].mxu0
      %v5353 = vadd.f32 0.0, %v5352
      %v5354 = vpop.f32.mrb[0].mxu0
      %v5355 = vpop.f32.mrb[0].mxu0
      %v5356 = vadd.f32 0.0, %v5355
      %v5357 = vpop.f32.mrb[0].mxu0
      %5358 = vmatprep.mubr.bf16.mxu0 0
      %5359 = vmatmul.mubr.bf16.gmra.mrb[0].mxu0 %v5219
      %v5360 = vpop.f32.mrb[0].mxu0
      %v5361 = vadd.f32 0.0, %v5360
      %v5362 = vpop.f32.mrb[0].mxu0
      %v5363 = vpop.f32.mrb[0].mxu0
      %v5364 = vadd.f32 0.0, %v5363
      %v5365 = vpop.f32.mrb[0].mxu0
      %5366 = vmatprep.mubr.bf16.mxu0 0
      %5367 = vmatmul.mubr.bf16.gmra.mrb[0].mxu0 %v5222
      %v5368 = vpop.f32.mrb[0].mxu0
      %v5369 = vadd.f32 0.0, %v5368
      %v5370 = vpop.f32.mrb[0].mxu0
      %v5371 = vpop.f32.mrb[0].mxu0
      %v5372 = vadd.f32 0.0, %v5371
      %v5373 = vpop.f32.mrb[0].mxu0
      %5374 = vmatprep.mubr.bf16.mxu0 0
      %5375 = vmatmul.mubr.bf16.gmra.mrb[0].mxu0 %v5225
      %v5376 = vpop.f32.mrb[0].mxu0
      %v5377 = vadd.f32 0.0, %v5376
      %v5378 = vpop.f32.mrb[0].mxu0
      %v5379 = vpop.f32.mrb[0].mxu0
      %v5380 = vadd.f32 0.0, %v5379
      %v5381 = vpop.f32.mrb[0].mxu0
      %5382 = vmatprep.mubr.bf16.mxu0 0
      %5383 = vmatmul.mubr.bf16.gmra.mrb[0].mxu0 %v5228
      %v5384 = vpop.f32.mrb[0].mxu0
      %v5385 = vadd.f32 0.0, %v5384
      %v5386 = vpop.f32.mrb[0].mxu0
      %v5387 = vpop.f32.mrb[0].mxu0
      %v5388 = vadd.f32 0.0, %v5387
      %v5389 = vpop.f32.mrb[0].mxu0
      %5390 = vmatprep.mubr.bf16.mxu0 0
      %5391 = vmatmul.mubr.bf16.gmra.mrb[0].mxu0 %v5231
      %v5392 = vpop.f32.mrb[0].mxu0
      %v5393 = vadd.f32 0.0, %v5392
      %v5394 = vpop.f32.mrb[0].mxu0
      %v5395 = vpop.f32.mrb[0].mxu0
      %v5396 = vadd.f32 0.0, %v5395
      %v5397 = vpop.f32.mrb[0].mxu0
      %5398 = vmatprep.mubr.bf16.mxu0 0
      %5399 = vmatmul.mubr.bf16.gmra.mrb[0].mxu0 %v5234
      %v5400 = vpop.f32.mrb[0].mxu0
      %v5401 = vadd.f32 0.0, %v5400
      %v5402 = vpop.f32.mrb[0].mxu0
      %v5403 = vpop.f32.mrb[0].mxu0
      %v5404 = vadd.f32 0.0, %v5403
      %v5405 = vpop.f32.mrb[0].mxu0
      %5406 = vmatprep.mubr.bf16.mxu0 0
      %5407 = vmatmul.mubr.bf16.gmra.mrb[0].mxu0 %v5237
      %v5408 = vpop.f32.mrb[0].mxu0
      %v5409 = vadd.f32 0.0, %v5408
      %v5410 = vpop.f32.mrb[0].mxu0
      %v5411 = vpop.f32.mrb[0].mxu0
      %v5412 = vadd.f32 0.0, %v5411
      %v5413 = vpop.f32.mrb[0].mxu0
      %5414 = vmatprep.mubr.bf16.mxu0 0
      %5415 = vmatmul.mubr.bf16.gmra.mrb[0].mxu0 %v5240
      %v5416 = vpop.f32.mrb[0].mxu0
      %v5417 = vadd.f32 0.0, %v5416
      %v5418 = vpop.f32.mrb[0].mxu0
      %v5419 = vpop.f32.mrb[0].mxu0
      %v5420 = vadd.f32 0.0, %v5419
      %v5421 = vpop.f32.mrb[0].mxu0
      %5422 = vmatprep.mubr.bf16.mxu0 0
      %5423 = vmatmul.mubr.bf16.gmra.mrb[0].mxu0 %v5243
      %v5424 = vpop.f32.mrb[0].mxu0
      %v5425 = vadd.f32 0.0, %v5424
      %v5426 = vpop.f32.mrb[0].mxu0
      %v5427 = vpop.f32.mrb[0].mxu0
      %v5428 = vadd.f32 0.0, %v5427
      %v5429 = vpop.f32.mrb[0].mxu0
      %5430 = vmatprep.mubr.bf16.mxu0 0
      %5431 = vmatmul.mubr.bf16.gmra.mrb[0].mxu0 %v5246
      %v5432 = vpop.f32.mrb[0].mxu0
      %v5433 = vadd.f32 0.0, %v5432
      %v5434 = vpop.f32.mrb[0].mxu0
      %v5435 = vpop.f32.mrb[0].mxu0
      %v5436 = vadd.f32 0.0, %v5435
      %v5437 = vpop.f32.mrb[0].mxu0
      %5438 = vmatprep.mubr.bf16.mxu0 0
      %5439 = vmatmul.mubr.bf16.gmra.mrb[0].mxu0 %v5249
      %v5440 = vpop.f32.mrb[0].mxu0
      %v5441 = vadd.f32 0.0, %v5440
      %v5442 = vpop.f32.mrb[0].mxu0
      %v5443 = vpop.f32.mrb[0].mxu0
      %v5444 = vadd.f32 0.0, %v5443
      %v5445 = vpop.f32.mrb[0].mxu0
      %5446 = vmatprep.mubr.bf16.mxu0 0
      %5447 = vmatmul.mubr.bf16.gmra.mrb[0].mxu0 %v5252
      %v5448 = vpop.f32.mrb[0].mxu0
      %v5449 = vadd.f32 0.0, %v5448
      %v5450 = vpop.f32.mrb[0].mxu0
      %v5451 = vpop.f32.mrb[0].mxu0
      %v5452 = vpop.f32.mrb[0].mxu0
      %5453 = vdwg.mxu0
      %v5455 = vunpack.c.l.b16 %v4990
      %v5456 = vpack.c.b16 %v5081, %v5455
      %v5458 = vshrl.u32 %v5456, 16
      %v5460 = vrot.slane %v5458, 2
      %v5461 = vshll.u32 %v5456, 16
      %v5463 = vrot.slane %v5461, 3
      %v5464 = vor.u32 %v5460, %v5463
      %v5466 = vshrl.u32 %v5123, 16
      %v5468 = vrot.slane %v5466, 2
      %v5469 = vshll.u32 %v5123, 16
      %v5471 = vrot.slane %v5469, 3
      %v5472 = vor.u32 %v5468, %v5471
      %v5473 = vsel %vm717, %v5464, %v5472
      %v5475 = vshrl.u32 %v5124, 16
      %v5477 = vrot.slane %v5475, 2
      %v5478 = vshll.u32 %v5124, 16
      %v5480 = vrot.slane %v5478, 3
      %v5481 = vor.u32 %v5477, %v5480
      %v5482 = vsel %vm717, %v5472, %v5481
      %v5484 = vshrl.u32 %v5125, 16
      %v5486 = vrot.slane %v5484, 2
      %v5487 = vshll.u32 %v5125, 16
      %v5489 = vrot.slane %v5487, 3
      %v5490 = vor.u32 %v5486, %v5489
      %v5491 = vsel %vm717, %v5481, %v5490
      %v5493 = vshrl.u32 %v5126, 16
      %v5495 = vrot.slane %v5493, 2
      %v5496 = vshll.u32 %v5126, 16
      %v5498 = vrot.slane %v5496, 3
      %v5499 = vor.u32 %v5495, %v5498
      %v5500 = vsel %vm717, %v5490, %v5499
      %v5502 = vshrl.u32 %v5127, 16
      %v5504 = vrot.slane %v5502, 2
      %v5505 = vshll.u32 %v5127, 16
      %v5507 = vrot.slane %v5505, 3
      %v5508 = vor.u32 %v5504, %v5507
      %v5509 = vsel %vm717, %v5499, %v5508
      %v5511 = vshrl.u32 %v5128, 16
      %v5513 = vrot.slane %v5511, 2
      %v5514 = vshll.u32 %v5128, 16
      %v5516 = vrot.slane %v5514, 3
      %v5517 = vor.u32 %v5513, %v5516
      %v5518 = vsel %vm717, %v5508, %v5517
      %v5520 = vshrl.u32 %v5129, 16
      %v5522 = vrot.slane %v5520, 2
      %v5523 = vshll.u32 %v5129, 16
      %v5525 = vrot.slane %v5523, 3
      %v5526 = vor.u32 %v5522, %v5525
      %v5527 = vsel %vm717, %v5517, %v5526
      %v5529 = vshrl.u32 %v5130, 16
      %v5531 = vrot.slane %v5529, 2
      %v5532 = vshll.u32 %v5130, 16
      %v5534 = vrot.slane %v5532, 3
      %v5535 = vor.u32 %v5531, %v5534
      %v5536 = vsel %vm717, %v5526, %v5535
      %v5538 = vshrl.u32 %v5131, 16
      %v5540 = vrot.slane %v5538, 2
      %v5541 = vshll.u32 %v5131, 16
      %v5543 = vrot.slane %v5541, 3
      %v5544 = vor.u32 %v5540, %v5543
      %v5545 = vsel %vm717, %v5535, %v5544
      %v5547 = vshrl.u32 %v5132, 16
      %v5549 = vrot.slane %v5547, 2
      %v5550 = vshll.u32 %v5132, 16
      %v5552 = vrot.slane %v5550, 3
      %v5553 = vor.u32 %v5549, %v5552
      %v5554 = vsel %vm717, %v5544, %v5553
      %v5556 = vshrl.u32 %v5133, 16
      %v5558 = vrot.slane %v5556, 2
      %v5559 = vshll.u32 %v5133, 16
      %v5561 = vrot.slane %v5559, 3
      %v5562 = vor.u32 %v5558, %v5561
      %v5563 = vsel %vm717, %v5553, %v5562
      %v5565 = vshrl.u32 %v5134, 16
      %v5567 = vrot.slane %v5565, 2
      %v5568 = vshll.u32 %v5134, 16
      %v5570 = vrot.slane %v5568, 3
      %v5571 = vor.u32 %v5567, %v5570
      %v5572 = vsel %vm717, %v5562, %v5571
      %v5574 = vshrl.u32 %v5135, 16
      %v5576 = vrot.slane %v5574, 2
      %v5577 = vshll.u32 %v5135, 16
      %v5579 = vrot.slane %v5577, 3
      %v5580 = vor.u32 %v5576, %v5579
      %v5581 = vsel %vm717, %v5571, %v5580
      %v5583 = vshrl.u32 %v5136, 16
      %v5585 = vrot.slane %v5583, 2
      %v5586 = vshll.u32 %v5136, 16
      %v5588 = vrot.slane %v5586, 3
      %v5589 = vor.u32 %v5585, %v5588
      %v5590 = vsel %vm717, %v5580, %v5589
      %v5592 = vshrl.u32 %v5137, 16
      %v5594 = vrot.slane %v5592, 2
      %v5595 = vshll.u32 %v5137, 16
      %v5597 = vrot.slane %v5595, 3
      %v5598 = vor.u32 %v5594, %v5597
      %v5599 = vsel %vm717, %v5589, %v5598
      %v5601 = vshrl.u32 %v5138, 16
      %v5603 = vrot.slane %v5601, 2
      %v5604 = vshll.u32 %v5138, 16
      %v5606 = vrot.slane %v5604, 3
      %v5607 = vor.u32 %v5603, %v5606
      %v5608 = vsel %vm717, %v5598, %v5607
      %v5610 = vshrl.u32 %v5139, 16
      %v5612 = vrot.slane %v5610, 2
      %v5613 = vshll.u32 %v5139, 16
      %v5615 = vrot.slane %v5613, 3
      %v5616 = vor.u32 %v5612, %v5615
      %v5617 = vsel %vm717, %v5607, %v5616
      %v5619 = vshrl.u32 %v5140, 16
      %v5621 = vrot.slane %v5619, 2
      %v5622 = vshll.u32 %v5140, 16
      %v5624 = vrot.slane %v5622, 3
      %v5625 = vor.u32 %v5621, %v5624
      %v5626 = vsel %vm717, %v5616, %v5625
      %v5628 = vshrl.u32 %v5141, 16
      %v5630 = vrot.slane %v5628, 2
      %v5631 = vshll.u32 %v5141, 16
      %v5633 = vrot.slane %v5631, 3
      %v5634 = vor.u32 %v5630, %v5633
      %v5635 = vsel %vm717, %v5625, %v5634
      %v5637 = vshrl.u32 %v5142, 16
      %v5639 = vrot.slane %v5637, 2
      %v5640 = vshll.u32 %v5142, 16
      %v5642 = vrot.slane %v5640, 3
      %v5643 = vor.u32 %v5639, %v5642
      %v5644 = vsel %vm717, %v5634, %v5643
      %v5647 = vunpack.c.l.b16 %v5032
      %v5648 = vunpack.c.l.b16 %v5033
      %v5649 = vpack.c.b16 %v5648, %v5647
      %v5652 = vsel %vm5190, %v5473, 0
      %v5655 = vsel %vm5190, %v5482, 0
      %v5658 = vsel %vm5190, %v5491, 0
      %v5661 = vsel %vm5190, %v5500, 0
      %v5664 = vsel %vm5190, %v5509, 0
      %v5667 = vsel %vm5190, %v5518, 0
      %v5670 = vsel %vm5190, %v5527, 0
      %v5673 = vsel %vm5190, %v5536, 0
      %v5676 = vsel %vm5190, %v5545, 0
      %v5679 = vsel %vm5190, %v5554, 0
      %v5682 = vsel %vm5190, %v5563, 0
      %v5685 = vsel %vm5190, %v5572, 0
      %v5688 = vsel %vm5190, %v5581, 0
      %v5691 = vsel %vm5190, %v5590, 0
      %v5694 = vsel %vm5190, %v5599, 0
      %v5697 = vsel %vm5190, %v5608, 0
      %v5700 = vsel %vm5190, %v5617, 0
      %v5703 = vsel %vm5190, %v5626, 0
      %v5706 = vsel %vm5190, %v5635, 0
      %v5709 = vsel %vm5190, %v5644, 0
      %v5712 = vsel %vm5190, %v5643, 0
      %5714 = vmatprep.subr.bf16.mxu0 0
      %5715 = vmatpush1.bf16.msra.mxu0 %v5649
      %5716 = vmatprep.subr.bf16.mxu0 0
      %5717 = vmatpush1.bf16.msra.mxu0 0
      %5718 = vmatprep.subr.bf16.mxu0 0
      %5719 = vmatpush1.bf16.msra.mxu0 0
      %5720 = vmatprep.subr.bf16.mxu0 0
      %5721 = vmatpush1.bf16.msra.mxu0 0
      %5722 = vmatprep.subr.bf16.mxu0 0
      %5723 = vmatpush1.bf16.msra.mxu0 0
      %5724 = vmatprep.subr.bf16.mxu0 0
      %5725 = vmatpush1.bf16.msra.mxu0 0
      %5726 = vmatprep.subr.bf16.mxu0 0
      %5727 = vmatpush1.bf16.msra.mxu0 0
      %5728 = vmatprep.subr.bf16.mxu0 0
      %5729 = vmatpush1.bf16.msra.mxu0 0
      %5730 = vmatprep.subr.bf16.mxu0 0
      %5731 = vmatpush1.bf16.msra.mxu0 0
      %5732 = vmatprep.subr.bf16.mxu0 0
      %5733 = vmatpush1.bf16.msra.mxu0 0
      %5734 = vmatprep.subr.bf16.mxu0 0
      %5735 = vmatpush1.bf16.msra.mxu0 0
      %5736 = vmatprep.subr.bf16.mxu0 0
      %5737 = vmatpush1.bf16.msra.mxu0 0
      %5738 = vmatprep.subr.bf16.mxu0 0
      %5739 = vmatpush1.bf16.msra.mxu0 0
      %5740 = vmatprep.subr.bf16.mxu0 0
      %5741 = vmatpush1.bf16.msra.mxu0 0
      %5742 = vmatprep.subr.bf16.mxu0 0
      %5743 = vmatpush1.bf16.msra.mxu0 0
      %5744 = vmatprep.subr.bf16.mxu0 0
      %5745 = vmatpush1.bf16.msra.mxu0 0
      %5746 = vmatprep.mubr.bf16.mxu0 0
      %5747 = vmatmul.mubr.bf16.gmra.mrb[0].mxu0 %v5652
      %v5748 = vpop.f32.mrb[0].mxu0
      %v5749 = vadd.f32 %v5289, %v5748
      %v5750 = vpop.f32.mrb[0].mxu0
      %v5751 = vpop.f32.mrb[0].mxu0
      %v5752 = vadd.f32 %v5292, %v5751
      %v5753 = vpop.f32.mrb[0].mxu0
      %5754 = vmatprep.mubr.bf16.mxu0 0
      %5755 = vmatmul.mubr.bf16.gmra.mrb[0].mxu0 %v5655
      %v5756 = vpop.f32.mrb[0].mxu0
      %v5757 = vadd.f32 %v5297, %v5756
      %v5758 = vpop.f32.mrb[0].mxu0
      %v5759 = vpop.f32.mrb[0].mxu0
      %v5760 = vadd.f32 %v5300, %v5759
      %v5761 = vpop.f32.mrb[0].mxu0
      %5762 = vmatprep.mubr.bf16.mxu0 0
      %5763 = vmatmul.mubr.bf16.gmra.mrb[0].mxu0 %v5658
      %v5764 = vpop.f32.mrb[0].mxu0
      %v5765 = vadd.f32 %v5305, %v5764
      %v5766 = vpop.f32.mrb[0].mxu0
      %v5767 = vpop.f32.mrb[0].mxu0
      %v5768 = vadd.f32 %v5308, %v5767
      %v5769 = vpop.f32.mrb[0].mxu0
      %5770 = vmatprep.mubr.bf16.mxu0 0
      %5771 = vmatmul.mubr.bf16.gmra.mrb[0].mxu0 %v5661
      %v5772 = vpop.f32.mrb[0].mxu0
      %v5773 = vadd.f32 %v5313, %v5772
      %v5774 = vpop.f32.mrb[0].mxu0
      %v5775 = vpop.f32.mrb[0].mxu0
      %v5776 = vadd.f32 %v5316, %v5775
      %v5777 = vpop.f32.mrb[0].mxu0
      %5778 = vmatprep.mubr.bf16.mxu0 0
      %5779 = vmatmul.mubr.bf16.gmra.mrb[0].mxu0 %v5664
      %v5780 = vpop.f32.mrb[0].mxu0
      %v5781 = vadd.f32 %v5321, %v5780
      %v5782 = vpop.f32.mrb[0].mxu0
      %v5783 = vpop.f32.mrb[0].mxu0
      %v5784 = vadd.f32 %v5324, %v5783
      %v5785 = vpop.f32.mrb[0].mxu0
      %5786 = vmatprep.mubr.bf16.mxu0 0
      %5787 = vmatmul.mubr.bf16.gmra.mrb[0].mxu0 %v5667
      %v5788 = vpop.f32.mrb[0].mxu0
      %v5789 = vadd.f32 %v5329, %v5788
      %v5790 = vpop.f32.mrb[0].mxu0
      %v5791 = vpop.f32.mrb[0].mxu0
      %v5792 = vadd.f32 %v5332, %v5791
      %v5793 = vpop.f32.mrb[0].mxu0
      %5794 = vmatprep.mubr.bf16.mxu0 0
      %5795 = vmatmul.mubr.bf16.gmra.mrb[0].mxu0 %v5670
      %v5796 = vpop.f32.mrb[0].mxu0
      %v5797 = vadd.f32 %v5337, %v5796
      %v5798 = vpop.f32.mrb[0].mxu0
      %v5799 = vpop.f32.mrb[0].mxu0
      %v5800 = vadd.f32 %v5340, %v5799
      %v5801 = vpop.f32.mrb[0].mxu0
      %5802 = vmatprep.mubr.bf16.mxu0 0
      %5803 = vmatmul.mubr.bf16.gmra.mrb[0].mxu0 %v5673
      %v5804 = vpop.f32.mrb[0].mxu0
      %v5805 = vadd.f32 %v5345, %v5804
      %v5806 = vpop.f32.mrb[0].mxu0
      %v5807 = vpop.f32.mrb[0].mxu0
      %v5808 = vadd.f32 %v5348, %v5807
      %v5809 = vpop.f32.mrb[0].mxu0
      %5810 = vmatprep.mubr.bf16.mxu0 0
      %5811 = vmatmul.mubr.bf16.gmra.mrb[0].mxu0 %v5676
      %v5812 = vpop.f32.mrb[0].mxu0
      %v5813 = vadd.f32 %v5353, %v5812
      %v5814 = vpop.f32.mrb[0].mxu0
      %v5815 = vpop.f32.mrb[0].mxu0
      %v5816 = vadd.f32 %v5356, %v5815
      %v5817 = vpop.f32.mrb[0].mxu0
      %5818 = vmatprep.mubr.bf16.mxu0 0
      %5819 = vmatmul.mubr.bf16.gmra.mrb[0].mxu0 %v5679
      %v5820 = vpop.f32.mrb[0].mxu0
      %v5821 = vadd.f32 %v5361, %v5820
      %v5822 = vpop.f32.mrb[0].mxu0
      %v5823 = vpop.f32.mrb[0].mxu0
      %v5824 = vadd.f32 %v5364, %v5823
      %v5825 = vpop.f32.mrb[0].mxu0
      %5826 = vmatprep.mubr.bf16.mxu0 0
      %5827 = vmatmul.mubr.bf16.gmra.mrb[0].mxu0 %v5682
      %v5828 = vpop.f32.mrb[0].mxu0
      %v5829 = vadd.f32 %v5369, %v5828
      %v5830 = vpop.f32.mrb[0].mxu0
      %v5831 = vpop.f32.mrb[0].mxu0
      %v5832 = vadd.f32 %v5372, %v5831
      %v5833 = vpop.f32.mrb[0].mxu0
      %5834 = vmatprep.mubr.bf16.mxu0 0
      %5835 = vmatmul.mubr.bf16.gmra.mrb[0].mxu0 %v5685
      %v5836 = vpop.f32.mrb[0].mxu0
      %v5837 = vadd.f32 %v5377, %v5836
      %v5838 = vpop.f32.mrb[0].mxu0
      %v5839 = vpop.f32.mrb[0].mxu0
      %v5840 = vadd.f32 %v5380, %v5839
      %v5841 = vpop.f32.mrb[0].mxu0
      %5842 = vmatprep.mubr.bf16.mxu0 0
      %5843 = vmatmul.mubr.bf16.gmra.mrb[0].mxu0 %v5688
      %v5844 = vpop.f32.mrb[0].mxu0
      %v5845 = vadd.f32 %v5385, %v5844
      %v5846 = vpop.f32.mrb[0].mxu0
      %v5847 = vpop.f32.mrb[0].mxu0
      %v5848 = vadd.f32 %v5388, %v5847
      %v5849 = vpop.f32.mrb[0].mxu0
      %5850 = vmatprep.mubr.bf16.mxu0 0
      %5851 = vmatmul.mubr.bf16.gmra.mrb[0].mxu0 %v5691
      %v5852 = vpop.f32.mrb[0].mxu0
      %v5853 = vadd.f32 %v5393, %v5852
      %v5854 = vpop.f32.mrb[0].mxu0
      %v5855 = vpop.f32.mrb[0].mxu0
      %v5856 = vadd.f32 %v5396, %v5855
      %v5857 = vpop.f32.mrb[0].mxu0
      %5858 = vmatprep.mubr.bf16.mxu0 0
      %5859 = vmatmul.mubr.bf16.gmra.mrb[0].mxu0 %v5694
      %v5860 = vpop.f32.mrb[0].mxu0
      %v5861 = vadd.f32 %v5401, %v5860
      %v5862 = vpop.f32.mrb[0].mxu0
      %v5863 = vpop.f32.mrb[0].mxu0
      %v5864 = vadd.f32 %v5404, %v5863
      %v5865 = vpop.f32.mrb[0].mxu0
      %5866 = vmatprep.mubr.bf16.mxu0 0
      %5867 = vmatmul.mubr.bf16.gmra.mrb[0].mxu0 %v5697
      %v5868 = vpop.f32.mrb[0].mxu0
      %v5869 = vadd.f32 %v5409, %v5868
      %v5870 = vpop.f32.mrb[0].mxu0
      %v5871 = vpop.f32.mrb[0].mxu0
      %v5872 = vadd.f32 %v5412, %v5871
      %v5873 = vpop.f32.mrb[0].mxu0
      %5874 = vmatprep.mubr.bf16.mxu0 0
      %5875 = vmatmul.mubr.bf16.gmra.mrb[0].mxu0 %v5700
      %v5876 = vpop.f32.mrb[0].mxu0
      %v5877 = vadd.f32 %v5417, %v5876
      %v5878 = vpop.f32.mrb[0].mxu0
      %v5879 = vpop.f32.mrb[0].mxu0
      %v5880 = vadd.f32 %v5420, %v5879
      %v5881 = vpop.f32.mrb[0].mxu0
      %5882 = vmatprep.mubr.bf16.mxu0 0
      %5883 = vmatmul.mubr.bf16.gmra.mrb[0].mxu0 %v5703
      %v5884 = vpop.f32.mrb[0].mxu0
      %v5885 = vadd.f32 %v5425, %v5884
      %v5886 = vpop.f32.mrb[0].mxu0
      %v5887 = vpop.f32.mrb[0].mxu0
      %v5888 = vadd.f32 %v5428, %v5887
      %v5889 = vpop.f32.mrb[0].mxu0
      %5890 = vmatprep.mubr.bf16.mxu0 0
      %5891 = vmatmul.mubr.bf16.gmra.mrb[0].mxu0 %v5706
      %v5892 = vpop.f32.mrb[0].mxu0
      %v5893 = vadd.f32 %v5433, %v5892
      %v5894 = vpop.f32.mrb[0].mxu0
      %v5895 = vpop.f32.mrb[0].mxu0
      %v5896 = vadd.f32 %v5436, %v5895
      %v5897 = vpop.f32.mrb[0].mxu0
      %5898 = vmatprep.mubr.bf16.mxu0 0
      %5899 = vmatmul.mubr.bf16.gmra.mrb[0].mxu0 %v5709
      %v5900 = vpop.f32.mrb[0].mxu0
      %v5901 = vadd.f32 %v5441, %v5900
      %v5902 = vpop.f32.mrb[0].mxu0
      %v5903 = vpop.f32.mrb[0].mxu0
      %v5904 = vadd.f32 %v5444, %v5903
      %v5905 = vpop.f32.mrb[0].mxu0
      %5906 = vmatprep.mubr.bf16.mxu0 0
      %5907 = vmatmul.mubr.bf16.gmra.mrb[0].mxu0 %v5712
      %v5908 = vpop.f32.mrb[0].mxu0
      %v5909 = vadd.f32 %v5449, %v5908
      %v5910 = vpop.f32.mrb[0].mxu0
      %v5911 = vpop.f32.mrb[0].mxu0
      %v5912 = vpop.f32.mrb[0].mxu0
      %5913 = vdwg.mxu0
      %v5914 = vld [vmem:[#allocation2 + $0xa8] sm:$0x3]
      %s5915 = scalar_lea.vmem %s4, 16
      %v5916 = vld [vmem:[%s5915] sm:$0xf]
      %v5917 = vld [vmem:[%s5915 + $0x4] sm:$0xf]
      %v5919 = vunpack.c.l.b16 %v5914
      %v5920 = vpack.c.b16 %v5919, %v5120
      %v5922 = vshrl.u32 %v5122, 16
      %v5924 = vrot.slane %v5922, 3
      %v5925 = vshll.u32 %v5122, 16
      %v5927 = vrot.slane %v5925, 4
      %v5928 = vor.u32 %v5924, %v5927
      %v5929 = vrot.slane %v5466, 3
      %v5930 = vrot.slane %v5469, 4
      %v5931 = vor.u32 %v5929, %v5930
      %v5932 = vsel %vm1178, %v5928, %v5931
      %v5933 = vrot.slane %v5475, 3
      %v5934 = vrot.slane %v5478, 4
      %v5935 = vor.u32 %v5933, %v5934
      %v5936 = vsel %vm1178, %v5931, %v5935
      %v5937 = vrot.slane %v5484, 3
      %v5938 = vrot.slane %v5487, 4
      %v5939 = vor.u32 %v5937, %v5938
      %v5940 = vsel %vm1178, %v5935, %v5939
      %v5941 = vrot.slane %v5493, 3
      %v5942 = vrot.slane %v5496, 4
      %v5943 = vor.u32 %v5941, %v5942
      %v5944 = vsel %vm1178, %v5939, %v5943
      %v5945 = vrot.slane %v5502, 3
      %v5946 = vrot.slane %v5505, 4
      %v5947 = vor.u32 %v5945, %v5946
      %v5948 = vsel %vm1178, %v5943, %v5947
      %v5949 = vrot.slane %v5511, 3
      %v5950 = vrot.slane %v5514, 4
      %v5951 = vor.u32 %v5949, %v5950
      %v5952 = vsel %vm1178, %v5947, %v5951
      %v5953 = vrot.slane %v5520, 3
      %v5954 = vrot.slane %v5523, 4
      %v5955 = vor.u32 %v5953, %v5954
      %v5956 = vsel %vm1178, %v5951, %v5955
      %v5957 = vrot.slane %v5529, 3
      %v5958 = vrot.slane %v5532, 4
      %v5959 = vor.u32 %v5957, %v5958
      %v5960 = vsel %vm1178, %v5955, %v5959
      %v5961 = vrot.slane %v5538, 3
      %v5962 = vrot.slane %v5541, 4
      %v5963 = vor.u32 %v5961, %v5962
      %v5964 = vsel %vm1178, %v5959, %v5963
      %v5965 = vrot.slane %v5547, 3
      %v5966 = vrot.slane %v5550, 4
      %v5967 = vor.u32 %v5965, %v5966
      %v5968 = vsel %vm1178, %v5963, %v5967
      %v5969 = vrot.slane %v5556, 3
      %v5970 = vrot.slane %v5559, 4
      %v5971 = vor.u32 %v5969, %v5970
      %v5972 = vsel %vm1178, %v5967, %v5971
      %v5973 = vrot.slane %v5565, 3
      %v5974 = vrot.slane %v5568, 4
      %v5975 = vor.u32 %v5973, %v5974
      %v5976 = vsel %vm1178, %v5971, %v5975
      %v5977 = vrot.slane %v5574, 3
      %v5978 = vrot.slane %v5577, 4
      %v5979 = vor.u32 %v5977, %v5978
      %v5980 = vsel %vm1178, %v5975, %v5979
      %v5981 = vrot.slane %v5583, 3
      %v5982 = vrot.slane %v5586, 4
      %v5983 = vor.u32 %v5981, %v5982
      %v5984 = vsel %vm1178, %v5979, %v5983
      %v5985 = vrot.slane %v5592, 3
      %v5986 = vrot.slane %v5595, 4
      %v5987 = vor.u32 %v5985, %v5986
      %v5988 = vsel %vm1178, %v5983, %v5987
      %v5989 = vrot.slane %v5601, 3
      %v5990 = vrot.slane %v5604, 4
      %v5991 = vor.u32 %v5989, %v5990
      %v5992 = vsel %vm1178, %v5987, %v5991
      %v5993 = vrot.slane %v5610, 3
      %v5994 = vrot.slane %v5613, 4
      %v5995 = vor.u32 %v5993, %v5994
      %v5996 = vsel %vm1178, %v5991, %v5995
      %v5997 = vrot.slane %v5619, 3
      %v5998 = vrot.slane %v5622, 4
      %v5999 = vor.u32 %v5997, %v5998
      %v6000 = vsel %vm1178, %v5995, %v5999
      %v6001 = vrot.slane %v5628, 3
      %v6002 = vrot.slane %v5631, 4
      %v6003 = vor.u32 %v6001, %v6002
      %v6004 = vsel %vm1178, %v5999, %v6003
      %v6006 = vshrl.u32 %v5920, 16
      %v6008 = vrot.slane %v6006, 3
      %v6009 = vshll.u32 %v5920, 16
      %v6011 = vrot.slane %v6009, 4
      %v6012 = vor.u32 %v6008, %v6011
      %v6013 = vsel %vm1178, %v6003, %v6012
      %v6016 = vunpack.c.l.b16 %v5916
      %v6017 = vunpack.c.l.b16 %v5917
      %v6018 = vpack.c.b16 %v6017, %v6016
      %v6021 = vsel %vm5190, %v5932, 0
      %v6024 = vsel %vm5190, %v5936, 0
      %v6027 = vsel %vm5190, %v5940, 0
      %v6030 = vsel %vm5190, %v5944, 0
      %v6033 = vsel %vm5190, %v5948, 0
      %v6036 = vsel %vm5190, %v5952, 0
      %v6039 = vsel %vm5190, %v5956, 0
      %v6042 = vsel %vm5190, %v5960, 0
      %v6045 = vsel %vm5190, %v5964, 0
      %v6048 = vsel %vm5190, %v5968, 0
      %v6051 = vsel %vm5190, %v5972, 0
      %v6054 = vsel %vm5190, %v5976, 0
      %v6057 = vsel %vm5190, %v5980, 0
      %v6060 = vsel %vm5190, %v5984, 0
      %v6063 = vsel %vm5190, %v5988, 0
      %v6066 = vsel %vm5190, %v5992, 0
      %v6069 = vsel %vm5190, %v5996, 0
      %v6072 = vsel %vm5190, %v6000, 0
      %v6075 = vsel %vm5190, %v6004, 0
      %v6078 = vsel %vm5190, %v6013, 0
      %v6081 = vsel %vm5190, %v6012, 0
      %6083 = vmatprep.subr.bf16.mxu0 0
      %6084 = vmatpush1.bf16.msra.mxu0 %v6018
      %6085 = vmatprep.subr.bf16.mxu0 0
      %6086 = vmatpush1.bf16.msra.mxu0 0
      %6087 = vmatprep.subr.bf16.mxu0 0
      %6088 = vmatpush1.bf16.msra.mxu0 0
      %6089 = vmatprep.subr.bf16.mxu0 0
      %6090 = vmatpush1.bf16.msra.mxu0 0
      %6091 = vmatprep.subr.bf16.mxu0 0
      %6092 = vmatpush1.bf16.msra.mxu0 0
      %6093 = vmatprep.subr.bf16.mxu0 0
      %6094 = vmatpush1.bf16.msra.mxu0 0
      %6095 = vmatprep.subr.bf16.mxu0 0
      %6096 = vmatpush1.bf16.msra.mxu0 0
      %6097 = vmatprep.subr.bf16.mxu0 0
      %6098 = vmatpush1.bf16.msra.mxu0 0
      %6099 = vmatprep.subr.bf16.mxu0 0
      %6100 = vmatpush1.bf16.msra.mxu0 0
      %6101 = vmatprep.subr.bf16.mxu0 0
      %6102 = vmatpush1.bf16.msra.mxu0 0
      %6103 = vmatprep.subr.bf16.mxu0 0
      %6104 = vmatpush1.bf16.msra.mxu0 0
      %6105 = vmatprep.subr.bf16.mxu0 0
      %6106 = vmatpush1.bf16.msra.mxu0 0
      %6107 = vmatprep.subr.bf16.mxu0 0
      %6108 = vmatpush1.bf16.msra.mxu0 0
      %6109 = vmatprep.subr.bf16.mxu0 0
      %6110 = vmatpush1.bf16.msra.mxu0 0
      %6111 = vmatprep.subr.bf16.mxu0 0
      %6112 = vmatpush1.bf16.msra.mxu0 0
      %6113 = vmatprep.subr.bf16.mxu0 0
      %6114 = vmatpush1.bf16.msra.mxu0 0
      %6115 = vmatprep.mubr.bf16.mxu0 0
      %6116 = vmatmul.mubr.bf16.gmra.mrb[0].mxu0 %v6021
      %v6117 = vpop.f32.mrb[0].mxu0
      %v6118 = vadd.f32 0.0, %v6117
      %v6119 = vpop.f32.mrb[0].mxu0
      %v6120 = vpop.f32.mrb[0].mxu0
      %v6121 = vadd.f32 0.0, %v6120
      %v6122 = vpop.f32.mrb[0].mxu0
      %6123 = vmatprep.mubr.bf16.mxu0 0
      %6124 = vmatmul.mubr.bf16.gmra.mrb[0].mxu0 %v6024
      %v6125 = vpop.f32.mrb[0].mxu0
      %v6126 = vadd.f32 0.0, %v6125
      %v6127 = vpop.f32.mrb[0].mxu0
      %v6128 = vpop.f32.mrb[0].mxu0
      %v6129 = vadd.f32 0.0, %v6128
      %v6130 = vpop.f32.mrb[0].mxu0
      %6131 = vmatprep.mubr.bf16.mxu0 0
      %6132 = vmatmul.mubr.bf16.gmra.mrb[0].mxu0 %v6027
      %v6133 = vpop.f32.mrb[0].mxu0
      %v6134 = vadd.f32 0.0, %v6133
      %v6135 = vpop.f32.mrb[0].mxu0
      %v6136 = vpop.f32.mrb[0].mxu0
      %v6137 = vadd.f32 0.0, %v6136
      %v6138 = vpop.f32.mrb[0].mxu0
      %6139 = vmatprep.mubr.bf16.mxu0 0
      %6140 = vmatmul.mubr.bf16.gmra.mrb[0].mxu0 %v6030
      %v6141 = vpop.f32.mrb[0].mxu0
      %v6142 = vadd.f32 0.0, %v6141
      %v6143 = vpop.f32.mrb[0].mxu0
      %v6144 = vpop.f32.mrb[0].mxu0
      %v6145 = vadd.f32 0.0, %v6144
      %v6146 = vpop.f32.mrb[0].mxu0
      %6147 = vmatprep.mubr.bf16.mxu0 0
      %6148 = vmatmul.mubr.bf16.gmra.mrb[0].mxu0 %v6033
      %v6149 = vpop.f32.mrb[0].mxu0
      %v6150 = vadd.f32 0.0, %v6149
      %v6151 = vpop.f32.mrb[0].mxu0
      %v6152 = vpop.f32.mrb[0].mxu0
      %v6153 = vadd.f32 0.0, %v6152
      %v6154 = vpop.f32.mrb[0].mxu0
      %6155 = vmatprep.mubr.bf16.mxu0 0
      %6156 = vmatmul.mubr.bf16.gmra.mrb[0].mxu0 %v6036
      %v6157 = vpop.f32.mrb[0].mxu0
      %v6158 = vadd.f32 0.0, %v6157
      %v6159 = vpop.f32.mrb[0].mxu0
      %v6160 = vpop.f32.mrb[0].mxu0
      %v6161 = vadd.f32 0.0, %v6160
      %v6162 = vpop.f32.mrb[0].mxu0
      %6163 = vmatprep.mubr.bf16.mxu0 0
      %6164 = vmatmul.mubr.bf16.gmra.mrb[0].mxu0 %v6039
      %v6165 = vpop.f32.mrb[0].mxu0
      %v6166 = vadd.f32 0.0, %v6165
      %v6167 = vpop.f32.mrb[0].mxu0
      %v6168 = vpop.f32.mrb[0].mxu0
      %v6169 = vadd.f32 0.0, %v6168
      %v6170 = vpop.f32.mrb[0].mxu0
      %6171 = vmatprep.mubr.bf16.mxu0 0
      %6172 = vmatmul.mubr.bf16.gmra.mrb[0].mxu0 %v6042
      %v6173 = vpop.f32.mrb[0].mxu0
      %v6174 = vadd.f32 0.0, %v6173
      %v6175 = vpop.f32.mrb[0].mxu0
      %v6176 = vpop.f32.mrb[0].mxu0
      %v6177 = vadd.f32 0.0, %v6176
      %v6178 = vpop.f32.mrb[0].mxu0
      %6179 = vmatprep.mubr.bf16.mxu0 0
      %6180 = vmatmul.mubr.bf16.gmra.mrb[0].mxu0 %v6045
      %v6181 = vpop.f32.mrb[0].mxu0
      %v6182 = vadd.f32 0.0, %v6181
      %v6183 = vpop.f32.mrb[0].mxu0
      %v6184 = vpop.f32.mrb[0].mxu0
      %v6185 = vadd.f32 0.0, %v6184
      %v6186 = vpop.f32.mrb[0].mxu0
      %6187 = vmatprep.mubr.bf16.mxu0 0
      %6188 = vmatmul.mubr.bf16.gmra.mrb[0].mxu0 %v6048
      %v6189 = vpop.f32.mrb[0].mxu0
      %v6190 = vadd.f32 0.0, %v6189
      %v6191 = vpop.f32.mrb[0].mxu0
      %v6192 = vpop.f32.mrb[0].mxu0
      %v6193 = vadd.f32 0.0, %v6192
      %v6194 = vpop.f32.mrb[0].mxu0
      %6195 = vmatprep.mubr.bf16.mxu0 0
      %6196 = vmatmul.mubr.bf16.gmra.mrb[0].mxu0 %v6051
      %v6197 = vpop.f32.mrb[0].mxu0
      %v6198 = vadd.f32 0.0, %v6197
      %v6199 = vpop.f32.mrb[0].mxu0
      %v6200 = vpop.f32.mrb[0].mxu0
      %v6201 = vadd.f32 0.0, %v6200
      %v6202 = vpop.f32.mrb[0].mxu0
      %6203 = vmatprep.mubr.bf16.mxu0 0
      %6204 = vmatmul.mubr.bf16.gmra.mrb[0].mxu0 %v6054
      %v6205 = vpop.f32.mrb[0].mxu0
      %v6206 = vadd.f32 0.0, %v6205
      %v6207 = vpop.f32.mrb[0].mxu0
      %v6208 = vpop.f32.mrb[0].mxu0
      %v6209 = vadd.f32 0.0, %v6208
      %v6210 = vpop.f32.mrb[0].mxu0
      %6211 = vmatprep.mubr.bf16.mxu0 0
      %6212 = vmatmul.mubr.bf16.gmra.mrb[0].mxu0 %v6057
      %v6213 = vpop.f32.mrb[0].mxu0
      %v6214 = vadd.f32 0.0, %v6213
      %v6215 = vpop.f32.mrb[0].mxu0
      %v6216 = vpop.f32.mrb[0].mxu0
      %v6217 = vadd.f32 0.0, %v6216
      %v6218 = vpop.f32.mrb[0].mxu0
      %6219 = vmatprep.mubr.bf16.mxu0 0
      %6220 = vmatmul.mubr.bf16.gmra.mrb[0].mxu0 %v6060
      %v6221 = vpop.f32.mrb[0].mxu0
      %v6222 = vadd.f32 0.0, %v6221
      %v6223 = vpop.f32.mrb[0].mxu0
      %v6224 = vpop.f32.mrb[0].mxu0
      %v6225 = vadd.f32 0.0, %v6224
      %v6226 = vpop.f32.mrb[0].mxu0
      %6227 = vmatprep.mubr.bf16.mxu0 0
      %6228 = vmatmul.mubr.bf16.gmra.mrb[0].mxu0 %v6063
      %v6229 = vpop.f32.mrb[0].mxu0
      %v6230 = vadd.f32 0.0, %v6229
      %v6231 = vpop.f32.mrb[0].mxu0
      %v6232 = vpop.f32.mrb[0].mxu0
      %v6233 = vadd.f32 0.0, %v6232
      %v6234 = vpop.f32.mrb[0].mxu0
      %6235 = vmatprep.mubr.bf16.mxu0 0
      %6236 = vmatmul.mubr.bf16.gmra.mrb[0].mxu0 %v6066
      %v6237 = vpop.f32.mrb[0].mxu0
      %v6238 = vadd.f32 0.0, %v6237
      %v6239 = vpop.f32.mrb[0].mxu0
      %v6240 = vpop.f32.mrb[0].mxu0
      %v6241 = vadd.f32 0.0, %v6240
      %v6242 = vpop.f32.mrb[0].mxu0
      %6243 = vmatprep.mubr.bf16.mxu0 0
      %6244 = vmatmul.mubr.bf16.gmra.mrb[0].mxu0 %v6069
      %v6245 = vpop.f32.mrb[0].mxu0
      %v6246 = vadd.f32 0.0, %v6245
      %v6247 = vpop.f32.mrb[0].mxu0
      %v6248 = vpop.f32.mrb[0].mxu0
      %v6249 = vadd.f32 0.0, %v6248
      %v6250 = vpop.f32.mrb[0].mxu0
      %6251 = vmatprep.mubr.bf16.mxu0 0
      %6252 = vmatmul.mubr.bf16.gmra.mrb[0].mxu0 %v6072
      %v6253 = vpop.f32.mrb[0].mxu0
      %v6254 = vadd.f32 0.0, %v6253
      %v6255 = vpop.f32.mrb[0].mxu0
      %v6256 = vpop.f32.mrb[0].mxu0
      %v6257 = vadd.f32 0.0, %v6256
      %v6258 = vpop.f32.mrb[0].mxu0
      %6259 = vmatprep.mubr.bf16.mxu0 0
      %6260 = vmatmul.mubr.bf16.gmra.mrb[0].mxu0 %v6075
      %v6261 = vpop.f32.mrb[0].mxu0
      %v6262 = vadd.f32 0.0, %v6261
      %v6263 = vpop.f32.mrb[0].mxu0
      %v6264 = vpop.f32.mrb[0].mxu0
      %v6265 = vadd.f32 0.0, %v6264
      %v6266 = vpop.f32.mrb[0].mxu0
      %6267 = vmatprep.mubr.bf16.mxu0 0
      %6268 = vmatmul.mubr.bf16.gmra.mrb[0].mxu0 %v6078
      %v6269 = vpop.f32.mrb[0].mxu0
      %v6270 = vadd.f32 0.0, %v6269
      %v6271 = vpop.f32.mrb[0].mxu0
      %v6272 = vpop.f32.mrb[0].mxu0
      %v6273 = vadd.f32 0.0, %v6272
      %v6274 = vpop.f32.mrb[0].mxu0
      %6275 = vmatprep.mubr.bf16.mxu0 0
      %6276 = vmatmul.mubr.bf16.gmra.mrb[0].mxu0 %v6081
      %v6277 = vpop.f32.mrb[0].mxu0
      %v6278 = vadd.f32 0.0, %v6277
      %v6279 = vpop.f32.mrb[0].mxu0
      %v6280 = vpop.f32.mrb[0].mxu0
      %v6281 = vpop.f32.mrb[0].mxu0
      %6282 = vdwg.mxu0
      %v6283 = vadd.f32 %v5749, %v6118
      %v6284 = vadd.f32 %v5752, %v6121
      %v6285 = vadd.f32 %v5757, %v6126
      %v6286 = vadd.f32 %v5760, %v6129
      %v6287 = vadd.f32 %v5765, %v6134
      %v6288 = vadd.f32 %v5768, %v6137
      %v6289 = vadd.f32 %v5773, %v6142
      %v6290 = vadd.f32 %v5776, %v6145
      %v6291 = vadd.f32 %v5781, %v6150
      %v6292 = vadd.f32 %v5784, %v6153
      %v6293 = vadd.f32 %v5789, %v6158
      %v6294 = vadd.f32 %v5792, %v6161
      %v6295 = vadd.f32 %v5797, %v6166
      %v6296 = vadd.f32 %v5800, %v6169
      %v6297 = vadd.f32 %v5805, %v6174
      %v6298 = vadd.f32 %v5808, %v6177
      %v6299 = vadd.f32 %v5813, %v6182
      %v6300 = vadd.f32 %v5816, %v6185
      %v6301 = vadd.f32 %v5821, %v6190
      %v6302 = vadd.f32 %v5824, %v6193
      %v6303 = vadd.f32 %v5829, %v6198
      %v6304 = vadd.f32 %v5832, %v6201
      %v6305 = vadd.f32 %v5837, %v6206
      %v6306 = vadd.f32 %v5840, %v6209
      %v6307 = vadd.f32 %v5845, %v6214
      %v6308 = vadd.f32 %v5848, %v6217
      %v6309 = vadd.f32 %v5853, %v6222
      %v6310 = vadd.f32 %v5856, %v6225
      %v6311 = vadd.f32 %v5861, %v6230
      %v6312 = vadd.f32 %v5864, %v6233
      %v6313 = vadd.f32 %v5869, %v6238
      %v6314 = vadd.f32 %v5872, %v6241
      %v6315 = vadd.f32 %v5877, %v6246
      %v6316 = vadd.f32 %v5880, %v6249
      %v6317 = vadd.f32 %v5885, %v6254
      %v6318 = vadd.f32 %v5888, %v6257
      %v6319 = vadd.f32 %v5893, %v6262
      %v6320 = vadd.f32 %v5896, %v6265
      %v6321 = vadd.f32 %v5901, %v6270
      %v6322 = vadd.f32 %v5904, %v6273
      %v6323 = vadd.f32 %v5909, %v6278
      %v6324 = vld [vmem:[#allocation2 + $0xc] sm:$0x8]
      %v6325 = vld [vmem:[#allocation2 + $0x10] sm:$0xf]
      %v6326 = vld [vmem:[#allocation2 + $0x14] sm:$0xf]
      %v6327 = vld [vmem:[#allocation2 + $0x18] sm:$0xf]
      %v6328 = vld [vmem:[#allocation2 + $0x1c] sm:$0xf]
      %v6329 = vld [vmem:[#allocation2 + $0x20] sm:$0xf]
      %v6330 = vld [vmem:[#allocation2 + $0x24] sm:$0xf]
      %v6331 = vld [vmem:[#allocation2 + $0x28] sm:$0xf]
      %v6332 = vld [vmem:[#allocation2 + $0x2c] sm:$0xf]
      %v6333 = vld [vmem:[#allocation2 + $0x30] sm:$0xf]
      %v6334 = vld [vmem:[#allocation2 + $0x34] sm:$0xf]
      %v6335 = vld [vmem:[#allocation2 + $0x38] sm:$0xf]
      %v6336 = vld [vmem:[#allocation2 + $0x3c] sm:$0xf]
      %v6337 = vld [vmem:[#allocation2 + $0x40] sm:$0xf]
      %v6338 = vld [vmem:[#allocation2 + $0x44] sm:$0xf]
      %v6339 = vld [vmem:[#allocation2 + $0x48] sm:$0xf]
      %v6340 = vld [vmem:[#allocation2 + $0x4c] sm:$0xf]
      %v6341 = vld [vmem:[#allocation2 + $0x50] sm:$0xf]
      %v6342 = vld [vmem:[#allocation2 + $0x54] sm:$0xf]
      %v6343 = vld [vmem:[#allocation2 + $0x58] sm:$0xf]
      %v6344 = vld [vmem:[#allocation2 + $0x5c] sm:$0xf]
      %v6345 = vld [vmem:[#allocation2 + $0x60] sm:$0xf]
      %v6346 = vld [vmem:[#allocation2 + $0x64] sm:$0xf]
      %v6347 = vld [vmem:[#allocation2 + $0x68] sm:$0xf]
      %v6348 = vld [vmem:[#allocation2 + $0x6c] sm:$0xf]
      %v6349 = vld [vmem:[#allocation2 + $0x70] sm:$0xf]
      %v6350 = vld [vmem:[#allocation2 + $0x74] sm:$0xf]
      %v6351 = vld [vmem:[#allocation2 + $0x78] sm:$0xf]
      %v6352 = vld [vmem:[#allocation2 + $0x7c] sm:$0xf]
      %v6353 = vld [vmem:[#allocation2 + $0x80] sm:$0xf]
      %v6354 = vld [vmem:[#allocation2 + $0x84] sm:$0xf]
      %v6355 = vld [vmem:[#allocation2 + $0x88] sm:$0xf]
      %v6356 = vld [vmem:[#allocation2 + $0x8c] sm:$0xf]
      %v6357 = vld [vmem:[#allocation2 + $0x90] sm:$0xf]
      %v6358 = vld [vmem:[#allocation2 + $0x94] sm:$0xf]
      %v6359 = vld [vmem:[#allocation2 + $0x98] sm:$0xf]
      %v6360 = vld [vmem:[#allocation2 + $0x9c] sm:$0xf]
      %v6361 = vld [vmem:[#allocation2 + $0xa0] sm:$0xf]
      %v6362 = vld [vmem:[#allocation2 + $0xa4] sm:$0xf]
      %v6363 = vld [vmem:[#allocation2 + $0xa8] sm:$0xf]
      %v6364 = vld [vmem:[#allocation2 + $0xac] sm:$0xf]
      %v6365 = vld [vmem:[#allocation2 + $0xb0] sm:$0x3]
      %s6366 = scalar_lea.vmem %s4, 24
      %v6367 = vld [vmem:[%s6366] sm:$0xf]
      %v6368 = vld [vmem:[%s6366 + $0x4] sm:$0xf]
      %v6411 = vunpack.c.l.b16 %v6324
      %v6412 = vunpack.c.l.b16 %v6325
      %v6413 = vunpack.c.l.b16 %v6326
      %v6414 = vunpack.c.l.b16 %v6327
      %v6415 = vunpack.c.l.b16 %v6328
      %v6416 = vunpack.c.l.b16 %v6329
      %v6417 = vunpack.c.l.b16 %v6330
      %v6418 = vunpack.c.l.b16 %v6331
      %v6419 = vunpack.c.l.b16 %v6332
      %v6420 = vunpack.c.l.b16 %v6333
      %v6421 = vunpack.c.l.b16 %v6334
      %v6422 = vunpack.c.l.b16 %v6335
      %v6423 = vunpack.c.l.b16 %v6336
      %v6424 = vunpack.c.l.b16 %v6337
      %v6425 = vunpack.c.l.b16 %v6338
      %v6426 = vunpack.c.l.b16 %v6339
      %v6427 = vunpack.c.l.b16 %v6340
      %v6428 = vunpack.c.l.b16 %v6341
      %v6429 = vunpack.c.l.b16 %v6342
      %v6430 = vunpack.c.l.b16 %v6343
      %v6431 = vunpack.c.l.b16 %v6344
      %v6432 = vunpack.c.l.b16 %v6345
      %v6433 = vunpack.c.l.b16 %v6346
      %v6434 = vunpack.c.l.b16 %v6347
      %v6435 = vunpack.c.l.b16 %v6348
      %v6436 = vunpack.c.l.b16 %v6349
      %v6437 = vunpack.c.l.b16 %v6350
      %v6438 = vunpack.c.l.b16 %v6351
      %v6439 = vunpack.c.l.b16 %v6352
      %v6440 = vunpack.c.l.b16 %v6353
      %v6441 = vunpack.c.l.b16 %v6354
      %v6442 = vunpack.c.l.b16 %v6355
      %v6443 = vunpack.c.l.b16 %v6356
      %v6444 = vunpack.c.l.b16 %v6357
      %v6445 = vunpack.c.l.b16 %v6358
      %v6446 = vunpack.c.l.b16 %v6359
      %v6447 = vunpack.c.l.b16 %v6360
      %v6448 = vunpack.c.l.b16 %v6361
      %v6449 = vunpack.c.l.b16 %v6362
      %v6450 = vunpack.c.l.b16 %v6363
      %v6451 = vunpack.c.l.b16 %v6364
      %v6452 = vunpack.c.l.b16 %v6365
      %v6453 = vpack.c.b16 %v6412, %v6411
      %v6454 = vpack.c.b16 %v6414, %v6413
      %v6455 = vpack.c.b16 %v6416, %v6415
      %v6456 = vpack.c.b16 %v6418, %v6417
      %v6457 = vpack.c.b16 %v6420, %v6419
      %v6458 = vpack.c.b16 %v6422, %v6421
      %v6459 = vpack.c.b16 %v6424, %v6423
      %v6460 = vpack.c.b16 %v6426, %v6425
      %v6461 = vpack.c.b16 %v6428, %v6427
      %v6462 = vpack.c.b16 %v6430, %v6429
      %v6463 = vpack.c.b16 %v6432, %v6431
      %v6464 = vpack.c.b16 %v6434, %v6433
      %v6465 = vpack.c.b16 %v6436, %v6435
      %v6466 = vpack.c.b16 %v6438, %v6437
      %v6467 = vpack.c.b16 %v6440, %v6439
      %v6468 = vpack.c.b16 %v6442, %v6441
      %v6469 = vpack.c.b16 %v6444, %v6443
      %v6470 = vpack.c.b16 %v6446, %v6445
      %v6471 = vpack.c.b16 %v6448, %v6447
      %v6472 = vpack.c.b16 %v6450, %v6449
      %v6473 = vpack.c.b16 %v6452, %v6451
      %v6475 = vshrl.u32 %v6453, 16
      %v6477 = vrot.slane %v6475, 3
      %v6478 = vshll.u32 %v6453, 16
      %v6480 = vrot.slane %v6478, 4
      %v6481 = vor.u32 %v6477, %v6480
      %v6483 = vshrl.u32 %v6454, 16
      %v6485 = vrot.slane %v6483, 3
      %v6486 = vshll.u32 %v6454, 16
      %v6488 = vrot.slane %v6486, 4
      %v6489 = vor.u32 %v6485, %v6488
      %v6490 = vsel %vm1178, %v6481, %v6489
      %v6492 = vshrl.u32 %v6455, 16
      %v6494 = vrot.slane %v6492, 3
      %v6495 = vshll.u32 %v6455, 16
      %v6497 = vrot.slane %v6495, 4
      %v6498 = vor.u32 %v6494, %v6497
      %v6499 = vsel %vm1178, %v6489, %v6498
      %v6501 = vshrl.u32 %v6456, 16
      %v6503 = vrot.slane %v6501, 3
      %v6504 = vshll.u32 %v6456, 16
      %v6506 = vrot.slane %v6504, 4
      %v6507 = vor.u32 %v6503, %v6506
      %v6508 = vsel %vm1178, %v6498, %v6507
      %v6510 = vshrl.u32 %v6457, 16
      %v6512 = vrot.slane %v6510, 3
      %v6513 = vshll.u32 %v6457, 16
      %v6515 = vrot.slane %v6513, 4
      %v6516 = vor.u32 %v6512, %v6515
      %v6517 = vsel %vm1178, %v6507, %v6516
      %v6519 = vshrl.u32 %v6458, 16
      %v6521 = vrot.slane %v6519, 3
      %v6522 = vshll.u32 %v6458, 16
      %v6524 = vrot.slane %v6522, 4
      %v6525 = vor.u32 %v6521, %v6524
      %v6526 = vsel %vm1178, %v6516, %v6525
      %v6528 = vshrl.u32 %v6459, 16
      %v6530 = vrot.slane %v6528, 3
      %v6531 = vshll.u32 %v6459, 16
      %v6533 = vrot.slane %v6531, 4
      %v6534 = vor.u32 %v6530, %v6533
      %v6535 = vsel %vm1178, %v6525, %v6534
      %v6537 = vshrl.u32 %v6460, 16
      %v6539 = vrot.slane %v6537, 3
      %v6540 = vshll.u32 %v6460, 16
      %v6542 = vrot.slane %v6540, 4
      %v6543 = vor.u32 %v6539, %v6542
      %v6544 = vsel %vm1178, %v6534, %v6543
      %v6546 = vshrl.u32 %v6461, 16
      %v6548 = vrot.slane %v6546, 3
      %v6549 = vshll.u32 %v6461, 16
      %v6551 = vrot.slane %v6549, 4
      %v6552 = vor.u32 %v6548, %v6551
      %v6553 = vsel %vm1178, %v6543, %v6552
      %v6555 = vshrl.u32 %v6462, 16
      %v6557 = vrot.slane %v6555, 3
      %v6558 = vshll.u32 %v6462, 16
      %v6560 = vrot.slane %v6558, 4
      %v6561 = vor.u32 %v6557, %v6560
      %v6562 = vsel %vm1178, %v6552, %v6561
      %v6564 = vshrl.u32 %v6463, 16
      %v6566 = vrot.slane %v6564, 3
      %v6567 = vshll.u32 %v6463, 16
      %v6569 = vrot.slane %v6567, 4
      %v6570 = vor.u32 %v6566, %v6569
      %v6571 = vsel %vm1178, %v6561, %v6570
      %v6573 = vshrl.u32 %v6464, 16
      %v6575 = vrot.slane %v6573, 3
      %v6576 = vshll.u32 %v6464, 16
      %v6578 = vrot.slane %v6576, 4
      %v6579 = vor.u32 %v6575, %v6578
      %v6580 = vsel %vm1178, %v6570, %v6579
      %v6582 = vshrl.u32 %v6465, 16
      %v6584 = vrot.slane %v6582, 3
      %v6585 = vshll.u32 %v6465, 16
      %v6587 = vrot.slane %v6585, 4
      %v6588 = vor.u32 %v6584, %v6587
      %v6589 = vsel %vm1178, %v6579, %v6588
      %v6591 = vshrl.u32 %v6466, 16
      %v6593 = vrot.slane %v6591, 3
      %v6594 = vshll.u32 %v6466, 16
      %v6596 = vrot.slane %v6594, 4
      %v6597 = vor.u32 %v6593, %v6596
      %v6598 = vsel %vm1178, %v6588, %v6597
      %v6600 = vshrl.u32 %v6467, 16
      %v6602 = vrot.slane %v6600, 3
      %v6603 = vshll.u32 %v6467, 16
      %v6605 = vrot.slane %v6603, 4
      %v6606 = vor.u32 %v6602, %v6605
      %v6607 = vsel %vm1178, %v6597, %v6606
      %v6609 = vshrl.u32 %v6468, 16
      %v6611 = vrot.slane %v6609, 3
      %v6612 = vshll.u32 %v6468, 16
      %v6614 = vrot.slane %v6612, 4
      %v6615 = vor.u32 %v6611, %v6614
      %v6616 = vsel %vm1178, %v6606, %v6615
      %v6618 = vshrl.u32 %v6469, 16
      %v6620 = vrot.slane %v6618, 3
      %v6621 = vshll.u32 %v6469, 16
      %v6623 = vrot.slane %v6621, 4
      %v6624 = vor.u32 %v6620, %v6623
      %v6625 = vsel %vm1178, %v6615, %v6624
      %v6627 = vshrl.u32 %v6470, 16
      %v6629 = vrot.slane %v6627, 3
      %v6630 = vshll.u32 %v6470, 16
      %v6632 = vrot.slane %v6630, 4
      %v6633 = vor.u32 %v6629, %v6632
      %v6634 = vsel %vm1178, %v6624, %v6633
      %v6636 = vshrl.u32 %v6471, 16
      %v6638 = vrot.slane %v6636, 3
      %v6639 = vshll.u32 %v6471, 16
      %v6641 = vrot.slane %v6639, 4
      %v6642 = vor.u32 %v6638, %v6641
      %v6643 = vsel %vm1178, %v6633, %v6642
      %v6645 = vshrl.u32 %v6472, 16
      %v6647 = vrot.slane %v6645, 3
      %v6648 = vshll.u32 %v6472, 16
      %v6650 = vrot.slane %v6648, 4
      %v6651 = vor.u32 %v6647, %v6650
      %v6652 = vsel %vm1178, %v6642, %v6651
      %v6654 = vshrl.u32 %v6473, 16
      %v6656 = vrot.slane %v6654, 3
      %v6657 = vshll.u32 %v6473, 16
      %v6659 = vrot.slane %v6657, 4
      %v6660 = vor.u32 %v6656, %v6659
      %v6661 = vsel %vm1178, %v6651, %v6660
      %v6664 = vunpack.c.l.b16 %v6367
      %v6665 = vunpack.c.l.b16 %v6368
      %v6666 = vpack.c.b16 %v6665, %v6664
      %v6669 = vsel %vm5190, %v6490, 0
      %v6672 = vsel %vm5190, %v6499, 0
      %v6675 = vsel %vm5190, %v6508, 0
      %v6678 = vsel %vm5190, %v6517, 0
      %v6681 = vsel %vm5190, %v6526, 0
      %v6684 = vsel %vm5190, %v6535, 0
      %v6687 = vsel %vm5190, %v6544, 0
      %v6690 = vsel %vm5190, %v6553, 0
      %v6693 = vsel %vm5190, %v6562, 0
      %v6696 = vsel %vm5190, %v6571, 0
      %v6699 = vsel %vm5190, %v6580, 0
      %v6702 = vsel %vm5190, %v6589, 0
      %v6705 = vsel %vm5190, %v6598, 0
      %v6708 = vsel %vm5190, %v6607, 0
      %v6711 = vsel %vm5190, %v6616, 0
      %v6714 = vsel %vm5190, %v6625, 0
      %v6717 = vsel %vm5190, %v6634, 0
      %v6720 = vsel %vm5190, %v6643, 0
      %v6723 = vsel %vm5190, %v6652, 0
      %v6726 = vsel %vm5190, %v6661, 0
      %v6729 = vsel %vm5190, %v6660, 0
      %6731 = vmatprep.subr.bf16.mxu0 0
      %6732 = vmatpush1.bf16.msra.mxu0 %v6666
      %6733 = vmatprep.subr.bf16.mxu0 0
      %6734 = vmatpush1.bf16.msra.mxu0 0
      %6735 = vmatprep.subr.bf16.mxu0 0
      %6736 = vmatpush1.bf16.msra.mxu0 0
      %6737 = vmatprep.subr.bf16.mxu0 0
      %6738 = vmatpush1.bf16.msra.mxu0 0
      %6739 = vmatprep.subr.bf16.mxu0 0
      %6740 = vmatpush1.bf16.msra.mxu0 0
      %6741 = vmatprep.subr.bf16.mxu0 0
      %6742 = vmatpush1.bf16.msra.mxu0 0
      %6743 = vmatprep.subr.bf16.mxu0 0
      %6744 = vmatpush1.bf16.msra.mxu0 0
      %6745 = vmatprep.subr.bf16.mxu0 0
      %6746 = vmatpush1.bf16.msra.mxu0 0
      %6747 = vmatprep.subr.bf16.mxu0 0
      %6748 = vmatpush1.bf16.msra.mxu0 0
      %6749 = vmatprep.subr.bf16.mxu0 0
      %6750 = vmatpush1.bf16.msra.mxu0 0
      %6751 = vmatprep.subr.bf16.mxu0 0
      %6752 = vmatpush1.bf16.msra.mxu0 0
      %6753 = vmatprep.subr.bf16.mxu0 0
      %6754 = vmatpush1.bf16.msra.mxu0 0
      %6755 = vmatprep.subr.bf16.mxu0 0
      %6756 = vmatpush1.bf16.msra.mxu0 0
      %6757 = vmatprep.subr.bf16.mxu0 0
      %6758 = vmatpush1.bf16.msra.mxu0 0
      %6759 = vmatprep.subr.bf16.mxu0 0
      %6760 = vmatpush1.bf16.msra.mxu0 0
      %6761 = vmatprep.subr.bf16.mxu0 0
      %6762 = vmatpush1.bf16.msra.mxu0 0
      %6763 = vmatprep.mubr.bf16.mxu0 0
      %6764 = vmatmul.mubr.bf16.gmra.mrb[0].mxu0 %v6669
      %v6765 = vpop.f32.mrb[0].mxu0
      %v6766 = vadd.f32 0.0, %v6765
      %v6767 = vpop.f32.mrb[0].mxu0
      %v6768 = vpop.f32.mrb[0].mxu0
      %v6769 = vadd.f32 0.0, %v6768
      %v6770 = vpop.f32.mrb[0].mxu0
      %6771 = vmatprep.mubr.bf16.mxu0 0
      %6772 = vmatmul.mubr.bf16.gmra.mrb[0].mxu0 %v6672
      %v6773 = vpop.f32.mrb[0].mxu0
      %v6774 = vadd.f32 0.0, %v6773
      %v6775 = vpop.f32.mrb[0].mxu0
      %v6776 = vpop.f32.mrb[0].mxu0
      %v6777 = vadd.f32 0.0, %v6776
      %v6778 = vpop.f32.mrb[0].mxu0
      %6779 = vmatprep.mubr.bf16.mxu0 0
      %6780 = vmatmul.mubr.bf16.gmra.mrb[0].mxu0 %v6675
      %v6781 = vpop.f32.mrb[0].mxu0
      %v6782 = vadd.f32 0.0, %v6781
      %v6783 = vpop.f32.mrb[0].mxu0
      %v6784 = vpop.f32.mrb[0].mxu0
      %v6785 = vadd.f32 0.0, %v6784
      %v6786 = vpop.f32.mrb[0].mxu0
      %6787 = vmatprep.mubr.bf16.mxu0 0
      %6788 = vmatmul.mubr.bf16.gmra.mrb[0].mxu0 %v6678
      %v6789 = vpop.f32.mrb[0].mxu0
      %v6790 = vadd.f32 0.0, %v6789
      %v6791 = vpop.f32.mrb[0].mxu0
      %v6792 = vpop.f32.mrb[0].mxu0
      %v6793 = vadd.f32 0.0, %v6792
      %v6794 = vpop.f32.mrb[0].mxu0
      %6795 = vmatprep.mubr.bf16.mxu0 0
      %6796 = vmatmul.mubr.bf16.gmra.mrb[0].mxu0 %v6681
      %v6797 = vpop.f32.mrb[0].mxu0
      %v6798 = vadd.f32 0.0, %v6797
      %v6799 = vpop.f32.mrb[0].mxu0
      %v6800 = vpop.f32.mrb[0].mxu0
      %v6801 = vadd.f32 0.0, %v6800
      %v6802 = vpop.f32.mrb[0].mxu0
      %6803 = vmatprep.mubr.bf16.mxu0 0
      %6804 = vmatmul.mubr.bf16.gmra.mrb[0].mxu0 %v6684
      %v6805 = vpop.f32.mrb[0].mxu0
      %v6806 = vadd.f32 0.0, %v6805
      %v6807 = vpop.f32.mrb[0].mxu0
      %v6808 = vpop.f32.mrb[0].mxu0
      %v6809 = vadd.f32 0.0, %v6808
      %v6810 = vpop.f32.mrb[0].mxu0
      %6811 = vmatprep.mubr.bf16.mxu0 0
      %6812 = vmatmul.mubr.bf16.gmra.mrb[0].mxu0 %v6687
      %v6813 = vpop.f32.mrb[0].mxu0
      %v6814 = vadd.f32 0.0, %v6813
      %v6815 = vpop.f32.mrb[0].mxu0
      %v6816 = vpop.f32.mrb[0].mxu0
      %v6817 = vadd.f32 0.0, %v6816
      %v6818 = vpop.f32.mrb[0].mxu0
      %6819 = vmatprep.mubr.bf16.mxu0 0
      %6820 = vmatmul.mubr.bf16.gmra.mrb[0].mxu0 %v6690
      %v6821 = vpop.f32.mrb[0].mxu0
      %v6822 = vadd.f32 0.0, %v6821
      %v6823 = vpop.f32.mrb[0].mxu0
      %v6824 = vpop.f32.mrb[0].mxu0
      %v6825 = vadd.f32 0.0, %v6824
      %v6826 = vpop.f32.mrb[0].mxu0
      %6827 = vmatprep.mubr.bf16.mxu0 0
      %6828 = vmatmul.mubr.bf16.gmra.mrb[0].mxu0 %v6693
      %v6829 = vpop.f32.mrb[0].mxu0
      %v6830 = vadd.f32 0.0, %v6829
      %v6831 = vpop.f32.mrb[0].mxu0
      %v6832 = vpop.f32.mrb[0].mxu0
      %v6833 = vadd.f32 0.0, %v6832
      %v6834 = vpop.f32.mrb[0].mxu0
      %6835 = vmatprep.mubr.bf16.mxu0 0
      %6836 = vmatmul.mubr.bf16.gmra.mrb[0].mxu0 %v6696
      %v6837 = vpop.f32.mrb[0].mxu0
      %v6838 = vadd.f32 0.0, %v6837
      %v6839 = vpop.f32.mrb[0].mxu0
      %v6840 = vpop.f32.mrb[0].mxu0
      %v6841 = vadd.f32 0.0, %v6840
      %v6842 = vpop.f32.mrb[0].mxu0
      %6843 = vmatprep.mubr.bf16.mxu0 0
      %6844 = vmatmul.mubr.bf16.gmra.mrb[0].mxu0 %v6699
      %v6845 = vpop.f32.mrb[0].mxu0
      %v6846 = vadd.f32 0.0, %v6845
      %v6847 = vpop.f32.mrb[0].mxu0
      %v6848 = vpop.f32.mrb[0].mxu0
      %v6849 = vadd.f32 0.0, %v6848
      %v6850 = vpop.f32.mrb[0].mxu0
      %6851 = vmatprep.mubr.bf16.mxu0 0
      %6852 = vmatmul.mubr.bf16.gmra.mrb[0].mxu0 %v6702
      %v6853 = vpop.f32.mrb[0].mxu0
      %v6854 = vadd.f32 0.0, %v6853
      %v6855 = vpop.f32.mrb[0].mxu0
      %v6856 = vpop.f32.mrb[0].mxu0
      %v6857 = vadd.f32 0.0, %v6856
      %v6858 = vpop.f32.mrb[0].mxu0
      %6859 = vmatprep.mubr.bf16.mxu0 0
      %6860 = vmatmul.mubr.bf16.gmra.mrb[0].mxu0 %v6705
      %v6861 = vpop.f32.mrb[0].mxu0
      %v6862 = vadd.f32 0.0, %v6861
      %v6863 = vpop.f32.mrb[0].mxu0
      %v6864 = vpop.f32.mrb[0].mxu0
      %v6865 = vadd.f32 0.0, %v6864
      %v6866 = vpop.f32.mrb[0].mxu0
      %6867 = vmatprep.mubr.bf16.mxu0 0
      %6868 = vmatmul.mubr.bf16.gmra.mrb[0].mxu0 %v6708
      %v6869 = vpop.f32.mrb[0].mxu0
      %v6870 = vadd.f32 0.0, %v6869
      %v6871 = vpop.f32.mrb[0].mxu0
      %v6872 = vpop.f32.mrb[0].mxu0
      %v6873 = vadd.f32 0.0, %v6872
      %v6874 = vpop.f32.mrb[0].mxu0
      %6875 = vmatprep.mubr.bf16.mxu0 0
      %6876 = vmatmul.mubr.bf16.gmra.mrb[0].mxu0 %v6711
      %v6877 = vpop.f32.mrb[0].mxu0
      %v6878 = vadd.f32 0.0, %v6877
      %v6879 = vpop.f32.mrb[0].mxu0
      %v6880 = vpop.f32.mrb[0].mxu0
      %v6881 = vadd.f32 0.0, %v6880
      %v6882 = vpop.f32.mrb[0].mxu0
      %6883 = vmatprep.mubr.bf16.mxu0 0
      %6884 = vmatmul.mubr.bf16.gmra.mrb[0].mxu0 %v6714
      %v6885 = vpop.f32.mrb[0].mxu0
      %v6886 = vadd.f32 0.0, %v6885
      %v6887 = vpop.f32.mrb[0].mxu0
      %v6888 = vpop.f32.mrb[0].mxu0
      %v6889 = vadd.f32 0.0, %v6888
      %v6890 = vpop.f32.mrb[0].mxu0
      %6891 = vmatprep.mubr.bf16.mxu0 0
      %6892 = vmatmul.mubr.bf16.gmra.mrb[0].mxu0 %v6717
      %v6893 = vpop.f32.mrb[0].mxu0
      %v6894 = vadd.f32 0.0, %v6893
      %v6895 = vpop.f32.mrb[0].mxu0
      %v6896 = vpop.f32.mrb[0].mxu0
      %v6897 = vadd.f32 0.0, %v6896
      %v6898 = vpop.f32.mrb[0].mxu0
      %6899 = vmatprep.mubr.bf16.mxu0 0
      %6900 = vmatmul.mubr.bf16.gmra.mrb[0].mxu0 %v6720
      %v6901 = vpop.f32.mrb[0].mxu0
      %v6902 = vadd.f32 0.0, %v6901
      %v6903 = vpop.f32.mrb[0].mxu0
      %v6904 = vpop.f32.mrb[0].mxu0
      %v6905 = vadd.f32 0.0, %v6904
      %v6906 = vpop.f32.mrb[0].mxu0
      %6907 = vmatprep.mubr.bf16.mxu0 0
      %6908 = vmatmul.mubr.bf16.gmra.mrb[0].mxu0 %v6723
      %v6909 = vpop.f32.mrb[0].mxu0
      %v6910 = vadd.f32 0.0, %v6909
      %v6911 = vpop.f32.mrb[0].mxu0
      %v6912 = vpop.f32.mrb[0].mxu0
      %v6913 = vadd.f32 0.0, %v6912
      %v6914 = vpop.f32.mrb[0].mxu0
      %6915 = vmatprep.mubr.bf16.mxu0 0
      %6916 = vmatmul.mubr.bf16.gmra.mrb[0].mxu0 %v6726
      %v6917 = vpop.f32.mrb[0].mxu0
      %v6918 = vadd.f32 0.0, %v6917
      %v6919 = vpop.f32.mrb[0].mxu0
      %v6920 = vpop.f32.mrb[0].mxu0
      %v6921 = vadd.f32 0.0, %v6920
      %v6922 = vpop.f32.mrb[0].mxu0
      %6923 = vmatprep.mubr.bf16.mxu0 0
      %6924 = vmatmul.mubr.bf16.gmra.mrb[0].mxu0 %v6729
      %v6925 = vpop.f32.mrb[0].mxu0
      %v6926 = vadd.f32 0.0, %v6925
      %v6927 = vpop.f32.mrb[0].mxu0
      %v6928 = vpop.f32.mrb[0].mxu0
      %v6929 = vpop.f32.mrb[0].mxu0
      %6930 = vdwg.mxu0
      %v6931 = vadd.f32 %v6283, %v6766
      %v6932 = vadd.f32 %v6284, %v6769
      %v6933 = vadd.f32 %v6285, %v6774
      %v6934 = vadd.f32 %v6286, %v6777
      %v6935 = vadd.f32 %v6287, %v6782
      %v6936 = vadd.f32 %v6288, %v6785
      %v6937 = vadd.f32 %v6289, %v6790
      %v6938 = vadd.f32 %v6290, %v6793
      %v6939 = vadd.f32 %v6291, %v6798
      %v6940 = vadd.f32 %v6292, %v6801
      %v6941 = vadd.f32 %v6293, %v6806
      %v6942 = vadd.f32 %v6294, %v6809
      %v6943 = vadd.f32 %v6295, %v6814
      %v6944 = vadd.f32 %v6296, %v6817
      %v6945 = vadd.f32 %v6297, %v6822
      %v6946 = vadd.f32 %v6298, %v6825
      %v6947 = vadd.f32 %v6299, %v6830
      %v6948 = vadd.f32 %v6300, %v6833
      %v6949 = vadd.f32 %v6301, %v6838
      %v6950 = vadd.f32 %v6302, %v6841
      %v6951 = vadd.f32 %v6303, %v6846
      %v6952 = vadd.f32 %v6304, %v6849
      %v6953 = vadd.f32 %v6305, %v6854
      %v6954 = vadd.f32 %v6306, %v6857
      %v6955 = vadd.f32 %v6307, %v6862
      %v6956 = vadd.f32 %v6308, %v6865
      %v6957 = vadd.f32 %v6309, %v6870
      %v6958 = vadd.f32 %v6310, %v6873
      %v6959 = vadd.f32 %v6311, %v6878
      %v6960 = vadd.f32 %v6312, %v6881
      %v6961 = vadd.f32 %v6313, %v6886
      %v6962 = vadd.f32 %v6314, %v6889
      %v6963 = vadd.f32 %v6315, %v6894
      %v6964 = vadd.f32 %v6316, %v6897
      %v6965 = vadd.f32 %v6317, %v6902
      %v6966 = vadd.f32 %v6318, %v6905
      %v6967 = vadd.f32 %v6319, %v6910
      %v6968 = vadd.f32 %v6320, %v6913
      %v6969 = vadd.f32 %v6321, %v6918
      %v6970 = vadd.f32 %v6322, %v6921
      %v6971 = vadd.f32 %v6323, %v6926
      %s6972 = scalar_lea.vmem %s4, 32
      %v6973 = vld [vmem:[%s6972] sm:$0xf]
      %v6974 = vld [vmem:[%s6972 + $0x4] sm:$0xf]
      %v6975 = vpack.c.b16 %v6413, %v6412
      %v6976 = vpack.c.b16 %v6415, %v6414
      %v6977 = vpack.c.b16 %v6417, %v6416
      %v6978 = vpack.c.b16 %v6419, %v6418
      %v6979 = vpack.c.b16 %v6421, %v6420
      %v6980 = vpack.c.b16 %v6423, %v6422
      %v6981 = vpack.c.b16 %v6425, %v6424
      %v6982 = vpack.c.b16 %v6427, %v6426
      %v6983 = vpack.c.b16 %v6429, %v6428
      %v6984 = vpack.c.b16 %v6431, %v6430
      %v6985 = vpack.c.b16 %v6433, %v6432
      %v6986 = vpack.c.b16 %v6435, %v6434
      %v6987 = vpack.c.b16 %v6437, %v6436
      %v6988 = vpack.c.b16 %v6439, %v6438
      %v6989 = vpack.c.b16 %v6441, %v6440
      %v6990 = vpack.c.b16 %v6443, %v6442
      %v6991 = vpack.c.b16 %v6445, %v6444
      %v6992 = vpack.c.b16 %v6447, %v6446
      %v6993 = vpack.c.b16 %v6449, %v6448
      %v6994 = vpack.c.b16 %v6451, %v6450
      %v6995 = vpack.c.b16 %v6452, %v6452
      %v6998 = vunpack.c.l.b16 %v6973
      %v6999 = vunpack.c.l.b16 %v6974
      %v7000 = vpack.c.b16 %v6999, %v6998
      %v7003 = vsel %vm5190, %v6975, 0
      %v7006 = vsel %vm5190, %v6976, 0
      %v7009 = vsel %vm5190, %v6977, 0
      %v7012 = vsel %vm5190, %v6978, 0
      %v7015 = vsel %vm5190, %v6979, 0
      %v7018 = vsel %vm5190, %v6980, 0
      %v7021 = vsel %vm5190, %v6981, 0
      %v7024 = vsel %vm5190, %v6982, 0
      %v7027 = vsel %vm5190, %v6983, 0
      %v7030 = vsel %vm5190, %v6984, 0
      %v7033 = vsel %vm5190, %v6985, 0
      %v7036 = vsel %vm5190, %v6986, 0
      %v7039 = vsel %vm5190, %v6987, 0
      %v7042 = vsel %vm5190, %v6988, 0
      %v7045 = vsel %vm5190, %v6989, 0
      %v7048 = vsel %vm5190, %v6990, 0
      %v7051 = vsel %vm5190, %v6991, 0
      %v7054 = vsel %vm5190, %v6992, 0
      %v7057 = vsel %vm5190, %v6993, 0
      %v7060 = vsel %vm5190, %v6994, 0
      %v7063 = vsel %vm5190, %v6995, 0
      %7065 = vmatprep.subr.bf16.mxu0 0
      %7066 = vmatpush1.bf16.msra.mxu0 %v7000
      %7067 = vmatprep.subr.bf16.mxu0 0
      %7068 = vmatpush1.bf16.msra.mxu0 0
      %7069 = vmatprep.subr.bf16.mxu0 0
      %7070 = vmatpush1.bf16.msra.mxu0 0
      %7071 = vmatprep.subr.bf16.mxu0 0
      %7072 = vmatpush1.bf16.msra.mxu0 0
      %7073 = vmatprep.subr.bf16.mxu0 0
      %7074 = vmatpush1.bf16.msra.mxu0 0
      %7075 = vmatprep.subr.bf16.mxu0 0
      %7076 = vmatpush1.bf16.msra.mxu0 0
      %7077 = vmatprep.subr.bf16.mxu0 0
      %7078 = vmatpush1.bf16.msra.mxu0 0
      %7079 = vmatprep.subr.bf16.mxu0 0
      %7080 = vmatpush1.bf16.msra.mxu0 0
      %7081 = vmatprep.subr.bf16.mxu0 0
      %7082 = vmatpush1.bf16.msra.mxu0 0
      %7083 = vmatprep.subr.bf16.mxu0 0
      %7084 = vmatpush1.bf16.msra.mxu0 0
      %7085 = vmatprep.subr.bf16.mxu0 0
      %7086 = vmatpush1.bf16.msra.mxu0 0
      %7087 = vmatprep.subr.bf16.mxu0 0
      %7088 = vmatpush1.bf16.msra.mxu0 0
      %7089 = vmatprep.subr.bf16.mxu0 0
      %7090 = vmatpush1.bf16.msra.mxu0 0
      %7091 = vmatprep.subr.bf16.mxu0 0
      %7092 = vmatpush1.bf16.msra.mxu0 0
      %7093 = vmatprep.subr.bf16.mxu0 0
      %7094 = vmatpush1.bf16.msra.mxu0 0
      %7095 = vmatprep.subr.bf16.mxu0 0
      %7096 = vmatpush1.bf16.msra.mxu0 0
      %7097 = vmatprep.mubr.bf16.mxu0 0
      %7098 = vmatmul.mubr.bf16.gmra.mrb[0].mxu0 %v7003
      %v7099 = vpop.f32.mrb[0].mxu0
      %v7100 = vadd.f32 0.0, %v7099
      %v7101 = vpop.f32.mrb[0].mxu0
      %v7102 = vpop.f32.mrb[0].mxu0
      %v7103 = vadd.f32 0.0, %v7102
      %v7104 = vpop.f32.mrb[0].mxu0
      %7105 = vmatprep.mubr.bf16.mxu0 0
      %7106 = vmatmul.mubr.bf16.gmra.mrb[0].mxu0 %v7006
      %v7107 = vpop.f32.mrb[0].mxu0
      %v7108 = vadd.f32 0.0, %v7107
      %v7109 = vpop.f32.mrb[0].mxu0
      %v7110 = vpop.f32.mrb[0].mxu0
      %v7111 = vadd.f32 0.0, %v7110
      %v7112 = vpop.f32.mrb[0].mxu0
      %7113 = vmatprep.mubr.bf16.mxu0 0
      %7114 = vmatmul.mubr.bf16.gmra.mrb[0].mxu0 %v7009
      %v7115 = vpop.f32.mrb[0].mxu0
      %v7116 = vadd.f32 0.0, %v7115
      %v7117 = vpop.f32.mrb[0].mxu0
      %v7118 = vpop.f32.mrb[0].mxu0
      %v7119 = vadd.f32 0.0, %v7118
      %v7120 = vpop.f32.mrb[0].mxu0
      %7121 = vmatprep.mubr.bf16.mxu0 0
      %7122 = vmatmul.mubr.bf16.gmra.mrb[0].mxu0 %v7012
      %v7123 = vpop.f32.mrb[0].mxu0
      %v7124 = vadd.f32 0.0, %v7123
      %v7125 = vpop.f32.mrb[0].mxu0
      %v7126 = vpop.f32.mrb[0].mxu0
      %v7127 = vadd.f32 0.0, %v7126
      %v7128 = vpop.f32.mrb[0].mxu0
      %7129 = vmatprep.mubr.bf16.mxu0 0
      %7130 = vmatmul.mubr.bf16.gmra.mrb[0].mxu0 %v7015
      %v7131 = vpop.f32.mrb[0].mxu0
      %v7132 = vadd.f32 0.0, %v7131
      %v7133 = vpop.f32.mrb[0].mxu0
      %v7134 = vpop.f32.mrb[0].mxu0
      %v7135 = vadd.f32 0.0, %v7134
      %v7136 = vpop.f32.mrb[0].mxu0
      %7137 = vmatprep.mubr.bf16.mxu0 0
      %7138 = vmatmul.mubr.bf16.gmra.mrb[0].mxu0 %v7018
      %v7139 = vpop.f32.mrb[0].mxu0
      %v7140 = vadd.f32 0.0, %v7139
      %v7141 = vpop.f32.mrb[0].mxu0
      %v7142 = vpop.f32.mrb[0].mxu0
      %v7143 = vadd.f32 0.0, %v7142
      %v7144 = vpop.f32.mrb[0].mxu0
      %7145 = vmatprep.mubr.bf16.mxu0 0
      %7146 = vmatmul.mubr.bf16.gmra.mrb[0].mxu0 %v7021
      %v7147 = vpop.f32.mrb[0].mxu0
      %v7148 = vadd.f32 0.0, %v7147
      %v7149 = vpop.f32.mrb[0].mxu0
      %v7150 = vpop.f32.mrb[0].mxu0
      %v7151 = vadd.f32 0.0, %v7150
      %v7152 = vpop.f32.mrb[0].mxu0
      %7153 = vmatprep.mubr.bf16.mxu0 0
      %7154 = vmatmul.mubr.bf16.gmra.mrb[0].mxu0 %v7024
      %v7155 = vpop.f32.mrb[0].mxu0
      %v7156 = vadd.f32 0.0, %v7155
      %v7157 = vpop.f32.mrb[0].mxu0
      %v7158 = vpop.f32.mrb[0].mxu0
      %v7159 = vadd.f32 0.0, %v7158
      %v7160 = vpop.f32.mrb[0].mxu0
      %7161 = vmatprep.mubr.bf16.mxu0 0
      %7162 = vmatmul.mubr.bf16.gmra.mrb[0].mxu0 %v7027
      %v7163 = vpop.f32.mrb[0].mxu0
      %v7164 = vadd.f32 0.0, %v7163
      %v7165 = vpop.f32.mrb[0].mxu0
      %v7166 = vpop.f32.mrb[0].mxu0
      %v7167 = vadd.f32 0.0, %v7166
      %v7168 = vpop.f32.mrb[0].mxu0
      %7169 = vmatprep.mubr.bf16.mxu0 0
      %7170 = vmatmul.mubr.bf16.gmra.mrb[0].mxu0 %v7030
      %v7171 = vpop.f32.mrb[0].mxu0
      %v7172 = vadd.f32 0.0, %v7171
      %v7173 = vpop.f32.mrb[0].mxu0
      %v7174 = vpop.f32.mrb[0].mxu0
      %v7175 = vadd.f32 0.0, %v7174
      %v7176 = vpop.f32.mrb[0].mxu0
      %7177 = vmatprep.mubr.bf16.mxu0 0
      %7178 = vmatmul.mubr.bf16.gmra.mrb[0].mxu0 %v7033
      %v7179 = vpop.f32.mrb[0].mxu0
      %v7180 = vadd.f32 0.0, %v7179
      %v7181 = vpop.f32.mrb[0].mxu0
      %v7182 = vpop.f32.mrb[0].mxu0
      %v7183 = vadd.f32 0.0, %v7182
      %v7184 = vpop.f32.mrb[0].mxu0
      %7185 = vmatprep.mubr.bf16.mxu0 0
      %7186 = vmatmul.mubr.bf16.gmra.mrb[0].mxu0 %v7036
      %v7187 = vpop.f32.mrb[0].mxu0
      %v7188 = vadd.f32 0.0, %v7187
      %v7189 = vpop.f32.mrb[0].mxu0
      %v7190 = vpop.f32.mrb[0].mxu0
      %v7191 = vadd.f32 0.0, %v7190
      %v7192 = vpop.f32.mrb[0].mxu0
      %7193 = vmatprep.mubr.bf16.mxu0 0
      %7194 = vmatmul.mubr.bf16.gmra.mrb[0].mxu0 %v7039
      %v7195 = vpop.f32.mrb[0].mxu0
      %v7196 = vadd.f32 0.0, %v7195
      %v7197 = vpop.f32.mrb[0].mxu0
      %v7198 = vpop.f32.mrb[0].mxu0
      %v7199 = vadd.f32 0.0, %v7198
      %v7200 = vpop.f32.mrb[0].mxu0
      %7201 = vmatprep.mubr.bf16.mxu0 0
      %7202 = vmatmul.mubr.bf16.gmra.mrb[0].mxu0 %v7042
      %v7203 = vpop.f32.mrb[0].mxu0
      %v7204 = vadd.f32 0.0, %v7203
      %v7205 = vpop.f32.mrb[0].mxu0
      %v7206 = vpop.f32.mrb[0].mxu0
      %v7207 = vadd.f32 0.0, %v7206
      %v7208 = vpop.f32.mrb[0].mxu0
      %7209 = vmatprep.mubr.bf16.mxu0 0
      %7210 = vmatmul.mubr.bf16.gmra.mrb[0].mxu0 %v7045
      %v7211 = vpop.f32.mrb[0].mxu0
      %v7212 = vadd.f32 0.0, %v7211
      %v7213 = vpop.f32.mrb[0].mxu0
      %v7214 = vpop.f32.mrb[0].mxu0
      %v7215 = vadd.f32 0.0, %v7214
      %v7216 = vpop.f32.mrb[0].mxu0
      %7217 = vmatprep.mubr.bf16.mxu0 0
      %7218 = vmatmul.mubr.bf16.gmra.mrb[0].mxu0 %v7048
      %v7219 = vpop.f32.mrb[0].mxu0
      %v7220 = vadd.f32 0.0, %v7219
      %v7221 = vpop.f32.mrb[0].mxu0
      %v7222 = vpop.f32.mrb[0].mxu0
      %v7223 = vadd.f32 0.0, %v7222
      %v7224 = vpop.f32.mrb[0].mxu0
      %7225 = vmatprep.mubr.bf16.mxu0 0
      %7226 = vmatmul.mubr.bf16.gmra.mrb[0].mxu0 %v7051
      %v7227 = vpop.f32.mrb[0].mxu0
      %v7228 = vadd.f32 0.0, %v7227
      %v7229 = vpop.f32.mrb[0].mxu0
      %v7230 = vpop.f32.mrb[0].mxu0
      %v7231 = vadd.f32 0.0, %v7230
      %v7232 = vpop.f32.mrb[0].mxu0
      %7233 = vmatprep.mubr.bf16.mxu0 0
      %7234 = vmatmul.mubr.bf16.gmra.mrb[0].mxu0 %v7054
      %v7235 = vpop.f32.mrb[0].mxu0
      %v7236 = vadd.f32 0.0, %v7235
      %v7237 = vpop.f32.mrb[0].mxu0
      %v7238 = vpop.f32.mrb[0].mxu0
      %v7239 = vadd.f32 0.0, %v7238
      %v7240 = vpop.f32.mrb[0].mxu0
      %7241 = vmatprep.mubr.bf16.mxu0 0
      %7242 = vmatmul.mubr.bf16.gmra.mrb[0].mxu0 %v7057
      %v7243 = vpop.f32.mrb[0].mxu0
      %v7244 = vadd.f32 0.0, %v7243
      %v7245 = vpop.f32.mrb[0].mxu0
      %v7246 = vpop.f32.mrb[0].mxu0
      %v7247 = vadd.f32 0.0, %v7246
      %v7248 = vpop.f32.mrb[0].mxu0
      %7249 = vmatprep.mubr.bf16.mxu0 0
      %7250 = vmatmul.mubr.bf16.gmra.mrb[0].mxu0 %v7060
      %v7251 = vpop.f32.mrb[0].mxu0
      %v7252 = vadd.f32 0.0, %v7251
      %v7253 = vpop.f32.mrb[0].mxu0
      %v7254 = vpop.f32.mrb[0].mxu0
      %v7255 = vadd.f32 0.0, %v7254
      %v7256 = vpop.f32.mrb[0].mxu0
      %7257 = vmatprep.mubr.bf16.mxu0 0
      %7258 = vmatmul.mubr.bf16.gmra.mrb[0].mxu0 %v7063
      %v7259 = vpop.f32.mrb[0].mxu0
      %v7260 = vadd.f32 0.0, %v7259
      %v7261 = vpop.f32.mrb[0].mxu0
      %v7262 = vpop.f32.mrb[0].mxu0
      %v7263 = vpop.f32.mrb[0].mxu0
      %7264 = vdwg.mxu0
      %v7265 = vadd.f32 %v6931, %v7100
      %v7266 = vadd.f32 %v6932, %v7103
      %v7267 = vadd.f32 %v6933, %v7108
      %v7268 = vadd.f32 %v6934, %v7111
      %v7269 = vadd.f32 %v6935, %v7116
      %v7270 = vadd.f32 %v6936, %v7119
      %v7271 = vadd.f32 %v6937, %v7124
      %v7272 = vadd.f32 %v6938, %v7127
      %v7273 = vadd.f32 %v6939, %v7132
      %v7274 = vadd.f32 %v6940, %v7135
      %v7275 = vadd.f32 %v6941, %v7140
      %v7276 = vadd.f32 %v6942, %v7143
      %v7277 = vadd.f32 %v6943, %v7148
      %v7278 = vadd.f32 %v6944, %v7151
      %v7279 = vadd.f32 %v6945, %v7156
      %v7280 = vadd.f32 %v6946, %v7159
      %v7281 = vadd.f32 %v6947, %v7164
      %v7282 = vadd.f32 %v6948, %v7167
      %v7283 = vadd.f32 %v6949, %v7172
      %v7284 = vadd.f32 %v6950, %v7175
      %v7285 = vadd.f32 %v6951, %v7180
      %v7286 = vadd.f32 %v6952, %v7183
      %v7287 = vadd.f32 %v6953, %v7188
      %v7288 = vadd.f32 %v6954, %v7191
      %v7289 = vadd.f32 %v6955, %v7196
      %v7290 = vadd.f32 %v6956, %v7199
      %v7291 = vadd.f32 %v6957, %v7204
      %v7292 = vadd.f32 %v6958, %v7207
      %v7293 = vadd.f32 %v6959, %v7212
      %v7294 = vadd.f32 %v6960, %v7215
      %v7295 = vadd.f32 %v6961, %v7220
      %v7296 = vadd.f32 %v6962, %v7223
      %v7297 = vadd.f32 %v6963, %v7228
      %v7298 = vadd.f32 %v6964, %v7231
      %v7299 = vadd.f32 %v6965, %v7236
      %v7300 = vadd.f32 %v6966, %v7239
      %v7301 = vadd.f32 %v6967, %v7244
      %v7302 = vadd.f32 %v6968, %v7247
      %v7303 = vadd.f32 %v6969, %v7252
      %v7304 = vadd.f32 %v6970, %v7255
      %v7305 = vadd.f32 %v6971, %v7260
      %v7306 = vld [vmem:[#allocation2 + $0xb0] sm:$0x7]
      %s7307 = scalar_lea.vmem %s4, 40
      %v7308 = vld [vmem:[%s7307] sm:$0xf]
      %v7309 = vld [vmem:[%s7307 + $0x4] sm:$0xf]
      %v7311 = vunpack.c.l.b16 %v7306
      %v7312 = vpack.c.b16 %v7311, %v7311
      %v7313 = vshrl.u32 %v6975, 16
      %v7315 = vshll.u32 %v6975, 16
      %v7317 = vrot.slane %v7315, 1
      %v7318 = vor.u32 %v7313, %v7317
      %v7319 = vshll.u32 %v6976, 16
      %v7321 = vrot.slane %v7319, 1
      %v7322 = vsel %vm2559, %v7318, %v7321
      %v7323 = vshrl.u32 %v6976, 16
      %v7325 = vor.u32 %v7323, %v7321
      %v7326 = vshll.u32 %v6977, 16
      %v7328 = vrot.slane %v7326, 1
      %v7329 = vsel %vm2559, %v7325, %v7328
      %v7330 = vshrl.u32 %v6977, 16
      %v7332 = vor.u32 %v7330, %v7328
      %v7333 = vshll.u32 %v6978, 16
      %v7335 = vrot.slane %v7333, 1
      %v7336 = vsel %vm2559, %v7332, %v7335
      %v7337 = vshrl.u32 %v6978, 16
      %v7339 = vor.u32 %v7337, %v7335
      %v7340 = vshll.u32 %v6979, 16
      %v7342 = vrot.slane %v7340, 1
      %v7343 = vsel %vm2559, %v7339, %v7342
      %v7344 = vshrl.u32 %v6979, 16
      %v7346 = vor.u32 %v7344, %v7342
      %v7347 = vshll.u32 %v6980, 16
      %v7349 = vrot.slane %v7347, 1
      %v7350 = vsel %vm2559, %v7346, %v7349
      %v7351 = vshrl.u32 %v6980, 16
      %v7353 = vor.u32 %v7351, %v7349
      %v7354 = vshll.u32 %v6981, 16
      %v7356 = vrot.slane %v7354, 1
      %v7357 = vsel %vm2559, %v7353, %v7356
      %v7358 = vshrl.u32 %v6981, 16
      %v7360 = vor.u32 %v7358, %v7356
      %v7361 = vshll.u32 %v6982, 16
      %v7363 = vrot.slane %v7361, 1
      %v7364 = vsel %vm2559, %v7360, %v7363
      %v7365 = vshrl.u32 %v6982, 16
      %v7367 = vor.u32 %v7365, %v7363
      %v7368 = vshll.u32 %v6983, 16
      %v7370 = vrot.slane %v7368, 1
      %v7371 = vsel %vm2559, %v7367, %v7370
      %v7372 = vshrl.u32 %v6983, 16
      %v7374 = vor.u32 %v7372, %v7370
      %v7375 = vshll.u32 %v6984, 16
      %v7377 = vrot.slane %v7375, 1
      %v7378 = vsel %vm2559, %v7374, %v7377
      %v7379 = vshrl.u32 %v6984, 16
      %v7381 = vor.u32 %v7379, %v7377
      %v7382 = vshll.u32 %v6985, 16
      %v7384 = vrot.slane %v7382, 1
      %v7385 = vsel %vm2559, %v7381, %v7384
      %v7386 = vshrl.u32 %v6985, 16
      %v7388 = vor.u32 %v7386, %v7384
      %v7389 = vshll.u32 %v6986, 16
      %v7391 = vrot.slane %v7389, 1
      %v7392 = vsel %vm2559, %v7388, %v7391
      %v7393 = vshrl.u32 %v6986, 16
      %v7395 = vor.u32 %v7393, %v7391
      %v7396 = vshll.u32 %v6987, 16
      %v7398 = vrot.slane %v7396, 1
      %v7399 = vsel %vm2559, %v7395, %v7398
      %v7400 = vshrl.u32 %v6987, 16
      %v7402 = vor.u32 %v7400, %v7398
      %v7403 = vshll.u32 %v6988, 16
      %v7405 = vrot.slane %v7403, 1
      %v7406 = vsel %vm2559, %v7402, %v7405
      %v7407 = vshrl.u32 %v6988, 16
      %v7409 = vor.u32 %v7407, %v7405
      %v7410 = vshll.u32 %v6989, 16
      %v7412 = vrot.slane %v7410, 1
      %v7413 = vsel %vm2559, %v7409, %v7412
      %v7414 = vshrl.u32 %v6989, 16
      %v7416 = vor.u32 %v7414, %v7412
      %v7417 = vshll.u32 %v6990, 16
      %v7419 = vrot.slane %v7417, 1
      %v7420 = vsel %vm2559, %v7416, %v7419
      %v7421 = vshrl.u32 %v6990, 16
      %v7423 = vor.u32 %v7421, %v7419
      %v7424 = vshll.u32 %v6991, 16
      %v7426 = vrot.slane %v7424, 1
      %v7427 = vsel %vm2559, %v7423, %v7426
      %v7428 = vshrl.u32 %v6991, 16
      %v7430 = vor.u32 %v7428, %v7426
      %v7431 = vshll.u32 %v6992, 16
      %v7433 = vrot.slane %v7431, 1
      %v7434 = vsel %vm2559, %v7430, %v7433
      %v7435 = vshrl.u32 %v6992, 16
      %v7437 = vor.u32 %v7435, %v7433
      %v7438 = vshll.u32 %v6993, 16
      %v7440 = vrot.slane %v7438, 1
      %v7441 = vsel %vm2559, %v7437, %v7440
      %v7442 = vshrl.u32 %v6993, 16
      %v7444 = vor.u32 %v7442, %v7440
      %v7445 = vshll.u32 %v6994, 16
      %v7447 = vrot.slane %v7445, 1
      %v7448 = vsel %vm2559, %v7444, %v7447
      %v7449 = vshrl.u32 %v6994, 16
      %v7451 = vor.u32 %v7449, %v7447
      %v7453 = vshll.u32 %v7312, 16
      %v7455 = vrot.slane %v7453, 1
      %v7456 = vsel %vm2559, %v7451, %v7455
      %v7457 = vshrl.u32 %v7312, 16
      %v7459 = vor.u32 %v7457, %v7455
      %v7462 = vunpack.c.l.b16 %v7308
      %v7463 = vunpack.c.l.b16 %v7309
      %v7464 = vpack.c.b16 %v7463, %v7462
      %v7467 = vsel %vm5190, %v7322, 0
      %v7470 = vsel %vm5190, %v7329, 0
      %v7473 = vsel %vm5190, %v7336, 0
      %v7476 = vsel %vm5190, %v7343, 0
      %v7479 = vsel %vm5190, %v7350, 0
      %v7482 = vsel %vm5190, %v7357, 0
      %v7485 = vsel %vm5190, %v7364, 0
      %v7488 = vsel %vm5190, %v7371, 0
      %v7491 = vsel %vm5190, %v7378, 0
      %v7494 = vsel %vm5190, %v7385, 0
      %v7497 = vsel %vm5190, %v7392, 0
      %v7500 = vsel %vm5190, %v7399, 0
      %v7503 = vsel %vm5190, %v7406, 0
      %v7506 = vsel %vm5190, %v7413, 0
      %v7509 = vsel %vm5190, %v7420, 0
      %v7512 = vsel %vm5190, %v7427, 0
      %v7515 = vsel %vm5190, %v7434, 0
      %v7518 = vsel %vm5190, %v7441, 0
      %v7521 = vsel %vm5190, %v7448, 0
      %v7524 = vsel %vm5190, %v7456, 0
      %v7527 = vsel %vm5190, %v7459, 0
      %7529 = vmatprep.subr.bf16.mxu0 0
      %7530 = vmatpush1.bf16.msra.mxu0 %v7464
      %7531 = vmatprep.subr.bf16.mxu0 0
      %7532 = vmatpush1.bf16.msra.mxu0 0
      %7533 = vmatprep.subr.bf16.mxu0 0
      %7534 = vmatpush1.bf16.msra.mxu0 0
      %7535 = vmatprep.subr.bf16.mxu0 0
      %7536 = vmatpush1.bf16.msra.mxu0 0
      %7537 = vmatprep.subr.bf16.mxu0 0
      %7538 = vmatpush1.bf16.msra.mxu0 0
      %7539 = vmatprep.subr.bf16.mxu0 0
      %7540 = vmatpush1.bf16.msra.mxu0 0
      %7541 = vmatprep.subr.bf16.mxu0 0
      %7542 = vmatpush1.bf16.msra.mxu0 0
      %7543 = vmatprep.subr.bf16.mxu0 0
      %7544 = vmatpush1.bf16.msra.mxu0 0
      %7545 = vmatprep.subr.bf16.mxu0 0
      %7546 = vmatpush1.bf16.msra.mxu0 0
      %7547 = vmatprep.subr.bf16.mxu0 0
      %7548 = vmatpush1.bf16.msra.mxu0 0
      %7549 = vmatprep.subr.bf16.mxu0 0
      %7550 = vmatpush1.bf16.msra.mxu0 0
      %7551 = vmatprep.subr.bf16.mxu0 0
      %7552 = vmatpush1.bf16.msra.mxu0 0
      %7553 = vmatprep.subr.bf16.mxu0 0
      %7554 = vmatpush1.bf16.msra.mxu0 0
      %7555 = vmatprep.subr.bf16.mxu0 0
      %7556 = vmatpush1.bf16.msra.mxu0 0
      %7557 = vmatprep.subr.bf16.mxu0 0
      %7558 = vmatpush1.bf16.msra.mxu0 0
      %7559 = vmatprep.subr.bf16.mxu0 0
      %7560 = vmatpush1.bf16.msra.mxu0 0
      %7561 = vmatprep.mubr.bf16.mxu0 0
      %7562 = vmatmul.mubr.bf16.gmra.mrb[0].mxu0 %v7467
      %v7563 = vpop.f32.mrb[0].mxu0
      %v7564 = vadd.f32 0.0, %v7563
      %v7565 = vpop.f32.mrb[0].mxu0
      %v7566 = vpop.f32.mrb[0].mxu0
      %v7567 = vadd.f32 0.0, %v7566
      %v7568 = vpop.f32.mrb[0].mxu0
      %7569 = vmatprep.mubr.bf16.mxu0 0
      %7570 = vmatmul.mubr.bf16.gmra.mrb[0].mxu0 %v7470
      %v7571 = vpop.f32.mrb[0].mxu0
      %v7572 = vadd.f32 0.0, %v7571
      %v7573 = vpop.f32.mrb[0].mxu0
      %v7574 = vpop.f32.mrb[0].mxu0
      %v7575 = vadd.f32 0.0, %v7574
      %v7576 = vpop.f32.mrb[0].mxu0
      %7577 = vmatprep.mubr.bf16.mxu0 0
      %7578 = vmatmul.mubr.bf16.gmra.mrb[0].mxu0 %v7473
      %v7579 = vpop.f32.mrb[0].mxu0
      %v7580 = vadd.f32 0.0, %v7579
      %v7581 = vpop.f32.mrb[0].mxu0
      %v7582 = vpop.f32.mrb[0].mxu0
      %v7583 = vadd.f32 0.0, %v7582
      %v7584 = vpop.f32.mrb[0].mxu0
      %7585 = vmatprep.mubr.bf16.mxu0 0
      %7586 = vmatmul.mubr.bf16.gmra.mrb[0].mxu0 %v7476
      %v7587 = vpop.f32.mrb[0].mxu0
      %v7588 = vadd.f32 0.0, %v7587
      %v7589 = vpop.f32.mrb[0].mxu0
      %v7590 = vpop.f32.mrb[0].mxu0
      %v7591 = vadd.f32 0.0, %v7590
      %v7592 = vpop.f32.mrb[0].mxu0
      %7593 = vmatprep.mubr.bf16.mxu0 0
      %7594 = vmatmul.mubr.bf16.gmra.mrb[0].mxu0 %v7479
      %v7595 = vpop.f32.mrb[0].mxu0
      %v7596 = vadd.f32 0.0, %v7595
      %v7597 = vpop.f32.mrb[0].mxu0
      %v7598 = vpop.f32.mrb[0].mxu0
      %v7599 = vadd.f32 0.0, %v7598
      %v7600 = vpop.f32.mrb[0].mxu0
      %7601 = vmatprep.mubr.bf16.mxu0 0
      %7602 = vmatmul.mubr.bf16.gmra.mrb[0].mxu0 %v7482
      %v7603 = vpop.f32.mrb[0].mxu0
      %v7604 = vadd.f32 0.0, %v7603
      %v7605 = vpop.f32.mrb[0].mxu0
      %v7606 = vpop.f32.mrb[0].mxu0
      %v7607 = vadd.f32 0.0, %v7606
      %v7608 = vpop.f32.mrb[0].mxu0
      %7609 = vmatprep.mubr.bf16.mxu0 0
      %7610 = vmatmul.mubr.bf16.gmra.mrb[0].mxu0 %v7485
      %v7611 = vpop.f32.mrb[0].mxu0
      %v7612 = vadd.f32 0.0, %v7611
      %v7613 = vpop.f32.mrb[0].mxu0
      %v7614 = vpop.f32.mrb[0].mxu0
      %v7615 = vadd.f32 0.0, %v7614
      %v7616 = vpop.f32.mrb[0].mxu0
      %7617 = vmatprep.mubr.bf16.mxu0 0
      %7618 = vmatmul.mubr.bf16.gmra.mrb[0].mxu0 %v7488
      %v7619 = vpop.f32.mrb[0].mxu0
      %v7620 = vadd.f32 0.0, %v7619
      %v7621 = vpop.f32.mrb[0].mxu0
      %v7622 = vpop.f32.mrb[0].mxu0
      %v7623 = vadd.f32 0.0, %v7622
      %v7624 = vpop.f32.mrb[0].mxu0
      %7625 = vmatprep.mubr.bf16.mxu0 0
      %7626 = vmatmul.mubr.bf16.gmra.mrb[0].mxu0 %v7491
      %v7627 = vpop.f32.mrb[0].mxu0
      %v7628 = vadd.f32 0.0, %v7627
      %v7629 = vpop.f32.mrb[0].mxu0
      %v7630 = vpop.f32.mrb[0].mxu0
      %v7631 = vadd.f32 0.0, %v7630
      %v7632 = vpop.f32.mrb[0].mxu0
      %7633 = vmatprep.mubr.bf16.mxu0 0
      %7634 = vmatmul.mubr.bf16.gmra.mrb[0].mxu0 %v7494
      %v7635 = vpop.f32.mrb[0].mxu0
      %v7636 = vadd.f32 0.0, %v7635
      %v7637 = vpop.f32.mrb[0].mxu0
      %v7638 = vpop.f32.mrb[0].mxu0
      %v7639 = vadd.f32 0.0, %v7638
      %v7640 = vpop.f32.mrb[0].mxu0
      %7641 = vmatprep.mubr.bf16.mxu0 0
      %7642 = vmatmul.mubr.bf16.gmra.mrb[0].mxu0 %v7497
      %v7643 = vpop.f32.mrb[0].mxu0
      %v7644 = vadd.f32 0.0, %v7643
      %v7645 = vpop.f32.mrb[0].mxu0
      %v7646 = vpop.f32.mrb[0].mxu0
      %v7647 = vadd.f32 0.0, %v7646
      %v7648 = vpop.f32.mrb[0].mxu0
      %7649 = vmatprep.mubr.bf16.mxu0 0
      %7650 = vmatmul.mubr.bf16.gmra.mrb[0].mxu0 %v7500
      %v7651 = vpop.f32.mrb[0].mxu0
      %v7652 = vadd.f32 0.0, %v7651
      %v7653 = vpop.f32.mrb[0].mxu0
      %v7654 = vpop.f32.mrb[0].mxu0
      %v7655 = vadd.f32 0.0, %v7654
      %v7656 = vpop.f32.mrb[0].mxu0
      %7657 = vmatprep.mubr.bf16.mxu0 0
      %7658 = vmatmul.mubr.bf16.gmra.mrb[0].mxu0 %v7503
      %v7659 = vpop.f32.mrb[0].mxu0
      %v7660 = vadd.f32 0.0, %v7659
      %v7661 = vpop.f32.mrb[0].mxu0
      %v7662 = vpop.f32.mrb[0].mxu0
      %v7663 = vadd.f32 0.0, %v7662
      %v7664 = vpop.f32.mrb[0].mxu0
      %7665 = vmatprep.mubr.bf16.mxu0 0
      %7666 = vmatmul.mubr.bf16.gmra.mrb[0].mxu0 %v7506
      %v7667 = vpop.f32.mrb[0].mxu0
      %v7668 = vadd.f32 0.0, %v7667
      %v7669 = vpop.f32.mrb[0].mxu0
      %v7670 = vpop.f32.mrb[0].mxu0
      %v7671 = vadd.f32 0.0, %v7670
      %v7672 = vpop.f32.mrb[0].mxu0
      %7673 = vmatprep.mubr.bf16.mxu0 0
      %7674 = vmatmul.mubr.bf16.gmra.mrb[0].mxu0 %v7509
      %v7675 = vpop.f32.mrb[0].mxu0
      %v7676 = vadd.f32 0.0, %v7675
      %v7677 = vpop.f32.mrb[0].mxu0
      %v7678 = vpop.f32.mrb[0].mxu0
      %v7679 = vadd.f32 0.0, %v7678
      %v7680 = vpop.f32.mrb[0].mxu0
      %7681 = vmatprep.mubr.bf16.mxu0 0
      %7682 = vmatmul.mubr.bf16.gmra.mrb[0].mxu0 %v7512
      %v7683 = vpop.f32.mrb[0].mxu0
      %v7684 = vadd.f32 0.0, %v7683
      %v7685 = vpop.f32.mrb[0].mxu0
      %v7686 = vpop.f32.mrb[0].mxu0
      %v7687 = vadd.f32 0.0, %v7686
      %v7688 = vpop.f32.mrb[0].mxu0
      %7689 = vmatprep.mubr.bf16.mxu0 0
      %7690 = vmatmul.mubr.bf16.gmra.mrb[0].mxu0 %v7515
      %v7691 = vpop.f32.mrb[0].mxu0
      %v7692 = vadd.f32 0.0, %v7691
      %v7693 = vpop.f32.mrb[0].mxu0
      %v7694 = vpop.f32.mrb[0].mxu0
      %v7695 = vadd.f32 0.0, %v7694
      %v7696 = vpop.f32.mrb[0].mxu0
      %7697 = vmatprep.mubr.bf16.mxu0 0
      %7698 = vmatmul.mubr.bf16.gmra.mrb[0].mxu0 %v7518
      %v7699 = vpop.f32.mrb[0].mxu0
      %v7700 = vadd.f32 0.0, %v7699
      %v7701 = vpop.f32.mrb[0].mxu0
      %v7702 = vpop.f32.mrb[0].mxu0
      %v7703 = vadd.f32 0.0, %v7702
      %v7704 = vpop.f32.mrb[0].mxu0
      %7705 = vmatprep.mubr.bf16.mxu0 0
      %7706 = vmatmul.mubr.bf16.gmra.mrb[0].mxu0 %v7521
      %v7707 = vpop.f32.mrb[0].mxu0
      %v7708 = vadd.f32 0.0, %v7707
      %v7709 = vpop.f32.mrb[0].mxu0
      %v7710 = vpop.f32.mrb[0].mxu0
      %v7711 = vadd.f32 0.0, %v7710
      %v7712 = vpop.f32.mrb[0].mxu0
      %7713 = vmatprep.mubr.bf16.mxu0 0
      %7714 = vmatmul.mubr.bf16.gmra.mrb[0].mxu0 %v7524
      %v7715 = vpop.f32.mrb[0].mxu0
      %v7716 = vadd.f32 0.0, %v7715
      %v7717 = vpop.f32.mrb[0].mxu0
      %v7718 = vpop.f32.mrb[0].mxu0
      %v7719 = vadd.f32 0.0, %v7718
      %v7720 = vpop.f32.mrb[0].mxu0
      %7721 = vmatprep.mubr.bf16.mxu0 0
      %7722 = vmatmul.mubr.bf16.gmra.mrb[0].mxu0 %v7527
      %v7723 = vpop.f32.mrb[0].mxu0
      %v7724 = vadd.f32 0.0, %v7723
      %v7725 = vpop.f32.mrb[0].mxu0
      %v7726 = vpop.f32.mrb[0].mxu0
      %v7727 = vpop.f32.mrb[0].mxu0
      %7728 = vdwg.mxu0
      %v7729 = vadd.f32 %v7265, %v7564
      %v7730 = vadd.f32 %v7266, %v7567
      %v7731 = vadd.f32 %v7267, %v7572
      %v7732 = vadd.f32 %v7268, %v7575
      %v7733 = vadd.f32 %v7269, %v7580
      %v7734 = vadd.f32 %v7270, %v7583
      %v7735 = vadd.f32 %v7271, %v7588
      %v7736 = vadd.f32 %v7272, %v7591
      %v7737 = vadd.f32 %v7273, %v7596
      %v7738 = vadd.f32 %v7274, %v7599
      %v7739 = vadd.f32 %v7275, %v7604
      %v7740 = vadd.f32 %v7276, %v7607
      %v7741 = vadd.f32 %v7277, %v7612
      %v7742 = vadd.f32 %v7278, %v7615
      %v7743 = vadd.f32 %v7279, %v7620
      %v7744 = vadd.f32 %v7280, %v7623
      %v7745 = vadd.f32 %v7281, %v7628
      %v7746 = vadd.f32 %v7282, %v7631
      %v7747 = vadd.f32 %v7283, %v7636
      %v7748 = vadd.f32 %v7284, %v7639
      %v7749 = vadd.f32 %v7285, %v7644
      %v7750 = vadd.f32 %v7286, %v7647
      %v7751 = vadd.f32 %v7287, %v7652
      %v7752 = vadd.f32 %v7288, %v7655
      %v7753 = vadd.f32 %v7289, %v7660
      %v7754 = vadd.f32 %v7290, %v7663
      %v7755 = vadd.f32 %v7291, %v7668
      %v7756 = vadd.f32 %v7292, %v7671
      %v7757 = vadd.f32 %v7293, %v7676
      %v7758 = vadd.f32 %v7294, %v7679
      %v7759 = vadd.f32 %v7295, %v7684
      %v7760 = vadd.f32 %v7296, %v7687
      %v7761 = vadd.f32 %v7297, %v7692
      %v7762 = vadd.f32 %v7298, %v7695
      %v7763 = vadd.f32 %v7299, %v7700
      %v7764 = vadd.f32 %v7300, %v7703
      %v7765 = vadd.f32 %v7301, %v7708
      %v7766 = vadd.f32 %v7302, %v7711
      %v7767 = vadd.f32 %v7303, %v7716
      %v7768 = vadd.f32 %v7304, %v7719
      %v7769 = vadd.f32 %v7305, %v7724
      %v7770 = vld [vmem:[#allocation2 + $0x18] sm:$0xf]
      %v7771 = vld [vmem:[#allocation2 + $0x1c] sm:$0xf]
      %v7772 = vld [vmem:[#allocation2 + $0x20] sm:$0xf]
      %v7773 = vld [vmem:[#allocation2 + $0x24] sm:$0xf]
      %v7774 = vld [vmem:[#allocation2 + $0x28] sm:$0xf]
      %v7775 = vld [vmem:[#allocation2 + $0x2c] sm:$0xf]
      %v7776 = vld [vmem:[#allocation2 + $0x30] sm:$0xf]
      %v7777 = vld [vmem:[#allocation2 + $0x34] sm:$0xf]
      %v7778 = vld [vmem:[#allocation2 + $0x38] sm:$0xf]
      %v7779 = vld [vmem:[#allocation2 + $0x3c] sm:$0xf]
      %v7780 = vld [vmem:[#allocation2 + $0x40] sm:$0xf]
      %v7781 = vld [vmem:[#allocation2 + $0x44] sm:$0xf]
      %v7782 = vld [vmem:[#allocation2 + $0x48] sm:$0xf]
      %v7783 = vld [vmem:[#allocation2 + $0x4c] sm:$0xf]
      %v7784 = vld [vmem:[#allocation2 + $0x50] sm:$0xf]
      %v7785 = vld [vmem:[#allocation2 + $0x54] sm:$0xf]
      %v7786 = vld [vmem:[#allocation2 + $0x58] sm:$0xf]
      %v7787 = vld [vmem:[#allocation2 + $0x5c] sm:$0xf]
      %v7788 = vld [vmem:[#allocation2 + $0x60] sm:$0xf]
      %v7789 = vld [vmem:[#allocation2 + $0x64] sm:$0xf]
      %v7790 = vld [vmem:[#allocation2 + $0x68] sm:$0xf]
      %v7791 = vld [vmem:[#allocation2 + $0x6c] sm:$0xf]
      %v7792 = vld [vmem:[#allocation2 + $0x70] sm:$0xf]
      %v7793 = vld [vmem:[#allocation2 + $0x74] sm:$0xf]
      %v7794 = vld [vmem:[#allocation2 + $0x78] sm:$0xf]
      %v7795 = vld [vmem:[#allocation2 + $0x7c] sm:$0xf]
      %v7796 = vld [vmem:[#allocation2 + $0x80] sm:$0xf]
      %v7797 = vld [vmem:[#allocation2 + $0x84] sm:$0xf]
      %v7798 = vld [vmem:[#allocation2 + $0x88] sm:$0xf]
      %v7799 = vld [vmem:[#allocation2 + $0x8c] sm:$0xf]
      %v7800 = vld [vmem:[#allocation2 + $0x90] sm:$0xf]
      %v7801 = vld [vmem:[#allocation2 + $0x94] sm:$0xf]
      %v7802 = vld [vmem:[#allocation2 + $0x98] sm:$0xf]
      %v7803 = vld [vmem:[#allocation2 + $0x9c] sm:$0xf]
      %v7804 = vld [vmem:[#allocation2 + $0xa0] sm:$0xf]
      %v7805 = vld [vmem:[#allocation2 + $0xa4] sm:$0xf]
      %v7806 = vld [vmem:[#allocation2 + $0xa8] sm:$0xf]
      %v7807 = vld [vmem:[#allocation2 + $0xac] sm:$0xf]
      %v7808 = vld [vmem:[#allocation2 + $0xb0] sm:$0xf]
      %v7809 = vld [vmem:[#allocation2 + $0xb4] sm:$0xf]
      %v7810 = vld [vmem:[#allocation2 + $0xb8] sm:$0x7]
      %s7811 = scalar_lea.vmem %s4, 48
      %v7812 = vld [vmem:[%s7811] sm:$0xf]
      %v7813 = vld [vmem:[%s7811 + $0x4] sm:$0xf]
      %v7855 = vunpack.c.l.b16 %v7770
      %v7856 = vunpack.c.l.b16 %v7771
      %v7857 = vunpack.c.l.b16 %v7772
      %v7858 = vunpack.c.l.b16 %v7773
      %v7859 = vunpack.c.l.b16 %v7774
      %v7860 = vunpack.c.l.b16 %v7775
      %v7861 = vunpack.c.l.b16 %v7776
      %v7862 = vunpack.c.l.b16 %v7777
      %v7863 = vunpack.c.l.b16 %v7778
      %v7864 = vunpack.c.l.b16 %v7779
      %v7865 = vunpack.c.l.b16 %v7780
      %v7866 = vunpack.c.l.b16 %v7781
      %v7867 = vunpack.c.l.b16 %v7782
      %v7868 = vunpack.c.l.b16 %v7783
      %v7869 = vunpack.c.l.b16 %v7784
      %v7870 = vunpack.c.l.b16 %v7785
      %v7871 = vunpack.c.l.b16 %v7786
      %v7872 = vunpack.c.l.b16 %v7787
      %v7873 = vunpack.c.l.b16 %v7788
      %v7874 = vunpack.c.l.b16 %v7789
      %v7875 = vunpack.c.l.b16 %v7790
      %v7876 = vunpack.c.l.b16 %v7791
      %v7877 = vunpack.c.l.b16 %v7792
      %v7878 = vunpack.c.l.b16 %v7793
      %v7879 = vunpack.c.l.b16 %v7794
      %v7880 = vunpack.c.l.b16 %v7795
      %v7881 = vunpack.c.l.b16 %v7796
      %v7882 = vunpack.c.l.b16 %v7797
      %v7883 = vunpack.c.l.b16 %v7798
      %v7884 = vunpack.c.l.b16 %v7799
      %v7885 = vunpack.c.l.b16 %v7800
      %v7886 = vunpack.c.l.b16 %v7801
      %v7887 = vunpack.c.l.b16 %v7802
      %v7888 = vunpack.c.l.b16 %v7803
      %v7889 = vunpack.c.l.b16 %v7804
      %v7890 = vunpack.c.l.b16 %v7805
      %v7891 = vunpack.c.l.b16 %v7806
      %v7892 = vunpack.c.l.b16 %v7807
      %v7893 = vunpack.c.l.b16 %v7808
      %v7894 = vunpack.c.l.b16 %v7809
      %v7895 = vunpack.c.l.b16 %v7810
      %v7896 = vpack.c.b16 %v7856, %v7855
      %v7897 = vpack.c.b16 %v7858, %v7857
      %v7898 = vpack.c.b16 %v7860, %v7859
      %v7899 = vpack.c.b16 %v7862, %v7861
      %v7900 = vpack.c.b16 %v7864, %v7863
      %v7901 = vpack.c.b16 %v7866, %v7865
      %v7902 = vpack.c.b16 %v7868, %v7867
      %v7903 = vpack.c.b16 %v7870, %v7869
      %v7904 = vpack.c.b16 %v7872, %v7871
      %v7905 = vpack.c.b16 %v7874, %v7873
      %v7906 = vpack.c.b16 %v7876, %v7875
      %v7907 = vpack.c.b16 %v7878, %v7877
      %v7908 = vpack.c.b16 %v7880, %v7879
      %v7909 = vpack.c.b16 %v7882, %v7881
      %v7910 = vpack.c.b16 %v7884, %v7883
      %v7911 = vpack.c.b16 %v7886, %v7885
      %v7912 = vpack.c.b16 %v7888, %v7887
      %v7913 = vpack.c.b16 %v7890, %v7889
      %v7914 = vpack.c.b16 %v7892, %v7891
      %v7915 = vpack.c.b16 %v7894, %v7893
      %v7916 = vpack.c.b16 %v7895, %v7895
      %v7918 = vshrl.u32 %v7896, 16
      %v7920 = vshll.u32 %v7896, 16
      %v7922 = vrot.slane %v7920, 1
      %v7923 = vor.u32 %v7918, %v7922
      %v7925 = vshll.u32 %v7897, 16
      %v7927 = vrot.slane %v7925, 1
      %v7928 = vsel %vm2559, %v7923, %v7927
      %v7929 = vshrl.u32 %v7897, 16
      %v7931 = vor.u32 %v7929, %v7927
      %v7933 = vshll.u32 %v7898, 16
      %v7935 = vrot.slane %v7933, 1
      %v7936 = vsel %vm2559, %v7931, %v7935
      %v7937 = vshrl.u32 %v7898, 16
      %v7939 = vor.u32 %v7937, %v7935
      %v7941 = vshll.u32 %v7899, 16
      %v7943 = vrot.slane %v7941, 1
      %v7944 = vsel %vm2559, %v7939, %v7943
      %v7945 = vshrl.u32 %v7899, 16
      %v7947 = vor.u32 %v7945, %v7943
      %v7949 = vshll.u32 %v7900, 16
      %v7951 = vrot.slane %v7949, 1
      %v7952 = vsel %vm2559, %v7947, %v7951
      %v7953 = vshrl.u32 %v7900, 16
      %v7955 = vor.u32 %v7953, %v7951
      %v7957 = vshll.u32 %v7901, 16
      %v7959 = vrot.slane %v7957, 1
      %v7960 = vsel %vm2559, %v7955, %v7959
      %v7961 = vshrl.u32 %v7901, 16
      %v7963 = vor.u32 %v7961, %v7959
      %v7965 = vshll.u32 %v7902, 16
      %v7967 = vrot.slane %v7965, 1
      %v7968 = vsel %vm2559, %v7963, %v7967
      %v7969 = vshrl.u32 %v7902, 16
      %v7971 = vor.u32 %v7969, %v7967
      %v7973 = vshll.u32 %v7903, 16
      %v7975 = vrot.slane %v7973, 1
      %v7976 = vsel %vm2559, %v7971, %v7975
      %v7977 = vshrl.u32 %v7903, 16
      %v7979 = vor.u32 %v7977, %v7975
      %v7981 = vshll.u32 %v7904, 16
      %v7983 = vrot.slane %v7981, 1
      %v7984 = vsel %vm2559, %v7979, %v7983
      %v7985 = vshrl.u32 %v7904, 16
      %v7987 = vor.u32 %v7985, %v7983
      %v7989 = vshll.u32 %v7905, 16
      %v7991 = vrot.slane %v7989, 1
      %v7992 = vsel %vm2559, %v7987, %v7991
      %v7993 = vshrl.u32 %v7905, 16
      %v7995 = vor.u32 %v7993, %v7991
      %v7997 = vshll.u32 %v7906, 16
      %v7999 = vrot.slane %v7997, 1
      %v8000 = vsel %vm2559, %v7995, %v7999
      %v8001 = vshrl.u32 %v7906, 16
      %v8003 = vor.u32 %v8001, %v7999
      %v8005 = vshll.u32 %v7907, 16
      %v8007 = vrot.slane %v8005, 1
      %v8008 = vsel %vm2559, %v8003, %v8007
      %v8009 = vshrl.u32 %v7907, 16
      %v8011 = vor.u32 %v8009, %v8007
      %v8013 = vshll.u32 %v7908, 16
      %v8015 = vrot.slane %v8013, 1
      %v8016 = vsel %vm2559, %v8011, %v8015
      %v8017 = vshrl.u32 %v7908, 16
      %v8019 = vor.u32 %v8017, %v8015
      %v8021 = vshll.u32 %v7909, 16
      %v8023 = vrot.slane %v8021, 1
      %v8024 = vsel %vm2559, %v8019, %v8023
      %v8025 = vshrl.u32 %v7909, 16
      %v8027 = vor.u32 %v8025, %v8023
      %v8029 = vshll.u32 %v7910, 16
      %v8031 = vrot.slane %v8029, 1
      %v8032 = vsel %vm2559, %v8027, %v8031
      %v8033 = vshrl.u32 %v7910, 16
      %v8035 = vor.u32 %v8033, %v8031
      %v8037 = vshll.u32 %v7911, 16
      %v8039 = vrot.slane %v8037, 1
      %v8040 = vsel %vm2559, %v8035, %v8039
      %v8041 = vshrl.u32 %v7911, 16
      %v8043 = vor.u32 %v8041, %v8039
      %v8045 = vshll.u32 %v7912, 16
      %v8047 = vrot.slane %v8045, 1
      %v8048 = vsel %vm2559, %v8043, %v8047
      %v8049 = vshrl.u32 %v7912, 16
      %v8051 = vor.u32 %v8049, %v8047
      %v8053 = vshll.u32 %v7913, 16
      %v8055 = vrot.slane %v8053, 1
      %v8056 = vsel %vm2559, %v8051, %v8055
      %v8057 = vshrl.u32 %v7913, 16
      %v8059 = vor.u32 %v8057, %v8055
      %v8061 = vshll.u32 %v7914, 16
      %v8063 = vrot.slane %v8061, 1
      %v8064 = vsel %vm2559, %v8059, %v8063
      %v8065 = vshrl.u32 %v7914, 16
      %v8067 = vor.u32 %v8065, %v8063
      %v8069 = vshll.u32 %v7915, 16
      %v8071 = vrot.slane %v8069, 1
      %v8072 = vsel %vm2559, %v8067, %v8071
      %v8073 = vshrl.u32 %v7915, 16
      %v8075 = vor.u32 %v8073, %v8071
      %v8077 = vshll.u32 %v7916, 16
      %v8079 = vrot.slane %v8077, 1
      %v8080 = vsel %vm2559, %v8075, %v8079
      %v8081 = vshrl.u32 %v7916, 16
      %v8083 = vor.u32 %v8081, %v8079
      %v8086 = vunpack.c.l.b16 %v7812
      %v8087 = vunpack.c.l.b16 %v7813
      %v8088 = vpack.c.b16 %v8087, %v8086
      %v8091 = vsel %vm5190, %v7928, 0
      %v8094 = vsel %vm5190, %v7936, 0
      %v8097 = vsel %vm5190, %v7944, 0
      %v8100 = vsel %vm5190, %v7952, 0
      %v8103 = vsel %vm5190, %v7960, 0
      %v8106 = vsel %vm5190, %v7968, 0
      %v8109 = vsel %vm5190, %v7976, 0
      %v8112 = vsel %vm5190, %v7984, 0
      %v8115 = vsel %vm5190, %v7992, 0
      %v8118 = vsel %vm5190, %v8000, 0
      %v8121 = vsel %vm5190, %v8008, 0
      %v8124 = vsel %vm5190, %v8016, 0
      %v8127 = vsel %vm5190, %v8024, 0
      %v8130 = vsel %vm5190, %v8032, 0
      %v8133 = vsel %vm5190, %v8040, 0
      %v8136 = vsel %vm5190, %v8048, 0
      %v8139 = vsel %vm5190, %v8056, 0
      %v8142 = vsel %vm5190, %v8064, 0
      %v8145 = vsel %vm5190, %v8072, 0
      %v8148 = vsel %vm5190, %v8080, 0
      %v8151 = vsel %vm5190, %v8083, 0
      %8153 = vmatprep.subr.bf16.mxu0 0
      %8154 = vmatpush1.bf16.msra.mxu0 %v8088
      %8155 = vmatprep.subr.bf16.mxu0 0
      %8156 = vmatpush1.bf16.msra.mxu0 0
      %8157 = vmatprep.subr.bf16.mxu0 0
      %8158 = vmatpush1.bf16.msra.mxu0 0
      %8159 = vmatprep.subr.bf16.mxu0 0
      %8160 = vmatpush1.bf16.msra.mxu0 0
      %8161 = vmatprep.subr.bf16.mxu0 0
      %8162 = vmatpush1.bf16.msra.mxu0 0
      %8163 = vmatprep.subr.bf16.mxu0 0
      %8164 = vmatpush1.bf16.msra.mxu0 0
      %8165 = vmatprep.subr.bf16.mxu0 0
      %8166 = vmatpush1.bf16.msra.mxu0 0
      %8167 = vmatprep.subr.bf16.mxu0 0
      %8168 = vmatpush1.bf16.msra.mxu0 0
      %8169 = vmatprep.subr.bf16.mxu0 0
      %8170 = vmatpush1.bf16.msra.mxu0 0
      %8171 = vmatprep.subr.bf16.mxu0 0
      %8172 = vmatpush1.bf16.msra.mxu0 0
      %8173 = vmatprep.subr.bf16.mxu0 0
      %8174 = vmatpush1.bf16.msra.mxu0 0
      %8175 = vmatprep.subr.bf16.mxu0 0
      %8176 = vmatpush1.bf16.msra.mxu0 0
      %8177 = vmatprep.subr.bf16.mxu0 0
      %8178 = vmatpush1.bf16.msra.mxu0 0
      %8179 = vmatprep.subr.bf16.mxu0 0
      %8180 = vmatpush1.bf16.msra.mxu0 0
      %8181 = vmatprep.subr.bf16.mxu0 0
      %8182 = vmatpush1.bf16.msra.mxu0 0
      %8183 = vmatprep.subr.bf16.mxu0 0
      %8184 = vmatpush1.bf16.msra.mxu0 0
      %8185 = vmatprep.mubr.bf16.mxu0 0
      %8186 = vmatmul.mubr.bf16.gmra.mrb[0].mxu0 %v8091
      %v8187 = vpop.f32.mrb[0].mxu0
      %v8188 = vadd.f32 0.0, %v8187
      %v8189 = vpop.f32.mrb[0].mxu0
      %v8190 = vpop.f32.mrb[0].mxu0
      %v8191 = vadd.f32 0.0, %v8190
      %v8192 = vpop.f32.mrb[0].mxu0
      %8193 = vmatprep.mubr.bf16.mxu0 0
      %8194 = vmatmul.mubr.bf16.gmra.mrb[0].mxu0 %v8094
      %v8195 = vpop.f32.mrb[0].mxu0
      %v8196 = vadd.f32 0.0, %v8195
      %v8197 = vpop.f32.mrb[0].mxu0
      %v8198 = vpop.f32.mrb[0].mxu0
      %v8199 = vadd.f32 0.0, %v8198
      %v8200 = vpop.f32.mrb[0].mxu0
      %8201 = vmatprep.mubr.bf16.mxu0 0
      %8202 = vmatmul.mubr.bf16.gmra.mrb[0].mxu0 %v8097
      %v8203 = vpop.f32.mrb[0].mxu0
      %v8204 = vadd.f32 0.0, %v8203
      %v8205 = vpop.f32.mrb[0].mxu0
      %v8206 = vpop.f32.mrb[0].mxu0
      %v8207 = vadd.f32 0.0, %v8206
      %v8208 = vpop.f32.mrb[0].mxu0
      %8209 = vmatprep.mubr.bf16.mxu0 0
      %8210 = vmatmul.mubr.bf16.gmra.mrb[0].mxu0 %v8100
      %v8211 = vpop.f32.mrb[0].mxu0
      %v8212 = vadd.f32 0.0, %v8211
      %v8213 = vpop.f32.mrb[0].mxu0
      %v8214 = vpop.f32.mrb[0].mxu0
      %v8215 = vadd.f32 0.0, %v8214
      %v8216 = vpop.f32.mrb[0].mxu0
      %8217 = vmatprep.mubr.bf16.mxu0 0
      %8218 = vmatmul.mubr.bf16.gmra.mrb[0].mxu0 %v8103
      %v8219 = vpop.f32.mrb[0].mxu0
      %v8220 = vadd.f32 0.0, %v8219
      %v8221 = vpop.f32.mrb[0].mxu0
      %v8222 = vpop.f32.mrb[0].mxu0
      %v8223 = vadd.f32 0.0, %v8222
      %v8224 = vpop.f32.mrb[0].mxu0
      %8225 = vmatprep.mubr.bf16.mxu0 0
      %8226 = vmatmul.mubr.bf16.gmra.mrb[0].mxu0 %v8106
      %v8227 = vpop.f32.mrb[0].mxu0
      %v8228 = vadd.f32 0.0, %v8227
      %v8229 = vpop.f32.mrb[0].mxu0
      %v8230 = vpop.f32.mrb[0].mxu0
      %v8231 = vadd.f32 0.0, %v8230
      %v8232 = vpop.f32.mrb[0].mxu0
      %8233 = vmatprep.mubr.bf16.mxu0 0
      %8234 = vmatmul.mubr.bf16.gmra.mrb[0].mxu0 %v8109
      %v8235 = vpop.f32.mrb[0].mxu0
      %v8236 = vadd.f32 0.0, %v8235
      %v8237 = vpop.f32.mrb[0].mxu0
      %v8238 = vpop.f32.mrb[0].mxu0
      %v8239 = vadd.f32 0.0, %v8238
      %v8240 = vpop.f32.mrb[0].mxu0
      %8241 = vmatprep.mubr.bf16.mxu0 0
      %8242 = vmatmul.mubr.bf16.gmra.mrb[0].mxu0 %v8112
      %v8243 = vpop.f32.mrb[0].mxu0
      %v8244 = vadd.f32 0.0, %v8243
      %v8245 = vpop.f32.mrb[0].mxu0
      %v8246 = vpop.f32.mrb[0].mxu0
      %v8247 = vadd.f32 0.0, %v8246
      %v8248 = vpop.f32.mrb[0].mxu0
      %8249 = vmatprep.mubr.bf16.mxu0 0
      %8250 = vmatmul.mubr.bf16.gmra.mrb[0].mxu0 %v8115
      %v8251 = vpop.f32.mrb[0].mxu0
      %v8252 = vadd.f32 0.0, %v8251
      %v8253 = vpop.f32.mrb[0].mxu0
      %v8254 = vpop.f32.mrb[0].mxu0
      %v8255 = vadd.f32 0.0, %v8254
      %v8256 = vpop.f32.mrb[0].mxu0
      %8257 = vmatprep.mubr.bf16.mxu0 0
      %8258 = vmatmul.mubr.bf16.gmra.mrb[0].mxu0 %v8118
      %v8259 = vpop.f32.mrb[0].mxu0
      %v8260 = vadd.f32 0.0, %v8259
      %v8261 = vpop.f32.mrb[0].mxu0
      %v8262 = vpop.f32.mrb[0].mxu0
      %v8263 = vadd.f32 0.0, %v8262
      %v8264 = vpop.f32.mrb[0].mxu0
      %8265 = vmatprep.mubr.bf16.mxu0 0
      %8266 = vmatmul.mubr.bf16.gmra.mrb[0].mxu0 %v8121
      %v8267 = vpop.f32.mrb[0].mxu0
      %v8268 = vadd.f32 0.0, %v8267
      %v8269 = vpop.f32.mrb[0].mxu0
      %v8270 = vpop.f32.mrb[0].mxu0
      %v8271 = vadd.f32 0.0, %v8270
      %v8272 = vpop.f32.mrb[0].mxu0
      %8273 = vmatprep.mubr.bf16.mxu0 0
      %8274 = vmatmul.mubr.bf16.gmra.mrb[0].mxu0 %v8124
      %v8275 = vpop.f32.mrb[0].mxu0
      %v8276 = vadd.f32 0.0, %v8275
      %v8277 = vpop.f32.mrb[0].mxu0
      %v8278 = vpop.f32.mrb[0].mxu0
      %v8279 = vadd.f32 0.0, %v8278
      %v8280 = vpop.f32.mrb[0].mxu0
      %8281 = vmatprep.mubr.bf16.mxu0 0
      %8282 = vmatmul.mubr.bf16.gmra.mrb[0].mxu0 %v8127
      %v8283 = vpop.f32.mrb[0].mxu0
      %v8284 = vadd.f32 0.0, %v8283
      %v8285 = vpop.f32.mrb[0].mxu0
      %v8286 = vpop.f32.mrb[0].mxu0
      %v8287 = vadd.f32 0.0, %v8286
      %v8288 = vpop.f32.mrb[0].mxu0
      %8289 = vmatprep.mubr.bf16.mxu0 0
      %8290 = vmatmul.mubr.bf16.gmra.mrb[0].mxu0 %v8130
      %v8291 = vpop.f32.mrb[0].mxu0
      %v8292 = vadd.f32 0.0, %v8291
      %v8293 = vpop.f32.mrb[0].mxu0
      %v8294 = vpop.f32.mrb[0].mxu0
      %v8295 = vadd.f32 0.0, %v8294
      %v8296 = vpop.f32.mrb[0].mxu0
      %8297 = vmatprep.mubr.bf16.mxu0 0
      %8298 = vmatmul.mubr.bf16.gmra.mrb[0].mxu0 %v8133
      %v8299 = vpop.f32.mrb[0].mxu0
      %v8300 = vadd.f32 0.0, %v8299
      %v8301 = vpop.f32.mrb[0].mxu0
      %v8302 = vpop.f32.mrb[0].mxu0
      %v8303 = vadd.f32 0.0, %v8302
      %v8304 = vpop.f32.mrb[0].mxu0
      %8305 = vmatprep.mubr.bf16.mxu0 0
      %8306 = vmatmul.mubr.bf16.gmra.mrb[0].mxu0 %v8136
      %v8307 = vpop.f32.mrb[0].mxu0
      %v8308 = vadd.f32 0.0, %v8307
      %v8309 = vpop.f32.mrb[0].mxu0
      %v8310 = vpop.f32.mrb[0].mxu0
      %v8311 = vadd.f32 0.0, %v8310
      %v8312 = vpop.f32.mrb[0].mxu0
      %8313 = vmatprep.mubr.bf16.mxu0 0
      %8314 = vmatmul.mubr.bf16.gmra.mrb[0].mxu0 %v8139
      %v8315 = vpop.f32.mrb[0].mxu0
      %v8316 = vadd.f32 0.0, %v8315
      %v8317 = vpop.f32.mrb[0].mxu0
      %v8318 = vpop.f32.mrb[0].mxu0
      %v8319 = vadd.f32 0.0, %v8318
      %v8320 = vpop.f32.mrb[0].mxu0
      %8321 = vmatprep.mubr.bf16.mxu0 0
      %8322 = vmatmul.mubr.bf16.gmra.mrb[0].mxu0 %v8142
      %v8323 = vpop.f32.mrb[0].mxu0
      %v8324 = vadd.f32 0.0, %v8323
      %v8325 = vpop.f32.mrb[0].mxu0
      %v8326 = vpop.f32.mrb[0].mxu0
      %v8327 = vadd.f32 0.0, %v8326
      %v8328 = vpop.f32.mrb[0].mxu0
      %8329 = vmatprep.mubr.bf16.mxu0 0
      %8330 = vmatmul.mubr.bf16.gmra.mrb[0].mxu0 %v8145
      %v8331 = vpop.f32.mrb[0].mxu0
      %v8332 = vadd.f32 0.0, %v8331
      %v8333 = vpop.f32.mrb[0].mxu0
      %v8334 = vpop.f32.mrb[0].mxu0
      %v8335 = vadd.f32 0.0, %v8334
      %v8336 = vpop.f32.mrb[0].mxu0
      %8337 = vmatprep.mubr.bf16.mxu0 0
      %8338 = vmatmul.mubr.bf16.gmra.mrb[0].mxu0 %v8148
      %v8339 = vpop.f32.mrb[0].mxu0
      %v8340 = vadd.f32 0.0, %v8339
      %v8341 = vpop.f32.mrb[0].mxu0
      %v8342 = vpop.f32.mrb[0].mxu0
      %v8343 = vadd.f32 0.0, %v8342
      %v8344 = vpop.f32.mrb[0].mxu0
      %8345 = vmatprep.mubr.bf16.mxu0 0
      %8346 = vmatmul.mubr.bf16.gmra.mrb[0].mxu0 %v8151
      %v8347 = vpop.f32.mrb[0].mxu0
      %v8348 = vadd.f32 0.0, %v8347
      %v8349 = vpop.f32.mrb[0].mxu0
      %v8350 = vpop.f32.mrb[0].mxu0
      %v8351 = vpop.f32.mrb[0].mxu0
      %8352 = vdwg.mxu0
      %v8353 = vadd.f32 %v7729, %v8188
      %v8354 = vadd.f32 %v7730, %v8191
      %v8355 = vadd.f32 %v7731, %v8196
      %v8356 = vadd.f32 %v7732, %v8199
      %v8357 = vadd.f32 %v7733, %v8204
      %v8358 = vadd.f32 %v7734, %v8207
      %v8359 = vadd.f32 %v7735, %v8212
      %v8360 = vadd.f32 %v7736, %v8215
      %v8361 = vadd.f32 %v7737, %v8220
      %v8362 = vadd.f32 %v7738, %v8223
      %v8363 = vadd.f32 %v7739, %v8228
      %v8364 = vadd.f32 %v7740, %v8231
      %v8365 = vadd.f32 %v7741, %v8236
      %v8366 = vadd.f32 %v7742, %v8239
      %v8367 = vadd.f32 %v7743, %v8244
      %v8368 = vadd.f32 %v7744, %v8247
      %v8369 = vadd.f32 %v7745, %v8252
      %v8370 = vadd.f32 %v7746, %v8255
      %v8371 = vadd.f32 %v7747, %v8260
      %v8372 = vadd.f32 %v7748, %v8263
      %v8373 = vadd.f32 %v7749, %v8268
      %v8374 = vadd.f32 %v7750, %v8271
      %v8375 = vadd.f32 %v7751, %v8276
      %v8376 = vadd.f32 %v7752, %v8279
      %v8377 = vadd.f32 %v7753, %v8284
      %v8378 = vadd.f32 %v7754, %v8287
      %v8379 = vadd.f32 %v7755, %v8292
      %v8380 = vadd.f32 %v7756, %v8295
      %v8381 = vadd.f32 %v7757, %v8300
      %v8382 = vadd.f32 %v7758, %v8303
      %v8383 = vadd.f32 %v7759, %v8308
      %v8384 = vadd.f32 %v7760, %v8311
      %v8385 = vadd.f32 %v7761, %v8316
      %v8386 = vadd.f32 %v7762, %v8319
      %v8387 = vadd.f32 %v7763, %v8324
      %v8388 = vadd.f32 %v7764, %v8327
      %v8389 = vadd.f32 %v7765, %v8332
      %v8390 = vadd.f32 %v7766, %v8335
      %v8391 = vadd.f32 %v7767, %v8340
      %v8392 = vadd.f32 %v7768, %v8343
      %v8393 = vadd.f32 %v7769, %v8348
      %v8394 = vld [vmem:[#allocation2 + $0x18] sm:$0xe]
      %s8395 = scalar_lea.vmem %s4, 56
      %v8396 = vld [vmem:[%s8395] sm:$0xf]
      %v8397 = vld [vmem:[%s8395 + $0x4] sm:$0xf]
      %v8399 = vunpack.c.l.b16 %v8394
      %v8400 = vpack.c.b16 %v7856, %v8399
      %v8401 = vrot.slane %v8400, 1
      %v8402 = vrot.slane %v7897, 1
      %v8403 = vsel %vm3640, %v8401, %v8402
      %v8404 = vrot.slane %v7898, 1
      %v8405 = vsel %vm3640, %v8402, %v8404
      %v8406 = vrot.slane %v7899, 1
      %v8407 = vsel %vm3640, %v8404, %v8406
      %v8408 = vrot.slane %v7900, 1
      %v8409 = vsel %vm3640, %v8406, %v8408
      %v8410 = vrot.slane %v7901, 1
      %v8411 = vsel %vm3640, %v8408, %v8410
      %v8412 = vrot.slane %v7902, 1
      %v8413 = vsel %vm3640, %v8410, %v8412
      %v8414 = vrot.slane %v7903, 1
      %v8415 = vsel %vm3640, %v8412, %v8414
      %v8416 = vrot.slane %v7904, 1
      %v8417 = vsel %vm3640, %v8414, %v8416
      %v8418 = vrot.slane %v7905, 1
      %v8419 = vsel %vm3640, %v8416, %v8418
      %v8420 = vrot.slane %v7906, 1
      %v8421 = vsel %vm3640, %v8418, %v8420
      %v8422 = vrot.slane %v7907, 1
      %v8423 = vsel %vm3640, %v8420, %v8422
      %v8424 = vrot.slane %v7908, 1
      %v8425 = vsel %vm3640, %v8422, %v8424
      %v8426 = vrot.slane %v7909, 1
      %v8427 = vsel %vm3640, %v8424, %v8426
      %v8428 = vrot.slane %v7910, 1
      %v8429 = vsel %vm3640, %v8426, %v8428
      %v8430 = vrot.slane %v7911, 1
      %v8431 = vsel %vm3640, %v8428, %v8430
      %v8432 = vrot.slane %v7912, 1
      %v8433 = vsel %vm3640, %v8430, %v8432
      %v8434 = vrot.slane %v7913, 1
      %v8435 = vsel %vm3640, %v8432, %v8434
      %v8436 = vrot.slane %v7914, 1
      %v8437 = vsel %vm3640, %v8434, %v8436
      %v8438 = vrot.slane %v7915, 1
      %v8439 = vsel %vm3640, %v8436, %v8438
      %v8440 = vrot.slane %v7916, 1
      %v8441 = vsel %vm3640, %v8438, %v8440
      %v8444 = vunpack.c.l.b16 %v8396
      %v8445 = vunpack.c.l.b16 %v8397
      %v8446 = vpack.c.b16 %v8445, %v8444
      %v8449 = vsel %vm5190, %v8403, 0
      %v8452 = vsel %vm5190, %v8405, 0
      %v8455 = vsel %vm5190, %v8407, 0
      %v8458 = vsel %vm5190, %v8409, 0
      %v8461 = vsel %vm5190, %v8411, 0
      %v8464 = vsel %vm5190, %v8413, 0
      %v8467 = vsel %vm5190, %v8415, 0
      %v8470 = vsel %vm5190, %v8417, 0
      %v8473 = vsel %vm5190, %v8419, 0
      %v8476 = vsel %vm5190, %v8421, 0
      %v8479 = vsel %vm5190, %v8423, 0
      %v8482 = vsel %vm5190, %v8425, 0
      %v8485 = vsel %vm5190, %v8427, 0
      %v8488 = vsel %vm5190, %v8429, 0
      %v8491 = vsel %vm5190, %v8431, 0
      %v8494 = vsel %vm5190, %v8433, 0
      %v8497 = vsel %vm5190, %v8435, 0
      %v8500 = vsel %vm5190, %v8437, 0
      %v8503 = vsel %vm5190, %v8439, 0
      %v8506 = vsel %vm5190, %v8441, 0
      %v8509 = vsel %vm5190, %v8440, 0
      %8511 = vmatprep.subr.bf16.mxu0 0
      %8512 = vmatpush1.bf16.msra.mxu0 %v8446
      %8513 = vmatprep.subr.bf16.mxu0 0
      %8514 = vmatpush1.bf16.msra.mxu0 0
      %8515 = vmatprep.subr.bf16.mxu0 0
      %8516 = vmatpush1.bf16.msra.mxu0 0
      %8517 = vmatprep.subr.bf16.mxu0 0
      %8518 = vmatpush1.bf16.msra.mxu0 0
      %8519 = vmatprep.subr.bf16.mxu0 0
      %8520 = vmatpush1.bf16.msra.mxu0 0
      %8521 = vmatprep.subr.bf16.mxu0 0
      %8522 = vmatpush1.bf16.msra.mxu0 0
      %8523 = vmatprep.subr.bf16.mxu0 0
      %8524 = vmatpush1.bf16.msra.mxu0 0
      %8525 = vmatprep.subr.bf16.mxu0 0
      %8526 = vmatpush1.bf16.msra.mxu0 0
      %8527 = vmatprep.subr.bf16.mxu0 0
      %8528 = vmatpush1.bf16.msra.mxu0 0
      %8529 = vmatprep.subr.bf16.mxu0 0
      %8530 = vmatpush1.bf16.msra.mxu0 0
      %8531 = vmatprep.subr.bf16.mxu0 0
      %8532 = vmatpush1.bf16.msra.mxu0 0
      %8533 = vmatprep.subr.bf16.mxu0 0
      %8534 = vmatpush1.bf16.msra.mxu0 0
      %8535 = vmatprep.subr.bf16.mxu0 0
      %8536 = vmatpush1.bf16.msra.mxu0 0
      %8537 = vmatprep.subr.bf16.mxu0 0
      %8538 = vmatpush1.bf16.msra.mxu0 0
      %8539 = vmatprep.subr.bf16.mxu0 0
      %8540 = vmatpush1.bf16.msra.mxu0 0
      %8541 = vmatprep.subr.bf16.mxu0 0
      %8542 = vmatpush1.bf16.msra.mxu0 0
      %8543 = vmatprep.mubr.bf16.mxu0 0
      %8544 = vmatmul.mubr.bf16.gmra.mrb[0].mxu0 %v8449
      %v8545 = vpop.f32.mrb[0].mxu0
      %v8546 = vadd.f32 0.0, %v8545
      %v8547 = vpop.f32.mrb[0].mxu0
      %v8548 = vpop.f32.mrb[0].mxu0
      %v8549 = vadd.f32 0.0, %v8548
      %v8550 = vpop.f32.mrb[0].mxu0
      %8551 = vmatprep.mubr.bf16.mxu0 0
      %8552 = vmatmul.mubr.bf16.gmra.mrb[0].mxu0 %v8452
      %v8553 = vpop.f32.mrb[0].mxu0
      %v8554 = vadd.f32 0.0, %v8553
      %v8555 = vpop.f32.mrb[0].mxu0
      %v8556 = vpop.f32.mrb[0].mxu0
      %v8557 = vadd.f32 0.0, %v8556
      %v8558 = vpop.f32.mrb[0].mxu0
      %8559 = vmatprep.mubr.bf16.mxu0 0
      %8560 = vmatmul.mubr.bf16.gmra.mrb[0].mxu0 %v8455
      %v8561 = vpop.f32.mrb[0].mxu0
      %v8562 = vadd.f32 0.0, %v8561
      %v8563 = vpop.f32.mrb[0].mxu0
      %v8564 = vpop.f32.mrb[0].mxu0
      %v8565 = vadd.f32 0.0, %v8564
      %v8566 = vpop.f32.mrb[0].mxu0
      %8567 = vmatprep.mubr.bf16.mxu0 0
      %8568 = vmatmul.mubr.bf16.gmra.mrb[0].mxu0 %v8458
      %v8569 = vpop.f32.mrb[0].mxu0
      %v8570 = vadd.f32 0.0, %v8569
      %v8571 = vpop.f32.mrb[0].mxu0
      %v8572 = vpop.f32.mrb[0].mxu0
      %v8573 = vadd.f32 0.0, %v8572
      %v8574 = vpop.f32.mrb[0].mxu0
      %8575 = vmatprep.mubr.bf16.mxu0 0
      %8576 = vmatmul.mubr.bf16.gmra.mrb[0].mxu0 %v8461
      %v8577 = vpop.f32.mrb[0].mxu0
      %v8578 = vadd.f32 0.0, %v8577
      %v8579 = vpop.f32.mrb[0].mxu0
      %v8580 = vpop.f32.mrb[0].mxu0
      %v8581 = vadd.f32 0.0, %v8580
      %v8582 = vpop.f32.mrb[0].mxu0
      %8583 = vmatprep.mubr.bf16.mxu0 0
      %8584 = vmatmul.mubr.bf16.gmra.mrb[0].mxu0 %v8464
      %v8585 = vpop.f32.mrb[0].mxu0
      %v8586 = vadd.f32 0.0, %v8585
      %v8587 = vpop.f32.mrb[0].mxu0
      %v8588 = vpop.f32.mrb[0].mxu0
      %v8589 = vadd.f32 0.0, %v8588
      %v8590 = vpop.f32.mrb[0].mxu0
      %8591 = vmatprep.mubr.bf16.mxu0 0
      %8592 = vmatmul.mubr.bf16.gmra.mrb[0].mxu0 %v8467
      %v8593 = vpop.f32.mrb[0].mxu0
      %v8594 = vadd.f32 0.0, %v8593
      %v8595 = vpop.f32.mrb[0].mxu0
      %v8596 = vpop.f32.mrb[0].mxu0
      %v8597 = vadd.f32 0.0, %v8596
      %v8598 = vpop.f32.mrb[0].mxu0
      %8599 = vmatprep.mubr.bf16.mxu0 0
      %8600 = vmatmul.mubr.bf16.gmra.mrb[0].mxu0 %v8470
      %v8601 = vpop.f32.mrb[0].mxu0
      %v8602 = vadd.f32 0.0, %v8601
      %v8603 = vpop.f32.mrb[0].mxu0
      %v8604 = vpop.f32.mrb[0].mxu0
      %v8605 = vadd.f32 0.0, %v8604
      %v8606 = vpop.f32.mrb[0].mxu0
      %8607 = vmatprep.mubr.bf16.mxu0 0
      %8608 = vmatmul.mubr.bf16.gmra.mrb[0].mxu0 %v8473
      %v8609 = vpop.f32.mrb[0].mxu0
      %v8610 = vadd.f32 0.0, %v8609
      %v8611 = vpop.f32.mrb[0].mxu0
      %v8612 = vpop.f32.mrb[0].mxu0
      %v8613 = vadd.f32 0.0, %v8612
      %v8614 = vpop.f32.mrb[0].mxu0
      %8615 = vmatprep.mubr.bf16.mxu0 0
      %8616 = vmatmul.mubr.bf16.gmra.mrb[0].mxu0 %v8476
      %v8617 = vpop.f32.mrb[0].mxu0
      %v8618 = vadd.f32 0.0, %v8617
      %v8619 = vpop.f32.mrb[0].mxu0
      %v8620 = vpop.f32.mrb[0].mxu0
      %v8621 = vadd.f32 0.0, %v8620
      %v8622 = vpop.f32.mrb[0].mxu0
      %8623 = vmatprep.mubr.bf16.mxu0 0
      %8624 = vmatmul.mubr.bf16.gmra.mrb[0].mxu0 %v8479
      %v8625 = vpop.f32.mrb[0].mxu0
      %v8626 = vadd.f32 0.0, %v8625
      %v8627 = vpop.f32.mrb[0].mxu0
      %v8628 = vpop.f32.mrb[0].mxu0
      %v8629 = vadd.f32 0.0, %v8628
      %v8630 = vpop.f32.mrb[0].mxu0
      %8631 = vmatprep.mubr.bf16.mxu0 0
      %8632 = vmatmul.mubr.bf16.gmra.mrb[0].mxu0 %v8482
      %v8633 = vpop.f32.mrb[0].mxu0
      %v8634 = vadd.f32 0.0, %v8633
      %v8635 = vpop.f32.mrb[0].mxu0
      %v8636 = vpop.f32.mrb[0].mxu0
      %v8637 = vadd.f32 0.0, %v8636
      %v8638 = vpop.f32.mrb[0].mxu0
      %8639 = vmatprep.mubr.bf16.mxu0 0
      %8640 = vmatmul.mubr.bf16.gmra.mrb[0].mxu0 %v8485
      %v8641 = vpop.f32.mrb[0].mxu0
      %v8642 = vadd.f32 0.0, %v8641
      %v8643 = vpop.f32.mrb[0].mxu0
      %v8644 = vpop.f32.mrb[0].mxu0
      %v8645 = vadd.f32 0.0, %v8644
      %v8646 = vpop.f32.mrb[0].mxu0
      %8647 = vmatprep.mubr.bf16.mxu0 0
      %8648 = vmatmul.mubr.bf16.gmra.mrb[0].mxu0 %v8488
      %v8649 = vpop.f32.mrb[0].mxu0
      %v8650 = vadd.f32 0.0, %v8649
      %v8651 = vpop.f32.mrb[0].mxu0
      %v8652 = vpop.f32.mrb[0].mxu0
      %v8653 = vadd.f32 0.0, %v8652
      %v8654 = vpop.f32.mrb[0].mxu0
      %8655 = vmatprep.mubr.bf16.mxu0 0
      %8656 = vmatmul.mubr.bf16.gmra.mrb[0].mxu0 %v8491
      %v8657 = vpop.f32.mrb[0].mxu0
      %v8658 = vadd.f32 0.0, %v8657
      %v8659 = vpop.f32.mrb[0].mxu0
      %v8660 = vpop.f32.mrb[0].mxu0
      %v8661 = vadd.f32 0.0, %v8660
      %v8662 = vpop.f32.mrb[0].mxu0
      %8663 = vmatprep.mubr.bf16.mxu0 0
      %8664 = vmatmul.mubr.bf16.gmra.mrb[0].mxu0 %v8494
      %v8665 = vpop.f32.mrb[0].mxu0
      %v8666 = vadd.f32 0.0, %v8665
      %v8667 = vpop.f32.mrb[0].mxu0
      %v8668 = vpop.f32.mrb[0].mxu0
      %v8669 = vadd.f32 0.0, %v8668
      %v8670 = vpop.f32.mrb[0].mxu0
      %8671 = vmatprep.mubr.bf16.mxu0 0
      %8672 = vmatmul.mubr.bf16.gmra.mrb[0].mxu0 %v8497
      %v8673 = vpop.f32.mrb[0].mxu0
      %v8674 = vadd.f32 0.0, %v8673
      %v8675 = vpop.f32.mrb[0].mxu0
      %v8676 = vpop.f32.mrb[0].mxu0
      %v8677 = vadd.f32 0.0, %v8676
      %v8678 = vpop.f32.mrb[0].mxu0
      %8679 = vmatprep.mubr.bf16.mxu0 0
      %8680 = vmatmul.mubr.bf16.gmra.mrb[0].mxu0 %v8500
      %v8681 = vpop.f32.mrb[0].mxu0
      %v8682 = vadd.f32 0.0, %v8681
      %v8683 = vpop.f32.mrb[0].mxu0
      %v8684 = vpop.f32.mrb[0].mxu0
      %v8685 = vadd.f32 0.0, %v8684
      %v8686 = vpop.f32.mrb[0].mxu0
      %8687 = vmatprep.mubr.bf16.mxu0 0
      %8688 = vmatmul.mubr.bf16.gmra.mrb[0].mxu0 %v8503
      %v8689 = vpop.f32.mrb[0].mxu0
      %v8690 = vadd.f32 0.0, %v8689
      %v8691 = vpop.f32.mrb[0].mxu0
      %v8692 = vpop.f32.mrb[0].mxu0
      %v8693 = vadd.f32 0.0, %v8692
      %v8694 = vpop.f32.mrb[0].mxu0
      %8695 = vmatprep.mubr.bf16.mxu0 0
      %8696 = vmatmul.mubr.bf16.gmra.mrb[0].mxu0 %v8506
      %v8697 = vpop.f32.mrb[0].mxu0
      %v8698 = vadd.f32 0.0, %v8697
      %v8699 = vpop.f32.mrb[0].mxu0
      %v8700 = vpop.f32.mrb[0].mxu0
      %v8701 = vadd.f32 0.0, %v8700
      %v8702 = vpop.f32.mrb[0].mxu0
      %8703 = vmatprep.mubr.bf16.mxu0 0
      %8704 = vmatmul.mubr.bf16.gmra.mrb[0].mxu0 %v8509
      %v8705 = vpop.f32.mrb[0].mxu0
      %v8706 = vadd.f32 0.0, %v8705
      %v8707 = vpop.f32.mrb[0].mxu0
      %v8708 = vpop.f32.mrb[0].mxu0
      %v8709 = vpop.f32.mrb[0].mxu0
      %8710 = vdwg.mxu0
      %v8711 = vadd.f32 %v8353, %v8546
      %v8712 = vadd.f32 %v8354, %v8549
      %v8713 = vadd.f32 %v8355, %v8554
      %v8714 = vadd.f32 %v8356, %v8557
      %v8715 = vadd.f32 %v8357, %v8562
      %v8716 = vadd.f32 %v8358, %v8565
      %v8717 = vadd.f32 %v8359, %v8570
      %v8718 = vadd.f32 %v8360, %v8573
      %v8719 = vadd.f32 %v8361, %v8578
      %v8720 = vadd.f32 %v8362, %v8581
      %v8721 = vadd.f32 %v8363, %v8586
      %v8722 = vadd.f32 %v8364, %v8589
      %v8723 = vadd.f32 %v8365, %v8594
      %v8724 = vadd.f32 %v8366, %v8597
      %v8725 = vadd.f32 %v8367, %v8602
      %v8726 = vadd.f32 %v8368, %v8605
      %v8727 = vadd.f32 %v8369, %v8610
      %v8728 = vadd.f32 %v8370, %v8613
      %v8729 = vadd.f32 %v8371, %v8618
      %v8730 = vadd.f32 %v8372, %v8621
      %v8731 = vadd.f32 %v8373, %v8626
      %v8732 = vadd.f32 %v8374, %v8629
      %v8733 = vadd.f32 %v8375, %v8634
      %v8734 = vadd.f32 %v8376, %v8637
      %v8735 = vadd.f32 %v8377, %v8642
      %v8736 = vadd.f32 %v8378, %v8645
      %v8737 = vadd.f32 %v8379, %v8650
      %v8738 = vadd.f32 %v8380, %v8653
      %v8739 = vadd.f32 %v8381, %v8658
      %v8740 = vadd.f32 %v8382, %v8661
      %v8741 = vadd.f32 %v8383, %v8666
      %v8742 = vadd.f32 %v8384, %v8669
      %v8743 = vadd.f32 %v8385, %v8674
      %v8744 = vadd.f32 %v8386, %v8677
      %v8745 = vadd.f32 %v8387, %v8682
      %v8746 = vadd.f32 %v8388, %v8685
      %v8747 = vadd.f32 %v8389, %v8690
      %v8748 = vadd.f32 %v8390, %v8693
      %v8749 = vadd.f32 %v8391, %v8698
      %v8750 = vadd.f32 %v8392, %v8701
      %v8751 = vadd.f32 %v8393, %v8706
      %v8752 = vld [vmem:[#allocation2 + $0xb8] sm:$0xf]
      %s8753 = scalar_lea.vmem %s4, 64
      %v8754 = vld [vmem:[%s8753] sm:$0xf]
      %v8755 = vld [vmem:[%s8753 + $0x4] sm:$0xf]
      %v8757 = vunpack.c.l.b16 %v8752
      %v8758 = vpack.c.b16 %v8757, %v8757
      %v8760 = vshrl.u32 %v8400, 16
      %v8762 = vrot.slane %v8760, 1
      %v8763 = vshll.u32 %v8400, 16
      %v8765 = vrot.slane %v8763, 2
      %v8766 = vor.u32 %v8762, %v8765
      %v8767 = vrot.slane %v7929, 1
      %v8768 = vrot.slane %v7925, 2
      %v8769 = vor.u32 %v8767, %v8768
      %v8770 = vsel %vm3995, %v8766, %v8769
      %v8771 = vrot.slane %v7937, 1
      %v8772 = vrot.slane %v7933, 2
      %v8773 = vor.u32 %v8771, %v8772
      %v8774 = vsel %vm3995, %v8769, %v8773
      %v8775 = vrot.slane %v7945, 1
      %v8776 = vrot.slane %v7941, 2
      %v8777 = vor.u32 %v8775, %v8776
      %v8778 = vsel %vm3995, %v8773, %v8777
      %v8779 = vrot.slane %v7953, 1
      %v8780 = vrot.slane %v7949, 2
      %v8781 = vor.u32 %v8779, %v8780
      %v8782 = vsel %vm3995, %v8777, %v8781
      %v8783 = vrot.slane %v7961, 1
      %v8784 = vrot.slane %v7957, 2
      %v8785 = vor.u32 %v8783, %v8784
      %v8786 = vsel %vm3995, %v8781, %v8785
      %v8787 = vrot.slane %v7969, 1
      %v8788 = vrot.slane %v7965, 2
      %v8789 = vor.u32 %v8787, %v8788
      %v8790 = vsel %vm3995, %v8785, %v8789
      %v8791 = vrot.slane %v7977, 1
      %v8792 = vrot.slane %v7973, 2
      %v8793 = vor.u32 %v8791, %v8792
      %v8794 = vsel %vm3995, %v8789, %v8793
      %v8795 = vrot.slane %v7985, 1
      %v8796 = vrot.slane %v7981, 2
      %v8797 = vor.u32 %v8795, %v8796
      %v8798 = vsel %vm3995, %v8793, %v8797
      %v8799 = vrot.slane %v7993, 1
      %v8800 = vrot.slane %v7989, 2
      %v8801 = vor.u32 %v8799, %v8800
      %v8802 = vsel %vm3995, %v8797, %v8801
      %v8803 = vrot.slane %v8001, 1
      %v8804 = vrot.slane %v7997, 2
      %v8805 = vor.u32 %v8803, %v8804
      %v8806 = vsel %vm3995, %v8801, %v8805
      %v8807 = vrot.slane %v8009, 1
      %v8808 = vrot.slane %v8005, 2
      %v8809 = vor.u32 %v8807, %v8808
      %v8810 = vsel %vm3995, %v8805, %v8809
      %v8811 = vrot.slane %v8017, 1
      %v8812 = vrot.slane %v8013, 2
      %v8813 = vor.u32 %v8811, %v8812
      %v8814 = vsel %vm3995, %v8809, %v8813
      %v8815 = vrot.slane %v8025, 1
      %v8816 = vrot.slane %v8021, 2
      %v8817 = vor.u32 %v8815, %v8816
      %v8818 = vsel %vm3995, %v8813, %v8817
      %v8819 = vrot.slane %v8033, 1
      %v8820 = vrot.slane %v8029, 2
      %v8821 = vor.u32 %v8819, %v8820
      %v8822 = vsel %vm3995, %v8817, %v8821
      %v8823 = vrot.slane %v8041, 1
      %v8824 = vrot.slane %v8037, 2
      %v8825 = vor.u32 %v8823, %v8824
      %v8826 = vsel %vm3995, %v8821, %v8825
      %v8827 = vrot.slane %v8049, 1
      %v8828 = vrot.slane %v8045, 2
      %v8829 = vor.u32 %v8827, %v8828
      %v8830 = vsel %vm3995, %v8825, %v8829
      %v8831 = vrot.slane %v8057, 1
      %v8832 = vrot.slane %v8053, 2
      %v8833 = vor.u32 %v8831, %v8832
      %v8834 = vsel %vm3995, %v8829, %v8833
      %v8835 = vrot.slane %v8065, 1
      %v8836 = vrot.slane %v8061, 2
      %v8837 = vor.u32 %v8835, %v8836
      %v8838 = vsel %vm3995, %v8833, %v8837
      %v8839 = vrot.slane %v8073, 1
      %v8840 = vrot.slane %v8069, 2
      %v8841 = vor.u32 %v8839, %v8840
      %v8842 = vsel %vm3995, %v8837, %v8841
      %v8844 = vshrl.u32 %v8758, 16
      %v8846 = vrot.slane %v8844, 1
      %v8847 = vshll.u32 %v8758, 16
      %v8849 = vrot.slane %v8847, 2
      %v8850 = vor.u32 %v8846, %v8849
      %v8851 = vsel %vm3995, %v8841, %v8850
      %v8854 = vunpack.c.l.b16 %v8754
      %v8855 = vunpack.c.l.b16 %v8755
      %v8856 = vpack.c.b16 %v8855, %v8854
      %v8859 = vsel %vm5190, %v8770, 0
      %v8862 = vsel %vm5190, %v8774, 0
      %v8865 = vsel %vm5190, %v8778, 0
      %v8868 = vsel %vm5190, %v8782, 0
      %v8871 = vsel %vm5190, %v8786, 0
      %v8874 = vsel %vm5190, %v8790, 0
      %v8877 = vsel %vm5190, %v8794, 0
      %v8880 = vsel %vm5190, %v8798, 0
      %v8883 = vsel %vm5190, %v8802, 0
      %v8886 = vsel %vm5190, %v8806, 0
      %v8889 = vsel %vm5190, %v8810, 0
      %v8892 = vsel %vm5190, %v8814, 0
      %v8895 = vsel %vm5190, %v8818, 0
      %v8898 = vsel %vm5190, %v8822, 0
      %v8901 = vsel %vm5190, %v8826, 0
      %v8904 = vsel %vm5190, %v8830, 0
      %v8907 = vsel %vm5190, %v8834, 0
      %v8910 = vsel %vm5190, %v8838, 0
      %v8913 = vsel %vm5190, %v8842, 0
      %v8916 = vsel %vm5190, %v8851, 0
      %v8919 = vsel %vm5190, %v8850, 0
      %8921 = vmatprep.subr.bf16.mxu0 0
      %8922 = vmatpush1.bf16.msra.mxu0 %v8856
      %8923 = vmatprep.subr.bf16.mxu0 0
      %8924 = vmatpush1.bf16.msra.mxu0 0
      %8925 = vmatprep.subr.bf16.mxu0 0
      %8926 = vmatpush1.bf16.msra.mxu0 0
      %8927 = vmatprep.subr.bf16.mxu0 0
      %8928 = vmatpush1.bf16.msra.mxu0 0
      %8929 = vmatprep.subr.bf16.mxu0 0
      %8930 = vmatpush1.bf16.msra.mxu0 0
      %8931 = vmatprep.subr.bf16.mxu0 0
      %8932 = vmatpush1.bf16.msra.mxu0 0
      %8933 = vmatprep.subr.bf16.mxu0 0
      %8934 = vmatpush1.bf16.msra.mxu0 0
      %8935 = vmatprep.subr.bf16.mxu0 0
      %8936 = vmatpush1.bf16.msra.mxu0 0
      %8937 = vmatprep.subr.bf16.mxu0 0
      %8938 = vmatpush1.bf16.msra.mxu0 0
      %8939 = vmatprep.subr.bf16.mxu0 0
      %8940 = vmatpush1.bf16.msra.mxu0 0
      %8941 = vmatprep.subr.bf16.mxu0 0
      %8942 = vmatpush1.bf16.msra.mxu0 0
      %8943 = vmatprep.subr.bf16.mxu0 0
      %8944 = vmatpush1.bf16.msra.mxu0 0
      %8945 = vmatprep.subr.bf16.mxu0 0
      %8946 = vmatpush1.bf16.msra.mxu0 0
      %8947 = vmatprep.subr.bf16.mxu0 0
      %8948 = vmatpush1.bf16.msra.mxu0 0
      %8949 = vmatprep.subr.bf16.mxu0 0
      %8950 = vmatpush1.bf16.msra.mxu0 0
      %8951 = vmatprep.subr.bf16.mxu0 0
      %8952 = vmatpush1.bf16.msra.mxu0 0
      %8953 = vmatprep.mubr.bf16.mxu0 0
      %8954 = vmatmul.mubr.bf16.gmra.mrb[0].mxu0 %v8859
      %v8955 = vpop.f32.mrb[0].mxu0
      %v8956 = vadd.f32 0.0, %v8955
      %v8957 = vpop.f32.mrb[0].mxu0
      %v8958 = vpop.f32.mrb[0].mxu0
      %v8959 = vadd.f32 0.0, %v8958
      %v8960 = vpop.f32.mrb[0].mxu0
      %8961 = vmatprep.mubr.bf16.mxu0 0
      %8962 = vmatmul.mubr.bf16.gmra.mrb[0].mxu0 %v8862
      %v8963 = vpop.f32.mrb[0].mxu0
      %v8964 = vadd.f32 0.0, %v8963
      %v8965 = vpop.f32.mrb[0].mxu0
      %v8966 = vpop.f32.mrb[0].mxu0
      %v8967 = vadd.f32 0.0, %v8966
      %v8968 = vpop.f32.mrb[0].mxu0
      %8969 = vmatprep.mubr.bf16.mxu0 0
      %8970 = vmatmul.mubr.bf16.gmra.mrb[0].mxu0 %v8865
      %v8971 = vpop.f32.mrb[0].mxu0
      %v8972 = vadd.f32 0.0, %v8971
      %v8973 = vpop.f32.mrb[0].mxu0
      %v8974 = vpop.f32.mrb[0].mxu0
      %v8975 = vadd.f32 0.0, %v8974
      %v8976 = vpop.f32.mrb[0].mxu0
      %8977 = vmatprep.mubr.bf16.mxu0 0
      %8978 = vmatmul.mubr.bf16.gmra.mrb[0].mxu0 %v8868
      %v8979 = vpop.f32.mrb[0].mxu0
      %v8980 = vadd.f32 0.0, %v8979
      %v8981 = vpop.f32.mrb[0].mxu0
      %v8982 = vpop.f32.mrb[0].mxu0
      %v8983 = vadd.f32 0.0, %v8982
      %v8984 = vpop.f32.mrb[0].mxu0
      %8985 = vmatprep.mubr.bf16.mxu0 0
      %8986 = vmatmul.mubr.bf16.gmra.mrb[0].mxu0 %v8871
      %v8987 = vpop.f32.mrb[0].mxu0
      %v8988 = vadd.f32 0.0, %v8987
      %v8989 = vpop.f32.mrb[0].mxu0
      %v8990 = vpop.f32.mrb[0].mxu0
      %v8991 = vadd.f32 0.0, %v8990
      %v8992 = vpop.f32.mrb[0].mxu0
      %8993 = vmatprep.mubr.bf16.mxu0 0
      %8994 = vmatmul.mubr.bf16.gmra.mrb[0].mxu0 %v8874
      %v8995 = vpop.f32.mrb[0].mxu0
      %v8996 = vadd.f32 0.0, %v8995
      %v8997 = vpop.f32.mrb[0].mxu0
      %v8998 = vpop.f32.mrb[0].mxu0
      %v8999 = vadd.f32 0.0, %v8998
      %v9000 = vpop.f32.mrb[0].mxu0
      %9001 = vmatprep.mubr.bf16.mxu0 0
      %9002 = vmatmul.mubr.bf16.gmra.mrb[0].mxu0 %v8877
      %v9003 = vpop.f32.mrb[0].mxu0
      %v9004 = vadd.f32 0.0, %v9003
      %v9005 = vpop.f32.mrb[0].mxu0
      %v9006 = vpop.f32.mrb[0].mxu0
      %v9007 = vadd.f32 0.0, %v9006
      %v9008 = vpop.f32.mrb[0].mxu0
      %9009 = vmatprep.mubr.bf16.mxu0 0
      %9010 = vmatmul.mubr.bf16.gmra.mrb[0].mxu0 %v8880
      %v9011 = vpop.f32.mrb[0].mxu0
      %v9012 = vadd.f32 0.0, %v9011
      %v9013 = vpop.f32.mrb[0].mxu0
      %v9014 = vpop.f32.mrb[0].mxu0
      %v9015 = vadd.f32 0.0, %v9014
      %v9016 = vpop.f32.mrb[0].mxu0
      %9017 = vmatprep.mubr.bf16.mxu0 0
      %9018 = vmatmul.mubr.bf16.gmra.mrb[0].mxu0 %v8883
      %v9019 = vpop.f32.mrb[0].mxu0
      %v9020 = vadd.f32 0.0, %v9019
      %v9021 = vpop.f32.mrb[0].mxu0
      %v9022 = vpop.f32.mrb[0].mxu0
      %v9023 = vadd.f32 0.0, %v9022
      %v9024 = vpop.f32.mrb[0].mxu0
      %9025 = vmatprep.mubr.bf16.mxu0 0
      %9026 = vmatmul.mubr.bf16.gmra.mrb[0].mxu0 %v8886
      %v9027 = vpop.f32.mrb[0].mxu0
      %v9028 = vadd.f32 0.0, %v9027
      %v9029 = vpop.f32.mrb[0].mxu0
      %v9030 = vpop.f32.mrb[0].mxu0
      %v9031 = vadd.f32 0.0, %v9030
      %v9032 = vpop.f32.mrb[0].mxu0
      %9033 = vmatprep.mubr.bf16.mxu0 0
      %9034 = vmatmul.mubr.bf16.gmra.mrb[0].mxu0 %v8889
      %v9035 = vpop.f32.mrb[0].mxu0
      %v9036 = vadd.f32 0.0, %v9035
      %v9037 = vpop.f32.mrb[0].mxu0
      %v9038 = vpop.f32.mrb[0].mxu0
      %v9039 = vadd.f32 0.0, %v9038
      %v9040 = vpop.f32.mrb[0].mxu0
      %9041 = vmatprep.mubr.bf16.mxu0 0
      %9042 = vmatmul.mubr.bf16.gmra.mrb[0].mxu0 %v8892
      %v9043 = vpop.f32.mrb[0].mxu0
      %v9044 = vadd.f32 0.0, %v9043
      %v9045 = vpop.f32.mrb[0].mxu0
      %v9046 = vpop.f32.mrb[0].mxu0
      %v9047 = vadd.f32 0.0, %v9046
      %v9048 = vpop.f32.mrb[0].mxu0
      %9049 = vmatprep.mubr.bf16.mxu0 0
      %9050 = vmatmul.mubr.bf16.gmra.mrb[0].mxu0 %v8895
      %v9051 = vpop.f32.mrb[0].mxu0
      %v9052 = vadd.f32 0.0, %v9051
      %v9053 = vpop.f32.mrb[0].mxu0
      %v9054 = vpop.f32.mrb[0].mxu0
      %v9055 = vadd.f32 0.0, %v9054
      %v9056 = vpop.f32.mrb[0].mxu0
      %9057 = vmatprep.mubr.bf16.mxu0 0
      %9058 = vmatmul.mubr.bf16.gmra.mrb[0].mxu0 %v8898
      %v9059 = vpop.f32.mrb[0].mxu0
      %v9060 = vadd.f32 0.0, %v9059
      %v9061 = vpop.f32.mrb[0].mxu0
      %v9062 = vpop.f32.mrb[0].mxu0
      %v9063 = vadd.f32 0.0, %v9062
      %v9064 = vpop.f32.mrb[0].mxu0
      %9065 = vmatprep.mubr.bf16.mxu0 0
      %9066 = vmatmul.mubr.bf16.gmra.mrb[0].mxu0 %v8901
      %v9067 = vpop.f32.mrb[0].mxu0
      %v9068 = vadd.f32 0.0, %v9067
      %v9069 = vpop.f32.mrb[0].mxu0
      %v9070 = vpop.f32.mrb[0].mxu0
      %v9071 = vadd.f32 0.0, %v9070
      %v9072 = vpop.f32.mrb[0].mxu0
      %9073 = vmatprep.mubr.bf16.mxu0 0
      %9074 = vmatmul.mubr.bf16.gmra.mrb[0].mxu0 %v8904
      %v9075 = vpop.f32.mrb[0].mxu0
      %v9076 = vadd.f32 0.0, %v9075
      %v9077 = vpop.f32.mrb[0].mxu0
      %v9078 = vpop.f32.mrb[0].mxu0
      %v9079 = vadd.f32 0.0, %v9078
      %v9080 = vpop.f32.mrb[0].mxu0
      %9081 = vmatprep.mubr.bf16.mxu0 0
      %9082 = vmatmul.mubr.bf16.gmra.mrb[0].mxu0 %v8907
      %v9083 = vpop.f32.mrb[0].mxu0
      %v9084 = vadd.f32 0.0, %v9083
      %v9085 = vpop.f32.mrb[0].mxu0
      %v9086 = vpop.f32.mrb[0].mxu0
      %v9087 = vadd.f32 0.0, %v9086
      %v9088 = vpop.f32.mrb[0].mxu0
      %9089 = vmatprep.mubr.bf16.mxu0 0
      %9090 = vmatmul.mubr.bf16.gmra.mrb[0].mxu0 %v8910
      %v9091 = vpop.f32.mrb[0].mxu0
      %v9092 = vadd.f32 0.0, %v9091
      %v9093 = vpop.f32.mrb[0].mxu0
      %v9094 = vpop.f32.mrb[0].mxu0
      %v9095 = vadd.f32 0.0, %v9094
      %v9096 = vpop.f32.mrb[0].mxu0
      %9097 = vmatprep.mubr.bf16.mxu0 0
      %9098 = vmatmul.mubr.bf16.gmra.mrb[0].mxu0 %v8913
      %v9099 = vpop.f32.mrb[0].mxu0
      %v9100 = vadd.f32 0.0, %v9099
      %v9101 = vpop.f32.mrb[0].mxu0
      %v9102 = vpop.f32.mrb[0].mxu0
      %v9103 = vadd.f32 0.0, %v9102
      %v9104 = vpop.f32.mrb[0].mxu0
      %9105 = vmatprep.mubr.bf16.mxu0 0
      %9106 = vmatmul.mubr.bf16.gmra.mrb[0].mxu0 %v8916
      %v9107 = vpop.f32.mrb[0].mxu0
      %v9108 = vadd.f32 0.0, %v9107
      %v9109 = vpop.f32.mrb[0].mxu0
      %v9110 = vpop.f32.mrb[0].mxu0
      %v9111 = vadd.f32 0.0, %v9110
      %v9112 = vpop.f32.mrb[0].mxu0
      %9113 = vmatprep.mubr.bf16.mxu0 0
      %9114 = vmatmul.mubr.bf16.gmra.mrb[0].mxu0 %v8919
      %v9115 = vpop.f32.mrb[0].mxu0
      %v9116 = vadd.f32 0.0, %v9115
      %v9117 = vpop.f32.mrb[0].mxu0
      %v9118 = vpop.f32.mrb[0].mxu0
      %v9119 = vpop.f32.mrb[0].mxu0
      %9120 = vdwg.mxu0
      %v9121 = vadd.f32 %v8711, %v8956
      %v9122 = vadd.f32 %v8712, %v8959
      %v9123 = vadd.f32 %v8713, %v8964
      %v9124 = vadd.f32 %v8714, %v8967
      %v9125 = vadd.f32 %v8715, %v8972
      %v9126 = vadd.f32 %v8716, %v8975
      %v9127 = vadd.f32 %v8717, %v8980
      %v9128 = vadd.f32 %v8718, %v8983
      %v9129 = vadd.f32 %v8719, %v8988
      %v9130 = vadd.f32 %v8720, %v8991
      %v9131 = vadd.f32 %v8721, %v8996
      %v9132 = vadd.f32 %v8722, %v8999
      %v9133 = vadd.f32 %v8723, %v9004
      %v9134 = vadd.f32 %v8724, %v9007
      %v9135 = vadd.f32 %v8725, %v9012
      %v9136 = vadd.f32 %v8726, %v9015
      %v9137 = vadd.f32 %v8727, %v9020
      %v9138 = vadd.f32 %v8728, %v9023
      %v9139 = vadd.f32 %v8729, %v9028
      %v9140 = vadd.f32 %v8730, %v9031
      %v9141 = vadd.f32 %v8731, %v9036
      %v9142 = vadd.f32 %v8732, %v9039
      %v9143 = vadd.f32 %v8733, %v9044
      %v9144 = vadd.f32 %v8734, %v9047
      %v9145 = vadd.f32 %v8735, %v9052
      %v9146 = vadd.f32 %v8736, %v9055
      %v9147 = vadd.f32 %v8737, %v9060
      %v9148 = vadd.f32 %v8738, %v9063
      %v9149 = vadd.f32 %v8739, %v9068
      %v9150 = vadd.f32 %v8740, %v9071
      %v9151 = vadd.f32 %v8741, %v9076
      %v9152 = vadd.f32 %v8742, %v9079
      %v9153 = vadd.f32 %v8743, %v9084
      %v9154 = vadd.f32 %v8744, %v9087
      %v9155 = vadd.f32 %v8745, %v9092
      %v9156 = vadd.f32 %v8746, %v9095
      %v9157 = vadd.f32 %v8747, %v9100
      %v9158 = vadd.f32 %v8748, %v9103
      %v9159 = vadd.f32 %v8749, %v9108
      %v9160 = vadd.f32 %v8750, %v9111
      %v9161 = vadd.f32 %v8751, %v9116
      %v9162 = vld [vmem:[%s5] sm:$0x1]
      %v9164 = vlaneseq
      %v9165 = vshrl.u32 %v9164, 7
      %v9166 = vsub.s32 0, %v9165
      %v9167 = vrot.slane %v9162, %v9166
      %v9169 = vadd.f32 %v9121, %v9167
      %v9170 = vadd.f32 %v9122, %v9167
      %v9171 = vadd.f32 %v9123, %v9167
      %v9172 = vadd.f32 %v9124, %v9167
      %v9173 = vadd.f32 %v9125, %v9167
      %v9174 = vadd.f32 %v9126, %v9167
      %v9175 = vadd.f32 %v9127, %v9167
      %v9176 = vadd.f32 %v9128, %v9167
      %v9177 = vadd.f32 %v9129, %v9167
      %v9178 = vadd.f32 %v9130, %v9167
      %v9179 = vadd.f32 %v9131, %v9167
      %v9180 = vadd.f32 %v9132, %v9167
      %v9181 = vadd.f32 %v9133, %v9167
      %v9182 = vadd.f32 %v9134, %v9167
      %v9183 = vadd.f32 %v9135, %v9167
      %v9184 = vadd.f32 %v9136, %v9167
      %v9185 = vadd.f32 %v9137, %v9167
      %v9186 = vadd.f32 %v9138, %v9167
      %v9187 = vadd.f32 %v9139, %v9167
      %v9188 = vadd.f32 %v9140, %v9167
      %v9189 = vadd.f32 %v9141, %v9167
      %v9190 = vadd.f32 %v9142, %v9167
      %v9191 = vadd.f32 %v9143, %v9167
      %v9192 = vadd.f32 %v9144, %v9167
      %v9193 = vadd.f32 %v9145, %v9167
      %v9194 = vadd.f32 %v9146, %v9167
      %v9195 = vadd.f32 %v9147, %v9167
      %v9196 = vadd.f32 %v9148, %v9167
      %v9197 = vadd.f32 %v9149, %v9167
      %v9198 = vadd.f32 %v9150, %v9167
      %v9199 = vadd.f32 %v9151, %v9167
      %v9200 = vadd.f32 %v9152, %v9167
      %v9201 = vadd.f32 %v9153, %v9167
      %v9202 = vadd.f32 %v9154, %v9167
      %v9203 = vadd.f32 %v9155, %v9167
      %v9204 = vadd.f32 %v9156, %v9167
      %v9205 = vadd.f32 %v9157, %v9167
      %v9206 = vadd.f32 %v9158, %v9167
      %v9207 = vadd.f32 %v9159, %v9167
      %v9208 = vadd.f32 %v9160, %v9167
      %v9209 = vadd.f32 %v9161, %v9167
      %v9210 = vmax.f32 %v9169, 0.0
      %v9211 = vmax.f32 %v9170, 0.0
      %v9212 = vmax.f32 %v9171, 0.0
      %v9213 = vmax.f32 %v9172, 0.0
      %v9214 = vmax.f32 %v9173, 0.0
      %v9215 = vmax.f32 %v9174, 0.0
      %v9216 = vmax.f32 %v9175, 0.0
      %v9217 = vmax.f32 %v9176, 0.0
      %v9218 = vmax.f32 %v9177, 0.0
      %v9219 = vmax.f32 %v9178, 0.0
      %v9220 = vmax.f32 %v9179, 0.0
      %v9221 = vmax.f32 %v9180, 0.0
      %v9222 = vmax.f32 %v9181, 0.0
      %v9223 = vmax.f32 %v9182, 0.0
      %v9224 = vmax.f32 %v9183, 0.0
      %v9225 = vmax.f32 %v9184, 0.0
      %v9226 = vmax.f32 %v9185, 0.0
      %v9227 = vmax.f32 %v9186, 0.0
      %v9228 = vmax.f32 %v9187, 0.0
      %v9229 = vmax.f32 %v9188, 0.0
      %v9230 = vmax.f32 %v9189, 0.0
      %v9231 = vmax.f32 %v9190, 0.0
      %v9232 = vmax.f32 %v9191, 0.0
      %v9233 = vmax.f32 %v9192, 0.0
      %v9234 = vmax.f32 %v9193, 0.0
      %v9235 = vmax.f32 %v9194, 0.0
      %v9236 = vmax.f32 %v9195, 0.0
      %v9237 = vmax.f32 %v9196, 0.0
      %v9238 = vmax.f32 %v9197, 0.0
      %v9239 = vmax.f32 %v9198, 0.0
      %v9240 = vmax.f32 %v9199, 0.0
      %v9241 = vmax.f32 %v9200, 0.0
      %v9242 = vmax.f32 %v9201, 0.0
      %v9243 = vmax.f32 %v9202, 0.0
      %v9244 = vmax.f32 %v9203, 0.0
      %v9245 = vmax.f32 %v9204, 0.0
      %v9246 = vmax.f32 %v9205, 0.0
      %v9247 = vmax.f32 %v9206, 0.0
      %v9248 = vmax.f32 %v9207, 0.0
      %v9249 = vmax.f32 %v9208, 0.0
      %v9250 = vmax.f32 %v9209, 0.0
      %9251 = vst.msk [vmem:[%s251] sm:$0xff] %vm5190, %v9210
      %9252 = vst.msk [vmem:[%s251 + $0x8] sm:$0xff] %vm5190, %v9211
      %9253 = vst.msk [vmem:[%s251 + $0x10] sm:$0xff] %vm5190, %v9212
      %9254 = vst.msk [vmem:[%s251 + $0x18] sm:$0xff] %vm5190, %v9213
      %9255 = vst.msk [vmem:[%s251 + $0x20] sm:$0xff] %vm5190, %v9214
      %9256 = vst.msk [vmem:[%s251 + $0x28] sm:$0xff] %vm5190, %v9215
      %9257 = vst.msk [vmem:[%s251 + $0x30] sm:$0xff] %vm5190, %v9216
      %9258 = vst.msk [vmem:[%s251 + $0x38] sm:$0xff] %vm5190, %v9217
      %9259 = vst.msk [vmem:[%s251 + $0x40] sm:$0xff] %vm5190, %v9218
      %9260 = vst.msk [vmem:[%s251 + $0x48] sm:$0xff] %vm5190, %v9219
      %9261 = vst.msk [vmem:[%s251 + $0x50] sm:$0xff] %vm5190, %v9220
      %9262 = vst.msk [vmem:[%s251 + $0x58] sm:$0xff] %vm5190, %v9221
      %9263 = vst.msk [vmem:[%s251 + $0x60] sm:$0xff] %vm5190, %v9222
      %9264 = vst.msk [vmem:[%s251 + $0x68] sm:$0xff] %vm5190, %v9223
      %9265 = vst.msk [vmem:[%s251 + $0x70] sm:$0xff] %vm5190, %v9224
      %9266 = vst.msk [vmem:[%s251 + $0x78] sm:$0xff] %vm5190, %v9225
      %9267 = vst.msk [vmem:[%s251 + $0x80] sm:$0xff] %vm5190, %v9226
      %9268 = vst.msk [vmem:[%s251 + $0x88] sm:$0xff] %vm5190, %v9227
      %9269 = vst.msk [vmem:[%s251 + $0x90] sm:$0xff] %vm5190, %v9228
      %9270 = vst.msk [vmem:[%s251 + $0x98] sm:$0xff] %vm5190, %v9229
      %9271 = vst.msk [vmem:[%s251 + $0xa0] sm:$0xff] %vm5190, %v9230
      %9272 = vst.msk [vmem:[%s251 + $0xa8] sm:$0xff] %vm5190, %v9231
      %9273 = vst.msk [vmem:[%s251 + $0xb0] sm:$0xff] %vm5190, %v9232
      %9274 = vst.msk [vmem:[%s251 + $0xb8] sm:$0xff] %vm5190, %v9233
      %9275 = vst.msk [vmem:[%s251 + $0xc0] sm:$0xff] %vm5190, %v9234
      %9276 = vst.msk [vmem:[%s251 + $0xc8] sm:$0xff] %vm5190, %v9235
      %9277 = vst.msk [vmem:[%s251 + $0xd0] sm:$0xff] %vm5190, %v9236
      %9278 = vst.msk [vmem:[%s251 + $0xd8] sm:$0xff] %vm5190, %v9237
      %9279 = vst.msk [vmem:[%s251 + $0xe0] sm:$0xff] %vm5190, %v9238
      %9280 = vst.msk [vmem:[%s251 + $0xe8] sm:$0xff] %vm5190, %v9239
      %9281 = vst.msk [vmem:[%s251 + $0xf0] sm:$0xff] %vm5190, %v9240
      %9282 = vst.msk [vmem:[%s251 + $0xf8] sm:$0xff] %vm5190, %v9241
      %9283 = vst.msk [vmem:[%s251 + $0x100] sm:$0xff] %vm5190, %v9242
      %9284 = vst.msk [vmem:[%s251 + $0x108] sm:$0xff] %vm5190, %v9243
      %9285 = vst.msk [vmem:[%s251 + $0x110] sm:$0xff] %vm5190, %v9244
      %9286 = vst.msk [vmem:[%s251 + $0x118] sm:$0xff] %vm5190, %v9245
      %9287 = vst.msk [vmem:[%s251 + $0x120] sm:$0xff] %vm5190, %v9246
      %9288 = vst.msk [vmem:[%s251 + $0x128] sm:$0xff] %vm5190, %v9247
      %9289 = vst.msk [vmem:[%s251 + $0x130] sm:$0xff] %vm5190, %v9248
      %9290 = vst.msk [vmem:[%s251 + $0x138] sm:$0xff] %vm5190, %v9249
      %9291 = vst.msk [vmem:[%s251 + $0x140] sm:$0xf] %vm4772, %v9250
      %p9292 = scmp.lt.s32.totalorder %s17, 1
      %s9293 = scalar_select %p9292, %s17, 1
      %s9294 = smul.addr %s9293, 41
      %s9295 = smul.addr %s9294, 8
      %s9296 = scalar_lea.vmem %s6, %s9295
      // Predicated region
      $region45: #{up0_forward.3} parent=43 // pred_check
        %p9297 = pneg %p166
      $region46: #{up0_forward.3} parent=43 // pred_check_branch
        %9299 = sbr.rel (%p9297) target = $region48
      $region47: #{up0_forward.3} parent=43 // pred_region
        _
      $region48: #{up0_forward.3} parent=43 // pred_fallthru
        _
    $region44: #{up0_forward.3} parent=5 // pred_fallthru
      _
    %p9300 = scmp.le.s32.totalorder 2, %s12
    // Predicated region
    $region49: #{up0_forward.3} parent=5 // pred_check
      %p9301 = pneg %p9300
    $region50: #{up0_forward.3} parent=5 // pred_check_branch
      %9303 = sbr.rel (%p9301) target = $region52
    $region51: #{up0_forward.3} parent=5 // pred_region
      %s9304 = ssub.s32 %s12, 2
      // Predicated region
      $region53: #{up0_forward.3} parent=51 // pred_check
        %p9305 = pneg %p172
      $region54: #{up0_forward.3} parent=51 // pred_check_branch
        %9307 = sbr.rel (%p9305) target = $region56
      $region55: #{up0_forward.3} parent=51 // pred_region
        %p9308 = scmp.lt.s32.totalorder %s18, 1
        %s9309 = scalar_select %p9308, %s18, 1
        %s9310 = smul.addr %s9309, 41
        %s9311 = smul.addr %s9310, 8
        %s9312 = scalar_lea.vmem %s6, %s9311
      $region56: #{up0_forward.3} parent=51 // pred_fallthru
        _
    $region52: #{up0_forward.3} parent=5 // pred_fallthru
      _
  $region6: #{up0_forward.3} parent=0 // loop_footer
    %s16 = sadd.s32 1, %s12
  $region7: #{up0_forward.3} parent=0 // loop_footer_branch
    %11 = sbr.rel target = $region3
  $region8: #{up0_forward.3} parent=0 // loop_exit
    _

</llo_original>
